<compile_context>
chip_gen: v7x
topology: tpu7x:2x2x1
jax: 0.10.0
libtpu: 0.0.40
codegen_flags: <defaults>
</compile_context>

<pallas_src>
import functools

import numpy as np
import jax
import jax.numpy as jnp
from jax import lax
from jax.experimental import pallas as pl
from jax.experimental.pallas import tpu as pltpu

EPS = 1e-10
NEG_SIZE = 10  # only used by the contrastive term (not implemented, see TODO)

# ---------------------------------------------------------------------------
# Deterministic loss configuration (stands in for omegaconf loss_cfg)
# ---------------------------------------------------------------------------
STFT_SC_FACTOR = 0.5
STFT_MAG_FACTOR = 0.5
RECONSTRUCTION_FACTOR = 1.0
CONTRASTIVE_FACTOR = 1.0
NOISE_REG_FACTOR = 0.1
ENERGY_FACTOR = 0.01
WINDOW_SIZE = 4
JUST_RECONSTRUCTION = False
INCLUDE_REGULARIZATION = True
INCLUDE_ENERGY_LOSS = True
INCLUDE_CONTRASTIVE = False  # reference forward returns literal 0 for this slot

# Multi-resolution STFT configuration (small resolutions for the small test shapes)
FFT_SIZES = (128, 256, 64)
HOP_SIZES = (32, 64, 16)
WIN_LENGTHS = (64, 128, 32)

_VMEM_LIMIT = 32 * 1024 * 1024      # explicit scoped-VMEM limit (safe on v5e/v6e/v7x)
_MAX_FRAMES_PER_BLOCK = 256         # frame-block cap (keeps dot outputs well in VMEM)
_N_SUMS = 13                        # 3 sums per STFT resolution (9) + 4 time-domain sums


def _round_up(x, m):
    return ((x + m - 1) // m) * m


# ---------------------------------------------------------------------------
# Windowed DFT basis (Nyquist-folded packing, zero dead frequency lanes)
# ---------------------------------------------------------------------------
def _stft_basis(fft_size, win_length):
    """[n_fft, n_fft] bf16 basis:
         cols [0, N/2)      : win * cos(2*pi*f*n/N),   f = 0..N/2-1
         col  N/2           : win * cos(pi*n)          (Nyquist real; its imag is 0)
         cols (N/2, N)      : -win * sin(2*pi*f*n/N),  f = 1..N/2-1
       (sin of bin 0 and bin N/2 are identically zero, so nothing is lost)."""
    win = np.zeros(fft_size, dtype=np.float64)
    lpad = (fft_size - win_length) // 2
    n = np.arange(win_length)
    win[lpad:lpad + win_length] = 0.5 - 0.5 * np.cos(2.0 * np.pi * n / win_length)
    half = fft_size // 2
    k = np.arange(fft_size)[:, None].astype(np.float64)
    basis = np.zeros((fft_size, fft_size), dtype=np.float64)
    f = np.arange(half)[None, :]
    basis[:, :half] = win[:, None] * np.cos(2.0 * np.pi * k * f / fft_size)
    basis[:, half] = win * np.cos(np.pi * np.arange(fft_size))
    f = np.arange(1, half)[None, :]
    basis[:, half + 1:] = -(win[:, None] * np.sin(2.0 * np.pi * k * f / fft_size))
    return jnp.asarray(basis.astype(np.float32), dtype=jnp.bfloat16)


# ---------------------------------------------------------------------------
# Fused Pallas kernel: 3 STFT resolutions + time-domain sums
# ---------------------------------------------------------------------------
def _fused_loss_kernel(xv0, yv0, xv1, yv1, xv2, yv2, w0, w1, w2,
                       y_ref, z_ref, n_ref, c_ref,
                       out_ref, f0, f1, f2, *, res_cfg):
    """Partial sums accumulated across the (batch, frame-block) grid.

    Per resolution idx (k0 = 3*idx):
       out[k0+0] = sum((y_mag - x_mag)^2)        spectral-convergence numerator
       out[k0+1] = sum(clamp(|Y|^2, 1e-7))       spectral-convergence denominator
       out[k0+2] = sum(|log y_mag - log x_mag|)  log-magnitude L1 numerator
    Time domain:
       out[9]  = sum(|y + z - noisy|)
       out[10] = sum((z - noisy)^2 * neg)
       out[11] = sum(neg)
       out[12] = sum(log(1 + |y|) * pos)
    """
    b = pl.program_id(0)
    jb = pl.program_id(1)

    @pl.when(jnp.logical_and(b == 0, jb == 0))
    def _init():
        for i in range(_N_SUMS):
            out_ref[i] = jnp.float32(0.0)

    xv_refs = (xv0, xv1, xv2)
    yv_refs = (yv0, yv1, yv2)
    w_refs = (w0, w1, w2)
    f_refs = (f0, f1, f2)

    for idx, cfg in enumerate(res_cfg):
        block_m = cfg["block_m"]
        r = cfg["r"]
        hop = cfg["hop"]
        half = cfg["half"]
        n_frames = cfg["n_frames"]
        xv, yv, w, fscr = xv_refs[idx], yv_refs[idx], w_refs[idx], f_refs[idx]

        # Aligned chunk of hop-rows covering every frame of this block plus overlap.
        base = pl.multiple_of(jb * block_m, 8)
        xc = xv[pl.ds(base, block_m + 8), :]              # [block_m + 8, hop] bf16
        yc = yv[pl.ds(base, block_m + 8), :]

        # Build [2*block_m, n_fft] frame tile (est rows | noisy rows) in VMEM scratch:
        # frame(m)[j*hop:(j+1)*hop] == hop_view[m + j].
        for j in range(r):
            fscr[0:block_m, j * hop:(j + 1) * hop] = xc[j:j + block_m, :]
            fscr[block_m:2 * block_m, j * hop:(j + 1) * hop] = yc[j:j + block_m, :]

        # One big-K MXU dot for both operands.
        o = jnp.dot(fscr[...], w[...], preferred_element_type=jnp.float32)

        # Nyquist-folded epilogue (bins 0..N/2-1 dense, bin N/2 handled separately).
        re = o[:, :half]                                   # real, bins 0..N/2-1
        imq = o[:, half:]                                  # col0 = Nyquist real, col f = imag bin f
        col = lax.broadcasted_iota(jnp.int32, (1, half), 1)
        im = jnp.where(col > 0, imq, 0.0)                  # imag (bin 0 imag == 0)
        sq = jnp.maximum(re * re + im * im, 1e-7)
        mag = jnp.sqrt(sq)
        lmag = jnp.log(mag)
        nyq = imq[:, 0:1]
        nsq = jnp.maximum(nyq * nyq, 1e-7)
        nmag = jnp.sqrt(nsq)
        nlmag = jnp.log(nmag)

        # Row-validity mask (frames beyond n_frames are padding).
        rmask = jnp.where(
            lax.broadcasted_iota(jnp.int32, (block_m, 1), 0) + base < n_frames,
            jnp.float32(1.0), jnp.float32(0.0))

        x_mag, y_mag = mag[:block_m], mag[block_m:]
        x_lm, y_lm = lmag[:block_m], lmag[block_m:]
        y_sq = sq[block_m:]
        xn_mag, yn_mag = nmag[:block_m], nmag[block_m:]
        xn_lm, yn_lm = nlmag[:block_m], nlmag[block_m:]
        yn_sq = nsq[block_m:]

        d = (y_mag - x_mag) * rmask
        dn = (yn_mag - xn_mag) * rmask
        k0 = 3 * idx
        out_ref[k0 + 0] += jnp.sum(d * d) + jnp.sum(dn * dn)
        out_ref[k0 + 1] += jnp.sum(y_sq * rmask) + jnp.sum(yn_sq * rmask)
        out_ref[k0 + 2] += (jnp.sum(jnp.abs(y_lm - x_lm) * rmask)
                            + jnp.sum(jnp.abs(yn_lm - xn_lm) * rmask))

    # Time-domain sums: once per batch row.
    @pl.when(jb == 0)
    def _time():
        y = y_ref[...]
        z = z_ref[...]
        nz = n_ref[...]
        code = c_ref[...].astype(jnp.float32)   # 0 = pad, 1 = valid & ~vad, 2 = valid & vad
        pos = jnp.where(code > 1.5, jnp.float32(1.0), jnp.float32(0.0))
        neg = jnp.where(jnp.abs(code - 1.0) < 0.25, jnp.float32(1.0), jnp.float32(0.0))
        out_ref[9] += jnp.sum(jnp.abs(y + z - nz))
        dzn = (z - nz) * neg
        out_ref[10] += jnp.sum(dzn * dzn)
        out_ref[11] += jnp.sum(neg)
        out_ref[12] += jnp.sum(jnp.log1p(jnp.abs(y)) * pos)


# ---------------------------------------------------------------------------
# Wrapper: build hop views / bases / time tiles and run the fused kernel once
# ---------------------------------------------------------------------------
def _fused_sums(est_bf, noisy_bf, y2, z2, n2, code_bt):
    B, T = y2.shape
    assert len(FFT_SIZES) == 3
    n_frames_list = [T // hop + 1 for hop in HOP_SIZES]
    NB = max(1, -(-max(n_frames_list) // _MAX_FRAMES_PER_BLOCK))

    cfgs, hop_views, bases, meta = [], [], [], []
    for fft, hop, win_l, n_frames in zip(FFT_SIZES, HOP_SIZES, WIN_LENGTHS, n_frames_list):
        assert fft % hop == 0
        r = fft // hop
        assert r <= 8, "frame overlap read assumes n_fft/hop <= 8"
        block_m = _round_up(-(-n_frames // NB), 8)
        n_hops_pad = NB * block_m + 8
        pad = fft // 2
        cfgs.append(dict(fft=fft, hop=hop, r=r, half=fft // 2,
                         block_m=block_m, n_frames=n_frames))

        def hv(x):
            xp = jnp.pad(x, ((0, 0), (pad, pad)), mode="reflect")
            extra = n_hops_pad * hop - xp.shape[-1]
            assert extra >= 0
            xp = jnp.pad(xp, ((0, 0), (0, extra)))
            return xp.reshape(B, n_hops_pad, hop)

        hop_views.append((hv(est_bf), hv(noisy_bf), n_hops_pad))
        bases.append(_stft_basis(fft, win_l))
        meta.append((n_frames, fft // 2 + 1))

    # time-domain streams as lane-dense [B, T/128, 128] tiles (zero-pad is harmless:
    # padded positions have code 0 and zero samples, contributing 0 to every sum)
    Tp = _round_up(T, 128)
    rows = Tp // 128

    def tiles(x):
        if Tp != T:
            x = jnp.pad(x, ((0, 0), (0, Tp - T)))
        return x.reshape(B, rows, 128)

    y3 = tiles(y2)
    z3 = tiles(z2)
    n3 = tiles(n2)
    c3 = tiles(code_bt.astype(jnp.bfloat16))

    inputs, in_specs = [], []
    for (xv, yv, n_hops_pad), cfg in zip(hop_views, cfgs):
        spec = pl.BlockSpec((None, n_hops_pad, cfg["hop"]), lambda b, jb: (b, 0, 0))
        inputs += [xv, yv]
        in_specs += [spec, spec]
    for basis, cfg in zip(bases, cfgs):
        inputs.append(basis)
        in_specs.append(pl.BlockSpec((cfg["fft"], cfg["fft"]), lambda b, jb: (0, 0)))
    t_spec = pl.BlockSpec((None, rows, 128), lambda b, jb: (b, 0, 0))
    inputs += [y3, z3, n3, c3]
    in_specs += [t_spec] * 4

    kern = functools.partial(_fused_loss_kernel, res_cfg=tuple(cfgs))
    sums = pl.pallas_call(
        kern,
        out_shape=jax.ShapeDtypeStruct((_N_SUMS,), jnp.float32),
        grid=(B, NB),
        in_specs=in_specs,
        out_specs=pl.BlockSpec(memory_space=pltpu.MemorySpace.SMEM),
        scratch_shapes=[pltpu.VMEM((2 * cfg["block_m"], cfg["fft"]), jnp.bfloat16)
                        for cfg in cfgs],
        compiler_params=pltpu.CompilerParams(
            dimension_semantics=("arbitrary", "arbitrary"),
            vmem_limit_bytes=_VMEM_LIMIT),
    )(*inputs)
    return sums, meta


# ---------------------------------------------------------------------------
# SELoss forward
# ---------------------------------------------------------------------------
def se_loss_forward(outputs, noisy_sigs, vad_mask):
    l_c, l_n, y_hat, z_hat, w_c, w_n = outputs

    # length matching between noisy and estimates (static shapes)
    T = min(noisy_sigs.shape[-1], y_hat.shape[-1])
    noisy_sigs = noisy_sigs[..., :T]
    y_hat = y_hat[..., :T]
    z_hat = z_hat[..., :T]

    B = y_hat.shape[0]
    y2 = y_hat.reshape(B, T).astype(jnp.float32)
    z2 = z_hat.reshape(B, T).astype(jnp.float32)
    n2 = noisy_sigs.reshape(B, T).astype(jnp.float32)
    est2 = y2 + z2  # est_noisy.squeeze(1)
    est_bf = est2.astype(jnp.bfloat16)
    n_bf = n2.astype(jnp.bfloat16)

    # ---- time-domain code mask: 0 = invalid, 1 = valid & ~vad, 2 = valid & vad ----
    factor = T // vad_mask.shape[-1]
    stretched = jnp.repeat(vad_mask.astype(jnp.float32), factor, axis=-1)  # [B, L0]
    L = min(stretched.shape[-1], T)
    pos_bt = jnp.pad(stretched[:, :L], ((0, 0), (0, T - L)))               # [B, T]
    valid_t = jnp.asarray((np.arange(T) < L).astype(np.float32))[None, :]  # [1, T]
    code_bt = valid_t * (1.0 + pos_bt)                                     # [B, T]

    sums, meta = _fused_sums(est_bf, n_bf, y2, z2, n2, code_bt)

    # ---- Multi-resolution STFT loss (spectral convergence + log-magnitude L1) ----
    sc_loss = jnp.float32(0.0)
    mag_loss = jnp.float32(0.0)
    for idx, (n_frames, f_bins) in enumerate(meta):
        k = 3 * idx
        sc_loss = sc_loss + jnp.sqrt(sums[k]) / jnp.sqrt(sums[k + 1])
        mag_loss = mag_loss + sums[k + 2] / jnp.float32(B * n_frames * f_bins)
    sc_loss = STFT_SC_FACTOR * sc_loss / len(FFT_SIZES)
    mag_loss = STFT_MAG_FACTOR * mag_loss / len(FFT_SIZES)

    l1_loss = sums[9] / jnp.float32(B * 1 * T)
    reconstruction_loss = l1_loss + sc_loss + mag_loss

    if JUST_RECONSTRUCTION:
        return reconstruction_loss

    if INCLUDE_REGULARIZATION:
        reg_loss = sums[10] / sums[11]          # mse over masked_select(~vad)
    else:
        reg_loss = jnp.float32(0.0)

    if INCLUDE_ENERGY_LOSS:
        # torch.masked_select flattens across the batch, so the reference reduces
        # to a single global sum; -mean(log(scalar)) == -log(scalar).
        energy_loss = -jnp.log(sums[12])
    else:
        energy_loss = jnp.float32(0.0)

    return [
        RECONSTRUCTION_FACTOR * reconstruction_loss,
        jnp.float32(0.0),  # contrastive slot: reference forward returns literal 0
        NOISE_REG_FACTOR * reg_loss,
        ENERGY_FACTOR * energy_loss,
    ]


# ---------------------------------------------------------------------------
# Example run
# ---------------------------------------------------------------------------
if __name__ == "__main__":
    key = jax.random.PRNGKey(0)
    kn, ky, kz, kv, kwc, kwn = jax.random.split(key, 6)

    B, T = 2, 2048
    T_VAD = 128            # stretch factor = T // T_VAD = 16
    D_W, T_W = 16, 32      # latent windows (unused: contrastive slot is 0)

    noisy_sigs = jax.random.normal(kn, (B, 1, T), dtype=jnp.float32)
    y_hat = 0.5 * jax.random.normal(ky, (B, 1, T), dtype=jnp.float32)
    z_hat = 0.5 * jax.random.normal(kz, (B, 1, T), dtype=jnp.float32)
    vad_mask = jax.random.bernoulli(kv, 0.5, (B, T_VAD))
    w_c = jax.random.normal(kwc, (B, D_W, T_W), dtype=jnp.float32)
    w_n = jax.random.normal(kwn, (B, D_W, T_W), dtype=jnp.float32)
    l_c = jnp.zeros((B, D_W, T_W), dtype=jnp.float32)
    l_n = jnp.zeros((B, D_W, T_W), dtype=jnp.float32)

    outputs = (l_c, l_n, y_hat, z_hat, w_c, w_n)
    fwd = jax.jit(se_loss_forward)
    losses = fwd(outputs, noisy_sigs, vad_mask)
    losses = [jax.block_until_ready(x) for x in losses]

    ok = all(bool(jnp.isfinite(x)) for x in losses)
    if ok:
        print("KERNEL_OK")
    else:
        print("KERNEL_FAILED", losses)
</pallas_src>

<mosaic_0001>
module attributes {stable_mosaic.version = 11 : i64} {
  func.func @_fused_loss_kernel(%arg0: i32, %arg1: i32, %arg2: memref<1x80x32xbf16, #tpu.memory_space<vmem>>, %arg3: memref<1x80x32xbf16, #tpu.memory_space<vmem>>, %arg4: memref<1x48x64xbf16, #tpu.memory_space<vmem>>, %arg5: memref<1x48x64xbf16, #tpu.memory_space<vmem>>, %arg6: memref<1x144x16xbf16, #tpu.memory_space<vmem>>, %arg7: memref<1x144x16xbf16, #tpu.memory_space<vmem>>, %arg8: memref<128x128xbf16, #tpu.memory_space<vmem>>, %arg9: memref<256x256xbf16, #tpu.memory_space<vmem>>, %arg10: memref<64x64xbf16, #tpu.memory_space<vmem>>, %arg11: memref<1x16x128xf32, #tpu.memory_space<vmem>>, %arg12: memref<1x16x128xf32, #tpu.memory_space<vmem>>, %arg13: memref<1x16x128xf32, #tpu.memory_space<vmem>>, %arg14: memref<1x16x128xbf16, #tpu.memory_space<vmem>>, %arg15: memref<13xf32, #tpu.memory_space<smem>>, %arg16: memref<144x128xbf16, #tpu.memory_space<vmem>>, %arg17: memref<80x256xbf16, #tpu.memory_space<vmem>>, %arg18: memref<272x64xbf16, #tpu.memory_space<vmem>>) attributes {dimension_semantics = [#tpu.dimension_semantics<arbitrary>, #tpu.dimension_semantics<arbitrary>], iteration_bounds = array<i64: 2, 1>, scalar_prefetch = 0 : i64, scratch_operands = 3 : i64, tpu.core_type = #tpu.core_type<tc>, window_params = [{transform_indices = @transform_0, window_bounds = array<i64: 1, 80, 32>}, {transform_indices = @transform_1, window_bounds = array<i64: 1, 80, 32>}, {transform_indices = @transform_2, window_bounds = array<i64: 1, 48, 64>}, {transform_indices = @transform_3, window_bounds = array<i64: 1, 48, 64>}, {transform_indices = @transform_4, window_bounds = array<i64: 1, 144, 16>}, {transform_indices = @transform_5, window_bounds = array<i64: 1, 144, 16>}, {pipeline_mode = #tpu.pipeline_mode<synchronous>, transform_indices = @transform_6, window_bounds = array<i64: 128, 128>}, {pipeline_mode = #tpu.pipeline_mode<synchronous>, transform_indices = @transform_7, window_bounds = array<i64: 256, 256>}, {pipeline_mode = #tpu.pipeline_mode<synchronous>, transform_indices = @transform_8, window_bounds = array<i64: 64, 64>}, {transform_indices = @transform_9, window_bounds = array<i64: 1, 16, 128>}, {transform_indices = @transform_10, window_bounds = array<i64: 1, 16, 128>}, {transform_indices = @transform_11, window_bounds = array<i64: 1, 16, 128>}, {transform_indices = @transform_12, window_bounds = array<i64: 1, 16, 128>}, {transform_indices = @transform_13, window_bounds = array<i64: 13>}]} {
    %c0_i32 = arith.constant 0 : i32
    %0 = arith.cmpi eq, %arg0, %c0_i32 : i32
    %c0_i32_0 = arith.constant 0 : i32
    %1 = arith.cmpi eq, %arg1, %c0_i32_0 : i32
    %2 = arith.andi %0, %1 : i1
    %3 = arith.extui %2 : i1 to i32
    %c0_i32_1 = arith.constant 0 : i32
    %4 = arith.cmpi ne, %3, %c0_i32_1 : i32
    scf.if %4 {
      %cst_113 = arith.constant 0.000000e+00 : f32
      %c0_114 = arith.constant 0 : index
      %368 = memref.load %arg15[%c0_114] : memref<13xf32, #tpu.memory_space<smem>>
      memref.store %cst_113, %arg15[%c0_114] : memref<13xf32, #tpu.memory_space<smem>>
      %cst_115 = arith.constant 0.000000e+00 : f32
      %c1_116 = arith.constant 1 : index
      %369 = memref.load %arg15[%c1_116] : memref<13xf32, #tpu.memory_space<smem>>
      memref.store %cst_115, %arg15[%c1_116] : memref<13xf32, #tpu.memory_space<smem>>
      %cst_117 = arith.constant 0.000000e+00 : f32
      %c2_118 = arith.constant 2 : index
      %370 = memref.load %arg15[%c2_118] : memref<13xf32, #tpu.memory_space<smem>>
      memref.store %cst_117, %arg15[%c2_118] : memref<13xf32, #tpu.memory_space<smem>>
      %cst_119 = arith.constant 0.000000e+00 : f32
      %c3_120 = arith.constant 3 : index
      %371 = memref.load %arg15[%c3_120] : memref<13xf32, #tpu.memory_space<smem>>
      memref.store %cst_119, %arg15[%c3_120] : memref<13xf32, #tpu.memory_space<smem>>
      %cst_121 = arith.constant 0.000000e+00 : f32
      %c4_122 = arith.constant 4 : index
      %372 = memref.load %arg15[%c4_122] : memref<13xf32, #tpu.memory_space<smem>>
      memref.store %cst_121, %arg15[%c4_122] : memref<13xf32, #tpu.memory_space<smem>>
      %cst_123 = arith.constant 0.000000e+00 : f32
      %c5_124 = arith.constant 5 : index
      %373 = memref.load %arg15[%c5_124] : memref<13xf32, #tpu.memory_space<smem>>
      memref.store %cst_123, %arg15[%c5_124] : memref<13xf32, #tpu.memory_space<smem>>
      %cst_125 = arith.constant 0.000000e+00 : f32
      %c6_126 = arith.constant 6 : index
      %374 = memref.load %arg15[%c6_126] : memref<13xf32, #tpu.memory_space<smem>>
      memref.store %cst_125, %arg15[%c6_126] : memref<13xf32, #tpu.memory_space<smem>>
      %cst_127 = arith.constant 0.000000e+00 : f32
      %c7_128 = arith.constant 7 : index
      %375 = memref.load %arg15[%c7_128] : memref<13xf32, #tpu.memory_space<smem>>
      memref.store %cst_127, %arg15[%c7_128] : memref<13xf32, #tpu.memory_space<smem>>
      %cst_129 = arith.constant 0.000000e+00 : f32
      %c8_130 = arith.constant 8 : index
      %376 = memref.load %arg15[%c8_130] : memref<13xf32, #tpu.memory_space<smem>>
      memref.store %cst_129, %arg15[%c8_130] : memref<13xf32, #tpu.memory_space<smem>>
      %cst_131 = arith.constant 0.000000e+00 : f32
      %c9 = arith.constant 9 : index
      %377 = memref.load %arg15[%c9] : memref<13xf32, #tpu.memory_space<smem>>
      memref.store %cst_131, %arg15[%c9] : memref<13xf32, #tpu.memory_space<smem>>
      %cst_132 = arith.constant 0.000000e+00 : f32
      %c10 = arith.constant 10 : index
      %378 = memref.load %arg15[%c10] : memref<13xf32, #tpu.memory_space<smem>>
      memref.store %cst_132, %arg15[%c10] : memref<13xf32, #tpu.memory_space<smem>>
      %cst_133 = arith.constant 0.000000e+00 : f32
      %c11 = arith.constant 11 : index
      %379 = memref.load %arg15[%c11] : memref<13xf32, #tpu.memory_space<smem>>
      memref.store %cst_133, %arg15[%c11] : memref<13xf32, #tpu.memory_space<smem>>
      %cst_134 = arith.constant 0.000000e+00 : f32
      %c12 = arith.constant 12 : index
      %380 = memref.load %arg15[%c12] : memref<13xf32, #tpu.memory_space<smem>>
      memref.store %cst_134, %arg15[%c12] : memref<13xf32, #tpu.memory_space<smem>>
    } else {
    }
    %c72_i32 = arith.constant 72 : i32
    %5 = arith.muli %arg1, %c72_i32 : i32
    %6 = tpu.assume_multiple %5, 8 : i32
    %c0 = arith.constant 0 : index
    %7 = arith.index_cast %6 : i32 to index
    %c0_2 = arith.constant 0 : index
    %8 = vector.load %arg2[%c0, %7, %c0_2] : memref<1x80x32xbf16, #tpu.memory_space<vmem>>, vector<1x80x32xbf16>
    %9 = vector.shape_cast %8 : vector<1x80x32xbf16> to vector<80x32xbf16>
    %c0_3 = arith.constant 0 : index
    %10 = arith.index_cast %6 : i32 to index
    %c0_4 = arith.constant 0 : index
    %11 = vector.load %arg3[%c0_3, %10, %c0_4] : memref<1x80x32xbf16, #tpu.memory_space<vmem>>, vector<1x80x32xbf16>
    %12 = vector.shape_cast %11 : vector<1x80x32xbf16> to vector<80x32xbf16>
    %13 = vector.extract_strided_slice %9 {offsets = [0, 0], sizes = [72, 32], strides = [1, 1]} : vector<80x32xbf16> to vector<72x32xbf16>
    %c0_5 = arith.constant 0 : index
    %c0_6 = arith.constant 0 : index
    %14 = vector.load %arg16[%c0_5, %c0_6] : memref<144x128xbf16, #tpu.memory_space<vmem>>, vector<72x32xbf16>
    tpu.vector_store %arg16[%c0_5, %c0_6], %13 {strides = array<i32>} : memref<144x128xbf16, #tpu.memory_space<vmem>>, vector<72x32xbf16>,
    %15 = vector.extract_strided_slice %12 {offsets = [0, 0], sizes = [72, 32], strides = [1, 1]} : vector<80x32xbf16> to vector<72x32xbf16>
    %c72 = arith.constant 72 : index
    %c0_7 = arith.constant 0 : index
    %16 = vector.load %arg16[%c72, %c0_7] : memref<144x128xbf16, #tpu.memory_space<vmem>>, vector<72x32xbf16>
    tpu.vector_store %arg16[%c72, %c0_7], %15 {strides = array<i32>} : memref<144x128xbf16, #tpu.memory_space<vmem>>, vector<72x32xbf16>,
    %17 = vector.extract_strided_slice %9 {offsets = [1, 0], sizes = [72, 32], strides = [1, 1]} : vector<80x32xbf16> to vector<72x32xbf16>
    %c0_8 = arith.constant 0 : index
    %c32 = arith.constant 32 : index
    %18 = vector.load %arg16[%c0_8, %c32] : memref<144x128xbf16, #tpu.memory_space<vmem>>, vector<72x32xbf16>
    tpu.vector_store %arg16[%c0_8, %c32], %17 {strides = array<i32>} : memref<144x128xbf16, #tpu.memory_space<vmem>>, vector<72x32xbf16>,
    %19 = vector.extract_strided_slice %12 {offsets = [1, 0], sizes = [72, 32], strides = [1, 1]} : vector<80x32xbf16> to vector<72x32xbf16>
    %c72_9 = arith.constant 72 : index
    %c32_10 = arith.constant 32 : index
    %20 = vector.load %arg16[%c72_9, %c32_10] : memref<144x128xbf16, #tpu.memory_space<vmem>>, vector<72x32xbf16>
    tpu.vector_store %arg16[%c72_9, %c32_10], %19 {strides = array<i32>} : memref<144x128xbf16, #tpu.memory_space<vmem>>, vector<72x32xbf16>,
    %21 = vector.extract_strided_slice %9 {offsets = [2, 0], sizes = [72, 32], strides = [1, 1]} : vector<80x32xbf16> to vector<72x32xbf16>
    %c0_11 = arith.constant 0 : index
    %c64 = arith.constant 64 : index
    %22 = vector.load %arg16[%c0_11, %c64] : memref<144x128xbf16, #tpu.memory_space<vmem>>, vector<72x32xbf16>
    tpu.vector_store %arg16[%c0_11, %c64], %21 {strides = array<i32>} : memref<144x128xbf16, #tpu.memory_space<vmem>>, vector<72x32xbf16>,
    %23 = vector.extract_strided_slice %12 {offsets = [2, 0], sizes = [72, 32], strides = [1, 1]} : vector<80x32xbf16> to vector<72x32xbf16>
    %c72_12 = arith.constant 72 : index
    %c64_13 = arith.constant 64 : index
    %24 = vector.load %arg16[%c72_12, %c64_13] : memref<144x128xbf16, #tpu.memory_space<vmem>>, vector<72x32xbf16>
    tpu.vector_store %arg16[%c72_12, %c64_13], %23 {strides = array<i32>} : memref<144x128xbf16, #tpu.memory_space<vmem>>, vector<72x32xbf16>,
    %25 = vector.extract_strided_slice %9 {offsets = [3, 0], sizes = [72, 32], strides = [1, 1]} : vector<80x32xbf16> to vector<72x32xbf16>
    %c0_14 = arith.constant 0 : index
    %c96 = arith.constant 96 : index
    %26 = vector.load %arg16[%c0_14, %c96] : memref<144x128xbf16, #tpu.memory_space<vmem>>, vector<72x32xbf16>
    tpu.vector_store %arg16[%c0_14, %c96], %25 {strides = array<i32>} : memref<144x128xbf16, #tpu.memory_space<vmem>>, vector<72x32xbf16>,
    %27 = vector.extract_strided_slice %12 {offsets = [3, 0], sizes = [72, 32], strides = [1, 1]} : vector<80x32xbf16> to vector<72x32xbf16>
    %c72_15 = arith.constant 72 : index
    %c96_16 = arith.constant 96 : index
    %28 = vector.load %arg16[%c72_15, %c96_16] : memref<144x128xbf16, #tpu.memory_space<vmem>>, vector<72x32xbf16>
    tpu.vector_store %arg16[%c72_15, %c96_16], %27 {strides = array<i32>} : memref<144x128xbf16, #tpu.memory_space<vmem>>, vector<72x32xbf16>,
    %c0_17 = arith.constant 0 : index
    %c0_18 = arith.constant 0 : index
    %29 = vector.load %arg16[%c0_17, %c0_18] : memref<144x128xbf16, #tpu.memory_space<vmem>>, vector<144x128xbf16>
    %c0_19 = arith.constant 0 : index
    %c0_20 = arith.constant 0 : index
    %30 = vector.load %arg8[%c0_19, %c0_20] : memref<128x128xbf16, #tpu.memory_space<vmem>>, vector<128x128xbf16>
    %cst = arith.constant dense<0.000000e+00> : vector<144x128xf32>
    %31 = tpu.matmul %29, %30, %cst {dimension_numbers = #tpu.dot_dimension_numbers<[1], [0], [0], [1], [0, 0, 1, 1], [], []>} : vector<144x128xbf16>, vector<128x128xbf16>, vector<144x128xf32> -> vector<144x128xf32>
    %32 = vector.extract_strided_slice %31 {offsets = [0, 0], sizes = [144, 64], strides = [1, 1]} : vector<144x128xf32> to vector<144x64xf32>
    %33 = vector.extract_strided_slice %31 {offsets = [0, 64], sizes = [144, 64], strides = [1, 1]} : vector<144x128xf32> to vector<144x64xf32>
    %34 = tpu.iota {dimensions = array<i32: 1>} : vector<1x64xi32>
    %c0_i32_21 = arith.constant 0 : i32
    %35 = vector.broadcast %c0_i32_21 : i32 to vector<1x64xi32>
    %36 = arith.cmpi sgt, %34, %35 : vector<1x64xi32>
    %cst_22 = arith.constant 0.000000e+00 : f32
    %37 = vector.shape_cast %36 : vector<1x64xi1> to vector<1x64xi1>
    %38 = vector.broadcast %37 : vector<1x64xi1> to vector<144x64xi1>
    %39 = vector.broadcast %cst_22 : f32 to vector<144x64xf32>
    %40 = arith.select %38, %33, %39 : vector<144x64xi1>, vector<144x64xf32>
    %41 = arith.mulf %32, %32 : vector<144x64xf32>
    %42 = arith.mulf %40, %40 : vector<144x64xf32>
    %43 = arith.addf %41, %42 : vector<144x64xf32>
    %cst_23 = arith.constant 1.000000e-07 : f32
    %44 = vector.broadcast %cst_23 : f32 to vector<144x64xf32>
    %45 = arith.maximumf %43, %44 : vector<144x64xf32>
    %46 = math.sqrt %45 : vector<144x64xf32>
    %47 = math.log %46 : vector<144x64xf32>
    %48 = vector.extract_strided_slice %33 {offsets = [0, 0], sizes = [144, 1], strides = [1, 1]} : vector<144x64xf32> to vector<144x1xf32>
    %49 = arith.mulf %48, %48 : vector<144x1xf32>
    %cst_24 = arith.constant 1.000000e-07 : f32
    %50 = vector.broadcast %cst_24 : f32 to vector<144x1xf32>
    %51 = arith.maximumf %49, %50 : vector<144x1xf32>
    %52 = math.sqrt %51 : vector<144x1xf32>
    %53 = math.log %52 : vector<144x1xf32>
    %54 = tpu.iota {dimensions = array<i32: 0>} : vector<72x1xi32>
    %55 = vector.broadcast %6 : i32 to vector<72x1xi32>
    %56 = arith.addi %54, %55 : vector<72x1xi32>
    %c65_i32 = arith.constant 65 : i32
    %57 = vector.broadcast %c65_i32 : i32 to vector<72x1xi32>
    %58 = arith.cmpi slt, %56, %57 : vector<72x1xi32>
    %cst_25 = arith.constant 1.000000e+00 : f32
    %cst_26 = arith.constant 0.000000e+00 : f32
    %59 = vector.broadcast %cst_25 : f32 to vector<72x1xf32>
    %60 = vector.broadcast %cst_26 : f32 to vector<72x1xf32>
    %61 = arith.select %58, %59, %60 : vector<72x1xi1>, vector<72x1xf32>
    %62 = vector.extract_strided_slice %46 {offsets = [0, 0], sizes = [72, 64], strides = [1, 1]} : vector<144x64xf32> to vector<72x64xf32>
    %63 = vector.extract_strided_slice %46 {offsets = [72, 0], sizes = [72, 64], strides = [1, 1]} : vector<144x64xf32> to vector<72x64xf32>
    %64 = vector.extract_strided_slice %47 {offsets = [0, 0], sizes = [72, 64], strides = [1, 1]} : vector<144x64xf32> to vector<72x64xf32>
    %65 = vector.extract_strided_slice %47 {offsets = [72, 0], sizes = [72, 64], strides = [1, 1]} : vector<144x64xf32> to vector<72x64xf32>
    %66 = vector.extract_strided_slice %45 {offsets = [72, 0], sizes = [72, 64], strides = [1, 1]} : vector<144x64xf32> to vector<72x64xf32>
    %67 = vector.extract_strided_slice %52 {offsets = [0, 0], sizes = [72, 1], strides = [1, 1]} : vector<144x1xf32> to vector<72x1xf32>
    %68 = vector.extract_strided_slice %52 {offsets = [72, 0], sizes = [72, 1], strides = [1, 1]} : vector<144x1xf32> to vector<72x1xf32>
    %69 = vector.extract_strided_slice %53 {offsets = [0, 0], sizes = [72, 1], strides = [1, 1]} : vector<144x1xf32> to vector<72x1xf32>
    %70 = vector.extract_strided_slice %53 {offsets = [72, 0], sizes = [72, 1], strides = [1, 1]} : vector<144x1xf32> to vector<72x1xf32>
    %71 = vector.extract_strided_slice %51 {offsets = [72, 0], sizes = [72, 1], strides = [1, 1]} : vector<144x1xf32> to vector<72x1xf32>
    %72 = arith.subf %63, %62 : vector<72x64xf32>
    %73 = vector.broadcast %61 : vector<72x1xf32> to vector<72x64xf32>
    %74 = arith.mulf %72, %73 : vector<72x64xf32>
    %75 = arith.subf %68, %67 : vector<72x1xf32>
    %76 = arith.mulf %75, %61 : vector<72x1xf32>
    %c0_27 = arith.constant 0 : index
    %77 = memref.load %arg15[%c0_27] : memref<13xf32, #tpu.memory_space<smem>>
    %78 = arith.mulf %74, %74 : vector<72x64xf32>
    %79 = vector.shape_cast %78 : vector<72x64xf32> to vector<1x72x64xf32>
    %cst_28 = arith.constant dense<0.000000e+00> : vector<1xf32>
    %80 = vector.multi_reduction <add>, %79, %cst_28 [1, 2] : vector<1x72x64xf32> to vector<1xf32>
    %81 = vector.shape_cast %80 : vector<1xf32> to vector<1x1x1xf32>
    %82 = vector.extract %81[0, 0, 0] : f32 from vector<1x1x1xf32>
    %83 = arith.mulf %76, %76 : vector<72x1xf32>
    %84 = vector.shape_cast %83 : vector<72x1xf32> to vector<1x72x1xf32>
    %cst_29 = arith.constant dense<0.000000e+00> : vector<1xf32>
    %85 = vector.multi_reduction <add>, %84, %cst_29 [1, 2] : vector<1x72x1xf32> to vector<1xf32>
    %86 = vector.shape_cast %85 : vector<1xf32> to vector<1x1x1xf32>
    %87 = vector.extract %86[0, 0, 0] : f32 from vector<1x1x1xf32>
    %88 = arith.addf %82, %87 : f32
    %89 = arith.addf %77, %88 : f32
    %c0_30 = arith.constant 0 : index
    %90 = memref.load %arg15[%c0_30] : memref<13xf32, #tpu.memory_space<smem>>
    memref.store %89, %arg15[%c0_30] : memref<13xf32, #tpu.memory_space<smem>>
    %c1 = arith.constant 1 : index
    %91 = memref.load %arg15[%c1] : memref<13xf32, #tpu.memory_space<smem>>
    %92 = vector.broadcast %61 : vector<72x1xf32> to vector<72x64xf32>
    %93 = arith.mulf %66, %92 : vector<72x64xf32>
    %94 = vector.shape_cast %93 : vector<72x64xf32> to vector<1x72x64xf32>
    %cst_31 = arith.constant dense<0.000000e+00> : vector<1xf32>
    %95 = vector.multi_reduction <add>, %94, %cst_31 [1, 2] : vector<1x72x64xf32> to vector<1xf32>
    %96 = vector.shape_cast %95 : vector<1xf32> to vector<1x1x1xf32>
    %97 = vector.extract %96[0, 0, 0] : f32 from vector<1x1x1xf32>
    %98 = arith.mulf %71, %61 : vector<72x1xf32>
    %99 = vector.shape_cast %98 : vector<72x1xf32> to vector<1x72x1xf32>
    %cst_32 = arith.constant dense<0.000000e+00> : vector<1xf32>
    %100 = vector.multi_reduction <add>, %99, %cst_32 [1, 2] : vector<1x72x1xf32> to vector<1xf32>
    %101 = vector.shape_cast %100 : vector<1xf32> to vector<1x1x1xf32>
    %102 = vector.extract %101[0, 0, 0] : f32 from vector<1x1x1xf32>
    %103 = arith.addf %97, %102 : f32
    %104 = arith.addf %91, %103 : f32
    %c1_33 = arith.constant 1 : index
    %105 = memref.load %arg15[%c1_33] : memref<13xf32, #tpu.memory_space<smem>>
    memref.store %104, %arg15[%c1_33] : memref<13xf32, #tpu.memory_space<smem>>
    %c2 = arith.constant 2 : index
    %106 = memref.load %arg15[%c2] : memref<13xf32, #tpu.memory_space<smem>>
    %107 = arith.subf %65, %64 : vector<72x64xf32>
    %108 = math.absf %107 : vector<72x64xf32>
    %109 = vector.broadcast %61 : vector<72x1xf32> to vector<72x64xf32>
    %110 = arith.mulf %108, %109 : vector<72x64xf32>
    %111 = vector.shape_cast %110 : vector<72x64xf32> to vector<1x72x64xf32>
    %cst_34 = arith.constant dense<0.000000e+00> : vector<1xf32>
    %112 = vector.multi_reduction <add>, %111, %cst_34 [1, 2] : vector<1x72x64xf32> to vector<1xf32>
    %113 = vector.shape_cast %112 : vector<1xf32> to vector<1x1x1xf32>
    %114 = vector.extract %113[0, 0, 0] : f32 from vector<1x1x1xf32>
    %115 = arith.subf %70, %69 : vector<72x1xf32>
    %116 = math.absf %115 : vector<72x1xf32>
    %117 = arith.mulf %116, %61 : vector<72x1xf32>
    %118 = vector.shape_cast %117 : vector<72x1xf32> to vector<1x72x1xf32>
    %cst_35 = arith.constant dense<0.000000e+00> : vector<1xf32>
    %119 = vector.multi_reduction <add>, %118, %cst_35 [1, 2] : vector<1x72x1xf32> to vector<1xf32>
    %120 = vector.shape_cast %119 : vector<1xf32> to vector<1x1x1xf32>
    %121 = vector.extract %120[0, 0, 0] : f32 from vector<1x1x1xf32>
    %122 = arith.addf %114, %121 : f32
    %123 = arith.addf %106, %122 : f32
    %c2_36 = arith.constant 2 : index
    %124 = memref.load %arg15[%c2_36] : memref<13xf32, #tpu.memory_space<smem>>
    memref.store %123, %arg15[%c2_36] : memref<13xf32, #tpu.memory_space<smem>>
    %c40_i32 = arith.constant 40 : i32
    %125 = arith.muli %arg1, %c40_i32 : i32
    %126 = tpu.assume_multiple %125, 8 : i32
    %c0_37 = arith.constant 0 : index
    %127 = arith.index_cast %126 : i32 to index
    %c0_38 = arith.constant 0 : index
    %128 = vector.load %arg4[%c0_37, %127, %c0_38] : memref<1x48x64xbf16, #tpu.memory_space<vmem>>, vector<1x48x64xbf16>
    %129 = vector.shape_cast %128 : vector<1x48x64xbf16> to vector<48x64xbf16>
    %c0_39 = arith.constant 0 : index
    %130 = arith.index_cast %126 : i32 to index
    %c0_40 = arith.constant 0 : index
    %131 = vector.load %arg5[%c0_39, %130, %c0_40] : memref<1x48x64xbf16, #tpu.memory_space<vmem>>, vector<1x48x64xbf16>
    %132 = vector.shape_cast %131 : vector<1x48x64xbf16> to vector<48x64xbf16>
    %133 = vector.extract_strided_slice %129 {offsets = [0, 0], sizes = [40, 64], strides = [1, 1]} : vector<48x64xbf16> to vector<40x64xbf16>
    %c0_41 = arith.constant 0 : index
    %c0_42 = arith.constant 0 : index
    %134 = vector.load %arg17[%c0_41, %c0_42] : memref<80x256xbf16, #tpu.memory_space<vmem>>, vector<40x64xbf16>
    tpu.vector_store %arg17[%c0_41, %c0_42], %133 {strides = array<i32>} : memref<80x256xbf16, #tpu.memory_space<vmem>>, vector<40x64xbf16>,
    %135 = vector.extract_strided_slice %132 {offsets = [0, 0], sizes = [40, 64], strides = [1, 1]} : vector<48x64xbf16> to vector<40x64xbf16>
    %c40 = arith.constant 40 : index
    %c0_43 = arith.constant 0 : index
    %136 = vector.load %arg17[%c40, %c0_43] : memref<80x256xbf16, #tpu.memory_space<vmem>>, vector<40x64xbf16>
    tpu.vector_store %arg17[%c40, %c0_43], %135 {strides = array<i32>} : memref<80x256xbf16, #tpu.memory_space<vmem>>, vector<40x64xbf16>,
    %137 = vector.extract_strided_slice %129 {offsets = [1, 0], sizes = [40, 64], strides = [1, 1]} : vector<48x64xbf16> to vector<40x64xbf16>
    %c0_44 = arith.constant 0 : index
    %c64_45 = arith.constant 64 : index
    %138 = vector.load %arg17[%c0_44, %c64_45] : memref<80x256xbf16, #tpu.memory_space<vmem>>, vector<40x64xbf16>
    tpu.vector_store %arg17[%c0_44, %c64_45], %137 {strides = array<i32>} : memref<80x256xbf16, #tpu.memory_space<vmem>>, vector<40x64xbf16>,
    %139 = vector.extract_strided_slice %132 {offsets = [1, 0], sizes = [40, 64], strides = [1, 1]} : vector<48x64xbf16> to vector<40x64xbf16>
    %c40_46 = arith.constant 40 : index
    %c64_47 = arith.constant 64 : index
    %140 = vector.load %arg17[%c40_46, %c64_47] : memref<80x256xbf16, #tpu.memory_space<vmem>>, vector<40x64xbf16>
    tpu.vector_store %arg17[%c40_46, %c64_47], %139 {strides = array<i32>} : memref<80x256xbf16, #tpu.memory_space<vmem>>, vector<40x64xbf16>,
    %141 = vector.extract_strided_slice %129 {offsets = [2, 0], sizes = [40, 64], strides = [1, 1]} : vector<48x64xbf16> to vector<40x64xbf16>
    %c0_48 = arith.constant 0 : index
    %c128 = arith.constant 128 : index
    %142 = vector.load %arg17[%c0_48, %c128] : memref<80x256xbf16, #tpu.memory_space<vmem>>, vector<40x64xbf16>
    tpu.vector_store %arg17[%c0_48, %c128], %141 {strides = array<i32>} : memref<80x256xbf16, #tpu.memory_space<vmem>>, vector<40x64xbf16>,
    %143 = vector.extract_strided_slice %132 {offsets = [2, 0], sizes = [40, 64], strides = [1, 1]} : vector<48x64xbf16> to vector<40x64xbf16>
    %c40_49 = arith.constant 40 : index
    %c128_50 = arith.constant 128 : index
    %144 = vector.load %arg17[%c40_49, %c128_50] : memref<80x256xbf16, #tpu.memory_space<vmem>>, vector<40x64xbf16>
    tpu.vector_store %arg17[%c40_49, %c128_50], %143 {strides = array<i32>} : memref<80x256xbf16, #tpu.memory_space<vmem>>, vector<40x64xbf16>,
    %145 = vector.extract_strided_slice %129 {offsets = [3, 0], sizes = [40, 64], strides = [1, 1]} : vector<48x64xbf16> to vector<40x64xbf16>
    %c0_51 = arith.constant 0 : index
    %c192 = arith.constant 192 : index
    %146 = vector.load %arg17[%c0_51, %c192] : memref<80x256xbf16, #tpu.memory_space<vmem>>, vector<40x64xbf16>
    tpu.vector_store %arg17[%c0_51, %c192], %145 {strides = array<i32>} : memref<80x256xbf16, #tpu.memory_space<vmem>>, vector<40x64xbf16>,
    %147 = vector.extract_strided_slice %132 {offsets = [3, 0], sizes = [40, 64], strides = [1, 1]} : vector<48x64xbf16> to vector<40x64xbf16>
    %c40_52 = arith.constant 40 : index
    %c192_53 = arith.constant 192 : index
    %148 = vector.load %arg17[%c40_52, %c192_53] : memref<80x256xbf16, #tpu.memory_space<vmem>>, vector<40x64xbf16>
    tpu.vector_store %arg17[%c40_52, %c192_53], %147 {strides = array<i32>} : memref<80x256xbf16, #tpu.memory_space<vmem>>, vector<40x64xbf16>,
    %c0_54 = arith.constant 0 : index
    %c0_55 = arith.constant 0 : index
    %149 = vector.load %arg17[%c0_54, %c0_55] : memref<80x256xbf16, #tpu.memory_space<vmem>>, vector<80x256xbf16>
    %c0_56 = arith.constant 0 : index
    %c0_57 = arith.constant 0 : index
    %150 = vector.load %arg9[%c0_56, %c0_57] : memref<256x256xbf16, #tpu.memory_space<vmem>>, vector<256x256xbf16>
    %cst_58 = arith.constant dense<0.000000e+00> : vector<80x256xf32>
    %151 = tpu.matmul %149, %150, %cst_58 {dimension_numbers = #tpu.dot_dimension_numbers<[1], [0], [0], [1], [0, 0, 1, 1], [], []>} : vector<80x256xbf16>, vector<256x256xbf16>, vector<80x256xf32> -> vector<80x256xf32>
    %152 = vector.extract_strided_slice %151 {offsets = [0, 0], sizes = [80, 128], strides = [1, 1]} : vector<80x256xf32> to vector<80x128xf32>
    %153 = vector.extract_strided_slice %151 {offsets = [0, 128], sizes = [80, 128], strides = [1, 1]} : vector<80x256xf32> to vector<80x128xf32>
    %154 = tpu.iota {dimensions = array<i32: 1>} : vector<1x128xi32>
    %c0_i32_59 = arith.constant 0 : i32
    %155 = vector.broadcast %c0_i32_59 : i32 to vector<1x128xi32>
    %156 = arith.cmpi sgt, %154, %155 : vector<1x128xi32>
    %cst_60 = arith.constant 0.000000e+00 : f32
    %157 = vector.shape_cast %156 : vector<1x128xi1> to vector<1x128xi1>
    %158 = vector.broadcast %157 : vector<1x128xi1> to vector<80x128xi1>
    %159 = vector.broadcast %cst_60 : f32 to vector<80x128xf32>
    %160 = arith.select %158, %153, %159 : vector<80x128xi1>, vector<80x128xf32>
    %161 = arith.mulf %152, %152 : vector<80x128xf32>
    %162 = arith.mulf %160, %160 : vector<80x128xf32>
    %163 = arith.addf %161, %162 : vector<80x128xf32>
    %cst_61 = arith.constant 1.000000e-07 : f32
    %164 = vector.broadcast %cst_61 : f32 to vector<80x128xf32>
    %165 = arith.maximumf %163, %164 : vector<80x128xf32>
    %166 = math.sqrt %165 : vector<80x128xf32>
    %167 = math.log %166 : vector<80x128xf32>
    %168 = vector.extract_strided_slice %153 {offsets = [0, 0], sizes = [80, 1], strides = [1, 1]} : vector<80x128xf32> to vector<80x1xf32>
    %169 = arith.mulf %168, %168 : vector<80x1xf32>
    %cst_62 = arith.constant 1.000000e-07 : f32
    %170 = vector.broadcast %cst_62 : f32 to vector<80x1xf32>
    %171 = arith.maximumf %169, %170 : vector<80x1xf32>
    %172 = math.sqrt %171 : vector<80x1xf32>
    %173 = math.log %172 : vector<80x1xf32>
    %174 = tpu.iota {dimensions = array<i32: 0>} : vector<40x1xi32>
    %175 = vector.broadcast %126 : i32 to vector<40x1xi32>
    %176 = arith.addi %174, %175 : vector<40x1xi32>
    %c33_i32 = arith.constant 33 : i32
    %177 = vector.broadcast %c33_i32 : i32 to vector<40x1xi32>
    %178 = arith.cmpi slt, %176, %177 : vector<40x1xi32>
    %cst_63 = arith.constant 1.000000e+00 : f32
    %cst_64 = arith.constant 0.000000e+00 : f32
    %179 = vector.broadcast %cst_63 : f32 to vector<40x1xf32>
    %180 = vector.broadcast %cst_64 : f32 to vector<40x1xf32>
    %181 = arith.select %178, %179, %180 : vector<40x1xi1>, vector<40x1xf32>
    %182 = vector.extract_strided_slice %166 {offsets = [0, 0], sizes = [40, 128], strides = [1, 1]} : vector<80x128xf32> to vector<40x128xf32>
    %183 = vector.extract_strided_slice %166 {offsets = [40, 0], sizes = [40, 128], strides = [1, 1]} : vector<80x128xf32> to vector<40x128xf32>
    %184 = vector.extract_strided_slice %167 {offsets = [0, 0], sizes = [40, 128], strides = [1, 1]} : vector<80x128xf32> to vector<40x128xf32>
    %185 = vector.extract_strided_slice %167 {offsets = [40, 0], sizes = [40, 128], strides = [1, 1]} : vector<80x128xf32> to vector<40x128xf32>
    %186 = vector.extract_strided_slice %165 {offsets = [40, 0], sizes = [40, 128], strides = [1, 1]} : vector<80x128xf32> to vector<40x128xf32>
    %187 = vector.extract_strided_slice %172 {offsets = [0, 0], sizes = [40, 1], strides = [1, 1]} : vector<80x1xf32> to vector<40x1xf32>
    %188 = vector.extract_strided_slice %172 {offsets = [40, 0], sizes = [40, 1], strides = [1, 1]} : vector<80x1xf32> to vector<40x1xf32>
    %189 = vector.extract_strided_slice %173 {offsets = [0, 0], sizes = [40, 1], strides = [1, 1]} : vector<80x1xf32> to vector<40x1xf32>
    %190 = vector.extract_strided_slice %173 {offsets = [40, 0], sizes = [40, 1], strides = [1, 1]} : vector<80x1xf32> to vector<40x1xf32>
    %191 = vector.extract_strided_slice %171 {offsets = [40, 0], sizes = [40, 1], strides = [1, 1]} : vector<80x1xf32> to vector<40x1xf32>
    %192 = arith.subf %183, %182 : vector<40x128xf32>
    %193 = vector.broadcast %181 : vector<40x1xf32> to vector<40x128xf32>
    %194 = arith.mulf %192, %193 : vector<40x128xf32>
    %195 = arith.subf %188, %187 : vector<40x1xf32>
    %196 = arith.mulf %195, %181 : vector<40x1xf32>
    %c3 = arith.constant 3 : index
    %197 = memref.load %arg15[%c3] : memref<13xf32, #tpu.memory_space<smem>>
    %198 = arith.mulf %194, %194 : vector<40x128xf32>
    %199 = vector.shape_cast %198 : vector<40x128xf32> to vector<1x40x128xf32>
    %cst_65 = arith.constant dense<0.000000e+00> : vector<1xf32>
    %200 = vector.multi_reduction <add>, %199, %cst_65 [1, 2] : vector<1x40x128xf32> to vector<1xf32>
    %201 = vector.shape_cast %200 : vector<1xf32> to vector<1x1x1xf32>
    %202 = vector.extract %201[0, 0, 0] : f32 from vector<1x1x1xf32>
    %203 = arith.mulf %196, %196 : vector<40x1xf32>
    %204 = vector.shape_cast %203 : vector<40x1xf32> to vector<1x40x1xf32>
    %cst_66 = arith.constant dense<0.000000e+00> : vector<1xf32>
    %205 = vector.multi_reduction <add>, %204, %cst_66 [1, 2] : vector<1x40x1xf32> to vector<1xf32>
    %206 = vector.shape_cast %205 : vector<1xf32> to vector<1x1x1xf32>
    %207 = vector.extract %206[0, 0, 0] : f32 from vector<1x1x1xf32>
    %208 = arith.addf %202, %207 : f32
    %209 = arith.addf %197, %208 : f32
    %c3_67 = arith.constant 3 : index
    %210 = memref.load %arg15[%c3_67] : memref<13xf32, #tpu.memory_space<smem>>
    memref.store %209, %arg15[%c3_67] : memref<13xf32, #tpu.memory_space<smem>>
    %c4 = arith.constant 4 : index
    %211 = memref.load %arg15[%c4] : memref<13xf32, #tpu.memory_space<smem>>
    %212 = vector.broadcast %181 : vector<40x1xf32> to vector<40x128xf32>
    %213 = arith.mulf %186, %212 : vector<40x128xf32>
    %214 = vector.shape_cast %213 : vector<40x128xf32> to vector<1x40x128xf32>
    %cst_68 = arith.constant dense<0.000000e+00> : vector<1xf32>
    %215 = vector.multi_reduction <add>, %214, %cst_68 [1, 2] : vector<1x40x128xf32> to vector<1xf32>
    %216 = vector.shape_cast %215 : vector<1xf32> to vector<1x1x1xf32>
    %217 = vector.extract %216[0, 0, 0] : f32 from vector<1x1x1xf32>
    %218 = arith.mulf %191, %181 : vector<40x1xf32>
    %219 = vector.shape_cast %218 : vector<40x1xf32> to vector<1x40x1xf32>
    %cst_69 = arith.constant dense<0.000000e+00> : vector<1xf32>
    %220 = vector.multi_reduction <add>, %219, %cst_69 [1, 2] : vector<1x40x1xf32> to vector<1xf32>
    %221 = vector.shape_cast %220 : vector<1xf32> to vector<1x1x1xf32>
    %222 = vector.extract %221[0, 0, 0] : f32 from vector<1x1x1xf32>
    %223 = arith.addf %217, %222 : f32
    %224 = arith.addf %211, %223 : f32
    %c4_70 = arith.constant 4 : index
    %225 = memref.load %arg15[%c4_70] : memref<13xf32, #tpu.memory_space<smem>>
    memref.store %224, %arg15[%c4_70] : memref<13xf32, #tpu.memory_space<smem>>
    %c5 = arith.constant 5 : index
    %226 = memref.load %arg15[%c5] : memref<13xf32, #tpu.memory_space<smem>>
    %227 = arith.subf %185, %184 : vector<40x128xf32>
    %228 = math.absf %227 : vector<40x128xf32>
    %229 = vector.broadcast %181 : vector<40x1xf32> to vector<40x128xf32>
    %230 = arith.mulf %228, %229 : vector<40x128xf32>
    %231 = vector.shape_cast %230 : vector<40x128xf32> to vector<1x40x128xf32>
    %cst_71 = arith.constant dense<0.000000e+00> : vector<1xf32>
    %232 = vector.multi_reduction <add>, %231, %cst_71 [1, 2] : vector<1x40x128xf32> to vector<1xf32>
    %233 = vector.shape_cast %232 : vector<1xf32> to vector<1x1x1xf32>
    %234 = vector.extract %233[0, 0, 0] : f32 from vector<1x1x1xf32>
    %235 = arith.subf %190, %189 : vector<40x1xf32>
    %236 = math.absf %235 : vector<40x1xf32>
    %237 = arith.mulf %236, %181 : vector<40x1xf32>
    %238 = vector.shape_cast %237 : vector<40x1xf32> to vector<1x40x1xf32>
    %cst_72 = arith.constant dense<0.000000e+00> : vector<1xf32>
    %239 = vector.multi_reduction <add>, %238, %cst_72 [1, 2] : vector<1x40x1xf32> to vector<1xf32>
    %240 = vector.shape_cast %239 : vector<1xf32> to vector<1x1x1xf32>
    %241 = vector.extract %240[0, 0, 0] : f32 from vector<1x1x1xf32>
    %242 = arith.addf %234, %241 : f32
    %243 = arith.addf %226, %242 : f32
    %c5_73 = arith.constant 5 : index
    %244 = memref.load %arg15[%c5_73] : memref<13xf32, #tpu.memory_space<smem>>
    memref.store %243, %arg15[%c5_73] : memref<13xf32, #tpu.memory_space<smem>>
    %c136_i32 = arith.constant 136 : i32
    %245 = arith.muli %arg1, %c136_i32 : i32
    %246 = tpu.assume_multiple %245, 8 : i32
    %c0_74 = arith.constant 0 : index
    %247 = arith.index_cast %246 : i32 to index
    %c0_75 = arith.constant 0 : index
    %248 = vector.load %arg6[%c0_74, %247, %c0_75] : memref<1x144x16xbf16, #tpu.memory_space<vmem>>, vector<1x144x16xbf16>
    %249 = vector.shape_cast %248 : vector<1x144x16xbf16> to vector<144x16xbf16>
    %c0_76 = arith.constant 0 : index
    %250 = arith.index_cast %246 : i32 to index
    %c0_77 = arith.constant 0 : index
    %251 = vector.load %arg7[%c0_76, %250, %c0_77] : memref<1x144x16xbf16, #tpu.memory_space<vmem>>, vector<1x144x16xbf16>
    %252 = vector.shape_cast %251 : vector<1x144x16xbf16> to vector<144x16xbf16>
    %253 = vector.extract_strided_slice %249 {offsets = [0, 0], sizes = [136, 16], strides = [1, 1]} : vector<144x16xbf16> to vector<136x16xbf16>
    %c0_78 = arith.constant 0 : index
    %c0_79 = arith.constant 0 : index
    %254 = vector.load %arg18[%c0_78, %c0_79] : memref<272x64xbf16, #tpu.memory_space<vmem>>, vector<136x16xbf16>
    tpu.vector_store %arg18[%c0_78, %c0_79], %253 {strides = array<i32>} : memref<272x64xbf16, #tpu.memory_space<vmem>>, vector<136x16xbf16>,
    %255 = vector.extract_strided_slice %252 {offsets = [0, 0], sizes = [136, 16], strides = [1, 1]} : vector<144x16xbf16> to vector<136x16xbf16>
    %c136 = arith.constant 136 : index
    %c0_80 = arith.constant 0 : index
    %256 = vector.load %arg18[%c136, %c0_80] : memref<272x64xbf16, #tpu.memory_space<vmem>>, vector<136x16xbf16>
    tpu.vector_store %arg18[%c136, %c0_80], %255 {strides = array<i32>} : memref<272x64xbf16, #tpu.memory_space<vmem>>, vector<136x16xbf16>,
    %257 = vector.extract_strided_slice %249 {offsets = [1, 0], sizes = [136, 16], strides = [1, 1]} : vector<144x16xbf16> to vector<136x16xbf16>
    %c0_81 = arith.constant 0 : index
    %c16 = arith.constant 16 : index
    %258 = vector.load %arg18[%c0_81, %c16] : memref<272x64xbf16, #tpu.memory_space<vmem>>, vector<136x16xbf16>
    tpu.vector_store %arg18[%c0_81, %c16], %257 {strides = array<i32>} : memref<272x64xbf16, #tpu.memory_space<vmem>>, vector<136x16xbf16>,
    %259 = vector.extract_strided_slice %252 {offsets = [1, 0], sizes = [136, 16], strides = [1, 1]} : vector<144x16xbf16> to vector<136x16xbf16>
    %c136_82 = arith.constant 136 : index
    %c16_83 = arith.constant 16 : index
    %260 = vector.load %arg18[%c136_82, %c16_83] : memref<272x64xbf16, #tpu.memory_space<vmem>>, vector<136x16xbf16>
    tpu.vector_store %arg18[%c136_82, %c16_83], %259 {strides = array<i32>} : memref<272x64xbf16, #tpu.memory_space<vmem>>, vector<136x16xbf16>,
    %261 = vector.extract_strided_slice %249 {offsets = [2, 0], sizes = [136, 16], strides = [1, 1]} : vector<144x16xbf16> to vector<136x16xbf16>
    %c0_84 = arith.constant 0 : index
    %c32_85 = arith.constant 32 : index
    %262 = vector.load %arg18[%c0_84, %c32_85] : memref<272x64xbf16, #tpu.memory_space<vmem>>, vector<136x16xbf16>
    tpu.vector_store %arg18[%c0_84, %c32_85], %261 {strides = array<i32>} : memref<272x64xbf16, #tpu.memory_space<vmem>>, vector<136x16xbf16>,
    %263 = vector.extract_strided_slice %252 {offsets = [2, 0], sizes = [136, 16], strides = [1, 1]} : vector<144x16xbf16> to vector<136x16xbf16>
    %c136_86 = arith.constant 136 : index
    %c32_87 = arith.constant 32 : index
    %264 = vector.load %arg18[%c136_86, %c32_87] : memref<272x64xbf16, #tpu.memory_space<vmem>>, vector<136x16xbf16>
    tpu.vector_store %arg18[%c136_86, %c32_87], %263 {strides = array<i32>} : memref<272x64xbf16, #tpu.memory_space<vmem>>, vector<136x16xbf16>,
    %265 = vector.extract_strided_slice %249 {offsets = [3, 0], sizes = [136, 16], strides = [1, 1]} : vector<144x16xbf16> to vector<136x16xbf16>
    %c0_88 = arith.constant 0 : index
    %c48 = arith.constant 48 : index
    %266 = vector.load %arg18[%c0_88, %c48] : memref<272x64xbf16, #tpu.memory_space<vmem>>, vector<136x16xbf16>
    tpu.vector_store %arg18[%c0_88, %c48], %265 {strides = array<i32>} : memref<272x64xbf16, #tpu.memory_space<vmem>>, vector<136x16xbf16>,
    %267 = vector.extract_strided_slice %252 {offsets = [3, 0], sizes = [136, 16], strides = [1, 1]} : vector<144x16xbf16> to vector<136x16xbf16>
    %c136_89 = arith.constant 136 : index
    %c48_90 = arith.constant 48 : index
    %268 = vector.load %arg18[%c136_89, %c48_90] : memref<272x64xbf16, #tpu.memory_space<vmem>>, vector<136x16xbf16>
    tpu.vector_store %arg18[%c136_89, %c48_90], %267 {strides = array<i32>} : memref<272x64xbf16, #tpu.memory_space<vmem>>, vector<136x16xbf16>,
    %c0_91 = arith.constant 0 : index
    %c0_92 = arith.constant 0 : index
    %269 = vector.load %arg18[%c0_91, %c0_92] : memref<272x64xbf16, #tpu.memory_space<vmem>>, vector<272x64xbf16>
    %c0_93 = arith.constant 0 : index
    %c0_94 = arith.constant 0 : index
    %270 = vector.load %arg10[%c0_93, %c0_94] : memref<64x64xbf16, #tpu.memory_space<vmem>>, vector<64x64xbf16>
    %cst_95 = arith.constant dense<0.000000e+00> : vector<272x64xf32>
    %271 = tpu.matmul %269, %270, %cst_95 {dimension_numbers = #tpu.dot_dimension_numbers<[1], [0], [0], [1], [0, 0, 1, 1], [], []>} : vector<272x64xbf16>, vector<64x64xbf16>, vector<272x64xf32> -> vector<272x64xf32>
    %272 = vector.extract_strided_slice %271 {offsets = [0, 0], sizes = [272, 32], strides = [1, 1]} : vector<272x64xf32> to vector<272x32xf32>
    %273 = vector.extract_strided_slice %271 {offsets = [0, 32], sizes = [272, 32], strides = [1, 1]} : vector<272x64xf32> to vector<272x32xf32>
    %274 = tpu.iota {dimensions = array<i32: 1>} : vector<1x32xi32>
    %c0_i32_96 = arith.constant 0 : i32
    %275 = vector.broadcast %c0_i32_96 : i32 to vector<1x32xi32>
    %276 = arith.cmpi sgt, %274, %275 : vector<1x32xi32>
    %cst_97 = arith.constant 0.000000e+00 : f32
    %277 = vector.shape_cast %276 : vector<1x32xi1> to vector<1x32xi1>
    %278 = vector.broadcast %277 : vector<1x32xi1> to vector<272x32xi1>
    %279 = vector.broadcast %cst_97 : f32 to vector<272x32xf32>
    %280 = arith.select %278, %273, %279 : vector<272x32xi1>, vector<272x32xf32>
    %281 = arith.mulf %272, %272 : vector<272x32xf32>
    %282 = arith.mulf %280, %280 : vector<272x32xf32>
    %283 = arith.addf %281, %282 : vector<272x32xf32>
    %cst_98 = arith.constant 1.000000e-07 : f32
    %284 = vector.broadcast %cst_98 : f32 to vector<272x32xf32>
    %285 = arith.maximumf %283, %284 : vector<272x32xf32>
    %286 = math.sqrt %285 : vector<272x32xf32>
    %287 = math.log %286 : vector<272x32xf32>
    %288 = vector.extract_strided_slice %273 {offsets = [0, 0], sizes = [272, 1], strides = [1, 1]} : vector<272x32xf32> to vector<272x1xf32>
    %289 = arith.mulf %288, %288 : vector<272x1xf32>
    %cst_99 = arith.constant 1.000000e-07 : f32
    %290 = vector.broadcast %cst_99 : f32 to vector<272x1xf32>
    %291 = arith.maximumf %289, %290 : vector<272x1xf32>
    %292 = math.sqrt %291 : vector<272x1xf32>
    %293 = math.log %292 : vector<272x1xf32>
    %294 = tpu.iota {dimensions = array<i32: 0>} : vector<136x1xi32>
    %295 = vector.broadcast %246 : i32 to vector<136x1xi32>
    %296 = arith.addi %294, %295 : vector<136x1xi32>
    %c129_i32 = arith.constant 129 : i32
    %297 = vector.broadcast %c129_i32 : i32 to vector<136x1xi32>
    %298 = arith.cmpi slt, %296, %297 : vector<136x1xi32>
    %cst_100 = arith.constant 1.000000e+00 : f32
    %cst_101 = arith.constant 0.000000e+00 : f32
    %299 = vector.broadcast %cst_100 : f32 to vector<136x1xf32>
    %300 = vector.broadcast %cst_101 : f32 to vector<136x1xf32>
    %301 = arith.select %298, %299, %300 : vector<136x1xi1>, vector<136x1xf32>
    %302 = vector.extract_strided_slice %286 {offsets = [0, 0], sizes = [136, 32], strides = [1, 1]} : vector<272x32xf32> to vector<136x32xf32>
    %303 = vector.extract_strided_slice %286 {offsets = [136, 0], sizes = [136, 32], strides = [1, 1]} : vector<272x32xf32> to vector<136x32xf32>
    %304 = vector.extract_strided_slice %287 {offsets = [0, 0], sizes = [136, 32], strides = [1, 1]} : vector<272x32xf32> to vector<136x32xf32>
    %305 = vector.extract_strided_slice %287 {offsets = [136, 0], sizes = [136, 32], strides = [1, 1]} : vector<272x32xf32> to vector<136x32xf32>
    %306 = vector.extract_strided_slice %285 {offsets = [136, 0], sizes = [136, 32], strides = [1, 1]} : vector<272x32xf32> to vector<136x32xf32>
    %307 = vector.extract_strided_slice %292 {offsets = [0, 0], sizes = [136, 1], strides = [1, 1]} : vector<272x1xf32> to vector<136x1xf32>
    %308 = vector.extract_strided_slice %292 {offsets = [136, 0], sizes = [136, 1], strides = [1, 1]} : vector<272x1xf32> to vector<136x1xf32>
    %309 = vector.extract_strided_slice %293 {offsets = [0, 0], sizes = [136, 1], strides = [1, 1]} : vector<272x1xf32> to vector<136x1xf32>
    %310 = vector.extract_strided_slice %293 {offsets = [136, 0], sizes = [136, 1], strides = [1, 1]} : vector<272x1xf32> to vector<136x1xf32>
    %311 = vector.extract_strided_slice %291 {offsets = [136, 0], sizes = [136, 1], strides = [1, 1]} : vector<272x1xf32> to vector<136x1xf32>
    %312 = arith.subf %303, %302 : vector<136x32xf32>
    %313 = vector.broadcast %301 : vector<136x1xf32> to vector<136x32xf32>
    %314 = arith.mulf %312, %313 : vector<136x32xf32>
    %315 = arith.subf %308, %307 : vector<136x1xf32>
    %316 = arith.mulf %315, %301 : vector<136x1xf32>
    %c6 = arith.constant 6 : index
    %317 = memref.load %arg15[%c6] : memref<13xf32, #tpu.memory_space<smem>>
    %318 = arith.mulf %314, %314 : vector<136x32xf32>
    %319 = vector.shape_cast %318 : vector<136x32xf32> to vector<1x136x32xf32>
    %cst_102 = arith.constant dense<0.000000e+00> : vector<1xf32>
    %320 = vector.multi_reduction <add>, %319, %cst_102 [1, 2] : vector<1x136x32xf32> to vector<1xf32>
    %321 = vector.shape_cast %320 : vector<1xf32> to vector<1x1x1xf32>
    %322 = vector.extract %321[0, 0, 0] : f32 from vector<1x1x1xf32>
    %323 = arith.mulf %316, %316 : vector<136x1xf32>
    %324 = vector.shape_cast %323 : vector<136x1xf32> to vector<1x136x1xf32>
    %cst_103 = arith.constant dense<0.000000e+00> : vector<1xf32>
    %325 = vector.multi_reduction <add>, %324, %cst_103 [1, 2] : vector<1x136x1xf32> to vector<1xf32>
    %326 = vector.shape_cast %325 : vector<1xf32> to vector<1x1x1xf32>
    %327 = vector.extract %326[0, 0, 0] : f32 from vector<1x1x1xf32>
    %328 = arith.addf %322, %327 : f32
    %329 = arith.addf %317, %328 : f32
    %c6_104 = arith.constant 6 : index
    %330 = memref.load %arg15[%c6_104] : memref<13xf32, #tpu.memory_space<smem>>
    memref.store %329, %arg15[%c6_104] : memref<13xf32, #tpu.memory_space<smem>>
    %c7 = arith.constant 7 : index
    %331 = memref.load %arg15[%c7] : memref<13xf32, #tpu.memory_space<smem>>
    %332 = vector.broadcast %301 : vector<136x1xf32> to vector<136x32xf32>
    %333 = arith.mulf %306, %332 : vector<136x32xf32>
    %334 = vector.shape_cast %333 : vector<136x32xf32> to vector<1x136x32xf32>
    %cst_105 = arith.constant dense<0.000000e+00> : vector<1xf32>
    %335 = vector.multi_reduction <add>, %334, %cst_105 [1, 2] : vector<1x136x32xf32> to vector<1xf32>
    %336 = vector.shape_cast %335 : vector<1xf32> to vector<1x1x1xf32>
    %337 = vector.extract %336[0, 0, 0] : f32 from vector<1x1x1xf32>
    %338 = arith.mulf %311, %301 : vector<136x1xf32>
    %339 = vector.shape_cast %338 : vector<136x1xf32> to vector<1x136x1xf32>
    %cst_106 = arith.constant dense<0.000000e+00> : vector<1xf32>
    %340 = vector.multi_reduction <add>, %339, %cst_106 [1, 2] : vector<1x136x1xf32> to vector<1xf32>
    %341 = vector.shape_cast %340 : vector<1xf32> to vector<1x1x1xf32>
    %342 = vector.extract %341[0, 0, 0] : f32 from vector<1x1x1xf32>
    %343 = arith.addf %337, %342 : f32
    %344 = arith.addf %331, %343 : f32
    %c7_107 = arith.constant 7 : index
    %345 = memref.load %arg15[%c7_107] : memref<13xf32, #tpu.memory_space<smem>>
    memref.store %344, %arg15[%c7_107] : memref<13xf32, #tpu.memory_space<smem>>
    %c8 = arith.constant 8 : index
    %346 = memref.load %arg15[%c8] : memref<13xf32, #tpu.memory_space<smem>>
    %347 = arith.subf %305, %304 : vector<136x32xf32>
    %348 = math.absf %347 : vector<136x32xf32>
    %349 = vector.broadcast %301 : vector<136x1xf32> to vector<136x32xf32>
    %350 = arith.mulf %348, %349 : vector<136x32xf32>
    %351 = vector.shape_cast %350 : vector<136x32xf32> to vector<1x136x32xf32>
    %cst_108 = arith.constant dense<0.000000e+00> : vector<1xf32>
    %352 = vector.multi_reduction <add>, %351, %cst_108 [1, 2] : vector<1x136x32xf32> to vector<1xf32>
    %353 = vector.shape_cast %352 : vector<1xf32> to vector<1x1x1xf32>
    %354 = vector.extract %353[0, 0, 0] : f32 from vector<1x1x1xf32>
    %355 = arith.subf %310, %309 : vector<136x1xf32>
    %356 = math.absf %355 : vector<136x1xf32>
    %357 = arith.mulf %356, %301 : vector<136x1xf32>
    %358 = vector.shape_cast %357 : vector<136x1xf32> to vector<1x136x1xf32>
    %cst_109 = arith.constant dense<0.000000e+00> : vector<1xf32>
    %359 = vector.multi_reduction <add>, %358, %cst_109 [1, 2] : vector<1x136x1xf32> to vector<1xf32>
    %360 = vector.shape_cast %359 : vector<1xf32> to vector<1x1x1xf32>
    %361 = vector.extract %360[0, 0, 0] : f32 from vector<1x1x1xf32>
    %362 = arith.addf %354, %361 : f32
    %363 = arith.addf %346, %362 : f32
    %c8_110 = arith.constant 8 : index
    %364 = memref.load %arg15[%c8_110] : memref<13xf32, #tpu.memory_space<smem>>
    memref.store %363, %arg15[%c8_110] : memref<13xf32, #tpu.memory_space<smem>>
    %c0_i32_111 = arith.constant 0 : i32
    %365 = arith.cmpi eq, %arg1, %c0_i32_111 : i32
    %366 = arith.extui %365 : i1 to i32
    %c0_i32_112 = arith.constant 0 : i32
    %367 = arith.cmpi ne, %366, %c0_i32_112 : i32
    scf.if %367 {
      %c0_113 = arith.constant 0 : index
      %c0_114 = arith.constant 0 : index
      %c0_115 = arith.constant 0 : index
      %368 = vector.load %arg11[%c0_113, %c0_114, %c0_115] : memref<1x16x128xf32, #tpu.memory_space<vmem>>, vector<1x16x128xf32>
      %369 = vector.shape_cast %368 : vector<1x16x128xf32> to vector<16x128xf32>
      %c0_116 = arith.constant 0 : index
      %c0_117 = arith.constant 0 : index
      %c0_118 = arith.constant 0 : index
      %370 = vector.load %arg12[%c0_116, %c0_117, %c0_118] : memref<1x16x128xf32, #tpu.memory_space<vmem>>, vector<1x16x128xf32>
      %371 = vector.shape_cast %370 : vector<1x16x128xf32> to vector<16x128xf32>
      %c0_119 = arith.constant 0 : index
      %c0_120 = arith.constant 0 : index
      %c0_121 = arith.constant 0 : index
      %372 = vector.load %arg13[%c0_119, %c0_120, %c0_121] : memref<1x16x128xf32, #tpu.memory_space<vmem>>, vector<1x16x128xf32>
      %373 = vector.shape_cast %372 : vector<1x16x128xf32> to vector<16x128xf32>
      %c0_122 = arith.constant 0 : index
      %c0_123 = arith.constant 0 : index
      %c0_124 = arith.constant 0 : index
      %374 = vector.load %arg14[%c0_122, %c0_123, %c0_124] : memref<1x16x128xbf16, #tpu.memory_space<vmem>>, vector<1x16x128xbf16>
      %375 = vector.shape_cast %374 : vector<1x16x128xbf16> to vector<16x128xbf16>
      %376 = arith.extf %375 : vector<16x128xbf16> to vector<16x128xf32>
      %cst_125 = arith.constant 1.500000e+00 : f32
      %377 = vector.broadcast %cst_125 : f32 to vector<16x128xf32>
      %378 = arith.cmpf ogt, %376, %377 : vector<16x128xf32>
      %cst_126 = arith.constant 1.000000e+00 : f32
      %cst_127 = arith.constant 0.000000e+00 : f32
      %379 = vector.broadcast %cst_126 : f32 to vector<16x128xf32>
      %380 = vector.broadcast %cst_127 : f32 to vector<16x128xf32>
      %381 = arith.select %378, %379, %380 : vector<16x128xi1>, vector<16x128xf32>
      %cst_128 = arith.constant 1.000000e+00 : f32
      %382 = vector.broadcast %cst_128 : f32 to vector<16x128xf32>
      %383 = arith.subf %376, %382 : vector<16x128xf32>
      %384 = math.absf %383 : vector<16x128xf32>
      %cst_129 = arith.constant 2.500000e-01 : f32
      %385 = vector.broadcast %cst_129 : f32 to vector<16x128xf32>
      %386 = arith.cmpf olt, %384, %385 : vector<16x128xf32>
      %cst_130 = arith.constant 1.000000e+00 : f32
      %cst_131 = arith.constant 0.000000e+00 : f32
      %387 = vector.broadcast %cst_130 : f32 to vector<16x128xf32>
      %388 = vector.broadcast %cst_131 : f32 to vector<16x128xf32>
      %389 = arith.select %386, %387, %388 : vector<16x128xi1>, vector<16x128xf32>
      %c9 = arith.constant 9 : index
      %390 = memref.load %arg15[%c9] : memref<13xf32, #tpu.memory_space<smem>>
      %391 = arith.addf %369, %371 : vector<16x128xf32>
      %392 = arith.subf %391, %373 : vector<16x128xf32>
      %393 = math.absf %392 : vector<16x128xf32>
      %394 = vector.shape_cast %393 : vector<16x128xf32> to vector<1x16x128xf32>
      %cst_132 = arith.constant dense<0.000000e+00> : vector<1xf32>
      %395 = vector.multi_reduction <add>, %394, %cst_132 [1, 2] : vector<1x16x128xf32> to vector<1xf32>
      %396 = vector.shape_cast %395 : vector<1xf32> to vector<1x1x1xf32>
      %397 = vector.extract %396[0, 0, 0] : f32 from vector<1x1x1xf32>
      %398 = arith.addf %390, %397 : f32
      %c9_133 = arith.constant 9 : index
      %399 = memref.load %arg15[%c9_133] : memref<13xf32, #tpu.memory_space<smem>>
      memref.store %398, %arg15[%c9_133] : memref<13xf32, #tpu.memory_space<smem>>
      %400 = arith.subf %371, %373 : vector<16x128xf32>
      %401 = arith.mulf %400, %389 : vector<16x128xf32>
      %c10 = arith.constant 10 : index
      %402 = memref.load %arg15[%c10] : memref<13xf32, #tpu.memory_space<smem>>
      %403 = arith.mulf %401, %401 : vector<16x128xf32>
      %404 = vector.shape_cast %403 : vector<16x128xf32> to vector<1x16x128xf32>
      %cst_134 = arith.constant dense<0.000000e+00> : vector<1xf32>
      %405 = vector.multi_reduction <add>, %404, %cst_134 [1, 2] : vector<1x16x128xf32> to vector<1xf32>
      %406 = vector.shape_cast %405 : vector<1xf32> to vector<1x1x1xf32>
      %407 = vector.extract %406[0, 0, 0] : f32 from vector<1x1x1xf32>
      %408 = arith.addf %402, %407 : f32
      %c10_135 = arith.constant 10 : index
      %409 = memref.load %arg15[%c10_135] : memref<13xf32, #tpu.memory_space<smem>>
      memref.store %408, %arg15[%c10_135] : memref<13xf32, #tpu.memory_space<smem>>
      %c11 = arith.constant 11 : index
      %410 = memref.load %arg15[%c11] : memref<13xf32, #tpu.memory_space<smem>>
      %411 = vector.shape_cast %389 : vector<16x128xf32> to vector<1x16x128xf32>
      %cst_136 = arith.constant dense<0.000000e+00> : vector<1xf32>
      %412 = vector.multi_reduction <add>, %411, %cst_136 [1, 2] : vector<1x16x128xf32> to vector<1xf32>
      %413 = vector.shape_cast %412 : vector<1xf32> to vector<1x1x1xf32>
      %414 = vector.extract %413[0, 0, 0] : f32 from vector<1x1x1xf32>
      %415 = arith.addf %410, %414 : f32
      %c11_137 = arith.constant 11 : index
      %416 = memref.load %arg15[%c11_137] : memref<13xf32, #tpu.memory_space<smem>>
      memref.store %415, %arg15[%c11_137] : memref<13xf32, #tpu.memory_space<smem>>
      %c12 = arith.constant 12 : index
      %417 = memref.load %arg15[%c12] : memref<13xf32, #tpu.memory_space<smem>>
      %418 = math.absf %369 : vector<16x128xf32>
      %419 = math.log1p %418 : vector<16x128xf32>
      %420 = arith.mulf %419, %381 : vector<16x128xf32>
      %421 = vector.shape_cast %420 : vector<16x128xf32> to vector<1x16x128xf32>
      %cst_138 = arith.constant dense<0.000000e+00> : vector<1xf32>
      %422 = vector.multi_reduction <add>, %421, %cst_138 [1, 2] : vector<1x16x128xf32> to vector<1xf32>
      %423 = vector.shape_cast %422 : vector<1xf32> to vector<1x1x1xf32>
      %424 = vector.extract %423[0, 0, 0] : f32 from vector<1x1x1xf32>
      %425 = arith.addf %417, %424 : f32
      %c12_139 = arith.constant 12 : index
      %426 = memref.load %arg15[%c12_139] : memref<13xf32, #tpu.memory_space<smem>>
      memref.store %425, %arg15[%c12_139] : memref<13xf32, #tpu.memory_space<smem>>
    } else {
    }
    return
  }
  func.func @transform_0(%arg0: i32, %arg1: i32) -> (i32, i32, i32) {
    %c0_i32 = arith.constant 0 : i32
    %c0_i32_0 = arith.constant 0 : i32
    %c0_i32_1 = arith.constant 0 : i32
    return %arg0, %c0_i32, %c0_i32_0 : i32, i32, i32
  }
  func.func @transform_1(%arg0: i32, %arg1: i32) -> (i32, i32, i32) {
    %c0_i32 = arith.constant 0 : i32
    %c0_i32_0 = arith.constant 0 : i32
    %c0_i32_1 = arith.constant 0 : i32
    return %arg0, %c0_i32, %c0_i32_0 : i32, i32, i32
  }
  func.func @transform_2(%arg0: i32, %arg1: i32) -> (i32, i32, i32) {
    %c0_i32 = arith.constant 0 : i32
    %c0_i32_0 = arith.constant 0 : i32
    %c0_i32_1 = arith.constant 0 : i32
    return %arg0, %c0_i32, %c0_i32_0 : i32, i32, i32
  }
  func.func @transform_3(%arg0: i32, %arg1: i32) -> (i32, i32, i32) {
    %c0_i32 = arith.constant 0 : i32
    %c0_i32_0 = arith.constant 0 : i32
    %c0_i32_1 = arith.constant 0 : i32
    return %arg0, %c0_i32, %c0_i32_0 : i32, i32, i32
  }
  func.func @transform_4(%arg0: i32, %arg1: i32) -> (i32, i32, i32) {
    %c0_i32 = arith.constant 0 : i32
    %c0_i32_0 = arith.constant 0 : i32
    %c0_i32_1 = arith.constant 0 : i32
    return %arg0, %c0_i32, %c0_i32_0 : i32, i32, i32
  }
  func.func @transform_5(%arg0: i32, %arg1: i32) -> (i32, i32, i32) {
    %c0_i32 = arith.constant 0 : i32
    %c0_i32_0 = arith.constant 0 : i32
    %c0_i32_1 = arith.constant 0 : i32
    return %arg0, %c0_i32, %c0_i32_0 : i32, i32, i32
  }
  func.func @transform_6(%arg0: i32, %arg1: i32) -> (i32, i32) {
    %c0_i32 = arith.constant 0 : i32
    %c0_i32_0 = arith.constant 0 : i32
    %c0_i32_1 = arith.constant 0 : i32
    return %c0_i32, %c0_i32_0 : i32, i32
  }
  func.func @transform_7(%arg0: i32, %arg1: i32) -> (i32, i32) {
    %c0_i32 = arith.constant 0 : i32
    %c0_i32_0 = arith.constant 0 : i32
    %c0_i32_1 = arith.constant 0 : i32
    return %c0_i32, %c0_i32_0 : i32, i32
  }
  func.func @transform_8(%arg0: i32, %arg1: i32) -> (i32, i32) {
    %c0_i32 = arith.constant 0 : i32
    %c0_i32_0 = arith.constant 0 : i32
    %c0_i32_1 = arith.constant 0 : i32
    return %c0_i32, %c0_i32_0 : i32, i32
  }
  func.func @transform_9(%arg0: i32, %arg1: i32) -> (i32, i32, i32) {
    %c0_i32 = arith.constant 0 : i32
    %c0_i32_0 = arith.constant 0 : i32
    %c0_i32_1 = arith.constant 0 : i32
    return %arg0, %c0_i32, %c0_i32_0 : i32, i32, i32
  }
  func.func @transform_10(%arg0: i32, %arg1: i32) -> (i32, i32, i32) {
    %c0_i32 = arith.constant 0 : i32
    %c0_i32_0 = arith.constant 0 : i32
    %c0_i32_1 = arith.constant 0 : i32
    return %arg0, %c0_i32, %c0_i32_0 : i32, i32, i32
  }
  func.func @transform_11(%arg0: i32, %arg1: i32) -> (i32, i32, i32) {
    %c0_i32 = arith.constant 0 : i32
    %c0_i32_0 = arith.constant 0 : i32
    %c0_i32_1 = arith.constant 0 : i32
    return %arg0, %c0_i32, %c0_i32_0 : i32, i32, i32
  }
  func.func @transform_12(%arg0: i32, %arg1: i32) -> (i32, i32, i32) {
    %c0_i32 = arith.constant 0 : i32
    %c0_i32_0 = arith.constant 0 : i32
    %c0_i32_1 = arith.constant 0 : i32
    return %arg0, %c0_i32, %c0_i32_0 : i32, i32, i32
  }
  func.func @transform_13(%arg0: i32, %arg1: i32) -> i32 {
    %c0_i32 = arith.constant 0 : i32
    %c0_i32_0 = arith.constant 0 : i32
    return %c0_i32 : i32
  }
}

</mosaic_0001>

<llo_original>
// kernel: se_loss_forward.1
$region0: #{se_loss_forward.1}
  #allocation0 [shape = 'u32[]', space=smem, size = 0x4, offset = 0x4, fixed_abs, tag = 'smem constant byte address 0x4 - core index']
  #allocation1 [shape = 'u32[144,128]{1,0:T(1,128)}', space=vmem, size = 0x12000, scoped, tag = 'internal scratch']
  #allocation2 [shape = 'bf16[144,128]{1,0:T(16,128)(2,1)}', space=vmem, size = 0x9000, scoped, tag = 'scratch operand']
  #allocation3 [shape = 'bf16[80,256]{1,0:T(16,128)(2,1)}', space=vmem, size = 0xa000, scoped, tag = 'scratch operand']
  #allocation4 [shape = 'bf16[272,64]{1,0:T(16,128)(2,1)}', space=vmem, size = 0x11000, scoped, tag = 'scratch operand']
  %s0 = inlined_call_operand.vmem [shape: bf16[2,80,32], index: 0, kind: input, shape index: {}]
  %s1 = inlined_call_operand.vmem [shape: bf16[2,80,32], index: 1, kind: input, shape index: {}]
  %s2 = inlined_call_operand.vmem [shape: bf16[2,48,64], index: 2, kind: input, shape index: {}]
  %s3 = inlined_call_operand.vmem [shape: bf16[2,48,64], index: 3, kind: input, shape index: {}]
  %s4 = inlined_call_operand.vmem [shape: bf16[2,144,16], index: 4, kind: input, shape index: {}]
  %s5 = inlined_call_operand.vmem [shape: bf16[2,144,16], index: 5, kind: input, shape index: {}]
  %s6 = inlined_call_operand.vmem [shape: bf16[128,128], index: 6, kind: input, shape index: {}]
  %s7 = inlined_call_operand.vmem [shape: bf16[256,256], index: 7, kind: input, shape index: {}]
  %s8 = inlined_call_operand.vmem [shape: bf16[64,64], index: 8, kind: input, shape index: {}]
  %s9 = inlined_call_operand.vmem [shape: f32[2,16,128], index: 9, kind: input, shape index: {}]
  %s10 = inlined_call_operand.vmem [shape: f32[2,16,128], index: 10, kind: input, shape index: {}]
  %s11 = inlined_call_operand.vmem [shape: f32[2,16,128], index: 11, kind: input, shape index: {}]
  %s12 = inlined_call_operand.vmem [shape: bf16[2,16,128], index: 12, kind: input, shape index: {}]
  %s13 = inlined_call_operand.vmem [shape: f32[13], index: 13, kind: output, shape index: {}]
  %s14 = sld [smem:[#allocation0]]
  $region93: #{se_loss_forward.1} parent=0
    _
  %s16 = ssub.s32 1, %s14
  %s17 = scalar_select 0, %s16, %s14
  $region1: #{se_loss_forward.1} parent=0
    #allocation5 [shape = 'u8[512]{0}', space=smem, size = 0x200, scoped, tag = 'output window, operand 0, single buffered']
    #allocation6 [shape = 's32[2]{0}', space=sflag, size = 0x8, scoped, tag = 'scoped memory for se_loss_forward.1']
    %18 = vsyncpa [#allocation6], 0
    loop: start=0, step=1, limit=4
    $region2: #{se_loss_forward.1} parent=1 // loop_pre_header
      _
    $region3: #{se_loss_forward.1} parent=1 // loop_header
      %s20 = sphi 0, %s24
      %p21 = scmp.ge.s32.totalorder %s20, 4
      %s27 = sphi 0, %s39
      %s28 = sphi 0, %s35
      %s29 = sphi 0, %s27
      %s30 = sphi 0, %s28
      %s31 = sphi 0, %s29
      %s32 = sphi 0, %s30
      %s42 = sphi 0, %s44
      %s45 = sphi 0, %s42
      %s46 = sphi 0, %s45
      %s62 = sphi 0, %s46
      %s68 = sphi 0, %s70
      %s71 = sphi 0, %s68
      %s72 = sphi 0, %s71
      %s88 = sphi 0, %s72
      %s94 = sphi 0, %s96
      %s97 = sphi 0, %s94
      %s98 = sphi 0, %s97
      %s114 = sphi 0, %s98
      %s120 = sphi 0, %s122
      %s123 = sphi 0, %s120
      %s124 = sphi 0, %s123
      %s140 = sphi 0, %s124
      %s146 = sphi 0, %s148
      %s149 = sphi 0, %s146
      %s150 = sphi 0, %s149
      %s166 = sphi 0, %s150
      %s172 = sphi 0, %s174
      %s175 = sphi 0, %s172
      %s176 = sphi 0, %s175
      %s192 = sphi 0, %s176
      %s196 = sphi 0, %s196
      %s198 = sphi 0, %s196
      %s199 = sphi 0, %s198
      %s213 = sphi 0, %s199
      %s217 = sphi 0, %s217
      %s219 = sphi 0, %s217
      %s220 = sphi 0, %s219
      %s234 = sphi 0, %s220
      %s238 = sphi 0, %s238
      %s240 = sphi 0, %s238
      %s241 = sphi 0, %s240
      %s255 = sphi 0, %s241
      %s261 = sphi 0, %s263
      %s264 = sphi 0, %s261
      %s265 = sphi 0, %s264
      %s281 = sphi 0, %s265
      %s287 = sphi 0, %s289
      %s290 = sphi 0, %s287
      %s291 = sphi 0, %s290
      %s307 = sphi 0, %s291
      %s313 = sphi 0, %s315
      %s316 = sphi 0, %s313
      %s317 = sphi 0, %s316
      %s333 = sphi 0, %s317
      %s339 = sphi 0, %s341
      %s342 = sphi 0, %s339
      %s343 = sphi 0, %s342
      %s359 = sphi 0, %s343
      %s363 = sphi 0, %s363
      %s365 = sphi 0, %s363
      %s366 = sphi 0, %s365
      %s380 = sphi 0, %s366
    $region4: #{se_loss_forward.1} parent=1 // loop_header_branch
      %23 = sbr.rel (%p21) target = $region8
    $region5: #{se_loss_forward.1} parent=1 // loop_body
      %s25 = ssub.s32 %s20, 1
      %s26 = ssub.s32 %s20, 2
      %s33 = sadd.s32 1, %s28
      %p34 = scmp.ge.s32.totalorder %s33, 1
      %s35 = scalar_select %p34, 0, %s33
      %s36 = sadd.s32 1, %s27
      %s37 = scalar_select %p34, %s36, %s27
      %p38 = scmp.ge.s32.totalorder %s37, 2
      %s39 = scalar_select %p38, 0, %s37
      %s40 = ssub.s32 %s27, %s39
      %p41 = scmp.eq.s32.totalorder %s40, 0
      %s43 = sadd.s32 %s42, 1
      %s44 = scalar_select %p41, %s42, %s43
      %p47 = pneg %p41
      %p48 = scmp.eq.s32.totalorder %s20, 1
      %p49 = por %p47, %p48
      %p50 = scmp.ne.s32.totalorder %s42, %s45
      %p51 = scmp.eq.s32.totalorder %s20, 0
      %p52 = por %p50, %p51
      %p53 = scmp.ne.s32.totalorder %s42, %s45
      %p54 = scmp.eq.s32.totalorder %s25, 1
      %p55 = por %p53, %p54
      %p56 = scmp.ne.s32.totalorder %s45, %s46
      %p57 = scmp.eq.s32.totalorder %s25, 0
      %p58 = por %p56, %p57
      %p59 = scmp.ne.s32.totalorder %s45, %s46
      %p60 = scmp.eq.s32.totalorder %s26, 1
      %p61 = por %p59, %p60
      %p63 = scmp.ne.s32.totalorder %s46, %s62
      %p64 = scmp.eq.s32.totalorder %s26, 0
      %p65 = por %p63, %p64
      %s66 = ssub.s32 %s27, %s39
      %p67 = scmp.eq.s32.totalorder %s66, 0
      %s69 = sadd.s32 %s68, 1
      %s70 = scalar_select %p67, %s68, %s69
      %p73 = pneg %p67
      %p74 = scmp.eq.s32.totalorder %s20, 1
      %p75 = por %p73, %p74
      %p76 = scmp.ne.s32.totalorder %s68, %s71
      %p77 = scmp.eq.s32.totalorder %s20, 0
      %p78 = por %p76, %p77
      %p79 = scmp.ne.s32.totalorder %s68, %s71
      %p80 = scmp.eq.s32.totalorder %s25, 1
      %p81 = por %p79, %p80
      %p82 = scmp.ne.s32.totalorder %s71, %s72
      %p83 = scmp.eq.s32.totalorder %s25, 0
      %p84 = por %p82, %p83
      %p85 = scmp.ne.s32.totalorder %s71, %s72
      %p86 = scmp.eq.s32.totalorder %s26, 1
      %p87 = por %p85, %p86
      %p89 = scmp.ne.s32.totalorder %s72, %s88
      %p90 = scmp.eq.s32.totalorder %s26, 0
      %p91 = por %p89, %p90
      %s92 = ssub.s32 %s27, %s39
      %p93 = scmp.eq.s32.totalorder %s92, 0
      %s95 = sadd.s32 %s94, 1
      %s96 = scalar_select %p93, %s94, %s95
      %p99 = pneg %p93
      %p100 = scmp.eq.s32.totalorder %s20, 1
      %p101 = por %p99, %p100
      %p102 = scmp.ne.s32.totalorder %s94, %s97
      %p103 = scmp.eq.s32.totalorder %s20, 0
      %p104 = por %p102, %p103
      %p105 = scmp.ne.s32.totalorder %s94, %s97
      %p106 = scmp.eq.s32.totalorder %s25, 1
      %p107 = por %p105, %p106
      %p108 = scmp.ne.s32.totalorder %s97, %s98
      %p109 = scmp.eq.s32.totalorder %s25, 0
      %p110 = por %p108, %p109
      %p111 = scmp.ne.s32.totalorder %s97, %s98
      %p112 = scmp.eq.s32.totalorder %s26, 1
      %p113 = por %p111, %p112
      %p115 = scmp.ne.s32.totalorder %s98, %s114
      %p116 = scmp.eq.s32.totalorder %s26, 0
      %p117 = por %p115, %p116
      %s118 = ssub.s32 %s27, %s39
      %p119 = scmp.eq.s32.totalorder %s118, 0
      %s121 = sadd.s32 %s120, 1
      %s122 = scalar_select %p119, %s120, %s121
      %p125 = pneg %p119
      %p126 = scmp.eq.s32.totalorder %s20, 1
      %p127 = por %p125, %p126
      %p128 = scmp.ne.s32.totalorder %s120, %s123
      %p129 = scmp.eq.s32.totalorder %s20, 0
      %p130 = por %p128, %p129
      %p131 = scmp.ne.s32.totalorder %s120, %s123
      %p132 = scmp.eq.s32.totalorder %s25, 1
      %p133 = por %p131, %p132
      %p134 = scmp.ne.s32.totalorder %s123, %s124
      %p135 = scmp.eq.s32.totalorder %s25, 0
      %p136 = por %p134, %p135
      %p137 = scmp.ne.s32.totalorder %s123, %s124
      %p138 = scmp.eq.s32.totalorder %s26, 1
      %p139 = por %p137, %p138
      %p141 = scmp.ne.s32.totalorder %s124, %s140
      %p142 = scmp.eq.s32.totalorder %s26, 0
      %p143 = por %p141, %p142
      %s144 = ssub.s32 %s27, %s39
      %p145 = scmp.eq.s32.totalorder %s144, 0
      %s147 = sadd.s32 %s146, 1
      %s148 = scalar_select %p145, %s146, %s147
      %p151 = pneg %p145
      %p152 = scmp.eq.s32.totalorder %s20, 1
      %p153 = por %p151, %p152
      %p154 = scmp.ne.s32.totalorder %s146, %s149
      %p155 = scmp.eq.s32.totalorder %s20, 0
      %p156 = por %p154, %p155
      %p157 = scmp.ne.s32.totalorder %s146, %s149
      %p158 = scmp.eq.s32.totalorder %s25, 1
      %p159 = por %p157, %p158
      %p160 = scmp.ne.s32.totalorder %s149, %s150
      %p161 = scmp.eq.s32.totalorder %s25, 0
      %p162 = por %p160, %p161
      %p163 = scmp.ne.s32.totalorder %s149, %s150
      %p164 = scmp.eq.s32.totalorder %s26, 1
      %p165 = por %p163, %p164
      %p167 = scmp.ne.s32.totalorder %s150, %s166
      %p168 = scmp.eq.s32.totalorder %s26, 0
      %p169 = por %p167, %p168
      %s170 = ssub.s32 %s27, %s39
      %p171 = scmp.eq.s32.totalorder %s170, 0
      %s173 = sadd.s32 %s172, 1
      %s174 = scalar_select %p171, %s172, %s173
      %p177 = pneg %p171
      %p178 = scmp.eq.s32.totalorder %s20, 1
      %p179 = por %p177, %p178
      %p180 = scmp.ne.s32.totalorder %s172, %s175
      %p181 = scmp.eq.s32.totalorder %s20, 0
      %p182 = por %p180, %p181
      %p183 = scmp.ne.s32.totalorder %s172, %s175
      %p184 = scmp.eq.s32.totalorder %s25, 1
      %p185 = por %p183, %p184
      %p186 = scmp.ne.s32.totalorder %s175, %s176
      %p187 = scmp.eq.s32.totalorder %s25, 0
      %p188 = por %p186, %p187
      %p189 = scmp.ne.s32.totalorder %s175, %s176
      %p190 = scmp.eq.s32.totalorder %s26, 1
      %p191 = por %p189, %p190
      %p193 = scmp.ne.s32.totalorder %s176, %s192
      %p194 = scmp.eq.s32.totalorder %s26, 0
      %p195 = por %p193, %p194
      %s197 = sadd.s32 %s196, 1
      %p200 = scmp.eq.s32.totalorder %s20, 1
      %p201 = scmp.ne.s32.totalorder %s196, %s198
      %p202 = scmp.eq.s32.totalorder %s20, 0
      %p203 = por %p201, %p202
      %p204 = scmp.ne.s32.totalorder %s196, %s198
      %p205 = scmp.eq.s32.totalorder %s25, 1
      %p206 = por %p204, %p205
      %p207 = scmp.ne.s32.totalorder %s198, %s199
      %p208 = scmp.eq.s32.totalorder %s25, 0
      %p209 = por %p207, %p208
      %p210 = scmp.ne.s32.totalorder %s198, %s199
      %p211 = scmp.eq.s32.totalorder %s26, 1
      %p212 = por %p210, %p211
      %p214 = scmp.ne.s32.totalorder %s199, %s213
      %p215 = scmp.eq.s32.totalorder %s26, 0
      %p216 = por %p214, %p215
      %s218 = sadd.s32 %s217, 1
      %p221 = scmp.eq.s32.totalorder %s20, 1
      %p222 = scmp.ne.s32.totalorder %s217, %s219
      %p223 = scmp.eq.s32.totalorder %s20, 0
      %p224 = por %p222, %p223
      %p225 = scmp.ne.s32.totalorder %s217, %s219
      %p226 = scmp.eq.s32.totalorder %s25, 1
      %p227 = por %p225, %p226
      %p228 = scmp.ne.s32.totalorder %s219, %s220
      %p229 = scmp.eq.s32.totalorder %s25, 0
      %p230 = por %p228, %p229
      %p231 = scmp.ne.s32.totalorder %s219, %s220
      %p232 = scmp.eq.s32.totalorder %s26, 1
      %p233 = por %p231, %p232
      %p235 = scmp.ne.s32.totalorder %s220, %s234
      %p236 = scmp.eq.s32.totalorder %s26, 0
      %p237 = por %p235, %p236
      %s239 = sadd.s32 %s238, 1
      %p242 = scmp.eq.s32.totalorder %s20, 1
      %p243 = scmp.ne.s32.totalorder %s238, %s240
      %p244 = scmp.eq.s32.totalorder %s20, 0
      %p245 = por %p243, %p244
      %p246 = scmp.ne.s32.totalorder %s238, %s240
      %p247 = scmp.eq.s32.totalorder %s25, 1
      %p248 = por %p246, %p247
      %p249 = scmp.ne.s32.totalorder %s240, %s241
      %p250 = scmp.eq.s32.totalorder %s25, 0
      %p251 = por %p249, %p250
      %p252 = scmp.ne.s32.totalorder %s240, %s241
      %p253 = scmp.eq.s32.totalorder %s26, 1
      %p254 = por %p252, %p253
      %p256 = scmp.ne.s32.totalorder %s241, %s255
      %p257 = scmp.eq.s32.totalorder %s26, 0
      %p258 = por %p256, %p257
      %s259 = ssub.s32 %s27, %s39
      %p260 = scmp.eq.s32.totalorder %s259, 0
      %s262 = sadd.s32 %s261, 1
      %s263 = scalar_select %p260, %s261, %s262
      %p266 = pneg %p260
      %p267 = scmp.eq.s32.totalorder %s20, 1
      %p268 = por %p266, %p267
      %p269 = scmp.ne.s32.totalorder %s261, %s264
      %p270 = scmp.eq.s32.totalorder %s20, 0
      %p271 = por %p269, %p270
      %p272 = scmp.ne.s32.totalorder %s261, %s264
      %p273 = scmp.eq.s32.totalorder %s25, 1
      %p274 = por %p272, %p273
      %p275 = scmp.ne.s32.totalorder %s264, %s265
      %p276 = scmp.eq.s32.totalorder %s25, 0
      %p277 = por %p275, %p276
      %p278 = scmp.ne.s32.totalorder %s264, %s265
      %p279 = scmp.eq.s32.totalorder %s26, 1
      %p280 = por %p278, %p279
      %p282 = scmp.ne.s32.totalorder %s265, %s281
      %p283 = scmp.eq.s32.totalorder %s26, 0
      %p284 = por %p282, %p283
      %s285 = ssub.s32 %s27, %s39
      %p286 = scmp.eq.s32.totalorder %s285, 0
      %s288 = sadd.s32 %s287, 1
      %s289 = scalar_select %p286, %s287, %s288
      %p292 = pneg %p286
      %p293 = scmp.eq.s32.totalorder %s20, 1
      %p294 = por %p292, %p293
      %p295 = scmp.ne.s32.totalorder %s287, %s290
      %p296 = scmp.eq.s32.totalorder %s20, 0
      %p297 = por %p295, %p296
      %p298 = scmp.ne.s32.totalorder %s287, %s290
      %p299 = scmp.eq.s32.totalorder %s25, 1
      %p300 = por %p298, %p299
      %p301 = scmp.ne.s32.totalorder %s290, %s291
      %p302 = scmp.eq.s32.totalorder %s25, 0
      %p303 = por %p301, %p302
      %p304 = scmp.ne.s32.totalorder %s290, %s291
      %p305 = scmp.eq.s32.totalorder %s26, 1
      %p306 = por %p304, %p305
      %p308 = scmp.ne.s32.totalorder %s291, %s307
      %p309 = scmp.eq.s32.totalorder %s26, 0
      %p310 = por %p308, %p309
      %s311 = ssub.s32 %s27, %s39
      %p312 = scmp.eq.s32.totalorder %s311, 0
      %s314 = sadd.s32 %s313, 1
      %s315 = scalar_select %p312, %s313, %s314
      %p318 = pneg %p312
      %p319 = scmp.eq.s32.totalorder %s20, 1
      %p320 = por %p318, %p319
      %p321 = scmp.ne.s32.totalorder %s313, %s316
      %p322 = scmp.eq.s32.totalorder %s20, 0
      %p323 = por %p321, %p322
      %p324 = scmp.ne.s32.totalorder %s313, %s316
      %p325 = scmp.eq.s32.totalorder %s25, 1
      %p326 = por %p324, %p325
      %p327 = scmp.ne.s32.totalorder %s316, %s317
      %p328 = scmp.eq.s32.totalorder %s25, 0
      %p329 = por %p327, %p328
      %p330 = scmp.ne.s32.totalorder %s316, %s317
      %p331 = scmp.eq.s32.totalorder %s26, 1
      %p332 = por %p330, %p331
      %p334 = scmp.ne.s32.totalorder %s317, %s333
      %p335 = scmp.eq.s32.totalorder %s26, 0
      %p336 = por %p334, %p335
      %s337 = ssub.s32 %s27, %s39
      %p338 = scmp.eq.s32.totalorder %s337, 0
      %s340 = sadd.s32 %s339, 1
      %s341 = scalar_select %p338, %s339, %s340
      %p344 = pneg %p338
      %p345 = scmp.eq.s32.totalorder %s20, 1
      %p346 = por %p344, %p345
      %p347 = scmp.ne.s32.totalorder %s339, %s342
      %p348 = scmp.eq.s32.totalorder %s20, 0
      %p349 = por %p347, %p348
      %p350 = scmp.ne.s32.totalorder %s339, %s342
      %p351 = scmp.eq.s32.totalorder %s25, 1
      %p352 = por %p350, %p351
      %p353 = scmp.ne.s32.totalorder %s342, %s343
      %p354 = scmp.eq.s32.totalorder %s25, 0
      %p355 = por %p353, %p354
      %p356 = scmp.ne.s32.totalorder %s342, %s343
      %p357 = scmp.eq.s32.totalorder %s26, 1
      %p358 = por %p356, %p357
      %p360 = scmp.ne.s32.totalorder %s343, %s359
      %p361 = scmp.eq.s32.totalorder %s26, 0
      %p362 = por %p360, %p361
      %s364 = sadd.s32 %s363, 1
      %p367 = scmp.eq.s32.totalorder %s20, 1
      %p368 = scmp.ne.s32.totalorder %s363, %s365
      %p369 = scmp.eq.s32.totalorder %s20, 0
      %p370 = por %p368, %p369
      %p371 = scmp.ne.s32.totalorder %s363, %s365
      %p372 = scmp.eq.s32.totalorder %s25, 1
      %p373 = por %p371, %p372
      %p374 = scmp.ne.s32.totalorder %s365, %s366
      %p375 = scmp.eq.s32.totalorder %s25, 0
      %p376 = por %p374, %p375
      %p377 = scmp.ne.s32.totalorder %s365, %s366
      %p378 = scmp.eq.s32.totalorder %s26, 1
      %p379 = por %p377, %p378
      %p381 = scmp.ne.s32.totalorder %s366, %s380
      %p382 = scmp.eq.s32.totalorder %s26, 0
      %p383 = por %p381, %p382
      %p384 = scmp.le.s32.totalorder 1, %s20
      %p385 = scmp.lt.s32.totalorder %s20, 3
      %p386 = pnand %p384, %p385
      %p387 = pneg %p386
      // Predicated region
      $region9: #{se_loss_forward.1} parent=5 // pred_check
        _
      $region10: #{se_loss_forward.1} parent=5 // pred_check_branch
        %389 = sbr.rel (%p386) target = $region12
      $region11: #{se_loss_forward.1} parent=5 // pred_region
        %s390 = ssub.s32 %s20, 1
        // Predicated region
        $region13: #{se_loss_forward.1} parent=11 // pred_check
          %p391 = pneg %p209
        $region14: #{se_loss_forward.1} parent=11 // pred_check_branch
          %393 = sbr.rel (%p391) target = $region16
        $region15: #{se_loss_forward.1} parent=11 // pred_region
          _
        $region16: #{se_loss_forward.1} parent=11 // pred_fallthru
          _
        // Predicated region
        $region17: #{se_loss_forward.1} parent=11 // pred_check
          %p394 = pneg %p230
        $region18: #{se_loss_forward.1} parent=11 // pred_check_branch
          %396 = sbr.rel (%p394) target = $region20
        $region19: #{se_loss_forward.1} parent=11 // pred_region
          _
        $region20: #{se_loss_forward.1} parent=11 // pred_fallthru
          _
        // Predicated region
        $region21: #{se_loss_forward.1} parent=11 // pred_check
          %p397 = pneg %p251
        $region22: #{se_loss_forward.1} parent=11 // pred_check_branch
          %399 = sbr.rel (%p397) target = $region24
        $region23: #{se_loss_forward.1} parent=11 // pred_region
          _
        $region24: #{se_loss_forward.1} parent=11 // pred_fallthru
          _
      $region12: #{se_loss_forward.1} parent=5 // pred_fallthru
        _
      %p400 = scmp.lt.s32.totalorder %s20, 2
      // Predicated region
      $region25: #{se_loss_forward.1} parent=5 // pred_check
        %p401 = pneg %p400
      $region26: #{se_loss_forward.1} parent=5 // pred_check_branch
        %403 = sbr.rel (%p401) target = $region28
      $region27: #{se_loss_forward.1} parent=5 // pred_region
        // Predicated region
        $region29: #{se_loss_forward.1} parent=27 // pred_check
          %p404 = pneg %p52
        $region30: #{se_loss_forward.1} parent=27 // pred_check_branch
          %406 = sbr.rel (%p404) target = $region32
        $region31: #{se_loss_forward.1} parent=27 // pred_region
          %p407 = scmp.lt.s32.totalorder %s27, 1
          %s408 = scalar_select %p407, %s27, 1
          %s409 = smul.addr %s408, 10
          %s410 = smul.addr %s409, 4
          %s411 = scalar_lea.vmem %s0, %s410
        $region32: #{se_loss_forward.1} parent=27 // pred_fallthru
          _
        // Predicated region
        $region33: #{se_loss_forward.1} parent=27 // pred_check
          %p412 = pneg %p78
        $region34: #{se_loss_forward.1} parent=27 // pred_check_branch
          %414 = sbr.rel (%p412) target = $region36
        $region35: #{se_loss_forward.1} parent=27 // pred_region
          %p415 = scmp.lt.s32.totalorder %s27, 1
          %s416 = scalar_select %p415, %s27, 1
          %s417 = smul.addr %s416, 10
          %s418 = smul.addr %s417, 4
          %s419 = scalar_lea.vmem %s1, %s418
        $region36: #{se_loss_forward.1} parent=27 // pred_fallthru
          _
        // Predicated region
        $region37: #{se_loss_forward.1} parent=27 // pred_check
          %p420 = pneg %p104
        $region38: #{se_loss_forward.1} parent=27 // pred_check_branch
          %422 = sbr.rel (%p420) target = $region40
        $region39: #{se_loss_forward.1} parent=27 // pred_region
          %p423 = scmp.lt.s32.totalorder %s27, 1
          %s424 = scalar_select %p423, %s27, 1
          %s425 = smul.addr %s424, 6
          %s426 = smul.addr %s425, 4
          %s427 = scalar_lea.vmem %s2, %s426
        $region40: #{se_loss_forward.1} parent=27 // pred_fallthru
          _
        // Predicated region
        $region41: #{se_loss_forward.1} parent=27 // pred_check
          %p428 = pneg %p130
        $region42: #{se_loss_forward.1} parent=27 // pred_check_branch
          %430 = sbr.rel (%p428) target = $region44
        $region43: #{se_loss_forward.1} parent=27 // pred_region
          %p431 = scmp.lt.s32.totalorder %s27, 1
          %s432 = scalar_select %p431, %s27, 1
          %s433 = smul.addr %s432, 6
          %s434 = smul.addr %s433, 4
          %s435 = scalar_lea.vmem %s3, %s434
        $region44: #{se_loss_forward.1} parent=27 // pred_fallthru
          _
        // Predicated region
        $region45: #{se_loss_forward.1} parent=27 // pred_check
          %p436 = pneg %p156
        $region46: #{se_loss_forward.1} parent=27 // pred_check_branch
          %438 = sbr.rel (%p436) target = $region48
        $region47: #{se_loss_forward.1} parent=27 // pred_region
          %p439 = scmp.lt.s32.totalorder %s27, 1
          %s440 = scalar_select %p439, %s27, 1
          %s441 = smul.addr %s440, 18
          %s442 = smul.addr %s441, 4
          %s443 = scalar_lea.vmem %s4, %s442
        $region48: #{se_loss_forward.1} parent=27 // pred_fallthru
          _
        // Predicated region
        $region49: #{se_loss_forward.1} parent=27 // pred_check
          %p444 = pneg %p182
        $region50: #{se_loss_forward.1} parent=27 // pred_check_branch
          %446 = sbr.rel (%p444) target = $region52
        $region51: #{se_loss_forward.1} parent=27 // pred_region
          %p447 = scmp.lt.s32.totalorder %s27, 1
          %s448 = scalar_select %p447, %s27, 1
          %s449 = smul.addr %s448, 18
          %s450 = smul.addr %s449, 4
          %s451 = scalar_lea.vmem %s5, %s450
        $region52: #{se_loss_forward.1} parent=27 // pred_fallthru
          _
        // Predicated region
        $region53: #{se_loss_forward.1} parent=27 // pred_check
          %p452 = pneg %p271
        $region54: #{se_loss_forward.1} parent=27 // pred_check_branch
          %454 = sbr.rel (%p452) target = $region56
        $region55: #{se_loss_forward.1} parent=27 // pred_region
          %p455 = scmp.lt.s32.totalorder %s27, 1
          %s456 = scalar_select %p455, %s27, 1
          %s457 = smul.addr %s456, 2
          %s458 = smul.addr %s457, 8
          %s459 = scalar_lea.vmem %s9, %s458
        $region56: #{se_loss_forward.1} parent=27 // pred_fallthru
          _
        // Predicated region
        $region57: #{se_loss_forward.1} parent=27 // pred_check
          %p460 = pneg %p297
        $region58: #{se_loss_forward.1} parent=27 // pred_check_branch
          %462 = sbr.rel (%p460) target = $region60
        $region59: #{se_loss_forward.1} parent=27 // pred_region
          %p463 = scmp.lt.s32.totalorder %s27, 1
          %s464 = scalar_select %p463, %s27, 1
          %s465 = smul.addr %s464, 2
          %s466 = smul.addr %s465, 8
          %s467 = scalar_lea.vmem %s10, %s466
        $region60: #{se_loss_forward.1} parent=27 // pred_fallthru
          _
        // Predicated region
        $region61: #{se_loss_forward.1} parent=27 // pred_check
          %p468 = pneg %p323
        $region62: #{se_loss_forward.1} parent=27 // pred_check_branch
          %470 = sbr.rel (%p468) target = $region64
        $region63: #{se_loss_forward.1} parent=27 // pred_region
          %p471 = scmp.lt.s32.totalorder %s27, 1
          %s472 = scalar_select %p471, %s27, 1
          %s473 = smul.addr %s472, 2
          %s474 = smul.addr %s473, 8
          %s475 = scalar_lea.vmem %s11, %s474
        $region64: #{se_loss_forward.1} parent=27 // pred_fallthru
          _
        // Predicated region
        $region65: #{se_loss_forward.1} parent=27 // pred_check
          %p476 = pneg %p349
        $region66: #{se_loss_forward.1} parent=27 // pred_check_branch
          %478 = sbr.rel (%p476) target = $region68
        $region67: #{se_loss_forward.1} parent=27 // pred_region
          %p479 = scmp.lt.s32.totalorder %s27, 1
          %s480 = scalar_select %p479, %s27, 1
          %s481 = smul.addr %s480, 2
          %s482 = smul.addr %s481, 4
          %s483 = scalar_lea.vmem %s12, %s482
        $region68: #{se_loss_forward.1} parent=27 // pred_fallthru
          _
      $region28: #{se_loss_forward.1} parent=5 // pred_fallthru
        _
      %p484 = scmp.le.s32.totalorder 1, %s20
      %p485 = scmp.lt.s32.totalorder %s20, 3
      %p486 = pnand %p484, %p485
      %p487 = pneg %p486
      // Predicated region
      $region69: #{se_loss_forward.1} parent=5 // pred_check
        _
      $region70: #{se_loss_forward.1} parent=5 // pred_check_branch
        %489 = sbr.rel (%p486) target = $region72
      $region71: #{se_loss_forward.1} parent=5 // pred_region
        %s490 = ssub.s32 %s20, 1
        %p491 = scmp.lt.s32.totalorder %s29, 1
        %s492 = scalar_select %p491, %s29, 1
        %s493 = smul.addr %s492, 10
        %s494 = smul.addr %s493, 4
        %s495 = scalar_lea.vmem %s0, %s494
        %p496 = pneg %p58
        %p497 = pneg %p55
        %p498 = scmp.lt.s32.totalorder %s29, 1
        %s499 = scalar_select %p498, %s29, 1
        %s500 = smul.addr %s499, 10
        %s501 = smul.addr %s500, 4
        %s502 = scalar_lea.vmem %s1, %s501
        %p503 = pneg %p84
        %p504 = pneg %p81
        %p505 = scmp.lt.s32.totalorder %s29, 1
        %s506 = scalar_select %p505, %s29, 1
        %s507 = smul.addr %s506, 6
        %s508 = smul.addr %s507, 4
        %s509 = scalar_lea.vmem %s2, %s508
        %p510 = pneg %p110
        %p511 = pneg %p107
        %p512 = scmp.lt.s32.totalorder %s29, 1
        %s513 = scalar_select %p512, %s29, 1
        %s514 = smul.addr %s513, 6
        %s515 = smul.addr %s514, 4
        %s516 = scalar_lea.vmem %s3, %s515
        %p517 = pneg %p136
        %p518 = pneg %p133
        %p519 = scmp.lt.s32.totalorder %s29, 1
        %s520 = scalar_select %p519, %s29, 1
        %s521 = smul.addr %s520, 18
        %s522 = smul.addr %s521, 4
        %s523 = scalar_lea.vmem %s4, %s522
        %p524 = pneg %p162
        %p525 = pneg %p159
        %p526 = scmp.lt.s32.totalorder %s29, 1
        %s527 = scalar_select %p526, %s29, 1
        %s528 = smul.addr %s527, 18
        %s529 = smul.addr %s528, 4
        %s530 = scalar_lea.vmem %s5, %s529
        %p531 = pneg %p188
        %p532 = pneg %p185
        %p533 = pneg %p209
        %p534 = pneg %p206
        %p535 = pneg %p230
        %p536 = pneg %p227
        %p537 = pneg %p251
        %p538 = pneg %p248
        %p539 = scmp.lt.s32.totalorder %s29, 1
        %s540 = scalar_select %p539, %s29, 1
        %s541 = smul.addr %s540, 2
        %s542 = smul.addr %s541, 8
        %s543 = scalar_lea.vmem %s9, %s542
        %p544 = pneg %p277
        %p545 = pneg %p274
        %p546 = scmp.lt.s32.totalorder %s29, 1
        %s547 = scalar_select %p546, %s29, 1
        %s548 = smul.addr %s547, 2
        %s549 = smul.addr %s548, 8
        %s550 = scalar_lea.vmem %s10, %s549
        %p551 = pneg %p303
        %p552 = pneg %p300
        %p553 = scmp.lt.s32.totalorder %s29, 1
        %s554 = scalar_select %p553, %s29, 1
        %s555 = smul.addr %s554, 2
        %s556 = smul.addr %s555, 8
        %s557 = scalar_lea.vmem %s11, %s556
        %p558 = pneg %p329
        %p559 = pneg %p326
        %p560 = scmp.lt.s32.totalorder %s29, 1
        %s561 = scalar_select %p560, %s29, 1
        %s562 = smul.addr %s561, 2
        %s563 = smul.addr %s562, 4
        %s564 = scalar_lea.vmem %s12, %s563
        %p565 = pneg %p355
        %p566 = pneg %p352
        %p567 = pneg %p376
        %p568 = pneg %p373
        %p569 = scmp.lt.s32.totalorder %s29, 1
        %s570 = scalar_select %p569, %s29, 1
        %s571 = smul.addr %s570, 10
        %s572 = smul.addr %s571, 4
        %s573 = scalar_lea.vmem %s0, %s572
        %p574 = scmp.lt.s32.totalorder %s29, 1
        %s575 = scalar_select %p574, %s29, 1
        %s576 = smul.addr %s575, 10
        %s577 = smul.addr %s576, 4
        %s578 = scalar_lea.vmem %s1, %s577
        %p579 = scmp.lt.s32.totalorder %s29, 1
        %s580 = scalar_select %p579, %s29, 1
        %s581 = smul.addr %s580, 6
        %s582 = smul.addr %s581, 4
        %s583 = scalar_lea.vmem %s2, %s582
        %p584 = scmp.lt.s32.totalorder %s29, 1
        %s585 = scalar_select %p584, %s29, 1
        %s586 = smul.addr %s585, 6
        %s587 = smul.addr %s586, 4
        %s588 = scalar_lea.vmem %s3, %s587
        %p589 = scmp.lt.s32.totalorder %s29, 1
        %s590 = scalar_select %p589, %s29, 1
        %s591 = smul.addr %s590, 18
        %s592 = smul.addr %s591, 4
        %s593 = scalar_lea.vmem %s4, %s592
        %p594 = scmp.lt.s32.totalorder %s29, 1
        %s595 = scalar_select %p594, %s29, 1
        %s596 = smul.addr %s595, 18
        %s597 = smul.addr %s596, 4
        %s598 = scalar_lea.vmem %s5, %s597
        %p599 = scmp.lt.s32.totalorder %s29, 1
        %s600 = scalar_select %p599, %s29, 1
        %s601 = smul.addr %s600, 2
        %s602 = smul.addr %s601, 8
        %s603 = scalar_lea.vmem %s9, %s602
        %p604 = scmp.lt.s32.totalorder %s29, 1
        %s605 = scalar_select %p604, %s29, 1
        %s606 = smul.addr %s605, 2
        %s607 = smul.addr %s606, 8
        %s608 = scalar_lea.vmem %s10, %s607
        %p609 = scmp.lt.s32.totalorder %s29, 1
        %s610 = scalar_select %p609, %s29, 1
        %s611 = smul.addr %s610, 2
        %s612 = smul.addr %s611, 8
        %s613 = scalar_lea.vmem %s11, %s612
        %p614 = scmp.lt.s32.totalorder %s29, 1
        %s615 = scalar_select %p614, %s29, 1
        %s616 = smul.addr %s615, 2
        %s617 = smul.addr %s616, 4
        %s618 = scalar_lea.vmem %s12, %s617
        %p620 = scmp.eq.s32.totalorder %s29, 0
        %p621 = scmp.eq.s32.totalorder %s30, 0
        %p622 = pnand %p620, %p621
        %p623 = pneg %p622
        // Predicated region
        $region73: #{se_loss_forward.1} parent=71 // pred_check
          _
        $region74: #{se_loss_forward.1} parent=71 // pred_check_branch
          %625 = sbr.rel (%p622) target = $region76
        $region75: #{se_loss_forward.1} parent=71 // pred_region
          %s626 = scalar_lea.smem [#allocation5], 0
          %627 = sst [smem:[%s626]] 0.0
          %s628 = scalar_lea.smem [#allocation5], 1
          %629 = sst [smem:[%s628]] 0.0
          %s630 = scalar_lea.smem [#allocation5], 2
          %631 = sst [smem:[%s630]] 0.0
          %s632 = scalar_lea.smem [#allocation5], 3
          %633 = sst [smem:[%s632]] 0.0
          %s634 = scalar_lea.smem [#allocation5], 4
          %635 = sst [smem:[%s634]] 0.0
          %s636 = scalar_lea.smem [#allocation5], 5
          %637 = sst [smem:[%s636]] 0.0
          %s638 = scalar_lea.smem [#allocation5], 6
          %639 = sst [smem:[%s638]] 0.0
          %s640 = scalar_lea.smem [#allocation5], 7
          %641 = sst [smem:[%s640]] 0.0
          %s642 = scalar_lea.smem [#allocation5], 8
          %643 = sst [smem:[%s642]] 0.0
          %s644 = scalar_lea.smem [#allocation5], 9
          %645 = sst [smem:[%s644]] 0.0
          %s646 = scalar_lea.smem [#allocation5], 10
          %647 = sst [smem:[%s646]] 0.0
          %s648 = scalar_lea.smem [#allocation5], 11
          %649 = sst [smem:[%s648]] 0.0
          %s650 = scalar_lea.smem [#allocation5], 12
          %651 = sst [smem:[%s650]] 0.0
        $region76: #{se_loss_forward.1} parent=71 // pred_fallthru
          _
        %s652 = smul.u32 %s30, 72
        %s653 = sshra.s32 %s652, 3
        %s654 = sand.u32 %s652, 7
        %s655 = smul.addr %s653, 4
        %s656 = scalar_lea.vmem %s573, %s655
        %v657 = vld [vmem:[%s656] sm:$0xf]
        %v658 = vld [vmem:[%s656 + $0x4] sm:$0xf]
        %v659 = vld [vmem:[%s656 + $0x8] sm:$0xf]
        %v660 = vld [vmem:[%s656 + $0xc] sm:$0xf]
        %v661 = vld [vmem:[%s656 + $0x10] sm:$0xf]
        %v662 = vld [vmem:[%s656 + $0x14] sm:$0xf]
        %v663 = vld [vmem:[%s656 + $0x18] sm:$0xf]
        %v664 = vld [vmem:[%s656 + $0x1c] sm:$0xf]
        %v665 = vld [vmem:[%s656 + $0x20] sm:$0xf]
        %v666 = vld [vmem:[%s656 + $0x24] sm:$0xf]
        %s667 = smul.addr %s653, 4
        %s668 = scalar_lea.vmem %s578, %s667
        %v669 = vld [vmem:[%s668] sm:$0xf]
        %v670 = vld [vmem:[%s668 + $0x4] sm:$0xf]
        %v671 = vld [vmem:[%s668 + $0x8] sm:$0xf]
        %v672 = vld [vmem:[%s668 + $0xc] sm:$0xf]
        %v673 = vld [vmem:[%s668 + $0x10] sm:$0xf]
        %v674 = vld [vmem:[%s668 + $0x14] sm:$0xf]
        %v675 = vld [vmem:[%s668 + $0x18] sm:$0xf]
        %v676 = vld [vmem:[%s668 + $0x1c] sm:$0xf]
        %v677 = vld [vmem:[%s668 + $0x20] sm:$0xf]
        %v678 = vld [vmem:[%s668 + $0x24] sm:$0xf]
        %v688 = vunpack.c.l.b16 %v657
        %v689 = vunpack.c.l.b16 %v658
        %v690 = vunpack.c.l.b16 %v659
        %v691 = vunpack.c.l.b16 %v660
        %v692 = vunpack.c.l.b16 %v661
        %v693 = vunpack.c.l.b16 %v662
        %v694 = vunpack.c.l.b16 %v663
        %v695 = vunpack.c.l.b16 %v664
        %v696 = vunpack.c.l.b16 %v665
        %v697 = vpack.c.b16 %v689, %v688
        %v698 = vpack.c.b16 %v691, %v690
        %v699 = vpack.c.b16 %v693, %v692
        %v700 = vpack.c.b16 %v695, %v694
        %v701 = vpack.c.b16 %v696, %v696
        %vm707 = vcmask 261120
        %708 = vst.msk [vmem:[#allocation2] sm:$0xff] %vm707, %v697
        %709 = vst.msk [vmem:[#allocation2 + $0x8] sm:$0xff] %vm707, %v698
        %710 = vst.msk [vmem:[#allocation2 + $0x10] sm:$0xff] %vm707, %v699
        %711 = vst.msk [vmem:[#allocation2 + $0x18] sm:$0xff] %vm707, %v700
        %vm712 = vcmask 257024
        %713 = vst.msk [vmem:[#allocation2 + $0x20] sm:$0xf] %vm712, %v701
        %v723 = vunpack.c.l.b16 %v669
        %v724 = vunpack.c.l.b16 %v670
        %v725 = vunpack.c.l.b16 %v671
        %v726 = vunpack.c.l.b16 %v672
        %v727 = vunpack.c.l.b16 %v673
        %v728 = vunpack.c.l.b16 %v674
        %v729 = vunpack.c.l.b16 %v675
        %v730 = vunpack.c.l.b16 %v676
        %v731 = vunpack.c.l.b16 %v677
        %v732 = vpack.c.b16 %v723, %v723
        %v733 = vpack.c.b16 %v725, %v724
        %v734 = vpack.c.b16 %v727, %v726
        %v735 = vpack.c.b16 %v729, %v728
        %v736 = vpack.c.b16 %v731, %v730
        %vm742 = vcmask 261124
        %743 = vst.msk [vmem:[#allocation2 + $0x20] sm:$0xf0] %vm742, %v732
        %744 = vst.msk [vmem:[#allocation2 + $0x28] sm:$0xff] %vm707, %v733
        %745 = vst.msk [vmem:[#allocation2 + $0x30] sm:$0xff] %vm707, %v734
        %746 = vst.msk [vmem:[#allocation2 + $0x38] sm:$0xff] %vm707, %v735
        %747 = vst.msk [vmem:[#allocation2 + $0x40] sm:$0xff] %vm707, %v736
        %v749 = vunpack.c.l.b16 %v666
        %v750 = vpack.c.b16 %v749, %v696
        %vm751 = vsmask.f32 7424
        %v753 = vshrl.u32 %v697, 16
        %v755 = vshll.u32 %v697, 16
        %v757 = vrot.slane %v755, 1
        %v758 = vor.u32 %v753, %v757
        %v760 = vshll.u32 %v698, 16
        %v762 = vrot.slane %v760, 1
        %v763 = vsel %vm751, %v758, %v762
        %v764 = vshrl.u32 %v698, 16
        %v766 = vor.u32 %v764, %v762
        %v768 = vshll.u32 %v699, 16
        %v770 = vrot.slane %v768, 1
        %v771 = vsel %vm751, %v766, %v770
        %v772 = vshrl.u32 %v699, 16
        %v774 = vor.u32 %v772, %v770
        %v776 = vshll.u32 %v700, 16
        %v778 = vrot.slane %v776, 1
        %v779 = vsel %vm751, %v774, %v778
        %v780 = vshrl.u32 %v700, 16
        %v782 = vor.u32 %v780, %v778
        %v784 = vshll.u32 %v750, 16
        %v786 = vrot.slane %v784, 1
        %v787 = vsel %vm751, %v782, %v786
        %v788 = vshrl.u32 %v750, 16
        %v790 = vor.u32 %v788, %v786
        %791 = vrot.lane.b32.xlu0 %v763, 32
        %v792 = vpop.permute.xlu0 %791
        %793 = vrot.lane.b32.xlu0 %v771, 32
        %v794 = vpop.permute.xlu0 %793
        %795 = vrot.lane.b32.xlu0 %v779, 32
        %v796 = vpop.permute.xlu0 %795
        %797 = vrot.lane.b32.xlu0 %v787, 32
        %v798 = vpop.permute.xlu0 %797
        %799 = vrot.lane.b32.xlu0 %v790, 32
        %v800 = vpop.permute.xlu0 %799
        %vm806 = vcmask 523520
        %807 = vst.msk [vmem:[#allocation2] sm:$0xff] %vm806, %v792
        %808 = vst.msk [vmem:[#allocation2 + $0x8] sm:$0xff] %vm806, %v794
        %809 = vst.msk [vmem:[#allocation2 + $0x10] sm:$0xff] %vm806, %v796
        %810 = vst.msk [vmem:[#allocation2 + $0x18] sm:$0xff] %vm806, %v798
        %vm811 = vcmask 519424
        %812 = vst.msk [vmem:[#allocation2 + $0x20] sm:$0xf] %vm811, %v800
        %v814 = vunpack.c.l.b16 %v678
        %v815 = vpack.c.b16 %v724, %v723
        %v816 = vpack.c.b16 %v726, %v725
        %v817 = vpack.c.b16 %v728, %v727
        %v818 = vpack.c.b16 %v730, %v729
        %v819 = vpack.c.b16 %v814, %v731
        %vm820 = vsmask.f32 3328
        %v822 = vshrl.u32 %v815, 16
        %v824 = vrot.slane %v822, 4
        %v825 = vshll.u32 %v815, 16
        %v827 = vrot.slane %v825, 5
        %v828 = vor.u32 %v824, %v827
        %v830 = vshrl.u32 %v816, 16
        %v832 = vrot.slane %v830, 4
        %v833 = vshll.u32 %v816, 16
        %v835 = vrot.slane %v833, 5
        %v836 = vor.u32 %v832, %v835
        %v837 = vsel %vm820, %v828, %v836
        %v839 = vshrl.u32 %v817, 16
        %v841 = vrot.slane %v839, 4
        %v842 = vshll.u32 %v817, 16
        %v844 = vrot.slane %v842, 5
        %v845 = vor.u32 %v841, %v844
        %v846 = vsel %vm820, %v836, %v845
        %v848 = vshrl.u32 %v818, 16
        %v850 = vrot.slane %v848, 4
        %v851 = vshll.u32 %v818, 16
        %v853 = vrot.slane %v851, 5
        %v854 = vor.u32 %v850, %v853
        %v855 = vsel %vm820, %v845, %v854
        %v857 = vshrl.u32 %v819, 16
        %v859 = vrot.slane %v857, 4
        %v860 = vshll.u32 %v819, 16
        %v862 = vrot.slane %v860, 5
        %v863 = vor.u32 %v859, %v862
        %v864 = vsel %vm820, %v854, %v863
        %865 = vrot.lane.b32.xlu0 %v828, 32
        %v866 = vpop.permute.xlu0 %865
        %867 = vrot.lane.b32.xlu0 %v837, 32
        %v868 = vpop.permute.xlu0 %867
        %869 = vrot.lane.b32.xlu0 %v846, 32
        %v870 = vpop.permute.xlu0 %869
        %871 = vrot.lane.b32.xlu0 %v855, 32
        %v872 = vpop.permute.xlu0 %871
        %873 = vrot.lane.b32.xlu0 %v864, 32
        %v874 = vpop.permute.xlu0 %873
        %vm880 = vcmask 523524
        %881 = vst.msk [vmem:[#allocation2 + $0x20] sm:$0xf0] %vm880, %v866
        %882 = vst.msk [vmem:[#allocation2 + $0x28] sm:$0xff] %vm806, %v868
        %883 = vst.msk [vmem:[#allocation2 + $0x30] sm:$0xff] %vm806, %v870
        %884 = vst.msk [vmem:[#allocation2 + $0x38] sm:$0xff] %vm806, %v872
        %885 = vst.msk [vmem:[#allocation2 + $0x40] sm:$0xff] %vm806, %v874
        %vm886 = vcmask 1046528
        %v887 = vrot.slane %v697, 1
        %v888 = vrot.slane %v698, 1
        %v889 = vsel %vm886, %v887, %v888
        %v890 = vrot.slane %v699, 1
        %v891 = vsel %vm886, %v888, %v890
        %v892 = vrot.slane %v700, 1
        %v893 = vsel %vm886, %v890, %v892
        %v894 = vrot.slane %v750, 1
        %v895 = vsel %vm886, %v892, %v894
        %896 = vrot.lane.b32.xlu0 %v889, 64
        %v897 = vpop.permute.xlu0 %896
        %898 = vrot.lane.b32.xlu0 %v891, 64
        %v899 = vpop.permute.xlu0 %898
        %900 = vrot.lane.b32.xlu0 %v893, 64
        %v901 = vpop.permute.xlu0 %900
        %902 = vrot.lane.b32.xlu0 %v895, 64
        %v903 = vpop.permute.xlu0 %902
        %904 = vrot.lane.b32.xlu0 %v894, 64
        %v905 = vpop.permute.xlu0 %904
        %vm911 = vcmask 785920
        %912 = vst.msk [vmem:[#allocation2] sm:$0xff] %vm911, %v897
        %913 = vst.msk [vmem:[#allocation2 + $0x8] sm:$0xff] %vm911, %v899
        %914 = vst.msk [vmem:[#allocation2 + $0x10] sm:$0xff] %vm911, %v901
        %915 = vst.msk [vmem:[#allocation2 + $0x18] sm:$0xff] %vm911, %v903
        %vm916 = vcmask 781824
        %917 = vst.msk [vmem:[#allocation2 + $0x20] sm:$0xf] %vm916, %v905
        %vm918 = vcmask 1042432
        %v919 = vrot.slane %v815, 5
        %v920 = vrot.slane %v816, 5
        %v921 = vsel %vm918, %v919, %v920
        %v922 = vrot.slane %v817, 5
        %v923 = vsel %vm918, %v920, %v922
        %v924 = vrot.slane %v818, 5
        %v925 = vsel %vm918, %v922, %v924
        %v926 = vrot.slane %v819, 5
        %v927 = vsel %vm918, %v924, %v926
        %928 = vrot.lane.b32.xlu0 %v919, 64
        %v929 = vpop.permute.xlu0 %928
        %930 = vrot.lane.b32.xlu0 %v921, 64
        %v931 = vpop.permute.xlu0 %930
        %932 = vrot.lane.b32.xlu0 %v923, 64
        %v933 = vpop.permute.xlu0 %932
        %934 = vrot.lane.b32.xlu0 %v925, 64
        %v935 = vpop.permute.xlu0 %934
        %936 = vrot.lane.b32.xlu0 %v927, 64
        %v937 = vpop.permute.xlu0 %936
        %vm943 = vcmask 785924
        %944 = vst.msk [vmem:[#allocation2 + $0x20] sm:$0xf0] %vm943, %v929
        %945 = vst.msk [vmem:[#allocation2 + $0x28] sm:$0xff] %vm911, %v931
        %946 = vst.msk [vmem:[#allocation2 + $0x30] sm:$0xff] %vm911, %v933
        %947 = vst.msk [vmem:[#allocation2 + $0x38] sm:$0xff] %vm911, %v935
        %948 = vst.msk [vmem:[#allocation2 + $0x40] sm:$0xff] %vm911, %v937
        %vm949 = vsmask.f32 6400
        %v950 = vrot.slane %v753, 1
        %v951 = vrot.slane %v755, 2
        %v952 = vor.u32 %v950, %v951
        %v953 = vrot.slane %v764, 1
        %v954 = vrot.slane %v760, 2
        %v955 = vor.u32 %v953, %v954
        %v956 = vsel %vm949, %v952, %v955
        %v957 = vrot.slane %v772, 1
        %v958 = vrot.slane %v768, 2
        %v959 = vor.u32 %v957, %v958
        %v960 = vsel %vm949, %v955, %v959
        %v961 = vrot.slane %v780, 1
        %v962 = vrot.slane %v776, 2
        %v963 = vor.u32 %v961, %v962
        %v964 = vsel %vm949, %v959, %v963
        %v965 = vrot.slane %v788, 1
        %v966 = vrot.slane %v784, 2
        %v967 = vor.u32 %v965, %v966
        %v968 = vsel %vm949, %v963, %v967
        %969 = vrot.lane.b32.xlu0 %v956, 96
        %v970 = vpop.permute.xlu0 %969
        %971 = vrot.lane.b32.xlu0 %v960, 96
        %v972 = vpop.permute.xlu0 %971
        %973 = vrot.lane.b32.xlu0 %v964, 96
        %v974 = vpop.permute.xlu0 %973
        %975 = vrot.lane.b32.xlu0 %v968, 96
        %v976 = vpop.permute.xlu0 %975
        %977 = vrot.lane.b32.xlu0 %v967, 96
        %v978 = vpop.permute.xlu0 %977
        %vm984 = vcmask 1048320
        %985 = vst.msk [vmem:[#allocation2] sm:$0xff] %vm984, %v970
        %986 = vst.msk [vmem:[#allocation2 + $0x8] sm:$0xff] %vm984, %v972
        %987 = vst.msk [vmem:[#allocation2 + $0x10] sm:$0xff] %vm984, %v974
        %988 = vst.msk [vmem:[#allocation2 + $0x18] sm:$0xff] %vm984, %v976
        %vm989 = vcmask 1044224
        %990 = vst.msk [vmem:[#allocation2 + $0x20] sm:$0xf] %vm989, %v978
        %vm991 = vsmask.f32 2304
        %v992 = vrot.slane %v822, 5
        %v993 = vrot.slane %v825, 6
        %v994 = vor.u32 %v992, %v993
        %v995 = vrot.slane %v830, 5
        %v996 = vrot.slane %v833, 6
        %v997 = vor.u32 %v995, %v996
        %v998 = vsel %vm991, %v994, %v997
        %v999 = vrot.slane %v839, 5
        %v1000 = vrot.slane %v842, 6
        %v1001 = vor.u32 %v999, %v1000
        %v1002 = vsel %vm991, %v997, %v1001
        %v1003 = vrot.slane %v848, 5
        %v1004 = vrot.slane %v851, 6
        %v1005 = vor.u32 %v1003, %v1004
        %v1006 = vsel %vm991, %v1001, %v1005
        %v1007 = vrot.slane %v857, 5
        %v1008 = vrot.slane %v860, 6
        %v1009 = vor.u32 %v1007, %v1008
        %v1010 = vsel %vm991, %v1005, %v1009
        %1011 = vrot.lane.b32.xlu0 %v994, 96
        %v1012 = vpop.permute.xlu0 %1011
        %1013 = vrot.lane.b32.xlu0 %v998, 96
        %v1014 = vpop.permute.xlu0 %1013
        %1015 = vrot.lane.b32.xlu0 %v1002, 96
        %v1016 = vpop.permute.xlu0 %1015
        %1017 = vrot.lane.b32.xlu0 %v1006, 96
        %v1018 = vpop.permute.xlu0 %1017
        %1019 = vrot.lane.b32.xlu0 %v1010, 96
        %v1020 = vpop.permute.xlu0 %1019
        %vm1026 = vcmask 1048324
        %1027 = vst.msk [vmem:[#allocation2 + $0x20] sm:$0xf0] %vm1026, %v1012
        %1028 = vst.msk [vmem:[#allocation2 + $0x28] sm:$0xff] %vm984, %v1014
        %1029 = vst.msk [vmem:[#allocation2 + $0x30] sm:$0xff] %vm984, %v1016
        %1030 = vst.msk [vmem:[#allocation2 + $0x38] sm:$0xff] %vm984, %v1018
        %1031 = vst.msk [vmem:[#allocation2 + $0x40] sm:$0xff] %vm984, %v1020
        %v1032 = vld [vmem:[#allocation2] sm:$0xff]
        %v1033 = vld [vmem:[#allocation2 + $0x8] sm:$0xff]
        %v1034 = vld [vmem:[#allocation2 + $0x10] sm:$0xff]
        %v1035 = vld [vmem:[#allocation2 + $0x18] sm:$0xff]
        %v1036 = vld [vmem:[#allocation2 + $0x20] sm:$0xff]
        %v1037 = vld [vmem:[#allocation2 + $0x28] sm:$0xff]
        %v1038 = vld [vmem:[#allocation2 + $0x30] sm:$0xff]
        %v1039 = vld [vmem:[#allocation2 + $0x38] sm:$0xff]
        %v1040 = vld [vmem:[#allocation2 + $0x40] sm:$0xff]
        %v1041 = vld [vmem:[%s6] sm:$0xf]
        %v1042 = vld [vmem:[%s6 + $0x4] sm:$0xf]
        %v1043 = vld [vmem:[%s6 + $0x8] sm:$0xf]
        %v1044 = vld [vmem:[%s6 + $0xc] sm:$0xf]
        %v1045 = vld [vmem:[%s6 + $0x10] sm:$0xf]
        %v1046 = vld [vmem:[%s6 + $0x14] sm:$0xf]
        %v1047 = vld [vmem:[%s6 + $0x18] sm:$0xf]
        %v1048 = vld [vmem:[%s6 + $0x1c] sm:$0xf]
        %v1049 = vld [vmem:[%s6 + $0x20] sm:$0xf]
        %v1050 = vld [vmem:[%s6 + $0x24] sm:$0xf]
        %v1051 = vld [vmem:[%s6 + $0x28] sm:$0xf]
        %v1052 = vld [vmem:[%s6 + $0x2c] sm:$0xf]
        %v1053 = vld [vmem:[%s6 + $0x30] sm:$0xf]
        %v1054 = vld [vmem:[%s6 + $0x34] sm:$0xf]
        %v1055 = vld [vmem:[%s6 + $0x38] sm:$0xf]
        %v1056 = vld [vmem:[%s6 + $0x3c] sm:$0xf]
        %v1073 = vunpack.c.l.b16 %v1041
        %v1074 = vunpack.c.l.b16 %v1042
        %v1075 = vunpack.c.l.b16 %v1043
        %v1076 = vunpack.c.l.b16 %v1044
        %v1077 = vunpack.c.l.b16 %v1045
        %v1078 = vunpack.c.l.b16 %v1046
        %v1079 = vunpack.c.l.b16 %v1047
        %v1080 = vunpack.c.l.b16 %v1048
        %v1081 = vunpack.c.l.b16 %v1049
        %v1082 = vunpack.c.l.b16 %v1050
        %v1083 = vunpack.c.l.b16 %v1051
        %v1084 = vunpack.c.l.b16 %v1052
        %v1085 = vunpack.c.l.b16 %v1053
        %v1086 = vunpack.c.l.b16 %v1054
        %v1087 = vunpack.c.l.b16 %v1055
        %v1088 = vunpack.c.l.b16 %v1056
        %v1089 = vpack.c.b16 %v1074, %v1073
        %v1090 = vpack.c.b16 %v1076, %v1075
        %v1091 = vpack.c.b16 %v1078, %v1077
        %v1092 = vpack.c.b16 %v1080, %v1079
        %v1093 = vpack.c.b16 %v1082, %v1081
        %v1094 = vpack.c.b16 %v1084, %v1083
        %v1095 = vpack.c.b16 %v1086, %v1085
        %v1096 = vpack.c.b16 %v1088, %v1087
        %1105 = vmatprep.subr.bf16.mxu0 0
        %1106 = vmatpush1.bf16.msra.mxu0 %v1089
        %1107 = vmatprep.subr.bf16.mxu0 0
        %1108 = vmatpush1.bf16.msra.mxu0 %v1090
        %1109 = vmatprep.subr.bf16.mxu0 0
        %1110 = vmatpush1.bf16.msra.mxu0 %v1091
        %1111 = vmatprep.subr.bf16.mxu0 0
        %1112 = vmatpush1.bf16.msra.mxu0 %v1092
        %1113 = vmatprep.subr.bf16.mxu0 0
        %1114 = vmatpush1.bf16.msra.mxu0 %v1093
        %1115 = vmatprep.subr.bf16.mxu0 0
        %1116 = vmatpush1.bf16.msra.mxu0 %v1094
        %1117 = vmatprep.subr.bf16.mxu0 0
        %1118 = vmatpush1.bf16.msra.mxu0 %v1095
        %1119 = vmatprep.subr.bf16.mxu0 0
        %1120 = vmatpush1.bf16.msra.mxu0 %v1096
        %1121 = vmatprep.subr.bf16.mxu0 0
        %1122 = vmatpush1.bf16.msra.mxu0 0
        %1123 = vmatprep.subr.bf16.mxu0 0
        %1124 = vmatpush1.bf16.msra.mxu0 0
        %1125 = vmatprep.subr.bf16.mxu0 0
        %1126 = vmatpush1.bf16.msra.mxu0 0
        %1127 = vmatprep.subr.bf16.mxu0 0
        %1128 = vmatpush1.bf16.msra.mxu0 0
        %1129 = vmatprep.subr.bf16.mxu0 0
        %1130 = vmatpush1.bf16.msra.mxu0 0
        %1131 = vmatprep.subr.bf16.mxu0 0
        %1132 = vmatpush1.bf16.msra.mxu0 0
        %1133 = vmatprep.subr.bf16.mxu0 0
        %1134 = vmatpush1.bf16.msra.mxu0 0
        %1135 = vmatprep.subr.bf16.mxu0 0
        %1136 = vmatpush1.bf16.msra.mxu0 0
        %1137 = vmatprep.mubr.bf16.mxu0 0
        %1138 = vmatmul.mubr.bf16.gmra.mrb[0].mxu0 %v1032
        %v1139 = vpop.f32.mrb[0].mxu0
        %v1140 = vadd.f32 0.0, %v1139
        %v1141 = vpop.f32.mrb[0].mxu0
        %v1142 = vpop.f32.mrb[0].mxu0
        %v1143 = vadd.f32 0.0, %v1142
        %v1144 = vpop.f32.mrb[0].mxu0
        %1145 = vmatprep.mubr.bf16.mxu0 0
        %1146 = vmatmul.mubr.bf16.gmra.mrb[0].mxu0 %v1033
        %v1147 = vpop.f32.mrb[0].mxu0
        %v1148 = vadd.f32 0.0, %v1147
        %v1149 = vpop.f32.mrb[0].mxu0
        %v1150 = vpop.f32.mrb[0].mxu0
        %v1151 = vadd.f32 0.0, %v1150
        %v1152 = vpop.f32.mrb[0].mxu0
        %1153 = vmatprep.mubr.bf16.mxu0 0
        %1154 = vmatmul.mubr.bf16.gmra.mrb[0].mxu0 %v1034
        %v1155 = vpop.f32.mrb[0].mxu0
        %v1156 = vadd.f32 0.0, %v1155
        %v1157 = vpop.f32.mrb[0].mxu0
        %v1158 = vpop.f32.mrb[0].mxu0
        %v1159 = vadd.f32 0.0, %v1158
        %v1160 = vpop.f32.mrb[0].mxu0
        %1161 = vmatprep.mubr.bf16.mxu0 0
        %1162 = vmatmul.mubr.bf16.gmra.mrb[0].mxu0 %v1035
        %v1163 = vpop.f32.mrb[0].mxu0
        %v1164 = vadd.f32 0.0, %v1163
        %v1165 = vpop.f32.mrb[0].mxu0
        %v1166 = vpop.f32.mrb[0].mxu0
        %v1167 = vadd.f32 0.0, %v1166
        %v1168 = vpop.f32.mrb[0].mxu0
        %1169 = vmatprep.mubr.bf16.mxu0 0
        %1170 = vmatmul.mubr.bf16.gmra.mrb[0].mxu0 %v1036
        %v1171 = vpop.f32.mrb[0].mxu0
        %v1172 = vadd.f32 0.0, %v1171
        %v1173 = vpop.f32.mrb[0].mxu0
        %v1174 = vpop.f32.mrb[0].mxu0
        %v1175 = vadd.f32 0.0, %v1174
        %v1176 = vpop.f32.mrb[0].mxu0
        %1177 = vmatprep.mubr.bf16.mxu0 0
        %1178 = vmatmul.mubr.bf16.gmra.mrb[0].mxu0 %v1037
        %v1179 = vpop.f32.mrb[0].mxu0
        %v1180 = vadd.f32 0.0, %v1179
        %v1181 = vpop.f32.mrb[0].mxu0
        %v1182 = vpop.f32.mrb[0].mxu0
        %v1183 = vadd.f32 0.0, %v1182
        %v1184 = vpop.f32.mrb[0].mxu0
        %1185 = vmatprep.mubr.bf16.mxu0 0
        %1186 = vmatmul.mubr.bf16.gmra.mrb[0].mxu0 %v1038
        %v1187 = vpop.f32.mrb[0].mxu0
        %v1188 = vadd.f32 0.0, %v1187
        %v1189 = vpop.f32.mrb[0].mxu0
        %v1190 = vpop.f32.mrb[0].mxu0
        %v1191 = vadd.f32 0.0, %v1190
        %v1192 = vpop.f32.mrb[0].mxu0
        %1193 = vmatprep.mubr.bf16.mxu0 0
        %1194 = vmatmul.mubr.bf16.gmra.mrb[0].mxu0 %v1039
        %v1195 = vpop.f32.mrb[0].mxu0
        %v1196 = vadd.f32 0.0, %v1195
        %v1197 = vpop.f32.mrb[0].mxu0
        %v1198 = vpop.f32.mrb[0].mxu0
        %v1199 = vadd.f32 0.0, %v1198
        %v1200 = vpop.f32.mrb[0].mxu0
        %1201 = vmatprep.mubr.bf16.mxu0 0
        %1202 = vmatmul.mubr.bf16.gmra.mrb[0].mxu0 %v1040
        %v1203 = vpop.f32.mrb[0].mxu0
        %v1204 = vadd.f32 0.0, %v1203
        %v1205 = vpop.f32.mrb[0].mxu0
        %v1206 = vpop.f32.mrb[0].mxu0
        %v1207 = vadd.f32 0.0, %v1206
        %v1208 = vpop.f32.mrb[0].mxu0
        %1209 = vdwg.mxu0
        %v1210 = vlaneseq
        %v1211 = vand.u32 %v1210, 127
        %vm1212 = vcmp.gt.s32.totalorder %v1211, 0
        %v1213 = vsel %vm1212, 1, 0
        %vm1214 = vcmp.eq.s32.totalorder %v1213, 1
        %1233 = vrot.lane.b32.xlu0 %v1140, 64
        %v1234 = vpop.permute.xlu0 %1233
        %1235 = vrot.lane.b32.xlu0 %v1143, 64
        %v1236 = vpop.permute.xlu0 %1235
        %1237 = vrot.lane.b32.xlu0 %v1148, 64
        %v1238 = vpop.permute.xlu0 %1237
        %1239 = vrot.lane.b32.xlu0 %v1151, 64
        %v1240 = vpop.permute.xlu0 %1239
        %1241 = vrot.lane.b32.xlu0 %v1156, 64
        %v1242 = vpop.permute.xlu0 %1241
        %1243 = vrot.lane.b32.xlu0 %v1159, 64
        %v1244 = vpop.permute.xlu0 %1243
        %1245 = vrot.lane.b32.xlu0 %v1164, 64
        %v1246 = vpop.permute.xlu0 %1245
        %1247 = vrot.lane.b32.xlu0 %v1167, 64
        %v1248 = vpop.permute.xlu0 %1247
        %1249 = vrot.lane.b32.xlu0 %v1172, 64
        %v1250 = vpop.permute.xlu0 %1249
        %1251 = vrot.lane.b32.xlu0 %v1175, 64
        %v1252 = vpop.permute.xlu0 %1251
        %1253 = vrot.lane.b32.xlu0 %v1180, 64
        %v1254 = vpop.permute.xlu0 %1253
        %1255 = vrot.lane.b32.xlu0 %v1183, 64
        %v1256 = vpop.permute.xlu0 %1255
        %1257 = vrot.lane.b32.xlu0 %v1188, 64
        %v1258 = vpop.permute.xlu0 %1257
        %1259 = vrot.lane.b32.xlu0 %v1191, 64
        %v1260 = vpop.permute.xlu0 %1259
        %1261 = vrot.lane.b32.xlu0 %v1196, 64
        %v1262 = vpop.permute.xlu0 %1261
        %1263 = vrot.lane.b32.xlu0 %v1199, 64
        %v1264 = vpop.permute.xlu0 %1263
        %1265 = vrot.lane.b32.xlu0 %v1204, 64
        %v1266 = vpop.permute.xlu0 %1265
        %1267 = vrot.lane.b32.xlu0 %v1207, 64
        %v1268 = vpop.permute.xlu0 %1267
        %v1287 = vsel %vm1214, %v1234, 0.0
        %v1288 = vsel %vm1214, %v1236, 0.0
        %v1289 = vsel %vm1214, %v1238, 0.0
        %v1290 = vsel %vm1214, %v1240, 0.0
        %v1291 = vsel %vm1214, %v1242, 0.0
        %v1292 = vsel %vm1214, %v1244, 0.0
        %v1293 = vsel %vm1214, %v1246, 0.0
        %v1294 = vsel %vm1214, %v1248, 0.0
        %v1295 = vsel %vm1214, %v1250, 0.0
        %v1296 = vsel %vm1214, %v1252, 0.0
        %v1297 = vsel %vm1214, %v1254, 0.0
        %v1298 = vsel %vm1214, %v1256, 0.0
        %v1299 = vsel %vm1214, %v1258, 0.0
        %v1300 = vsel %vm1214, %v1260, 0.0
        %v1301 = vsel %vm1214, %v1262, 0.0
        %v1302 = vsel %vm1214, %v1264, 0.0
        %v1303 = vsel %vm1214, %v1266, 0.0
        %v1304 = vsel %vm1214, %v1268, 0.0
        %v1305 = vmul.f32 %v1140, %v1140
        %v1306 = vmul.f32 %v1143, %v1143
        %v1307 = vmul.f32 %v1148, %v1148
        %v1308 = vmul.f32 %v1151, %v1151
        %v1309 = vmul.f32 %v1156, %v1156
        %v1310 = vmul.f32 %v1159, %v1159
        %v1311 = vmul.f32 %v1164, %v1164
        %v1312 = vmul.f32 %v1167, %v1167
        %v1313 = vmul.f32 %v1172, %v1172
        %v1314 = vmul.f32 %v1175, %v1175
        %v1315 = vmul.f32 %v1180, %v1180
        %v1316 = vmul.f32 %v1183, %v1183
        %v1317 = vmul.f32 %v1188, %v1188
        %v1318 = vmul.f32 %v1191, %v1191
        %v1319 = vmul.f32 %v1196, %v1196
        %v1320 = vmul.f32 %v1199, %v1199
        %v1321 = vmul.f32 %v1204, %v1204
        %v1322 = vmul.f32 %v1207, %v1207
        %v1323 = vmul.f32 %v1287, %v1287
        %v1324 = vmul.f32 %v1288, %v1288
        %v1325 = vmul.f32 %v1289, %v1289
        %v1326 = vmul.f32 %v1290, %v1290
        %v1327 = vmul.f32 %v1291, %v1291
        %v1328 = vmul.f32 %v1292, %v1292
        %v1329 = vmul.f32 %v1293, %v1293
        %v1330 = vmul.f32 %v1294, %v1294
        %v1331 = vmul.f32 %v1295, %v1295
        %v1332 = vmul.f32 %v1296, %v1296
        %v1333 = vmul.f32 %v1297, %v1297
        %v1334 = vmul.f32 %v1298, %v1298
        %v1335 = vmul.f32 %v1299, %v1299
        %v1336 = vmul.f32 %v1300, %v1300
        %v1337 = vmul.f32 %v1301, %v1301
        %v1338 = vmul.f32 %v1302, %v1302
        %v1339 = vmul.f32 %v1303, %v1303
        %v1340 = vmul.f32 %v1304, %v1304
        %v1341 = vadd.f32 %v1305, %v1323
        %v1342 = vadd.f32 %v1306, %v1324
        %v1343 = vadd.f32 %v1307, %v1325
        %v1344 = vadd.f32 %v1308, %v1326
        %v1345 = vadd.f32 %v1309, %v1327
        %v1346 = vadd.f32 %v1310, %v1328
        %v1347 = vadd.f32 %v1311, %v1329
        %v1348 = vadd.f32 %v1312, %v1330
        %v1349 = vadd.f32 %v1313, %v1331
        %v1350 = vadd.f32 %v1314, %v1332
        %v1351 = vadd.f32 %v1315, %v1333
        %v1352 = vadd.f32 %v1316, %v1334
        %v1353 = vadd.f32 %v1317, %v1335
        %v1354 = vadd.f32 %v1318, %v1336
        %v1355 = vadd.f32 %v1319, %v1337
        %v1356 = vadd.f32 %v1320, %v1338
        %v1357 = vadd.f32 %v1321, %v1339
        %v1358 = vadd.f32 %v1322, %v1340
        %v1359 = vmax.f32 %v1341, 1e-07
        %v1360 = vmax.f32 %v1342, 1e-07
        %v1361 = vmax.f32 %v1343, 1e-07
        %v1362 = vmax.f32 %v1344, 1e-07
        %v1363 = vmax.f32 %v1345, 1e-07
        %v1364 = vmax.f32 %v1346, 1e-07
        %v1365 = vmax.f32 %v1347, 1e-07
        %v1366 = vmax.f32 %v1348, 1e-07
        %v1367 = vmax.f32 %v1349, 1e-07
        %v1368 = vmax.f32 %v1350, 1e-07
        %v1369 = vmax.f32 %v1351, 1e-07
        %v1370 = vmax.f32 %v1352, 1e-07
        %v1371 = vmax.f32 %v1353, 1e-07
        %v1372 = vmax.f32 %v1354, 1e-07
        %v1373 = vmax.f32 %v1355, 1e-07
        %v1374 = vmax.f32 %v1356, 1e-07
        %v1375 = vmax.f32 %v1357, 1e-07
        %v1376 = vmax.f32 %v1358, 1e-07
        %v1377 = vrsqrt.pop %v1359
        %v1378 = vmul.f32 %v1359, %v1377
        %vm1379 = vcmp.eq.f32.partialorder %v1359, inf
        %v1380 = vsel %vm1379, %v1359, %v1378
        %vm1381 = vcmp.eq.f32.partialorder %v1359, 0.0
        %v1382 = vand.u32 %v1359, 2147483648
        %v1383 = vsel %vm1381, %v1382, %v1380
        %v1384 = vrsqrt.pop %v1360
        %v1385 = vmul.f32 %v1360, %v1384
        %vm1386 = vcmp.eq.f32.partialorder %v1360, inf
        %v1387 = vsel %vm1386, %v1360, %v1385
        %vm1388 = vcmp.eq.f32.partialorder %v1360, 0.0
        %v1389 = vand.u32 %v1360, 2147483648
        %v1390 = vsel %vm1388, %v1389, %v1387
        %v1391 = vrsqrt.pop %v1361
        %v1392 = vmul.f32 %v1361, %v1391
        %vm1393 = vcmp.eq.f32.partialorder %v1361, inf
        %v1394 = vsel %vm1393, %v1361, %v1392
        %vm1395 = vcmp.eq.f32.partialorder %v1361, 0.0
        %v1396 = vand.u32 %v1361, 2147483648
        %v1397 = vsel %vm1395, %v1396, %v1394
        %v1398 = vrsqrt.pop %v1362
        %v1399 = vmul.f32 %v1362, %v1398
        %vm1400 = vcmp.eq.f32.partialorder %v1362, inf
        %v1401 = vsel %vm1400, %v1362, %v1399
        %vm1402 = vcmp.eq.f32.partialorder %v1362, 0.0
        %v1403 = vand.u32 %v1362, 2147483648
        %v1404 = vsel %vm1402, %v1403, %v1401
        %v1405 = vrsqrt.pop %v1363
        %v1406 = vmul.f32 %v1363, %v1405
        %vm1407 = vcmp.eq.f32.partialorder %v1363, inf
        %v1408 = vsel %vm1407, %v1363, %v1406
        %vm1409 = vcmp.eq.f32.partialorder %v1363, 0.0
        %v1410 = vand.u32 %v1363, 2147483648
        %v1411 = vsel %vm1409, %v1410, %v1408
        %v1412 = vrsqrt.pop %v1364
        %v1413 = vmul.f32 %v1364, %v1412
        %vm1414 = vcmp.eq.f32.partialorder %v1364, inf
        %v1415 = vsel %vm1414, %v1364, %v1413
        %vm1416 = vcmp.eq.f32.partialorder %v1364, 0.0
        %v1417 = vand.u32 %v1364, 2147483648
        %v1418 = vsel %vm1416, %v1417, %v1415
        %v1419 = vrsqrt.pop %v1365
        %v1420 = vmul.f32 %v1365, %v1419
        %vm1421 = vcmp.eq.f32.partialorder %v1365, inf
        %v1422 = vsel %vm1421, %v1365, %v1420
        %vm1423 = vcmp.eq.f32.partialorder %v1365, 0.0
        %v1424 = vand.u32 %v1365, 2147483648
        %v1425 = vsel %vm1423, %v1424, %v1422
        %v1426 = vrsqrt.pop %v1366
        %v1427 = vmul.f32 %v1366, %v1426
        %vm1428 = vcmp.eq.f32.partialorder %v1366, inf
        %v1429 = vsel %vm1428, %v1366, %v1427
        %vm1430 = vcmp.eq.f32.partialorder %v1366, 0.0
        %v1431 = vand.u32 %v1366, 2147483648
        %v1432 = vsel %vm1430, %v1431, %v1429
        %v1433 = vrsqrt.pop %v1367
        %v1434 = vmul.f32 %v1367, %v1433
        %vm1435 = vcmp.eq.f32.partialorder %v1367, inf
        %v1436 = vsel %vm1435, %v1367, %v1434
        %vm1437 = vcmp.eq.f32.partialorder %v1367, 0.0
        %v1438 = vand.u32 %v1367, 2147483648
        %v1439 = vsel %vm1437, %v1438, %v1436
        %v1440 = vrsqrt.pop %v1368
        %v1441 = vmul.f32 %v1368, %v1440
        %vm1442 = vcmp.eq.f32.partialorder %v1368, inf
        %v1443 = vsel %vm1442, %v1368, %v1441
        %vm1444 = vcmp.eq.f32.partialorder %v1368, 0.0
        %v1445 = vand.u32 %v1368, 2147483648
        %v1446 = vsel %vm1444, %v1445, %v1443
        %v1447 = vrsqrt.pop %v1369
        %v1448 = vmul.f32 %v1369, %v1447
        %vm1449 = vcmp.eq.f32.partialorder %v1369, inf
        %v1450 = vsel %vm1449, %v1369, %v1448
        %vm1451 = vcmp.eq.f32.partialorder %v1369, 0.0
        %v1452 = vand.u32 %v1369, 2147483648
        %v1453 = vsel %vm1451, %v1452, %v1450
        %v1454 = vrsqrt.pop %v1370
        %v1455 = vmul.f32 %v1370, %v1454
        %vm1456 = vcmp.eq.f32.partialorder %v1370, inf
        %v1457 = vsel %vm1456, %v1370, %v1455
        %vm1458 = vcmp.eq.f32.partialorder %v1370, 0.0
        %v1459 = vand.u32 %v1370, 2147483648
        %v1460 = vsel %vm1458, %v1459, %v1457
        %v1461 = vrsqrt.pop %v1371
        %v1462 = vmul.f32 %v1371, %v1461
        %vm1463 = vcmp.eq.f32.partialorder %v1371, inf
        %v1464 = vsel %vm1463, %v1371, %v1462
        %vm1465 = vcmp.eq.f32.partialorder %v1371, 0.0
        %v1466 = vand.u32 %v1371, 2147483648
        %v1467 = vsel %vm1465, %v1466, %v1464
        %v1468 = vrsqrt.pop %v1372
        %v1469 = vmul.f32 %v1372, %v1468
        %vm1470 = vcmp.eq.f32.partialorder %v1372, inf
        %v1471 = vsel %vm1470, %v1372, %v1469
        %vm1472 = vcmp.eq.f32.partialorder %v1372, 0.0
        %v1473 = vand.u32 %v1372, 2147483648
        %v1474 = vsel %vm1472, %v1473, %v1471
        %v1475 = vrsqrt.pop %v1373
        %v1476 = vmul.f32 %v1373, %v1475
        %vm1477 = vcmp.eq.f32.partialorder %v1373, inf
        %v1478 = vsel %vm1477, %v1373, %v1476
        %vm1479 = vcmp.eq.f32.partialorder %v1373, 0.0
        %v1480 = vand.u32 %v1373, 2147483648
        %v1481 = vsel %vm1479, %v1480, %v1478
        %v1482 = vrsqrt.pop %v1374
        %v1483 = vmul.f32 %v1374, %v1482
        %vm1484 = vcmp.eq.f32.partialorder %v1374, inf
        %v1485 = vsel %vm1484, %v1374, %v1483
        %vm1486 = vcmp.eq.f32.partialorder %v1374, 0.0
        %v1487 = vand.u32 %v1374, 2147483648
        %v1488 = vsel %vm1486, %v1487, %v1485
        %v1489 = vrsqrt.pop %v1375
        %v1490 = vmul.f32 %v1375, %v1489
        %vm1491 = vcmp.eq.f32.partialorder %v1375, inf
        %v1492 = vsel %vm1491, %v1375, %v1490
        %vm1493 = vcmp.eq.f32.partialorder %v1375, 0.0
        %v1494 = vand.u32 %v1375, 2147483648
        %v1495 = vsel %vm1493, %v1494, %v1492
        %v1496 = vrsqrt.pop %v1376
        %v1497 = vmul.f32 %v1376, %v1496
        %vm1498 = vcmp.eq.f32.partialorder %v1376, inf
        %v1499 = vsel %vm1498, %v1376, %v1497
        %vm1500 = vcmp.eq.f32.partialorder %v1376, 0.0
        %v1501 = vand.u32 %v1376, 2147483648
        %v1502 = vsel %vm1500, %v1501, %v1499
        %v1503 = vlog2.pop %v1383
        %v1504 = vmul.f32 %v1503, 0.6931472
        %v1505 = vlog2.pop %v1390
        %v1506 = vmul.f32 %v1505, 0.6931472
        %v1507 = vlog2.pop %v1397
        %v1508 = vmul.f32 %v1507, 0.6931472
        %v1509 = vlog2.pop %v1404
        %v1510 = vmul.f32 %v1509, 0.6931472
        %v1511 = vlog2.pop %v1411
        %v1512 = vmul.f32 %v1511, 0.6931472
        %v1513 = vlog2.pop %v1418
        %v1514 = vmul.f32 %v1513, 0.6931472
        %v1515 = vlog2.pop %v1425
        %v1516 = vmul.f32 %v1515, 0.6931472
        %v1517 = vlog2.pop %v1432
        %v1518 = vmul.f32 %v1517, 0.6931472
        %v1519 = vlog2.pop %v1439
        %v1520 = vmul.f32 %v1519, 0.6931472
        %v1521 = vlog2.pop %v1446
        %v1522 = vmul.f32 %v1521, 0.6931472
        %v1523 = vlog2.pop %v1453
        %v1524 = vmul.f32 %v1523, 0.6931472
        %v1525 = vlog2.pop %v1460
        %v1526 = vmul.f32 %v1525, 0.6931472
        %v1527 = vlog2.pop %v1467
        %v1528 = vmul.f32 %v1527, 0.6931472
        %v1529 = vlog2.pop %v1474
        %v1530 = vmul.f32 %v1529, 0.6931472
        %v1531 = vlog2.pop %v1481
        %v1532 = vmul.f32 %v1531, 0.6931472
        %v1533 = vlog2.pop %v1488
        %v1534 = vmul.f32 %v1533, 0.6931472
        %v1535 = vlog2.pop %v1495
        %v1536 = vmul.f32 %v1535, 0.6931472
        %v1537 = vlog2.pop %v1502
        %v1538 = vmul.f32 %v1537, 0.6931472
        %v1539 = vmax.f32 %v1305, 1e-07
        %v1540 = vmax.f32 %v1306, 1e-07
        %v1541 = vmax.f32 %v1307, 1e-07
        %v1542 = vmax.f32 %v1308, 1e-07
        %v1543 = vmax.f32 %v1309, 1e-07
        %v1544 = vmax.f32 %v1310, 1e-07
        %v1545 = vmax.f32 %v1311, 1e-07
        %v1546 = vmax.f32 %v1312, 1e-07
        %v1547 = vmax.f32 %v1313, 1e-07
        %v1548 = vmax.f32 %v1314, 1e-07
        %v1549 = vmax.f32 %v1315, 1e-07
        %v1550 = vmax.f32 %v1316, 1e-07
        %v1551 = vmax.f32 %v1317, 1e-07
        %v1552 = vmax.f32 %v1318, 1e-07
        %v1553 = vmax.f32 %v1319, 1e-07
        %v1554 = vmax.f32 %v1320, 1e-07
        %v1555 = vmax.f32 %v1321, 1e-07
        %v1556 = vmax.f32 %v1322, 1e-07
        %v1557 = vrsqrt.pop %v1539
        %v1558 = vmul.f32 %v1539, %v1557
        %vm1559 = vcmp.eq.f32.partialorder %v1539, inf
        %v1560 = vsel %vm1559, %v1539, %v1558
        %vm1561 = vcmp.eq.f32.partialorder %v1539, 0.0
        %v1562 = vand.u32 %v1539, 2147483648
        %v1563 = vsel %vm1561, %v1562, %v1560
        %v1564 = vrsqrt.pop %v1540
        %v1565 = vmul.f32 %v1540, %v1564
        %vm1566 = vcmp.eq.f32.partialorder %v1540, inf
        %v1567 = vsel %vm1566, %v1540, %v1565
        %vm1568 = vcmp.eq.f32.partialorder %v1540, 0.0
        %v1569 = vand.u32 %v1540, 2147483648
        %v1570 = vsel %vm1568, %v1569, %v1567
        %v1571 = vrsqrt.pop %v1541
        %v1572 = vmul.f32 %v1541, %v1571
        %vm1573 = vcmp.eq.f32.partialorder %v1541, inf
        %v1574 = vsel %vm1573, %v1541, %v1572
        %vm1575 = vcmp.eq.f32.partialorder %v1541, 0.0
        %v1576 = vand.u32 %v1541, 2147483648
        %v1577 = vsel %vm1575, %v1576, %v1574
        %v1578 = vrsqrt.pop %v1542
        %v1579 = vmul.f32 %v1542, %v1578
        %vm1580 = vcmp.eq.f32.partialorder %v1542, inf
        %v1581 = vsel %vm1580, %v1542, %v1579
        %vm1582 = vcmp.eq.f32.partialorder %v1542, 0.0
        %v1583 = vand.u32 %v1542, 2147483648
        %v1584 = vsel %vm1582, %v1583, %v1581
        %v1585 = vrsqrt.pop %v1543
        %v1586 = vmul.f32 %v1543, %v1585
        %vm1587 = vcmp.eq.f32.partialorder %v1543, inf
        %v1588 = vsel %vm1587, %v1543, %v1586
        %vm1589 = vcmp.eq.f32.partialorder %v1543, 0.0
        %v1590 = vand.u32 %v1543, 2147483648
        %v1591 = vsel %vm1589, %v1590, %v1588
        %v1592 = vrsqrt.pop %v1544
        %v1593 = vmul.f32 %v1544, %v1592
        %vm1594 = vcmp.eq.f32.partialorder %v1544, inf
        %v1595 = vsel %vm1594, %v1544, %v1593
        %vm1596 = vcmp.eq.f32.partialorder %v1544, 0.0
        %v1597 = vand.u32 %v1544, 2147483648
        %v1598 = vsel %vm1596, %v1597, %v1595
        %v1599 = vrsqrt.pop %v1545
        %v1600 = vmul.f32 %v1545, %v1599
        %vm1601 = vcmp.eq.f32.partialorder %v1545, inf
        %v1602 = vsel %vm1601, %v1545, %v1600
        %vm1603 = vcmp.eq.f32.partialorder %v1545, 0.0
        %v1604 = vand.u32 %v1545, 2147483648
        %v1605 = vsel %vm1603, %v1604, %v1602
        %v1606 = vrsqrt.pop %v1546
        %v1607 = vmul.f32 %v1546, %v1606
        %vm1608 = vcmp.eq.f32.partialorder %v1546, inf
        %v1609 = vsel %vm1608, %v1546, %v1607
        %vm1610 = vcmp.eq.f32.partialorder %v1546, 0.0
        %v1611 = vand.u32 %v1546, 2147483648
        %v1612 = vsel %vm1610, %v1611, %v1609
        %v1613 = vrsqrt.pop %v1547
        %v1614 = vmul.f32 %v1547, %v1613
        %vm1615 = vcmp.eq.f32.partialorder %v1547, inf
        %v1616 = vsel %vm1615, %v1547, %v1614
        %vm1617 = vcmp.eq.f32.partialorder %v1547, 0.0
        %v1618 = vand.u32 %v1547, 2147483648
        %v1619 = vsel %vm1617, %v1618, %v1616
        %v1620 = vrsqrt.pop %v1548
        %v1621 = vmul.f32 %v1548, %v1620
        %vm1622 = vcmp.eq.f32.partialorder %v1548, inf
        %v1623 = vsel %vm1622, %v1548, %v1621
        %vm1624 = vcmp.eq.f32.partialorder %v1548, 0.0
        %v1625 = vand.u32 %v1548, 2147483648
        %v1626 = vsel %vm1624, %v1625, %v1623
        %v1627 = vrsqrt.pop %v1549
        %v1628 = vmul.f32 %v1549, %v1627
        %vm1629 = vcmp.eq.f32.partialorder %v1549, inf
        %v1630 = vsel %vm1629, %v1549, %v1628
        %vm1631 = vcmp.eq.f32.partialorder %v1549, 0.0
        %v1632 = vand.u32 %v1549, 2147483648
        %v1633 = vsel %vm1631, %v1632, %v1630
        %v1634 = vrsqrt.pop %v1550
        %v1635 = vmul.f32 %v1550, %v1634
        %vm1636 = vcmp.eq.f32.partialorder %v1550, inf
        %v1637 = vsel %vm1636, %v1550, %v1635
        %vm1638 = vcmp.eq.f32.partialorder %v1550, 0.0
        %v1639 = vand.u32 %v1550, 2147483648
        %v1640 = vsel %vm1638, %v1639, %v1637
        %v1641 = vrsqrt.pop %v1551
        %v1642 = vmul.f32 %v1551, %v1641
        %vm1643 = vcmp.eq.f32.partialorder %v1551, inf
        %v1644 = vsel %vm1643, %v1551, %v1642
        %vm1645 = vcmp.eq.f32.partialorder %v1551, 0.0
        %v1646 = vand.u32 %v1551, 2147483648
        %v1647 = vsel %vm1645, %v1646, %v1644
        %v1648 = vrsqrt.pop %v1552
        %v1649 = vmul.f32 %v1552, %v1648
        %vm1650 = vcmp.eq.f32.partialorder %v1552, inf
        %v1651 = vsel %vm1650, %v1552, %v1649
        %vm1652 = vcmp.eq.f32.partialorder %v1552, 0.0
        %v1653 = vand.u32 %v1552, 2147483648
        %v1654 = vsel %vm1652, %v1653, %v1651
        %v1655 = vrsqrt.pop %v1553
        %v1656 = vmul.f32 %v1553, %v1655
        %vm1657 = vcmp.eq.f32.partialorder %v1553, inf
        %v1658 = vsel %vm1657, %v1553, %v1656
        %vm1659 = vcmp.eq.f32.partialorder %v1553, 0.0
        %v1660 = vand.u32 %v1553, 2147483648
        %v1661 = vsel %vm1659, %v1660, %v1658
        %v1662 = vrsqrt.pop %v1554
        %v1663 = vmul.f32 %v1554, %v1662
        %vm1664 = vcmp.eq.f32.partialorder %v1554, inf
        %v1665 = vsel %vm1664, %v1554, %v1663
        %vm1666 = vcmp.eq.f32.partialorder %v1554, 0.0
        %v1667 = vand.u32 %v1554, 2147483648
        %v1668 = vsel %vm1666, %v1667, %v1665
        %v1669 = vrsqrt.pop %v1555
        %v1670 = vmul.f32 %v1555, %v1669
        %vm1671 = vcmp.eq.f32.partialorder %v1555, inf
        %v1672 = vsel %vm1671, %v1555, %v1670
        %vm1673 = vcmp.eq.f32.partialorder %v1555, 0.0
        %v1674 = vand.u32 %v1555, 2147483648
        %v1675 = vsel %vm1673, %v1674, %v1672
        %v1676 = vrsqrt.pop %v1556
        %v1677 = vmul.f32 %v1556, %v1676
        %vm1678 = vcmp.eq.f32.partialorder %v1556, inf
        %v1679 = vsel %vm1678, %v1556, %v1677
        %vm1680 = vcmp.eq.f32.partialorder %v1556, 0.0
        %v1681 = vand.u32 %v1556, 2147483648
        %v1682 = vsel %vm1680, %v1681, %v1679
        %v1683 = vlog2.pop %v1563
        %v1684 = vmul.f32 %v1683, 0.6931472
        %v1685 = vlog2.pop %v1570
        %v1686 = vmul.f32 %v1685, 0.6931472
        %v1687 = vlog2.pop %v1577
        %v1688 = vmul.f32 %v1687, 0.6931472
        %v1689 = vlog2.pop %v1584
        %v1690 = vmul.f32 %v1689, 0.6931472
        %v1691 = vlog2.pop %v1591
        %v1692 = vmul.f32 %v1691, 0.6931472
        %v1693 = vlog2.pop %v1598
        %v1694 = vmul.f32 %v1693, 0.6931472
        %v1695 = vlog2.pop %v1605
        %v1696 = vmul.f32 %v1695, 0.6931472
        %v1697 = vlog2.pop %v1612
        %v1698 = vmul.f32 %v1697, 0.6931472
        %v1699 = vlog2.pop %v1619
        %v1700 = vmul.f32 %v1699, 0.6931472
        %v1701 = vlog2.pop %v1626
        %v1702 = vmul.f32 %v1701, 0.6931472
        %v1703 = vlog2.pop %v1633
        %v1704 = vmul.f32 %v1703, 0.6931472
        %v1705 = vlog2.pop %v1640
        %v1706 = vmul.f32 %v1705, 0.6931472
        %v1707 = vlog2.pop %v1647
        %v1708 = vmul.f32 %v1707, 0.6931472
        %v1709 = vlog2.pop %v1654
        %v1710 = vmul.f32 %v1709, 0.6931472
        %v1711 = vlog2.pop %v1661
        %v1712 = vmul.f32 %v1711, 0.6931472
        %v1713 = vlog2.pop %v1668
        %v1714 = vmul.f32 %v1713, 0.6931472
        %v1715 = vlog2.pop %v1675
        %v1716 = vmul.f32 %v1715, 0.6931472
        %v1717 = vlog2.pop %v1682
        %v1718 = vmul.f32 %v1717, 0.6931472
        %v1719 = vlaneseq
        %v1720 = vshrl.u32 %v1719, 7
        %v1721 = vadd.s32 %v1720, 8
        %v1722 = vadd.s32 %v1720, 16
        %v1723 = vadd.s32 %v1720, 24
        %v1724 = vadd.s32 %v1720, 32
        %v1725 = vadd.s32 %v1720, 40
        %v1726 = vadd.s32 %v1720, 48
        %v1727 = vadd.s32 %v1720, 56
        %v1728 = vadd.s32 %v1720, 64
        %v1729 = vstv %s652
        %v1730 = vadd.s32 %v1720, %v1729
        %v1731 = vadd.s32 %v1721, %v1729
        %v1732 = vadd.s32 %v1722, %v1729
        %v1733 = vadd.s32 %v1723, %v1729
        %v1734 = vadd.s32 %v1724, %v1729
        %v1735 = vadd.s32 %v1725, %v1729
        %v1736 = vadd.s32 %v1726, %v1729
        %v1737 = vadd.s32 %v1727, %v1729
        %v1738 = vadd.s32 %v1728, %v1729
        %vm1739 = vcmp.lt.s32.totalorder %v1730, 65
        %vm1740 = vcmp.lt.s32.totalorder %v1731, 65
        %vm1741 = vcmp.lt.s32.totalorder %v1732, 65
        %vm1742 = vcmp.lt.s32.totalorder %v1733, 65
        %vm1743 = vcmp.lt.s32.totalorder %v1734, 65
        %vm1744 = vcmp.lt.s32.totalorder %v1735, 65
        %vm1745 = vcmp.lt.s32.totalorder %v1736, 65
        %vm1746 = vcmp.lt.s32.totalorder %v1737, 65
        %vm1747 = vcmp.lt.s32.totalorder %v1738, 65
        %v1748 = vsel %vm1739, 1.0, 0.0
        %v1749 = vsel %vm1740, 1.0, 0.0
        %v1750 = vsel %vm1741, 1.0, 0.0
        %v1751 = vsel %vm1742, 1.0, 0.0
        %v1752 = vsel %vm1743, 1.0, 0.0
        %v1753 = vsel %vm1744, 1.0, 0.0
        %v1754 = vsel %vm1745, 1.0, 0.0
        %v1755 = vsel %vm1746, 1.0, 0.0
        %v1756 = vsel %vm1747, 1.0, 0.0
        %v1757 = vsub.f32 %v1446, %v1383
        %v1758 = vsub.f32 %v1453, %v1390
        %v1759 = vsub.f32 %v1460, %v1397
        %v1760 = vsub.f32 %v1467, %v1404
        %v1761 = vsub.f32 %v1474, %v1411
        %v1762 = vsub.f32 %v1481, %v1418
        %v1763 = vsub.f32 %v1488, %v1425
        %v1764 = vsub.f32 %v1495, %v1432
        %v1765 = vsub.f32 %v1502, %v1439
        %v1766 = vmul.f32 %v1757, %v1748
        %v1767 = vmul.f32 %v1758, %v1749
        %v1768 = vmul.f32 %v1759, %v1750
        %v1769 = vmul.f32 %v1760, %v1751
        %v1770 = vmul.f32 %v1761, %v1752
        %v1771 = vmul.f32 %v1762, %v1753
        %v1772 = vmul.f32 %v1763, %v1754
        %v1773 = vmul.f32 %v1764, %v1755
        %v1774 = vmul.f32 %v1765, %v1756
        %v1775 = vsub.f32 %v1626, %v1563
        %v1776 = vsub.f32 %v1633, %v1570
        %v1777 = vsub.f32 %v1640, %v1577
        %v1778 = vsub.f32 %v1647, %v1584
        %v1779 = vsub.f32 %v1654, %v1591
        %v1780 = vsub.f32 %v1661, %v1598
        %v1781 = vsub.f32 %v1668, %v1605
        %v1782 = vsub.f32 %v1675, %v1612
        %v1783 = vsub.f32 %v1682, %v1619
        %v1784 = vmul.f32 %v1775, %v1748
        %v1785 = vmul.f32 %v1776, %v1749
        %v1786 = vmul.f32 %v1777, %v1750
        %v1787 = vmul.f32 %v1778, %v1751
        %v1788 = vmul.f32 %v1779, %v1752
        %v1789 = vmul.f32 %v1780, %v1753
        %v1790 = vmul.f32 %v1781, %v1754
        %v1791 = vmul.f32 %v1782, %v1755
        %v1792 = vmul.f32 %v1783, %v1756
        %s1793 = sld [smem:[#allocation5]]
        %v1794 = vmul.f32 %v1766, %v1766
        %v1795 = vmul.f32 %v1767, %v1767
        %v1796 = vmul.f32 %v1768, %v1768
        %v1797 = vmul.f32 %v1769, %v1769
        %v1798 = vmul.f32 %v1770, %v1770
        %v1799 = vmul.f32 %v1771, %v1771
        %v1800 = vmul.f32 %v1772, %v1772
        %v1801 = vmul.f32 %v1773, %v1773
        %v1802 = vmul.f32 %v1774, %v1774
        %vm1803 = vcmask 523264
        %v1804 = vsel %vm1803, %v1794, 0.0
        %v1805 = vsel %vm1803, %v1795, 0.0
        %v1806 = vadd.f32 %v1804, %v1805
        %v1807 = vsel %vm1803, %v1796, 0.0
        %v1808 = vadd.f32 %v1806, %v1807
        %v1809 = vsel %vm1803, %v1797, 0.0
        %v1810 = vadd.f32 %v1808, %v1809
        %v1811 = vsel %vm1803, %v1798, 0.0
        %v1812 = vadd.f32 %v1810, %v1811
        %v1813 = vsel %vm1803, %v1799, 0.0
        %v1814 = vadd.f32 %v1812, %v1813
        %v1815 = vsel %vm1803, %v1800, 0.0
        %v1816 = vadd.f32 %v1814, %v1815
        %v1817 = vsel %vm1803, %v1801, 0.0
        %v1818 = vadd.f32 %v1816, %v1817
        %v1819 = vsel %vm1803, %v1802, 0.0
        %v1820 = vadd.f32 %v1818, %v1819
        %1821 = vadd.xlane.f32.xlu0 %v1820
        %v1822 = vpop.xlane.xlu0 %1821
        %v1823 = vrot.slane %v1822, 4
        %v1824 = vadd.f32 %v1822, %v1823
        %v1825 = vrot.slane %v1824, 2
        %v1826 = vadd.f32 %v1824, %v1825
        %v1827 = vrot.slane %v1826, 1
        %v1828 = vadd.f32 %v1826, %v1827
        %s1829 = vtos %v1828
        %v1830 = vmul.f32 %v1784, %v1784
        %v1831 = vmul.f32 %v1785, %v1785
        %v1832 = vmul.f32 %v1786, %v1786
        %v1833 = vmul.f32 %v1787, %v1787
        %v1834 = vmul.f32 %v1788, %v1788
        %v1835 = vmul.f32 %v1789, %v1789
        %v1836 = vmul.f32 %v1790, %v1790
        %v1837 = vmul.f32 %v1791, %v1791
        %v1838 = vmul.f32 %v1792, %v1792
        %1848 = vrot.lane.b32.xlu0 %v1830, 64
        %v1849 = vpop.permute.xlu0 %1848
        %1850 = vrot.lane.b32.xlu0 %v1831, 64
        %v1851 = vpop.permute.xlu0 %1850
        %1852 = vrot.lane.b32.xlu0 %v1832, 64
        %v1853 = vpop.permute.xlu0 %1852
        %1854 = vrot.lane.b32.xlu0 %v1833, 64
        %v1855 = vpop.permute.xlu0 %1854
        %1856 = vrot.lane.b32.xlu0 %v1834, 64
        %v1857 = vpop.permute.xlu0 %1856
        %1858 = vrot.lane.b32.xlu0 %v1835, 64
        %v1859 = vpop.permute.xlu0 %1858
        %1860 = vrot.lane.b32.xlu0 %v1836, 64
        %v1861 = vpop.permute.xlu0 %1860
        %1862 = vrot.lane.b32.xlu0 %v1837, 64
        %v1863 = vpop.permute.xlu0 %1862
        %1864 = vrot.lane.b32.xlu0 %v1838, 64
        %v1865 = vpop.permute.xlu0 %1864
        %vm1875 = vcmask 7168
        %v1876 = vsel %vm1875, %v1849, 0.0
        %v1877 = vsel %vm1875, %v1851, 0.0
        %v1878 = vadd.f32 %v1876, %v1877
        %v1879 = vsel %vm1875, %v1853, 0.0
        %v1880 = vadd.f32 %v1878, %v1879
        %v1881 = vsel %vm1875, %v1855, 0.0
        %v1882 = vadd.f32 %v1880, %v1881
        %v1883 = vsel %vm1875, %v1857, 0.0
        %v1884 = vadd.f32 %v1882, %v1883
        %v1885 = vsel %vm1875, %v1859, 0.0
        %v1886 = vadd.f32 %v1884, %v1885
        %v1887 = vsel %vm1875, %v1861, 0.0
        %v1888 = vadd.f32 %v1886, %v1887
        %v1889 = vsel %vm1875, %v1863, 0.0
        %v1890 = vadd.f32 %v1888, %v1889
        %v1891 = vsel %vm1875, %v1865, 0.0
        %v1892 = vadd.f32 %v1890, %v1891
        %1893 = vadd.xlane.f32.xlu0 %v1892
        %v1894 = vpop.xlane.xlu0 %1893
        %v1895 = vrot.slane %v1894, 4
        %v1896 = vadd.f32 %v1894, %v1895
        %v1897 = vrot.slane %v1896, 2
        %v1898 = vadd.f32 %v1896, %v1897
        %v1899 = vrot.slane %v1898, 1
        %v1900 = vadd.f32 %v1898, %v1899
        %s1901 = vtos %v1900
        %s1902 = sadd.f32 %s1829, %s1901
        %s1903 = sadd.f32 %s1793, %s1902
        %s1904 = scalar_lea.smem [#allocation5], 0
        %1905 = sst [smem:[%s1904]] %s1903
        %s1906 = sld [smem:[#allocation5 + $0x1]]
        %v1907 = vmul.f32 %v1368, %v1748
        %v1908 = vmul.f32 %v1369, %v1749
        %v1909 = vmul.f32 %v1370, %v1750
        %v1910 = vmul.f32 %v1371, %v1751
        %v1911 = vmul.f32 %v1372, %v1752
        %v1912 = vmul.f32 %v1373, %v1753
        %v1913 = vmul.f32 %v1374, %v1754
        %v1914 = vmul.f32 %v1375, %v1755
        %v1915 = vmul.f32 %v1376, %v1756
        %v1916 = vsel %vm1803, %v1907, 0.0
        %v1917 = vsel %vm1803, %v1908, 0.0
        %v1918 = vadd.f32 %v1916, %v1917
        %v1919 = vsel %vm1803, %v1909, 0.0
        %v1920 = vadd.f32 %v1918, %v1919
        %v1921 = vsel %vm1803, %v1910, 0.0
        %v1922 = vadd.f32 %v1920, %v1921
        %v1923 = vsel %vm1803, %v1911, 0.0
        %v1924 = vadd.f32 %v1922, %v1923
        %v1925 = vsel %vm1803, %v1912, 0.0
        %v1926 = vadd.f32 %v1924, %v1925
        %v1927 = vsel %vm1803, %v1913, 0.0
        %v1928 = vadd.f32 %v1926, %v1927
        %v1929 = vsel %vm1803, %v1914, 0.0
        %v1930 = vadd.f32 %v1928, %v1929
        %v1931 = vsel %vm1803, %v1915, 0.0
        %v1932 = vadd.f32 %v1930, %v1931
        %1933 = vadd.xlane.f32.xlu0 %v1932
        %v1934 = vpop.xlane.xlu0 %1933
        %v1935 = vrot.slane %v1934, 4
        %v1936 = vadd.f32 %v1934, %v1935
        %v1937 = vrot.slane %v1936, 2
        %v1938 = vadd.f32 %v1936, %v1937
        %v1939 = vrot.slane %v1938, 1
        %v1940 = vadd.f32 %v1938, %v1939
        %s1941 = vtos %v1940
        %v1942 = vmul.f32 %v1548, %v1748
        %v1943 = vmul.f32 %v1549, %v1749
        %v1944 = vmul.f32 %v1550, %v1750
        %v1945 = vmul.f32 %v1551, %v1751
        %v1946 = vmul.f32 %v1552, %v1752
        %v1947 = vmul.f32 %v1553, %v1753
        %v1948 = vmul.f32 %v1554, %v1754
        %v1949 = vmul.f32 %v1555, %v1755
        %v1950 = vmul.f32 %v1556, %v1756
        %1960 = vrot.lane.b32.xlu0 %v1942, 64
        %v1961 = vpop.permute.xlu0 %1960
        %1962 = vrot.lane.b32.xlu0 %v1943, 64
        %v1963 = vpop.permute.xlu0 %1962
        %1964 = vrot.lane.b32.xlu0 %v1944, 64
        %v1965 = vpop.permute.xlu0 %1964
        %1966 = vrot.lane.b32.xlu0 %v1945, 64
        %v1967 = vpop.permute.xlu0 %1966
        %1968 = vrot.lane.b32.xlu0 %v1946, 64
        %v1969 = vpop.permute.xlu0 %1968
        %1970 = vrot.lane.b32.xlu0 %v1947, 64
        %v1971 = vpop.permute.xlu0 %1970
        %1972 = vrot.lane.b32.xlu0 %v1948, 64
        %v1973 = vpop.permute.xlu0 %1972
        %1974 = vrot.lane.b32.xlu0 %v1949, 64
        %v1975 = vpop.permute.xlu0 %1974
        %1976 = vrot.lane.b32.xlu0 %v1950, 64
        %v1977 = vpop.permute.xlu0 %1976
        %v1987 = vsel %vm1875, %v1961, 0.0
        %v1988 = vsel %vm1875, %v1963, 0.0
        %v1989 = vadd.f32 %v1987, %v1988
        %v1990 = vsel %vm1875, %v1965, 0.0
        %v1991 = vadd.f32 %v1989, %v1990
        %v1992 = vsel %vm1875, %v1967, 0.0
        %v1993 = vadd.f32 %v1991, %v1992
        %v1994 = vsel %vm1875, %v1969, 0.0
        %v1995 = vadd.f32 %v1993, %v1994
        %v1996 = vsel %vm1875, %v1971, 0.0
        %v1997 = vadd.f32 %v1995, %v1996
        %v1998 = vsel %vm1875, %v1973, 0.0
        %v1999 = vadd.f32 %v1997, %v1998
        %v2000 = vsel %vm1875, %v1975, 0.0
        %v2001 = vadd.f32 %v1999, %v2000
        %v2002 = vsel %vm1875, %v1977, 0.0
        %v2003 = vadd.f32 %v2001, %v2002
        %2004 = vadd.xlane.f32.xlu0 %v2003
        %v2005 = vpop.xlane.xlu0 %2004
        %v2006 = vrot.slane %v2005, 4
        %v2007 = vadd.f32 %v2005, %v2006
        %v2008 = vrot.slane %v2007, 2
        %v2009 = vadd.f32 %v2007, %v2008
        %v2010 = vrot.slane %v2009, 1
        %v2011 = vadd.f32 %v2009, %v2010
        %s2012 = vtos %v2011
        %s2013 = sadd.f32 %s1941, %s2012
        %s2014 = sadd.f32 %s1906, %s2013
        %s2015 = scalar_lea.smem [#allocation5], 1
        %2016 = sst [smem:[%s2015]] %s2014
        %s2017 = sld [smem:[#allocation5 + $0x2]]
        %v2018 = vsub.f32 %v1522, %v1504
        %v2019 = vsub.f32 %v1524, %v1506
        %v2020 = vsub.f32 %v1526, %v1508
        %v2021 = vsub.f32 %v1528, %v1510
        %v2022 = vsub.f32 %v1530, %v1512
        %v2023 = vsub.f32 %v1532, %v1514
        %v2024 = vsub.f32 %v1534, %v1516
        %v2025 = vsub.f32 %v1536, %v1518
        %v2026 = vsub.f32 %v1538, %v1520
        %v2027 = vand.u32 2147483647, %v2018
        %v2028 = vand.u32 2147483647, %v2019
        %v2029 = vand.u32 2147483647, %v2020
        %v2030 = vand.u32 2147483647, %v2021
        %v2031 = vand.u32 2147483647, %v2022
        %v2032 = vand.u32 2147483647, %v2023
        %v2033 = vand.u32 2147483647, %v2024
        %v2034 = vand.u32 2147483647, %v2025
        %v2035 = vand.u32 2147483647, %v2026
        %v2036 = vmul.f32 %v2027, %v1748
        %v2037 = vmul.f32 %v2028, %v1749
        %v2038 = vmul.f32 %v2029, %v1750
        %v2039 = vmul.f32 %v2030, %v1751
        %v2040 = vmul.f32 %v2031, %v1752
        %v2041 = vmul.f32 %v2032, %v1753
        %v2042 = vmul.f32 %v2033, %v1754
        %v2043 = vmul.f32 %v2034, %v1755
        %v2044 = vmul.f32 %v2035, %v1756
        %v2045 = vsel %vm1803, %v2036, 0.0
        %v2046 = vsel %vm1803, %v2037, 0.0
        %v2047 = vadd.f32 %v2045, %v2046
        %v2048 = vsel %vm1803, %v2038, 0.0
        %v2049 = vadd.f32 %v2047, %v2048
        %v2050 = vsel %vm1803, %v2039, 0.0
        %v2051 = vadd.f32 %v2049, %v2050
        %v2052 = vsel %vm1803, %v2040, 0.0
        %v2053 = vadd.f32 %v2051, %v2052
        %v2054 = vsel %vm1803, %v2041, 0.0
        %v2055 = vadd.f32 %v2053, %v2054
        %v2056 = vsel %vm1803, %v2042, 0.0
        %v2057 = vadd.f32 %v2055, %v2056
        %v2058 = vsel %vm1803, %v2043, 0.0
        %v2059 = vadd.f32 %v2057, %v2058
        %v2060 = vsel %vm1803, %v2044, 0.0
        %v2061 = vadd.f32 %v2059, %v2060
        %2062 = vadd.xlane.f32.xlu0 %v2061
        %v2063 = vpop.xlane.xlu0 %2062
        %v2064 = vrot.slane %v2063, 4
        %v2065 = vadd.f32 %v2063, %v2064
        %v2066 = vrot.slane %v2065, 2
        %v2067 = vadd.f32 %v2065, %v2066
        %v2068 = vrot.slane %v2067, 1
        %v2069 = vadd.f32 %v2067, %v2068
        %s2070 = vtos %v2069
        %v2071 = vsub.f32 %v1702, %v1684
        %v2072 = vsub.f32 %v1704, %v1686
        %v2073 = vsub.f32 %v1706, %v1688
        %v2074 = vsub.f32 %v1708, %v1690
        %v2075 = vsub.f32 %v1710, %v1692
        %v2076 = vsub.f32 %v1712, %v1694
        %v2077 = vsub.f32 %v1714, %v1696
        %v2078 = vsub.f32 %v1716, %v1698
        %v2079 = vsub.f32 %v1718, %v1700
        %v2080 = vand.u32 2147483647, %v2071
        %v2081 = vand.u32 2147483647, %v2072
        %v2082 = vand.u32 2147483647, %v2073
        %v2083 = vand.u32 2147483647, %v2074
        %v2084 = vand.u32 2147483647, %v2075
        %v2085 = vand.u32 2147483647, %v2076
        %v2086 = vand.u32 2147483647, %v2077
        %v2087 = vand.u32 2147483647, %v2078
        %v2088 = vand.u32 2147483647, %v2079
        %v2089 = vmul.f32 %v2080, %v1748
        %v2090 = vmul.f32 %v2081, %v1749
        %v2091 = vmul.f32 %v2082, %v1750
        %v2092 = vmul.f32 %v2083, %v1751
        %v2093 = vmul.f32 %v2084, %v1752
        %v2094 = vmul.f32 %v2085, %v1753
        %v2095 = vmul.f32 %v2086, %v1754
        %v2096 = vmul.f32 %v2087, %v1755
        %v2097 = vmul.f32 %v2088, %v1756
        %2107 = vrot.lane.b32.xlu0 %v2089, 64
        %v2108 = vpop.permute.xlu0 %2107
        %2109 = vrot.lane.b32.xlu0 %v2090, 64
        %v2110 = vpop.permute.xlu0 %2109
        %2111 = vrot.lane.b32.xlu0 %v2091, 64
        %v2112 = vpop.permute.xlu0 %2111
        %2113 = vrot.lane.b32.xlu0 %v2092, 64
        %v2114 = vpop.permute.xlu0 %2113
        %2115 = vrot.lane.b32.xlu0 %v2093, 64
        %v2116 = vpop.permute.xlu0 %2115
        %2117 = vrot.lane.b32.xlu0 %v2094, 64
        %v2118 = vpop.permute.xlu0 %2117
        %2119 = vrot.lane.b32.xlu0 %v2095, 64
        %v2120 = vpop.permute.xlu0 %2119
        %2121 = vrot.lane.b32.xlu0 %v2096, 64
        %v2122 = vpop.permute.xlu0 %2121
        %2123 = vrot.lane.b32.xlu0 %v2097, 64
        %v2124 = vpop.permute.xlu0 %2123
        %v2134 = vsel %vm1875, %v2108, 0.0
        %v2135 = vsel %vm1875, %v2110, 0.0
        %v2136 = vadd.f32 %v2134, %v2135
        %v2137 = vsel %vm1875, %v2112, 0.0
        %v2138 = vadd.f32 %v2136, %v2137
        %v2139 = vsel %vm1875, %v2114, 0.0
        %v2140 = vadd.f32 %v2138, %v2139
        %v2141 = vsel %vm1875, %v2116, 0.0
        %v2142 = vadd.f32 %v2140, %v2141
        %v2143 = vsel %vm1875, %v2118, 0.0
        %v2144 = vadd.f32 %v2142, %v2143
        %v2145 = vsel %vm1875, %v2120, 0.0
        %v2146 = vadd.f32 %v2144, %v2145
        %v2147 = vsel %vm1875, %v2122, 0.0
        %v2148 = vadd.f32 %v2146, %v2147
        %v2149 = vsel %vm1875, %v2124, 0.0
        %v2150 = vadd.f32 %v2148, %v2149
        %2151 = vadd.xlane.f32.xlu0 %v2150
        %v2152 = vpop.xlane.xlu0 %2151
        %v2153 = vrot.slane %v2152, 4
        %v2154 = vadd.f32 %v2152, %v2153
        %v2155 = vrot.slane %v2154, 2
        %v2156 = vadd.f32 %v2154, %v2155
        %v2157 = vrot.slane %v2156, 1
        %v2158 = vadd.f32 %v2156, %v2157
        %s2159 = vtos %v2158
        %s2160 = sadd.f32 %s2070, %s2159
        %s2161 = sadd.f32 %s2017, %s2160
        %s2162 = scalar_lea.smem [#allocation5], 2
        %2163 = sst [smem:[%s2162]] %s2161
        %s2164 = smul.u32 %s30, 40
        %s2165 = sshra.s32 %s2164, 3
        %s2166 = sand.u32 %s2164, 7
        %s2167 = smul.addr %s2165, 4
        %s2168 = scalar_lea.vmem %s583, %s2167
        %v2169 = vld [vmem:[%s2168] sm:$0xf]
        %v2170 = vld [vmem:[%s2168 + $0x4] sm:$0xf]
        %v2171 = vld [vmem:[%s2168 + $0x8] sm:$0xf]
        %v2172 = vld [vmem:[%s2168 + $0xc] sm:$0xf]
        %v2173 = vld [vmem:[%s2168 + $0x10] sm:$0xf]
        %v2174 = vld [vmem:[%s2168 + $0x14] sm:$0xf]
        %s2175 = smul.addr %s2165, 4
        %s2176 = scalar_lea.vmem %s588, %s2175
        %v2177 = vld [vmem:[%s2176] sm:$0xf]
        %v2178 = vld [vmem:[%s2176 + $0x4] sm:$0xf]
        %v2179 = vld [vmem:[%s2176 + $0x8] sm:$0xf]
        %v2180 = vld [vmem:[%s2176 + $0xc] sm:$0xf]
        %v2181 = vld [vmem:[%s2176 + $0x10] sm:$0xf]
        %v2182 = vld [vmem:[%s2176 + $0x14] sm:$0xf]
        %v2188 = vunpack.c.l.b16 %v2169
        %v2189 = vunpack.c.l.b16 %v2170
        %v2190 = vunpack.c.l.b16 %v2171
        %v2191 = vunpack.c.l.b16 %v2172
        %v2192 = vunpack.c.l.b16 %v2173
        %v2193 = vpack.c.b16 %v2189, %v2188
        %v2194 = vpack.c.b16 %v2191, %v2190
        %v2195 = vpack.c.b16 %v2192, %v2192
        %2199 = vst.msk [vmem:[#allocation3] sm:$0xff] %vm1803, %v2193
        %2200 = vst.msk [vmem:[#allocation3 + $0x10] sm:$0xff] %vm1803, %v2194
        %vm2201 = vcmask 519168
        %2202 = vst.msk [vmem:[#allocation3 + $0x20] sm:$0xf] %vm2201, %v2195
        %v2208 = vunpack.c.l.b16 %v2177
        %v2209 = vunpack.c.l.b16 %v2178
        %v2210 = vunpack.c.l.b16 %v2179
        %v2211 = vunpack.c.l.b16 %v2180
        %v2212 = vunpack.c.l.b16 %v2181
        %v2213 = vpack.c.b16 %v2208, %v2208
        %v2214 = vpack.c.b16 %v2210, %v2209
        %v2215 = vpack.c.b16 %v2212, %v2211
        %vm2219 = vcmask 523268
        %2220 = vst.msk [vmem:[#allocation3 + $0x20] sm:$0xf0] %vm2219, %v2213
        %2221 = vst.msk [vmem:[#allocation3 + $0x30] sm:$0xff] %vm1803, %v2214
        %2222 = vst.msk [vmem:[#allocation3 + $0x40] sm:$0xff] %vm1803, %v2215
        %v2224 = vunpack.c.l.b16 %v2174
        %v2225 = vpack.c.b16 %v2224, %v2192
        %v2227 = vshrl.u32 %v2193, 16
        %v2229 = vshll.u32 %v2193, 16
        %v2231 = vrot.slane %v2229, 1
        %v2232 = vor.u32 %v2227, %v2231
        %v2234 = vshll.u32 %v2194, 16
        %v2236 = vrot.slane %v2234, 1
        %v2237 = vsel %vm751, %v2232, %v2236
        %v2238 = vshrl.u32 %v2194, 16
        %v2240 = vor.u32 %v2238, %v2236
        %v2242 = vshll.u32 %v2225, 16
        %v2244 = vrot.slane %v2242, 1
        %v2245 = vsel %vm751, %v2240, %v2244
        %v2246 = vshrl.u32 %v2225, 16
        %v2248 = vor.u32 %v2246, %v2244
        %2249 = vrot.lane.b32.xlu0 %v2237, 64
        %v2250 = vpop.permute.xlu0 %2249
        %2251 = vrot.lane.b32.xlu0 %v2245, 64
        %v2252 = vpop.permute.xlu0 %2251
        %2253 = vrot.lane.b32.xlu0 %v2248, 64
        %v2254 = vpop.permute.xlu0 %2253
        %vm2258 = vcmask 1048064
        %2259 = vst.msk [vmem:[#allocation3] sm:$0xff] %vm2258, %v2250
        %2260 = vst.msk [vmem:[#allocation3 + $0x10] sm:$0xff] %vm2258, %v2252
        %vm2261 = vcmask 1043968
        %2262 = vst.msk [vmem:[#allocation3 + $0x20] sm:$0xf] %vm2261, %v2254
        %v2264 = vunpack.c.l.b16 %v2182
        %v2265 = vpack.c.b16 %v2209, %v2208
        %v2266 = vpack.c.b16 %v2211, %v2210
        %v2267 = vpack.c.b16 %v2264, %v2212
        %v2269 = vshrl.u32 %v2265, 16
        %v2271 = vrot.slane %v2269, 4
        %v2272 = vshll.u32 %v2265, 16
        %v2274 = vrot.slane %v2272, 5
        %v2275 = vor.u32 %v2271, %v2274
        %v2277 = vshrl.u32 %v2266, 16
        %v2279 = vrot.slane %v2277, 4
        %v2280 = vshll.u32 %v2266, 16
        %v2282 = vrot.slane %v2280, 5
        %v2283 = vor.u32 %v2279, %v2282
        %v2284 = vsel %vm820, %v2275, %v2283
        %v2286 = vshrl.u32 %v2267, 16
        %v2288 = vrot.slane %v2286, 4
        %v2289 = vshll.u32 %v2267, 16
        %v2291 = vrot.slane %v2289, 5
        %v2292 = vor.u32 %v2288, %v2291
        %v2293 = vsel %vm820, %v2283, %v2292
        %2294 = vrot.lane.b32.xlu0 %v2275, 64
        %v2295 = vpop.permute.xlu0 %2294
        %2296 = vrot.lane.b32.xlu0 %v2284, 64
        %v2297 = vpop.permute.xlu0 %2296
        %2298 = vrot.lane.b32.xlu0 %v2293, 64
        %v2299 = vpop.permute.xlu0 %2298
        %vm2303 = vcmask 1048068
        %2304 = vst.msk [vmem:[#allocation3 + $0x20] sm:$0xf0] %vm2303, %v2295
        %2305 = vst.msk [vmem:[#allocation3 + $0x30] sm:$0xff] %vm2258, %v2297
        %2306 = vst.msk [vmem:[#allocation3 + $0x40] sm:$0xff] %vm2258, %v2299
        %v2307 = vrot.slane %v2193, 1
        %v2308 = vrot.slane %v2194, 1
        %v2309 = vsel %vm886, %v2307, %v2308
        %v2310 = vrot.slane %v2225, 1
        %v2311 = vsel %vm886, %v2308, %v2310
        %2315 = vst.msk [vmem:[#allocation3 + $0x8] sm:$0xff] %vm1803, %v2309
        %2316 = vst.msk [vmem:[#allocation3 + $0x18] sm:$0xff] %vm1803, %v2311
        %2317 = vst.msk [vmem:[#allocation3 + $0x28] sm:$0xf] %vm2201, %v2310
        %v2318 = vrot.slane %v2265, 5
        %v2319 = vrot.slane %v2266, 5
        %v2320 = vsel %vm918, %v2318, %v2319
        %v2321 = vrot.slane %v2267, 5
        %v2322 = vsel %vm918, %v2319, %v2321
        %2326 = vst.msk [vmem:[#allocation3 + $0x28] sm:$0xf0] %vm2219, %v2318
        %2327 = vst.msk [vmem:[#allocation3 + $0x38] sm:$0xff] %vm1803, %v2320
        %2328 = vst.msk [vmem:[#allocation3 + $0x48] sm:$0xff] %vm1803, %v2322
        %v2329 = vrot.slane %v2227, 1
        %v2330 = vrot.slane %v2229, 2
        %v2331 = vor.u32 %v2329, %v2330
        %v2332 = vrot.slane %v2238, 1
        %v2333 = vrot.slane %v2234, 2
        %v2334 = vor.u32 %v2332, %v2333
        %v2335 = vsel %vm949, %v2331, %v2334
        %v2336 = vrot.slane %v2246, 1
        %v2337 = vrot.slane %v2242, 2
        %v2338 = vor.u32 %v2336, %v2337
        %v2339 = vsel %vm949, %v2334, %v2338
        %2340 = vrot.lane.b32.xlu0 %v2335, 64
        %v2341 = vpop.permute.xlu0 %2340
        %2342 = vrot.lane.b32.xlu0 %v2339, 64
        %v2343 = vpop.permute.xlu0 %2342
        %2344 = vrot.lane.b32.xlu0 %v2338, 64
        %v2345 = vpop.permute.xlu0 %2344
        %2349 = vst.msk [vmem:[#allocation3 + $0x8] sm:$0xff] %vm2258, %v2341
        %2350 = vst.msk [vmem:[#allocation3 + $0x18] sm:$0xff] %vm2258, %v2343
        %2351 = vst.msk [vmem:[#allocation3 + $0x28] sm:$0xf] %vm2261, %v2345
        %v2352 = vrot.slane %v2269, 5
        %v2353 = vrot.slane %v2272, 6
        %v2354 = vor.u32 %v2352, %v2353
        %v2355 = vrot.slane %v2277, 5
        %v2356 = vrot.slane %v2280, 6
        %v2357 = vor.u32 %v2355, %v2356
        %v2358 = vsel %vm991, %v2354, %v2357
        %v2359 = vrot.slane %v2286, 5
        %v2360 = vrot.slane %v2289, 6
        %v2361 = vor.u32 %v2359, %v2360
        %v2362 = vsel %vm991, %v2357, %v2361
        %2363 = vrot.lane.b32.xlu0 %v2354, 64
        %v2364 = vpop.permute.xlu0 %2363
        %2365 = vrot.lane.b32.xlu0 %v2358, 64
        %v2366 = vpop.permute.xlu0 %2365
        %2367 = vrot.lane.b32.xlu0 %v2362, 64
        %v2368 = vpop.permute.xlu0 %2367
        %2372 = vst.msk [vmem:[#allocation3 + $0x28] sm:$0xf0] %vm2303, %v2364
        %2373 = vst.msk [vmem:[#allocation3 + $0x38] sm:$0xff] %vm2258, %v2366
        %2374 = vst.msk [vmem:[#allocation3 + $0x48] sm:$0xff] %vm2258, %v2368
        %v2375 = vld [vmem:[#allocation3] sm:$0xff]
        %v2376 = vld [vmem:[#allocation3 + $0x8] sm:$0xff]
        %v2377 = vld [vmem:[#allocation3 + $0x10] sm:$0xff]
        %v2378 = vld [vmem:[#allocation3 + $0x18] sm:$0xff]
        %v2379 = vld [vmem:[#allocation3 + $0x20] sm:$0xff]
        %v2380 = vld [vmem:[#allocation3 + $0x28] sm:$0xff]
        %v2381 = vld [vmem:[#allocation3 + $0x30] sm:$0xff]
        %v2382 = vld [vmem:[#allocation3 + $0x38] sm:$0xff]
        %v2383 = vld [vmem:[#allocation3 + $0x40] sm:$0xff]
        %v2384 = vld [vmem:[#allocation3 + $0x48] sm:$0xff]
        %v2385 = vld [vmem:[%s7] sm:$0xff]
        %v2386 = vld [vmem:[%s7 + $0x8] sm:$0xff]
        %v2387 = vld [vmem:[%s7 + $0x10] sm:$0xff]
        %v2388 = vld [vmem:[%s7 + $0x18] sm:$0xff]
        %v2389 = vld [vmem:[%s7 + $0x20] sm:$0xff]
        %v2390 = vld [vmem:[%s7 + $0x28] sm:$0xff]
        %v2391 = vld [vmem:[%s7 + $0x30] sm:$0xff]
        %v2392 = vld [vmem:[%s7 + $0x38] sm:$0xff]
        %v2393 = vld [vmem:[%s7 + $0x40] sm:$0xff]
        %v2394 = vld [vmem:[%s7 + $0x48] sm:$0xff]
        %v2395 = vld [vmem:[%s7 + $0x50] sm:$0xff]
        %v2396 = vld [vmem:[%s7 + $0x58] sm:$0xff]
        %v2397 = vld [vmem:[%s7 + $0x60] sm:$0xff]
        %v2398 = vld [vmem:[%s7 + $0x68] sm:$0xff]
        %v2399 = vld [vmem:[%s7 + $0x70] sm:$0xff]
        %v2400 = vld [vmem:[%s7 + $0x78] sm:$0xff]
        %v2401 = vld [vmem:[%s7 + $0x80] sm:$0xff]
        %v2402 = vld [vmem:[%s7 + $0x88] sm:$0xff]
        %v2403 = vld [vmem:[%s7 + $0x90] sm:$0xff]
        %v2404 = vld [vmem:[%s7 + $0x98] sm:$0xff]
        %v2405 = vld [vmem:[%s7 + $0xa0] sm:$0xff]
        %v2406 = vld [vmem:[%s7 + $0xa8] sm:$0xff]
        %v2407 = vld [vmem:[%s7 + $0xb0] sm:$0xff]
        %v2408 = vld [vmem:[%s7 + $0xb8] sm:$0xff]
        %v2409 = vld [vmem:[%s7 + $0xc0] sm:$0xff]
        %v2410 = vld [vmem:[%s7 + $0xc8] sm:$0xff]
        %v2411 = vld [vmem:[%s7 + $0xd0] sm:$0xff]
        %v2412 = vld [vmem:[%s7 + $0xd8] sm:$0xff]
        %v2413 = vld [vmem:[%s7 + $0xe0] sm:$0xff]
        %v2414 = vld [vmem:[%s7 + $0xe8] sm:$0xff]
        %v2415 = vld [vmem:[%s7 + $0xf0] sm:$0xff]
        %v2416 = vld [vmem:[%s7 + $0xf8] sm:$0xff]
        %v2449 = vunpack.c.l.b16 %v2385
        %v2450 = vunpack.c.h.b16 %v2385
        %v2451 = vunpack.c.l.b16 %v2386
        %v2452 = vunpack.c.h.b16 %v2386
        %v2453 = vunpack.c.l.b16 %v2387
        %v2454 = vunpack.c.h.b16 %v2387
        %v2455 = vunpack.c.l.b16 %v2388
        %v2456 = vunpack.c.h.b16 %v2388
        %v2457 = vunpack.c.l.b16 %v2389
        %v2458 = vunpack.c.h.b16 %v2389
        %v2459 = vunpack.c.l.b16 %v2390
        %v2460 = vunpack.c.h.b16 %v2390
        %v2461 = vunpack.c.l.b16 %v2391
        %v2462 = vunpack.c.h.b16 %v2391
        %v2463 = vunpack.c.l.b16 %v2392
        %v2464 = vunpack.c.h.b16 %v2392
        %v2465 = vunpack.c.l.b16 %v2393
        %v2466 = vunpack.c.h.b16 %v2393
        %v2467 = vunpack.c.l.b16 %v2394
        %v2468 = vunpack.c.h.b16 %v2394
        %v2469 = vunpack.c.l.b16 %v2395
        %v2470 = vunpack.c.h.b16 %v2395
        %v2471 = vunpack.c.l.b16 %v2396
        %v2472 = vunpack.c.h.b16 %v2396
        %v2473 = vunpack.c.l.b16 %v2397
        %v2474 = vunpack.c.h.b16 %v2397
        %v2475 = vunpack.c.l.b16 %v2398
        %v2476 = vunpack.c.h.b16 %v2398
        %v2477 = vunpack.c.l.b16 %v2399
        %v2478 = vunpack.c.h.b16 %v2399
        %v2479 = vunpack.c.l.b16 %v2400
        %v2480 = vunpack.c.h.b16 %v2400
        %v2481 = vunpack.c.l.b16 %v2401
        %v2482 = vunpack.c.h.b16 %v2401
        %v2483 = vunpack.c.l.b16 %v2402
        %v2484 = vunpack.c.h.b16 %v2402
        %v2485 = vunpack.c.l.b16 %v2403
        %v2486 = vunpack.c.h.b16 %v2403
        %v2487 = vunpack.c.l.b16 %v2404
        %v2488 = vunpack.c.h.b16 %v2404
        %v2489 = vunpack.c.l.b16 %v2405
        %v2490 = vunpack.c.h.b16 %v2405
        %v2491 = vunpack.c.l.b16 %v2406
        %v2492 = vunpack.c.h.b16 %v2406
        %v2493 = vunpack.c.l.b16 %v2407
        %v2494 = vunpack.c.h.b16 %v2407
        %v2495 = vunpack.c.l.b16 %v2408
        %v2496 = vunpack.c.h.b16 %v2408
        %v2497 = vunpack.c.l.b16 %v2409
        %v2498 = vunpack.c.h.b16 %v2409
        %v2499 = vunpack.c.l.b16 %v2410
        %v2500 = vunpack.c.h.b16 %v2410
        %v2501 = vunpack.c.l.b16 %v2411
        %v2502 = vunpack.c.h.b16 %v2411
        %v2503 = vunpack.c.l.b16 %v2412
        %v2504 = vunpack.c.h.b16 %v2412
        %v2505 = vunpack.c.l.b16 %v2413
        %v2506 = vunpack.c.h.b16 %v2413
        %v2507 = vunpack.c.l.b16 %v2414
        %v2508 = vunpack.c.h.b16 %v2414
        %v2509 = vunpack.c.l.b16 %v2415
        %v2510 = vunpack.c.h.b16 %v2415
        %v2511 = vunpack.c.l.b16 %v2416
        %v2512 = vunpack.c.h.b16 %v2416
        %v2513 = vpack.c.b16 %v2451, %v2449
        %v2514 = vpack.c.b16 %v2452, %v2450
        %v2515 = vpack.c.b16 %v2455, %v2453
        %v2516 = vpack.c.b16 %v2456, %v2454
        %v2517 = vpack.c.b16 %v2459, %v2457
        %v2518 = vpack.c.b16 %v2460, %v2458
        %v2519 = vpack.c.b16 %v2463, %v2461
        %v2520 = vpack.c.b16 %v2464, %v2462
        %v2521 = vpack.c.b16 %v2467, %v2465
        %v2522 = vpack.c.b16 %v2468, %v2466
        %v2523 = vpack.c.b16 %v2471, %v2469
        %v2524 = vpack.c.b16 %v2472, %v2470
        %v2525 = vpack.c.b16 %v2475, %v2473
        %v2526 = vpack.c.b16 %v2476, %v2474
        %v2527 = vpack.c.b16 %v2479, %v2477
        %v2528 = vpack.c.b16 %v2480, %v2478
        %v2529 = vpack.c.b16 %v2483, %v2481
        %v2530 = vpack.c.b16 %v2484, %v2482
        %v2531 = vpack.c.b16 %v2487, %v2485
        %v2532 = vpack.c.b16 %v2488, %v2486
        %v2533 = vpack.c.b16 %v2491, %v2489
        %v2534 = vpack.c.b16 %v2492, %v2490
        %v2535 = vpack.c.b16 %v2495, %v2493
        %v2536 = vpack.c.b16 %v2496, %v2494
        %v2537 = vpack.c.b16 %v2499, %v2497
        %v2538 = vpack.c.b16 %v2500, %v2498
        %v2539 = vpack.c.b16 %v2503, %v2501
        %v2540 = vpack.c.b16 %v2504, %v2502
        %v2541 = vpack.c.b16 %v2507, %v2505
        %v2542 = vpack.c.b16 %v2508, %v2506
        %v2543 = vpack.c.b16 %v2511, %v2509
        %v2544 = vpack.c.b16 %v2512, %v2510
        %2577 = vmatprep.subr.bf16.mxu0 %v2514
        %2578 = vmatpush1.bf16.msra.mxu0 %v2513
        %2579 = vmatprep.subr.bf16.mxu0 %v2516
        %2580 = vmatpush1.bf16.msra.mxu0 %v2515
        %2581 = vmatprep.subr.bf16.mxu0 %v2518
        %2582 = vmatpush1.bf16.msra.mxu0 %v2517
        %2583 = vmatprep.subr.bf16.mxu0 %v2520
        %2584 = vmatpush1.bf16.msra.mxu0 %v2519
        %2585 = vmatprep.subr.bf16.mxu0 %v2522
        %2586 = vmatpush1.bf16.msra.mxu0 %v2521
        %2587 = vmatprep.subr.bf16.mxu0 %v2524
        %2588 = vmatpush1.bf16.msra.mxu0 %v2523
        %2589 = vmatprep.subr.bf16.mxu0 %v2526
        %2590 = vmatpush1.bf16.msra.mxu0 %v2525
        %2591 = vmatprep.subr.bf16.mxu0 %v2528
        %2592 = vmatpush1.bf16.msra.mxu0 %v2527
        %2593 = vmatprep.subr.bf16.mxu0 %v2530
        %2594 = vmatpush1.bf16.msra.mxu0 %v2529
        %2595 = vmatprep.subr.bf16.mxu0 %v2532
        %2596 = vmatpush1.bf16.msra.mxu0 %v2531
        %2597 = vmatprep.subr.bf16.mxu0 %v2534
        %2598 = vmatpush1.bf16.msra.mxu0 %v2533
        %2599 = vmatprep.subr.bf16.mxu0 %v2536
        %2600 = vmatpush1.bf16.msra.mxu0 %v2535
        %2601 = vmatprep.subr.bf16.mxu0 %v2538
        %2602 = vmatpush1.bf16.msra.mxu0 %v2537
        %2603 = vmatprep.subr.bf16.mxu0 %v2540
        %2604 = vmatpush1.bf16.msra.mxu0 %v2539
        %2605 = vmatprep.subr.bf16.mxu0 %v2542
        %2606 = vmatpush1.bf16.msra.mxu0 %v2541
        %2607 = vmatprep.subr.bf16.mxu0 %v2544
        %2608 = vmatpush1.bf16.msra.mxu0 %v2543
        %2609 = vmatprep.mubr.bf16.mxu0 %v2376
        %2610 = vmatmul.mubr.bf16.gmra.mrb[0].mxu0 %v2375
        %v2611 = vpop.f32.mrb[0].mxu0
        %v2612 = vadd.f32 0.0, %v2611
        %v2613 = vpop.f32.mrb[0].mxu0
        %v2614 = vadd.f32 0.0, %v2613
        %v2615 = vpop.f32.mrb[0].mxu0
        %v2616 = vadd.f32 0.0, %v2615
        %v2617 = vpop.f32.mrb[0].mxu0
        %v2618 = vadd.f32 0.0, %v2617
        %2619 = vmatprep.mubr.bf16.mxu0 %v2378
        %2620 = vmatmul.mubr.bf16.gmra.mrb[0].mxu0 %v2377
        %v2621 = vpop.f32.mrb[0].mxu0
        %v2622 = vadd.f32 0.0, %v2621
        %v2623 = vpop.f32.mrb[0].mxu0
        %v2624 = vadd.f32 0.0, %v2623
        %v2625 = vpop.f32.mrb[0].mxu0
        %v2626 = vadd.f32 0.0, %v2625
        %v2627 = vpop.f32.mrb[0].mxu0
        %v2628 = vadd.f32 0.0, %v2627
        %2629 = vmatprep.mubr.bf16.mxu0 %v2380
        %2630 = vmatmul.mubr.bf16.gmra.mrb[0].mxu0 %v2379
        %v2631 = vpop.f32.mrb[0].mxu0
        %v2632 = vadd.f32 0.0, %v2631
        %v2633 = vpop.f32.mrb[0].mxu0
        %v2634 = vadd.f32 0.0, %v2633
        %v2635 = vpop.f32.mrb[0].mxu0
        %v2636 = vadd.f32 0.0, %v2635
        %v2637 = vpop.f32.mrb[0].mxu0
        %v2638 = vadd.f32 0.0, %v2637
        %2639 = vmatprep.mubr.bf16.mxu0 %v2382
        %2640 = vmatmul.mubr.bf16.gmra.mrb[0].mxu0 %v2381
        %v2641 = vpop.f32.mrb[0].mxu0
        %v2642 = vadd.f32 0.0, %v2641
        %v2643 = vpop.f32.mrb[0].mxu0
        %v2644 = vadd.f32 0.0, %v2643
        %v2645 = vpop.f32.mrb[0].mxu0
        %v2646 = vadd.f32 0.0, %v2645
        %v2647 = vpop.f32.mrb[0].mxu0
        %v2648 = vadd.f32 0.0, %v2647
        %2649 = vmatprep.mubr.bf16.mxu0 %v2384
        %2650 = vmatmul.mubr.bf16.gmra.mrb[0].mxu0 %v2383
        %v2651 = vpop.f32.mrb[0].mxu0
        %v2652 = vadd.f32 0.0, %v2651
        %v2653 = vpop.f32.mrb[0].mxu0
        %v2654 = vadd.f32 0.0, %v2653
        %v2655 = vpop.f32.mrb[0].mxu0
        %v2656 = vadd.f32 0.0, %v2655
        %v2657 = vpop.f32.mrb[0].mxu0
        %v2658 = vadd.f32 0.0, %v2657
        %2659 = vdwg.mxu0
        %v2660 = vsel %vm1214, %v2614, 0.0
        %v2661 = vsel %vm1214, %v2618, 0.0
        %v2662 = vsel %vm1214, %v2624, 0.0
        %v2663 = vsel %vm1214, %v2628, 0.0
        %v2664 = vsel %vm1214, %v2634, 0.0
        %v2665 = vsel %vm1214, %v2638, 0.0
        %v2666 = vsel %vm1214, %v2644, 0.0
        %v2667 = vsel %vm1214, %v2648, 0.0
        %v2668 = vsel %vm1214, %v2654, 0.0
        %v2669 = vsel %vm1214, %v2658, 0.0
        %v2670 = vmul.f32 %v2612, %v2612
        %v2671 = vmul.f32 %v2616, %v2616
        %v2672 = vmul.f32 %v2622, %v2622
        %v2673 = vmul.f32 %v2626, %v2626
        %v2674 = vmul.f32 %v2632, %v2632
        %v2675 = vmul.f32 %v2636, %v2636
        %v2676 = vmul.f32 %v2642, %v2642
        %v2677 = vmul.f32 %v2646, %v2646
        %v2678 = vmul.f32 %v2652, %v2652
        %v2679 = vmul.f32 %v2656, %v2656
        %v2680 = vmul.f32 %v2660, %v2660
        %v2681 = vmul.f32 %v2661, %v2661
        %v2682 = vmul.f32 %v2662, %v2662
        %v2683 = vmul.f32 %v2663, %v2663
        %v2684 = vmul.f32 %v2664, %v2664
        %v2685 = vmul.f32 %v2665, %v2665
        %v2686 = vmul.f32 %v2666, %v2666
        %v2687 = vmul.f32 %v2667, %v2667
        %v2688 = vmul.f32 %v2668, %v2668
        %v2689 = vmul.f32 %v2669, %v2669
        %v2690 = vadd.f32 %v2670, %v2680
        %v2691 = vadd.f32 %v2671, %v2681
        %v2692 = vadd.f32 %v2672, %v2682
        %v2693 = vadd.f32 %v2673, %v2683
        %v2694 = vadd.f32 %v2674, %v2684
        %v2695 = vadd.f32 %v2675, %v2685
        %v2696 = vadd.f32 %v2676, %v2686
        %v2697 = vadd.f32 %v2677, %v2687
        %v2698 = vadd.f32 %v2678, %v2688
        %v2699 = vadd.f32 %v2679, %v2689
        %v2700 = vmax.f32 %v2690, 1e-07
        %v2701 = vmax.f32 %v2691, 1e-07
        %v2702 = vmax.f32 %v2692, 1e-07
        %v2703 = vmax.f32 %v2693, 1e-07
        %v2704 = vmax.f32 %v2694, 1e-07
        %v2705 = vmax.f32 %v2695, 1e-07
        %v2706 = vmax.f32 %v2696, 1e-07
        %v2707 = vmax.f32 %v2697, 1e-07
        %v2708 = vmax.f32 %v2698, 1e-07
        %v2709 = vmax.f32 %v2699, 1e-07
        %v2710 = vrsqrt.pop %v2700
        %v2711 = vmul.f32 %v2700, %v2710
        %vm2712 = vcmp.eq.f32.partialorder %v2700, inf
        %v2713 = vsel %vm2712, %v2700, %v2711
        %vm2714 = vcmp.eq.f32.partialorder %v2700, 0.0
        %v2715 = vand.u32 %v2700, 2147483648
        %v2716 = vsel %vm2714, %v2715, %v2713
        %v2717 = vrsqrt.pop %v2701
        %v2718 = vmul.f32 %v2701, %v2717
        %vm2719 = vcmp.eq.f32.partialorder %v2701, inf
        %v2720 = vsel %vm2719, %v2701, %v2718
        %vm2721 = vcmp.eq.f32.partialorder %v2701, 0.0
        %v2722 = vand.u32 %v2701, 2147483648
        %v2723 = vsel %vm2721, %v2722, %v2720
        %v2724 = vrsqrt.pop %v2702
        %v2725 = vmul.f32 %v2702, %v2724
        %vm2726 = vcmp.eq.f32.partialorder %v2702, inf
        %v2727 = vsel %vm2726, %v2702, %v2725
        %vm2728 = vcmp.eq.f32.partialorder %v2702, 0.0
        %v2729 = vand.u32 %v2702, 2147483648
        %v2730 = vsel %vm2728, %v2729, %v2727
        %v2731 = vrsqrt.pop %v2703
        %v2732 = vmul.f32 %v2703, %v2731
        %vm2733 = vcmp.eq.f32.partialorder %v2703, inf
        %v2734 = vsel %vm2733, %v2703, %v2732
        %vm2735 = vcmp.eq.f32.partialorder %v2703, 0.0
        %v2736 = vand.u32 %v2703, 2147483648
        %v2737 = vsel %vm2735, %v2736, %v2734
        %v2738 = vrsqrt.pop %v2704
        %v2739 = vmul.f32 %v2704, %v2738
        %vm2740 = vcmp.eq.f32.partialorder %v2704, inf
        %v2741 = vsel %vm2740, %v2704, %v2739
        %vm2742 = vcmp.eq.f32.partialorder %v2704, 0.0
        %v2743 = vand.u32 %v2704, 2147483648
        %v2744 = vsel %vm2742, %v2743, %v2741
        %v2745 = vrsqrt.pop %v2705
        %v2746 = vmul.f32 %v2705, %v2745
        %vm2747 = vcmp.eq.f32.partialorder %v2705, inf
        %v2748 = vsel %vm2747, %v2705, %v2746
        %vm2749 = vcmp.eq.f32.partialorder %v2705, 0.0
        %v2750 = vand.u32 %v2705, 2147483648
        %v2751 = vsel %vm2749, %v2750, %v2748
        %v2752 = vrsqrt.pop %v2706
        %v2753 = vmul.f32 %v2706, %v2752
        %vm2754 = vcmp.eq.f32.partialorder %v2706, inf
        %v2755 = vsel %vm2754, %v2706, %v2753
        %vm2756 = vcmp.eq.f32.partialorder %v2706, 0.0
        %v2757 = vand.u32 %v2706, 2147483648
        %v2758 = vsel %vm2756, %v2757, %v2755
        %v2759 = vrsqrt.pop %v2707
        %v2760 = vmul.f32 %v2707, %v2759
        %vm2761 = vcmp.eq.f32.partialorder %v2707, inf
        %v2762 = vsel %vm2761, %v2707, %v2760
        %vm2763 = vcmp.eq.f32.partialorder %v2707, 0.0
        %v2764 = vand.u32 %v2707, 2147483648
        %v2765 = vsel %vm2763, %v2764, %v2762
        %v2766 = vrsqrt.pop %v2708
        %v2767 = vmul.f32 %v2708, %v2766
        %vm2768 = vcmp.eq.f32.partialorder %v2708, inf
        %v2769 = vsel %vm2768, %v2708, %v2767
        %vm2770 = vcmp.eq.f32.partialorder %v2708, 0.0
        %v2771 = vand.u32 %v2708, 2147483648
        %v2772 = vsel %vm2770, %v2771, %v2769
        %v2773 = vrsqrt.pop %v2709
        %v2774 = vmul.f32 %v2709, %v2773
        %vm2775 = vcmp.eq.f32.partialorder %v2709, inf
        %v2776 = vsel %vm2775, %v2709, %v2774
        %vm2777 = vcmp.eq.f32.partialorder %v2709, 0.0
        %v2778 = vand.u32 %v2709, 2147483648
        %v2779 = vsel %vm2777, %v2778, %v2776
        %v2780 = vlog2.pop %v2716
        %v2781 = vmul.f32 %v2780, 0.6931472
        %v2782 = vlog2.pop %v2723
        %v2783 = vmul.f32 %v2782, 0.6931472
        %v2784 = vlog2.pop %v2730
        %v2785 = vmul.f32 %v2784, 0.6931472
        %v2786 = vlog2.pop %v2737
        %v2787 = vmul.f32 %v2786, 0.6931472
        %v2788 = vlog2.pop %v2744
        %v2789 = vmul.f32 %v2788, 0.6931472
        %v2790 = vlog2.pop %v2751
        %v2791 = vmul.f32 %v2790, 0.6931472
        %v2792 = vlog2.pop %v2758
        %v2793 = vmul.f32 %v2792, 0.6931472
        %v2794 = vlog2.pop %v2765
        %v2795 = vmul.f32 %v2794, 0.6931472
        %v2796 = vlog2.pop %v2772
        %v2797 = vmul.f32 %v2796, 0.6931472
        %v2798 = vlog2.pop %v2779
        %v2799 = vmul.f32 %v2798, 0.6931472
        %v2800 = vmul.f32 %v2614, %v2614
        %v2801 = vmul.f32 %v2618, %v2618
        %v2802 = vmul.f32 %v2624, %v2624
        %v2803 = vmul.f32 %v2628, %v2628
        %v2804 = vmul.f32 %v2634, %v2634
        %v2805 = vmul.f32 %v2638, %v2638
        %v2806 = vmul.f32 %v2644, %v2644
        %v2807 = vmul.f32 %v2648, %v2648
        %v2808 = vmul.f32 %v2654, %v2654
        %v2809 = vmul.f32 %v2658, %v2658
        %v2810 = vmax.f32 %v2800, 1e-07
        %v2811 = vmax.f32 %v2801, 1e-07
        %v2812 = vmax.f32 %v2802, 1e-07
        %v2813 = vmax.f32 %v2803, 1e-07
        %v2814 = vmax.f32 %v2804, 1e-07
        %v2815 = vmax.f32 %v2805, 1e-07
        %v2816 = vmax.f32 %v2806, 1e-07
        %v2817 = vmax.f32 %v2807, 1e-07
        %v2818 = vmax.f32 %v2808, 1e-07
        %v2819 = vmax.f32 %v2809, 1e-07
        %v2820 = vrsqrt.pop %v2810
        %v2821 = vmul.f32 %v2810, %v2820
        %vm2822 = vcmp.eq.f32.partialorder %v2810, inf
        %v2823 = vsel %vm2822, %v2810, %v2821
        %vm2824 = vcmp.eq.f32.partialorder %v2810, 0.0
        %v2825 = vand.u32 %v2810, 2147483648
        %v2826 = vsel %vm2824, %v2825, %v2823
        %v2827 = vrsqrt.pop %v2811
        %v2828 = vmul.f32 %v2811, %v2827
        %vm2829 = vcmp.eq.f32.partialorder %v2811, inf
        %v2830 = vsel %vm2829, %v2811, %v2828
        %vm2831 = vcmp.eq.f32.partialorder %v2811, 0.0
        %v2832 = vand.u32 %v2811, 2147483648
        %v2833 = vsel %vm2831, %v2832, %v2830
        %v2834 = vrsqrt.pop %v2812
        %v2835 = vmul.f32 %v2812, %v2834
        %vm2836 = vcmp.eq.f32.partialorder %v2812, inf
        %v2837 = vsel %vm2836, %v2812, %v2835
        %vm2838 = vcmp.eq.f32.partialorder %v2812, 0.0
        %v2839 = vand.u32 %v2812, 2147483648
        %v2840 = vsel %vm2838, %v2839, %v2837
        %v2841 = vrsqrt.pop %v2813
        %v2842 = vmul.f32 %v2813, %v2841
        %vm2843 = vcmp.eq.f32.partialorder %v2813, inf
        %v2844 = vsel %vm2843, %v2813, %v2842
        %vm2845 = vcmp.eq.f32.partialorder %v2813, 0.0
        %v2846 = vand.u32 %v2813, 2147483648
        %v2847 = vsel %vm2845, %v2846, %v2844
        %v2848 = vrsqrt.pop %v2814
        %v2849 = vmul.f32 %v2814, %v2848
        %vm2850 = vcmp.eq.f32.partialorder %v2814, inf
        %v2851 = vsel %vm2850, %v2814, %v2849
        %vm2852 = vcmp.eq.f32.partialorder %v2814, 0.0
        %v2853 = vand.u32 %v2814, 2147483648
        %v2854 = vsel %vm2852, %v2853, %v2851
        %v2855 = vrsqrt.pop %v2815
        %v2856 = vmul.f32 %v2815, %v2855
        %vm2857 = vcmp.eq.f32.partialorder %v2815, inf
        %v2858 = vsel %vm2857, %v2815, %v2856
        %vm2859 = vcmp.eq.f32.partialorder %v2815, 0.0
        %v2860 = vand.u32 %v2815, 2147483648
        %v2861 = vsel %vm2859, %v2860, %v2858
        %v2862 = vrsqrt.pop %v2816
        %v2863 = vmul.f32 %v2816, %v2862
        %vm2864 = vcmp.eq.f32.partialorder %v2816, inf
        %v2865 = vsel %vm2864, %v2816, %v2863
        %vm2866 = vcmp.eq.f32.partialorder %v2816, 0.0
        %v2867 = vand.u32 %v2816, 2147483648
        %v2868 = vsel %vm2866, %v2867, %v2865
        %v2869 = vrsqrt.pop %v2817
        %v2870 = vmul.f32 %v2817, %v2869
        %vm2871 = vcmp.eq.f32.partialorder %v2817, inf
        %v2872 = vsel %vm2871, %v2817, %v2870
        %vm2873 = vcmp.eq.f32.partialorder %v2817, 0.0
        %v2874 = vand.u32 %v2817, 2147483648
        %v2875 = vsel %vm2873, %v2874, %v2872
        %v2876 = vrsqrt.pop %v2818
        %v2877 = vmul.f32 %v2818, %v2876
        %vm2878 = vcmp.eq.f32.partialorder %v2818, inf
        %v2879 = vsel %vm2878, %v2818, %v2877
        %vm2880 = vcmp.eq.f32.partialorder %v2818, 0.0
        %v2881 = vand.u32 %v2818, 2147483648
        %v2882 = vsel %vm2880, %v2881, %v2879
        %v2883 = vrsqrt.pop %v2819
        %v2884 = vmul.f32 %v2819, %v2883
        %vm2885 = vcmp.eq.f32.partialorder %v2819, inf
        %v2886 = vsel %vm2885, %v2819, %v2884
        %vm2887 = vcmp.eq.f32.partialorder %v2819, 0.0
        %v2888 = vand.u32 %v2819, 2147483648
        %v2889 = vsel %vm2887, %v2888, %v2886
        %v2890 = vlog2.pop %v2826
        %v2891 = vmul.f32 %v2890, 0.6931472
        %v2892 = vlog2.pop %v2833
        %v2893 = vmul.f32 %v2892, 0.6931472
        %v2894 = vlog2.pop %v2840
        %v2895 = vmul.f32 %v2894, 0.6931472
        %v2896 = vlog2.pop %v2847
        %v2897 = vmul.f32 %v2896, 0.6931472
        %v2898 = vlog2.pop %v2854
        %v2899 = vmul.f32 %v2898, 0.6931472
        %v2900 = vlog2.pop %v2861
        %v2901 = vmul.f32 %v2900, 0.6931472
        %v2902 = vlog2.pop %v2868
        %v2903 = vmul.f32 %v2902, 0.6931472
        %v2904 = vlog2.pop %v2875
        %v2905 = vmul.f32 %v2904, 0.6931472
        %v2906 = vlog2.pop %v2882
        %v2907 = vmul.f32 %v2906, 0.6931472
        %v2908 = vlog2.pop %v2889
        %v2909 = vmul.f32 %v2908, 0.6931472
        %v2910 = vstv %s2164
        %v2911 = vadd.s32 %v1720, %v2910
        %v2912 = vadd.s32 %v1721, %v2910
        %v2913 = vadd.s32 %v1722, %v2910
        %v2914 = vadd.s32 %v1723, %v2910
        %v2915 = vadd.s32 %v1724, %v2910
        %vm2916 = vcmp.lt.s32.totalorder %v2911, 33
        %vm2917 = vcmp.lt.s32.totalorder %v2912, 33
        %vm2918 = vcmp.lt.s32.totalorder %v2913, 33
        %vm2919 = vcmp.lt.s32.totalorder %v2914, 33
        %vm2920 = vcmp.lt.s32.totalorder %v2915, 33
        %v2921 = vsel %vm2916, 1.0, 0.0
        %v2922 = vsel %vm2917, 1.0, 0.0
        %v2923 = vsel %vm2918, 1.0, 0.0
        %v2924 = vsel %vm2919, 1.0, 0.0
        %v2925 = vsel %vm2920, 1.0, 0.0
        %v2926 = vsub.f32 %v2751, %v2716
        %v2927 = vsub.f32 %v2758, %v2723
        %v2928 = vsub.f32 %v2765, %v2730
        %v2929 = vsub.f32 %v2772, %v2737
        %v2930 = vsub.f32 %v2779, %v2744
        %v2931 = vmul.f32 %v2926, %v2921
        %v2932 = vmul.f32 %v2927, %v2922
        %v2933 = vmul.f32 %v2928, %v2923
        %v2934 = vmul.f32 %v2929, %v2924
        %v2935 = vmul.f32 %v2930, %v2925
        %v2936 = vsub.f32 %v2861, %v2826
        %v2937 = vsub.f32 %v2868, %v2833
        %v2938 = vsub.f32 %v2875, %v2840
        %v2939 = vsub.f32 %v2882, %v2847
        %v2940 = vsub.f32 %v2889, %v2854
        %v2941 = vmul.f32 %v2936, %v2921
        %v2942 = vmul.f32 %v2937, %v2922
        %v2943 = vmul.f32 %v2938, %v2923
        %v2944 = vmul.f32 %v2939, %v2924
        %v2945 = vmul.f32 %v2940, %v2925
        %s2946 = sld [smem:[#allocation5 + $0x3]]
        %v2947 = vmul.f32 %v2931, %v2931
        %v2948 = vmul.f32 %v2932, %v2932
        %v2949 = vmul.f32 %v2933, %v2933
        %v2950 = vmul.f32 %v2934, %v2934
        %v2951 = vmul.f32 %v2935, %v2935
        %v2952 = vadd.f32 %v2947, %v2948
        %v2953 = vadd.f32 %v2952, %v2949
        %v2954 = vadd.f32 %v2953, %v2950
        %v2955 = vadd.f32 %v2954, %v2951
        %2956 = vadd.xlane.f32.xlu0 %v2955
        %v2957 = vpop.xlane.xlu0 %2956
        %v2958 = vrot.slane %v2957, 4
        %v2959 = vadd.f32 %v2957, %v2958
        %v2960 = vrot.slane %v2959, 2
        %v2961 = vadd.f32 %v2959, %v2960
        %v2962 = vrot.slane %v2961, 1
        %v2963 = vadd.f32 %v2961, %v2962
        %s2964 = vtos %v2963
        %v2965 = vmul.f32 %v2941, %v2941
        %v2966 = vmul.f32 %v2942, %v2942
        %v2967 = vmul.f32 %v2943, %v2943
        %v2968 = vmul.f32 %v2944, %v2944
        %v2969 = vmul.f32 %v2945, %v2945
        %v2970 = vsel %vm1875, %v2965, 0.0
        %v2971 = vsel %vm1875, %v2966, 0.0
        %v2972 = vadd.f32 %v2970, %v2971
        %v2973 = vsel %vm1875, %v2967, 0.0
        %v2974 = vadd.f32 %v2972, %v2973
        %v2975 = vsel %vm1875, %v2968, 0.0
        %v2976 = vadd.f32 %v2974, %v2975
        %v2977 = vsel %vm1875, %v2969, 0.0
        %v2978 = vadd.f32 %v2976, %v2977
        %2979 = vadd.xlane.f32.xlu0 %v2978
        %v2980 = vpop.xlane.xlu0 %2979
        %v2981 = vrot.slane %v2980, 4
        %v2982 = vadd.f32 %v2980, %v2981
        %v2983 = vrot.slane %v2982, 2
        %v2984 = vadd.f32 %v2982, %v2983
        %v2985 = vrot.slane %v2984, 1
        %v2986 = vadd.f32 %v2984, %v2985
        %s2987 = vtos %v2986
        %s2988 = sadd.f32 %s2964, %s2987
        %s2989 = sadd.f32 %s2946, %s2988
        %s2990 = scalar_lea.smem [#allocation5], 3
        %2991 = sst [smem:[%s2990]] %s2989
        %s2992 = sld [smem:[#allocation5 + $0x4]]
        %v2993 = vmul.f32 %v2705, %v2921
        %v2994 = vmul.f32 %v2706, %v2922
        %v2995 = vmul.f32 %v2707, %v2923
        %v2996 = vmul.f32 %v2708, %v2924
        %v2997 = vmul.f32 %v2709, %v2925
        %v2998 = vadd.f32 %v2993, %v2994
        %v2999 = vadd.f32 %v2998, %v2995
        %v3000 = vadd.f32 %v2999, %v2996
        %v3001 = vadd.f32 %v3000, %v2997
        %3002 = vadd.xlane.f32.xlu0 %v3001
        %v3003 = vpop.xlane.xlu0 %3002
        %v3004 = vrot.slane %v3003, 4
        %v3005 = vadd.f32 %v3003, %v3004
        %v3006 = vrot.slane %v3005, 2
        %v3007 = vadd.f32 %v3005, %v3006
        %v3008 = vrot.slane %v3007, 1
        %v3009 = vadd.f32 %v3007, %v3008
        %s3010 = vtos %v3009
        %v3011 = vmul.f32 %v2815, %v2921
        %v3012 = vmul.f32 %v2816, %v2922
        %v3013 = vmul.f32 %v2817, %v2923
        %v3014 = vmul.f32 %v2818, %v2924
        %v3015 = vmul.f32 %v2819, %v2925
        %v3016 = vsel %vm1875, %v3011, 0.0
        %v3017 = vsel %vm1875, %v3012, 0.0
        %v3018 = vadd.f32 %v3016, %v3017
        %v3019 = vsel %vm1875, %v3013, 0.0
        %v3020 = vadd.f32 %v3018, %v3019
        %v3021 = vsel %vm1875, %v3014, 0.0
        %v3022 = vadd.f32 %v3020, %v3021
        %v3023 = vsel %vm1875, %v3015, 0.0
        %v3024 = vadd.f32 %v3022, %v3023
        %3025 = vadd.xlane.f32.xlu0 %v3024
        %v3026 = vpop.xlane.xlu0 %3025
        %v3027 = vrot.slane %v3026, 4
        %v3028 = vadd.f32 %v3026, %v3027
        %v3029 = vrot.slane %v3028, 2
        %v3030 = vadd.f32 %v3028, %v3029
        %v3031 = vrot.slane %v3030, 1
        %v3032 = vadd.f32 %v3030, %v3031
        %s3033 = vtos %v3032
        %s3034 = sadd.f32 %s3010, %s3033
        %s3035 = sadd.f32 %s2992, %s3034
        %s3036 = scalar_lea.smem [#allocation5], 4
        %3037 = sst [smem:[%s3036]] %s3035
        %s3038 = sld [smem:[#allocation5 + $0x5]]
        %v3039 = vsub.f32 %v2791, %v2781
        %v3040 = vsub.f32 %v2793, %v2783
        %v3041 = vsub.f32 %v2795, %v2785
        %v3042 = vsub.f32 %v2797, %v2787
        %v3043 = vsub.f32 %v2799, %v2789
        %v3044 = vand.u32 2147483647, %v3039
        %v3045 = vand.u32 2147483647, %v3040
        %v3046 = vand.u32 2147483647, %v3041
        %v3047 = vand.u32 2147483647, %v3042
        %v3048 = vand.u32 2147483647, %v3043
        %v3049 = vmul.f32 %v3044, %v2921
        %v3050 = vmul.f32 %v3045, %v2922
        %v3051 = vmul.f32 %v3046, %v2923
        %v3052 = vmul.f32 %v3047, %v2924
        %v3053 = vmul.f32 %v3048, %v2925
        %v3054 = vadd.f32 %v3049, %v3050
        %v3055 = vadd.f32 %v3054, %v3051
        %v3056 = vadd.f32 %v3055, %v3052
        %v3057 = vadd.f32 %v3056, %v3053
        %3058 = vadd.xlane.f32.xlu0 %v3057
        %v3059 = vpop.xlane.xlu0 %3058
        %v3060 = vrot.slane %v3059, 4
        %v3061 = vadd.f32 %v3059, %v3060
        %v3062 = vrot.slane %v3061, 2
        %v3063 = vadd.f32 %v3061, %v3062
        %v3064 = vrot.slane %v3063, 1
        %v3065 = vadd.f32 %v3063, %v3064
        %s3066 = vtos %v3065
        %v3067 = vsub.f32 %v2901, %v2891
        %v3068 = vsub.f32 %v2903, %v2893
        %v3069 = vsub.f32 %v2905, %v2895
        %v3070 = vsub.f32 %v2907, %v2897
        %v3071 = vsub.f32 %v2909, %v2899
        %v3072 = vand.u32 2147483647, %v3067
        %v3073 = vand.u32 2147483647, %v3068
        %v3074 = vand.u32 2147483647, %v3069
        %v3075 = vand.u32 2147483647, %v3070
        %v3076 = vand.u32 2147483647, %v3071
        %v3077 = vmul.f32 %v3072, %v2921
        %v3078 = vmul.f32 %v3073, %v2922
        %v3079 = vmul.f32 %v3074, %v2923
        %v3080 = vmul.f32 %v3075, %v2924
        %v3081 = vmul.f32 %v3076, %v2925
        %v3082 = vsel %vm1875, %v3077, 0.0
        %v3083 = vsel %vm1875, %v3078, 0.0
        %v3084 = vadd.f32 %v3082, %v3083
        %v3085 = vsel %vm1875, %v3079, 0.0
        %v3086 = vadd.f32 %v3084, %v3085
        %v3087 = vsel %vm1875, %v3080, 0.0
        %v3088 = vadd.f32 %v3086, %v3087
        %v3089 = vsel %vm1875, %v3081, 0.0
        %v3090 = vadd.f32 %v3088, %v3089
        %3091 = vadd.xlane.f32.xlu0 %v3090
        %v3092 = vpop.xlane.xlu0 %3091
        %v3093 = vrot.slane %v3092, 4
        %v3094 = vadd.f32 %v3092, %v3093
        %v3095 = vrot.slane %v3094, 2
        %v3096 = vadd.f32 %v3094, %v3095
        %v3097 = vrot.slane %v3096, 1
        %v3098 = vadd.f32 %v3096, %v3097
        %s3099 = vtos %v3098
        %s3100 = sadd.f32 %s3066, %s3099
        %s3101 = sadd.f32 %s3038, %s3100
        %s3102 = scalar_lea.smem [#allocation5], 5
        %3103 = sst [smem:[%s3102]] %s3101
        %s3104 = smul.u32 %s30, 136
        %s3105 = sshra.s32 %s3104, 3
        %s3106 = sand.u32 %s3104, 7
        %s3107 = smul.addr %s3105, 4
        %s3108 = scalar_lea.vmem %s593, %s3107
        %v3109 = vld [vmem:[%s3108] sm:$0xf]
        %v3110 = vld [vmem:[%s3108 + $0x4] sm:$0xf]
        %v3111 = vld [vmem:[%s3108 + $0x8] sm:$0xf]
        %v3112 = vld [vmem:[%s3108 + $0xc] sm:$0xf]
        %v3113 = vld [vmem:[%s3108 + $0x10] sm:$0xf]
        %v3114 = vld [vmem:[%s3108 + $0x14] sm:$0xf]
        %v3115 = vld [vmem:[%s3108 + $0x18] sm:$0xf]
        %v3116 = vld [vmem:[%s3108 + $0x1c] sm:$0xf]
        %v3117 = vld [vmem:[%s3108 + $0x20] sm:$0xf]
        %v3118 = vld [vmem:[%s3108 + $0x24] sm:$0xf]
        %v3119 = vld [vmem:[%s3108 + $0x28] sm:$0xf]
        %v3120 = vld [vmem:[%s3108 + $0x2c] sm:$0xf]
        %v3121 = vld [vmem:[%s3108 + $0x30] sm:$0xf]
        %v3122 = vld [vmem:[%s3108 + $0x34] sm:$0xf]
        %v3123 = vld [vmem:[%s3108 + $0x38] sm:$0xf]
        %v3124 = vld [vmem:[%s3108 + $0x3c] sm:$0xf]
        %v3125 = vld [vmem:[%s3108 + $0x40] sm:$0xf]
        %v3126 = vld [vmem:[%s3108 + $0x44] sm:$0xf]
        %s3127 = smul.addr %s3105, 4
        %s3128 = scalar_lea.vmem %s598, %s3127
        %v3129 = vld [vmem:[%s3128] sm:$0xf]
        %v3130 = vld [vmem:[%s3128 + $0x4] sm:$0xf]
        %v3131 = vld [vmem:[%s3128 + $0x8] sm:$0xf]
        %v3132 = vld [vmem:[%s3128 + $0xc] sm:$0xf]
        %v3133 = vld [vmem:[%s3128 + $0x10] sm:$0xf]
        %v3134 = vld [vmem:[%s3128 + $0x14] sm:$0xf]
        %v3135 = vld [vmem:[%s3128 + $0x18] sm:$0xf]
        %v3136 = vld [vmem:[%s3128 + $0x1c] sm:$0xf]
        %v3137 = vld [vmem:[%s3128 + $0x20] sm:$0xf]
        %v3138 = vld [vmem:[%s3128 + $0x24] sm:$0xf]
        %v3139 = vld [vmem:[%s3128 + $0x28] sm:$0xf]
        %v3140 = vld [vmem:[%s3128 + $0x2c] sm:$0xf]
        %v3141 = vld [vmem:[%s3128 + $0x30] sm:$0xf]
        %v3142 = vld [vmem:[%s3128 + $0x34] sm:$0xf]
        %v3143 = vld [vmem:[%s3128 + $0x38] sm:$0xf]
        %v3144 = vld [vmem:[%s3128 + $0x3c] sm:$0xf]
        %v3145 = vld [vmem:[%s3128 + $0x40] sm:$0xf]
        %v3146 = vld [vmem:[%s3128 + $0x44] sm:$0xf]
        %v3164 = vunpack.c.l.b16 %v3109
        %v3165 = vunpack.c.l.b16 %v3110
        %v3166 = vunpack.c.l.b16 %v3111
        %v3167 = vunpack.c.l.b16 %v3112
        %v3168 = vunpack.c.l.b16 %v3113
        %v3169 = vunpack.c.l.b16 %v3114
        %v3170 = vunpack.c.l.b16 %v3115
        %v3171 = vunpack.c.l.b16 %v3116
        %v3172 = vunpack.c.l.b16 %v3117
        %v3173 = vunpack.c.l.b16 %v3118
        %v3174 = vunpack.c.l.b16 %v3119
        %v3175 = vunpack.c.l.b16 %v3120
        %v3176 = vunpack.c.l.b16 %v3121
        %v3177 = vunpack.c.l.b16 %v3122
        %v3178 = vunpack.c.l.b16 %v3123
        %v3179 = vunpack.c.l.b16 %v3124
        %v3180 = vunpack.c.l.b16 %v3125
        %v3181 = vpack.c.b16 %v3165, %v3164
        %v3182 = vpack.c.b16 %v3167, %v3166
        %v3183 = vpack.c.b16 %v3169, %v3168
        %v3184 = vpack.c.b16 %v3171, %v3170
        %v3185 = vpack.c.b16 %v3173, %v3172
        %v3186 = vpack.c.b16 %v3175, %v3174
        %v3187 = vpack.c.b16 %v3177, %v3176
        %v3188 = vpack.c.b16 %v3179, %v3178
        %v3189 = vpack.c.b16 %v3180, %v3180
        %vm3199 = vcmask 130048
        %3200 = vst.msk [vmem:[#allocation4] sm:$0xff] %vm3199, %v3181
        %3201 = vst.msk [vmem:[#allocation4 + $0x8] sm:$0xff] %vm3199, %v3182
        %3202 = vst.msk [vmem:[#allocation4 + $0x10] sm:$0xff] %vm3199, %v3183
        %3203 = vst.msk [vmem:[#allocation4 + $0x18] sm:$0xff] %vm3199, %v3184
        %3204 = vst.msk [vmem:[#allocation4 + $0x20] sm:$0xff] %vm3199, %v3185
        %3205 = vst.msk [vmem:[#allocation4 + $0x28] sm:$0xff] %vm3199, %v3186
        %3206 = vst.msk [vmem:[#allocation4 + $0x30] sm:$0xff] %vm3199, %v3187
        %3207 = vst.msk [vmem:[#allocation4 + $0x38] sm:$0xff] %vm3199, %v3188
        %vm3208 = vcmask 125952
        %3209 = vst.msk [vmem:[#allocation4 + $0x40] sm:$0xf] %vm3208, %v3189
        %v3227 = vunpack.c.l.b16 %v3129
        %v3228 = vunpack.c.l.b16 %v3130
        %v3229 = vunpack.c.l.b16 %v3131
        %v3230 = vunpack.c.l.b16 %v3132
        %v3231 = vunpack.c.l.b16 %v3133
        %v3232 = vunpack.c.l.b16 %v3134
        %v3233 = vunpack.c.l.b16 %v3135
        %v3234 = vunpack.c.l.b16 %v3136
        %v3235 = vunpack.c.l.b16 %v3137
        %v3236 = vunpack.c.l.b16 %v3138
        %v3237 = vunpack.c.l.b16 %v3139
        %v3238 = vunpack.c.l.b16 %v3140
        %v3239 = vunpack.c.l.b16 %v3141
        %v3240 = vunpack.c.l.b16 %v3142
        %v3241 = vunpack.c.l.b16 %v3143
        %v3242 = vunpack.c.l.b16 %v3144
        %v3243 = vunpack.c.l.b16 %v3145
        %v3244 = vpack.c.b16 %v3227, %v3227
        %v3245 = vpack.c.b16 %v3229, %v3228
        %v3246 = vpack.c.b16 %v3231, %v3230
        %v3247 = vpack.c.b16 %v3233, %v3232
        %v3248 = vpack.c.b16 %v3235, %v3234
        %v3249 = vpack.c.b16 %v3237, %v3236
        %v3250 = vpack.c.b16 %v3239, %v3238
        %v3251 = vpack.c.b16 %v3241, %v3240
        %v3252 = vpack.c.b16 %v3243, %v3242
        %vm3262 = vcmask 130052
        %3263 = vst.msk [vmem:[#allocation4 + $0x40] sm:$0xf0] %vm3262, %v3244
        %3264 = vst.msk [vmem:[#allocation4 + $0x48] sm:$0xff] %vm3199, %v3245
        %3265 = vst.msk [vmem:[#allocation4 + $0x50] sm:$0xff] %vm3199, %v3246
        %3266 = vst.msk [vmem:[#allocation4 + $0x58] sm:$0xff] %vm3199, %v3247
        %3267 = vst.msk [vmem:[#allocation4 + $0x60] sm:$0xff] %vm3199, %v3248
        %3268 = vst.msk [vmem:[#allocation4 + $0x68] sm:$0xff] %vm3199, %v3249
        %3269 = vst.msk [vmem:[#allocation4 + $0x70] sm:$0xff] %vm3199, %v3250
        %3270 = vst.msk [vmem:[#allocation4 + $0x78] sm:$0xff] %vm3199, %v3251
        %3271 = vst.msk [vmem:[#allocation4 + $0x80] sm:$0xff] %vm3199, %v3252
        %v3273 = vunpack.c.l.b16 %v3126
        %v3274 = vpack.c.b16 %v3273, %v3180
        %v3276 = vshrl.u32 %v3181, 16
        %v3278 = vshll.u32 %v3181, 16
        %v3280 = vrot.slane %v3278, 1
        %v3281 = vor.u32 %v3276, %v3280
        %v3283 = vshll.u32 %v3182, 16
        %v3285 = vrot.slane %v3283, 1
        %v3286 = vsel %vm751, %v3281, %v3285
        %v3287 = vshrl.u32 %v3182, 16
        %v3289 = vor.u32 %v3287, %v3285
        %v3291 = vshll.u32 %v3183, 16
        %v3293 = vrot.slane %v3291, 1
        %v3294 = vsel %vm751, %v3289, %v3293
        %v3295 = vshrl.u32 %v3183, 16
        %v3297 = vor.u32 %v3295, %v3293
        %v3299 = vshll.u32 %v3184, 16
        %v3301 = vrot.slane %v3299, 1
        %v3302 = vsel %vm751, %v3297, %v3301
        %v3303 = vshrl.u32 %v3184, 16
        %v3305 = vor.u32 %v3303, %v3301
        %v3307 = vshll.u32 %v3185, 16
        %v3309 = vrot.slane %v3307, 1
        %v3310 = vsel %vm751, %v3305, %v3309
        %v3311 = vshrl.u32 %v3185, 16
        %v3313 = vor.u32 %v3311, %v3309
        %v3315 = vshll.u32 %v3186, 16
        %v3317 = vrot.slane %v3315, 1
        %v3318 = vsel %vm751, %v3313, %v3317
        %v3319 = vshrl.u32 %v3186, 16
        %v3321 = vor.u32 %v3319, %v3317
        %v3323 = vshll.u32 %v3187, 16
        %v3325 = vrot.slane %v3323, 1
        %v3326 = vsel %vm751, %v3321, %v3325
        %v3327 = vshrl.u32 %v3187, 16
        %v3329 = vor.u32 %v3327, %v3325
        %v3331 = vshll.u32 %v3188, 16
        %v3333 = vrot.slane %v3331, 1
        %v3334 = vsel %vm751, %v3329, %v3333
        %v3335 = vshrl.u32 %v3188, 16
        %v3337 = vor.u32 %v3335, %v3333
        %v3339 = vshll.u32 %v3274, 16
        %v3341 = vrot.slane %v3339, 1
        %v3342 = vsel %vm751, %v3337, %v3341
        %v3343 = vshrl.u32 %v3274, 16
        %v3345 = vor.u32 %v3343, %v3341
        %3346 = vrot.lane.b32.xlu0 %v3286, 16
        %v3347 = vpop.permute.xlu0 %3346
        %3348 = vrot.lane.b32.xlu0 %v3294, 16
        %v3349 = vpop.permute.xlu0 %3348
        %3350 = vrot.lane.b32.xlu0 %v3302, 16
        %v3351 = vpop.permute.xlu0 %3350
        %3352 = vrot.lane.b32.xlu0 %v3310, 16
        %v3353 = vpop.permute.xlu0 %3352
        %3354 = vrot.lane.b32.xlu0 %v3318, 16
        %v3355 = vpop.permute.xlu0 %3354
        %3356 = vrot.lane.b32.xlu0 %v3326, 16
        %v3357 = vpop.permute.xlu0 %3356
        %3358 = vrot.lane.b32.xlu0 %v3334, 16
        %v3359 = vpop.permute.xlu0 %3358
        %3360 = vrot.lane.b32.xlu0 %v3342, 16
        %v3361 = vpop.permute.xlu0 %3360
        %3362 = vrot.lane.b32.xlu0 %v3345, 16
        %v3363 = vpop.permute.xlu0 %3362
        %vm3373 = vcmask 261248
        %3374 = vst.msk [vmem:[#allocation4] sm:$0xff] %vm3373, %v3347
        %3375 = vst.msk [vmem:[#allocation4 + $0x8] sm:$0xff] %vm3373, %v3349
        %3376 = vst.msk [vmem:[#allocation4 + $0x10] sm:$0xff] %vm3373, %v3351
        %3377 = vst.msk [vmem:[#allocation4 + $0x18] sm:$0xff] %vm3373, %v3353
        %3378 = vst.msk [vmem:[#allocation4 + $0x20] sm:$0xff] %vm3373, %v3355
        %3379 = vst.msk [vmem:[#allocation4 + $0x28] sm:$0xff] %vm3373, %v3357
        %3380 = vst.msk [vmem:[#allocation4 + $0x30] sm:$0xff] %vm3373, %v3359
        %3381 = vst.msk [vmem:[#allocation4 + $0x38] sm:$0xff] %vm3373, %v3361
        %vm3382 = vcmask 257152
        %3383 = vst.msk [vmem:[#allocation4 + $0x40] sm:$0xf] %vm3382, %v3363
        %v3385 = vunpack.c.l.b16 %v3146
        %v3386 = vpack.c.b16 %v3228, %v3227
        %v3387 = vpack.c.b16 %v3230, %v3229
        %v3388 = vpack.c.b16 %v3232, %v3231
        %v3389 = vpack.c.b16 %v3234, %v3233
        %v3390 = vpack.c.b16 %v3236, %v3235
        %v3391 = vpack.c.b16 %v3238, %v3237
        %v3392 = vpack.c.b16 %v3240, %v3239
        %v3393 = vpack.c.b16 %v3242, %v3241
        %v3394 = vpack.c.b16 %v3385, %v3243
        %v3396 = vshrl.u32 %v3386, 16
        %v3398 = vrot.slane %v3396, 4
        %v3399 = vshll.u32 %v3386, 16
        %v3401 = vrot.slane %v3399, 5
        %v3402 = vor.u32 %v3398, %v3401
        %v3404 = vshrl.u32 %v3387, 16
        %v3406 = vrot.slane %v3404, 4
        %v3407 = vshll.u32 %v3387, 16
        %v3409 = vrot.slane %v3407, 5
        %v3410 = vor.u32 %v3406, %v3409
        %v3411 = vsel %vm820, %v3402, %v3410
        %v3413 = vshrl.u32 %v3388, 16
        %v3415 = vrot.slane %v3413, 4
        %v3416 = vshll.u32 %v3388, 16
        %v3418 = vrot.slane %v3416, 5
        %v3419 = vor.u32 %v3415, %v3418
        %v3420 = vsel %vm820, %v3410, %v3419
        %v3422 = vshrl.u32 %v3389, 16
        %v3424 = vrot.slane %v3422, 4
        %v3425 = vshll.u32 %v3389, 16
        %v3427 = vrot.slane %v3425, 5
        %v3428 = vor.u32 %v3424, %v3427
        %v3429 = vsel %vm820, %v3419, %v3428
        %v3431 = vshrl.u32 %v3390, 16
        %v3433 = vrot.slane %v3431, 4
        %v3434 = vshll.u32 %v3390, 16
        %v3436 = vrot.slane %v3434, 5
        %v3437 = vor.u32 %v3433, %v3436
        %v3438 = vsel %vm820, %v3428, %v3437
        %v3440 = vshrl.u32 %v3391, 16
        %v3442 = vrot.slane %v3440, 4
        %v3443 = vshll.u32 %v3391, 16
        %v3445 = vrot.slane %v3443, 5
        %v3446 = vor.u32 %v3442, %v3445
        %v3447 = vsel %vm820, %v3437, %v3446
        %v3449 = vshrl.u32 %v3392, 16
        %v3451 = vrot.slane %v3449, 4
        %v3452 = vshll.u32 %v3392, 16
        %v3454 = vrot.slane %v3452, 5
        %v3455 = vor.u32 %v3451, %v3454
        %v3456 = vsel %vm820, %v3446, %v3455
        %v3458 = vshrl.u32 %v3393, 16
        %v3460 = vrot.slane %v3458, 4
        %v3461 = vshll.u32 %v3393, 16
        %v3463 = vrot.slane %v3461, 5
        %v3464 = vor.u32 %v3460, %v3463
        %v3465 = vsel %vm820, %v3455, %v3464
        %v3467 = vshrl.u32 %v3394, 16
        %v3469 = vrot.slane %v3467, 4
        %v3470 = vshll.u32 %v3394, 16
        %v3472 = vrot.slane %v3470, 5
        %v3473 = vor.u32 %v3469, %v3472
        %v3474 = vsel %vm820, %v3464, %v3473
        %3475 = vrot.lane.b32.xlu0 %v3402, 16
        %v3476 = vpop.permute.xlu0 %3475
        %3477 = vrot.lane.b32.xlu0 %v3411, 16
        %v3478 = vpop.permute.xlu0 %3477
        %3479 = vrot.lane.b32.xlu0 %v3420, 16
        %v3480 = vpop.permute.xlu0 %3479
        %3481 = vrot.lane.b32.xlu0 %v3429, 16
        %v3482 = vpop.permute.xlu0 %3481
        %3483 = vrot.lane.b32.xlu0 %v3438, 16
        %v3484 = vpop.permute.xlu0 %3483
        %3485 = vrot.lane.b32.xlu0 %v3447, 16
        %v3486 = vpop.permute.xlu0 %3485
        %3487 = vrot.lane.b32.xlu0 %v3456, 16
        %v3488 = vpop.permute.xlu0 %3487
        %3489 = vrot.lane.b32.xlu0 %v3465, 16
        %v3490 = vpop.permute.xlu0 %3489
        %3491 = vrot.lane.b32.xlu0 %v3474, 16
        %v3492 = vpop.permute.xlu0 %3491
        %vm3502 = vcmask 261252
        %3503 = vst.msk [vmem:[#allocation4 + $0x40] sm:$0xf0] %vm3502, %v3476
        %3504 = vst.msk [vmem:[#allocation4 + $0x48] sm:$0xff] %vm3373, %v3478
        %3505 = vst.msk [vmem:[#allocation4 + $0x50] sm:$0xff] %vm3373, %v3480
        %3506 = vst.msk [vmem:[#allocation4 + $0x58] sm:$0xff] %vm3373, %v3482
        %3507 = vst.msk [vmem:[#allocation4 + $0x60] sm:$0xff] %vm3373, %v3484
        %3508 = vst.msk [vmem:[#allocation4 + $0x68] sm:$0xff] %vm3373, %v3486
        %3509 = vst.msk [vmem:[#allocation4 + $0x70] sm:$0xff] %vm3373, %v3488
        %3510 = vst.msk [vmem:[#allocation4 + $0x78] sm:$0xff] %vm3373, %v3490
        %3511 = vst.msk [vmem:[#allocation4 + $0x80] sm:$0xff] %vm3373, %v3492
        %v3512 = vrot.slane %v3181, 1
        %v3513 = vrot.slane %v3182, 1
        %v3514 = vsel %vm886, %v3512, %v3513
        %v3515 = vrot.slane %v3183, 1
        %v3516 = vsel %vm886, %v3513, %v3515
        %v3517 = vrot.slane %v3184, 1
        %v3518 = vsel %vm886, %v3515, %v3517
        %v3519 = vrot.slane %v3185, 1
        %v3520 = vsel %vm886, %v3517, %v3519
        %v3521 = vrot.slane %v3186, 1
        %v3522 = vsel %vm886, %v3519, %v3521
        %v3523 = vrot.slane %v3187, 1
        %v3524 = vsel %vm886, %v3521, %v3523
        %v3525 = vrot.slane %v3188, 1
        %v3526 = vsel %vm886, %v3523, %v3525
        %v3527 = vrot.slane %v3274, 1
        %v3528 = vsel %vm886, %v3525, %v3527
        %3529 = vrot.lane.b32.xlu0 %v3514, 32
        %v3530 = vpop.permute.xlu0 %3529
        %3531 = vrot.lane.b32.xlu0 %v3516, 32
        %v3532 = vpop.permute.xlu0 %3531
        %3533 = vrot.lane.b32.xlu0 %v3518, 32
        %v3534 = vpop.permute.xlu0 %3533
        %3535 = vrot.lane.b32.xlu0 %v3520, 32
        %v3536 = vpop.permute.xlu0 %3535
        %3537 = vrot.lane.b32.xlu0 %v3522, 32
        %v3538 = vpop.permute.xlu0 %3537
        %3539 = vrot.lane.b32.xlu0 %v3524, 32
        %v3540 = vpop.permute.xlu0 %3539
        %3541 = vrot.lane.b32.xlu0 %v3526, 32
        %v3542 = vpop.permute.xlu0 %3541
        %3543 = vrot.lane.b32.xlu0 %v3528, 32
        %v3544 = vpop.permute.xlu0 %3543
        %3545 = vrot.lane.b32.xlu0 %v3527, 32
        %v3546 = vpop.permute.xlu0 %3545
        %vm3556 = vcmask 392448
        %3557 = vst.msk [vmem:[#allocation4] sm:$0xff] %vm3556, %v3530
        %3558 = vst.msk [vmem:[#allocation4 + $0x8] sm:$0xff] %vm3556, %v3532
        %3559 = vst.msk [vmem:[#allocation4 + $0x10] sm:$0xff] %vm3556, %v3534
        %3560 = vst.msk [vmem:[#allocation4 + $0x18] sm:$0xff] %vm3556, %v3536
        %3561 = vst.msk [vmem:[#allocation4 + $0x20] sm:$0xff] %vm3556, %v3538
        %3562 = vst.msk [vmem:[#allocation4 + $0x28] sm:$0xff] %vm3556, %v3540
        %3563 = vst.msk [vmem:[#allocation4 + $0x30] sm:$0xff] %vm3556, %v3542
        %3564 = vst.msk [vmem:[#allocation4 + $0x38] sm:$0xff] %vm3556, %v3544
        %vm3565 = vcmask 388352
        %3566 = vst.msk [vmem:[#allocation4 + $0x40] sm:$0xf] %vm3565, %v3546
        %v3567 = vrot.slane %v3386, 5
        %v3568 = vrot.slane %v3387, 5
        %v3569 = vsel %vm918, %v3567, %v3568
        %v3570 = vrot.slane %v3388, 5
        %v3571 = vsel %vm918, %v3568, %v3570
        %v3572 = vrot.slane %v3389, 5
        %v3573 = vsel %vm918, %v3570, %v3572
        %v3574 = vrot.slane %v3390, 5
        %v3575 = vsel %vm918, %v3572, %v3574
        %v3576 = vrot.slane %v3391, 5
        %v3577 = vsel %vm918, %v3574, %v3576
        %v3578 = vrot.slane %v3392, 5
        %v3579 = vsel %vm918, %v3576, %v3578
        %v3580 = vrot.slane %v3393, 5
        %v3581 = vsel %vm918, %v3578, %v3580
        %v3582 = vrot.slane %v3394, 5
        %v3583 = vsel %vm918, %v3580, %v3582
        %3584 = vrot.lane.b32.xlu0 %v3567, 32
        %v3585 = vpop.permute.xlu0 %3584
        %3586 = vrot.lane.b32.xlu0 %v3569, 32
        %v3587 = vpop.permute.xlu0 %3586
        %3588 = vrot.lane.b32.xlu0 %v3571, 32
        %v3589 = vpop.permute.xlu0 %3588
        %3590 = vrot.lane.b32.xlu0 %v3573, 32
        %v3591 = vpop.permute.xlu0 %3590
        %3592 = vrot.lane.b32.xlu0 %v3575, 32
        %v3593 = vpop.permute.xlu0 %3592
        %3594 = vrot.lane.b32.xlu0 %v3577, 32
        %v3595 = vpop.permute.xlu0 %3594
        %3596 = vrot.lane.b32.xlu0 %v3579, 32
        %v3597 = vpop.permute.xlu0 %3596
        %3598 = vrot.lane.b32.xlu0 %v3581, 32
        %v3599 = vpop.permute.xlu0 %3598
        %3600 = vrot.lane.b32.xlu0 %v3583, 32
        %v3601 = vpop.permute.xlu0 %3600
        %vm3611 = vcmask 392452
        %3612 = vst.msk [vmem:[#allocation4 + $0x40] sm:$0xf0] %vm3611, %v3585
        %3613 = vst.msk [vmem:[#allocation4 + $0x48] sm:$0xff] %vm3556, %v3587
        %3614 = vst.msk [vmem:[#allocation4 + $0x50] sm:$0xff] %vm3556, %v3589
        %3615 = vst.msk [vmem:[#allocation4 + $0x58] sm:$0xff] %vm3556, %v3591
        %3616 = vst.msk [vmem:[#allocation4 + $0x60] sm:$0xff] %vm3556, %v3593
        %3617 = vst.msk [vmem:[#allocation4 + $0x68] sm:$0xff] %vm3556, %v3595
        %3618 = vst.msk [vmem:[#allocation4 + $0x70] sm:$0xff] %vm3556, %v3597
        %3619 = vst.msk [vmem:[#allocation4 + $0x78] sm:$0xff] %vm3556, %v3599
        %3620 = vst.msk [vmem:[#allocation4 + $0x80] sm:$0xff] %vm3556, %v3601
        %v3621 = vrot.slane %v3276, 1
        %v3622 = vrot.slane %v3278, 2
        %v3623 = vor.u32 %v3621, %v3622
        %v3624 = vrot.slane %v3287, 1
        %v3625 = vrot.slane %v3283, 2
        %v3626 = vor.u32 %v3624, %v3625
        %v3627 = vsel %vm949, %v3623, %v3626
        %v3628 = vrot.slane %v3295, 1
        %v3629 = vrot.slane %v3291, 2
        %v3630 = vor.u32 %v3628, %v3629
        %v3631 = vsel %vm949, %v3626, %v3630
        %v3632 = vrot.slane %v3303, 1
        %v3633 = vrot.slane %v3299, 2
        %v3634 = vor.u32 %v3632, %v3633
        %v3635 = vsel %vm949, %v3630, %v3634
        %v3636 = vrot.slane %v3311, 1
        %v3637 = vrot.slane %v3307, 2
        %v3638 = vor.u32 %v3636, %v3637
        %v3639 = vsel %vm949, %v3634, %v3638
        %v3640 = vrot.slane %v3319, 1
        %v3641 = vrot.slane %v3315, 2
        %v3642 = vor.u32 %v3640, %v3641
        %v3643 = vsel %vm949, %v3638, %v3642
        %v3644 = vrot.slane %v3327, 1
        %v3645 = vrot.slane %v3323, 2
        %v3646 = vor.u32 %v3644, %v3645
        %v3647 = vsel %vm949, %v3642, %v3646
        %v3648 = vrot.slane %v3335, 1
        %v3649 = vrot.slane %v3331, 2
        %v3650 = vor.u32 %v3648, %v3649
        %v3651 = vsel %vm949, %v3646, %v3650
        %v3652 = vrot.slane %v3343, 1
        %v3653 = vrot.slane %v3339, 2
        %v3654 = vor.u32 %v3652, %v3653
        %v3655 = vsel %vm949, %v3650, %v3654
        %3656 = vrot.lane.b32.xlu0 %v3627, 48
        %v3657 = vpop.permute.xlu0 %3656
        %3658 = vrot.lane.b32.xlu0 %v3631, 48
        %v3659 = vpop.permute.xlu0 %3658
        %3660 = vrot.lane.b32.xlu0 %v3635, 48
        %v3661 = vpop.permute.xlu0 %3660
        %3662 = vrot.lane.b32.xlu0 %v3639, 48
        %v3663 = vpop.permute.xlu0 %3662
        %3664 = vrot.lane.b32.xlu0 %v3643, 48
        %v3665 = vpop.permute.xlu0 %3664
        %3666 = vrot.lane.b32.xlu0 %v3647, 48
        %v3667 = vpop.permute.xlu0 %3666
        %3668 = vrot.lane.b32.xlu0 %v3651, 48
        %v3669 = vpop.permute.xlu0 %3668
        %3670 = vrot.lane.b32.xlu0 %v3655, 48
        %v3671 = vpop.permute.xlu0 %3670
        %3672 = vrot.lane.b32.xlu0 %v3654, 48
        %v3673 = vpop.permute.xlu0 %3672
        %vm3683 = vcmask 523648
        %3684 = vst.msk [vmem:[#allocation4] sm:$0xff] %vm3683, %v3657
        %3685 = vst.msk [vmem:[#allocation4 + $0x8] sm:$0xff] %vm3683, %v3659
        %3686 = vst.msk [vmem:[#allocation4 + $0x10] sm:$0xff] %vm3683, %v3661
        %3687 = vst.msk [vmem:[#allocation4 + $0x18] sm:$0xff] %vm3683, %v3663
        %3688 = vst.msk [vmem:[#allocation4 + $0x20] sm:$0xff] %vm3683, %v3665
        %3689 = vst.msk [vmem:[#allocation4 + $0x28] sm:$0xff] %vm3683, %v3667
        %3690 = vst.msk [vmem:[#allocation4 + $0x30] sm:$0xff] %vm3683, %v3669
        %3691 = vst.msk [vmem:[#allocation4 + $0x38] sm:$0xff] %vm3683, %v3671
        %vm3692 = vcmask 519552
        %3693 = vst.msk [vmem:[#allocation4 + $0x40] sm:$0xf] %vm3692, %v3673
        %v3694 = vrot.slane %v3396, 5
        %v3695 = vrot.slane %v3399, 6
        %v3696 = vor.u32 %v3694, %v3695
        %v3697 = vrot.slane %v3404, 5
        %v3698 = vrot.slane %v3407, 6
        %v3699 = vor.u32 %v3697, %v3698
        %v3700 = vsel %vm991, %v3696, %v3699
        %v3701 = vrot.slane %v3413, 5
        %v3702 = vrot.slane %v3416, 6
        %v3703 = vor.u32 %v3701, %v3702
        %v3704 = vsel %vm991, %v3699, %v3703
        %v3705 = vrot.slane %v3422, 5
        %v3706 = vrot.slane %v3425, 6
        %v3707 = vor.u32 %v3705, %v3706
        %v3708 = vsel %vm991, %v3703, %v3707
        %v3709 = vrot.slane %v3431, 5
        %v3710 = vrot.slane %v3434, 6
        %v3711 = vor.u32 %v3709, %v3710
        %v3712 = vsel %vm991, %v3707, %v3711
        %v3713 = vrot.slane %v3440, 5
        %v3714 = vrot.slane %v3443, 6
        %v3715 = vor.u32 %v3713, %v3714
        %v3716 = vsel %vm991, %v3711, %v3715
        %v3717 = vrot.slane %v3449, 5
        %v3718 = vrot.slane %v3452, 6
        %v3719 = vor.u32 %v3717, %v3718
        %v3720 = vsel %vm991, %v3715, %v3719
        %v3721 = vrot.slane %v3458, 5
        %v3722 = vrot.slane %v3461, 6
        %v3723 = vor.u32 %v3721, %v3722
        %v3724 = vsel %vm991, %v3719, %v3723
        %v3725 = vrot.slane %v3467, 5
        %v3726 = vrot.slane %v3470, 6
        %v3727 = vor.u32 %v3725, %v3726
        %v3728 = vsel %vm991, %v3723, %v3727
        %3729 = vrot.lane.b32.xlu0 %v3696, 48
        %v3730 = vpop.permute.xlu0 %3729
        %3731 = vrot.lane.b32.xlu0 %v3700, 48
        %v3732 = vpop.permute.xlu0 %3731
        %3733 = vrot.lane.b32.xlu0 %v3704, 48
        %v3734 = vpop.permute.xlu0 %3733
        %3735 = vrot.lane.b32.xlu0 %v3708, 48
        %v3736 = vpop.permute.xlu0 %3735
        %3737 = vrot.lane.b32.xlu0 %v3712, 48
        %v3738 = vpop.permute.xlu0 %3737
        %3739 = vrot.lane.b32.xlu0 %v3716, 48
        %v3740 = vpop.permute.xlu0 %3739
        %3741 = vrot.lane.b32.xlu0 %v3720, 48
        %v3742 = vpop.permute.xlu0 %3741
        %3743 = vrot.lane.b32.xlu0 %v3724, 48
        %v3744 = vpop.permute.xlu0 %3743
        %3745 = vrot.lane.b32.xlu0 %v3728, 48
        %v3746 = vpop.permute.xlu0 %3745
        %vm3756 = vcmask 523652
        %3757 = vst.msk [vmem:[#allocation4 + $0x40] sm:$0xf0] %vm3756, %v3730
        %3758 = vst.msk [vmem:[#allocation4 + $0x48] sm:$0xff] %vm3683, %v3732
        %3759 = vst.msk [vmem:[#allocation4 + $0x50] sm:$0xff] %vm3683, %v3734
        %3760 = vst.msk [vmem:[#allocation4 + $0x58] sm:$0xff] %vm3683, %v3736
        %3761 = vst.msk [vmem:[#allocation4 + $0x60] sm:$0xff] %vm3683, %v3738
        %3762 = vst.msk [vmem:[#allocation4 + $0x68] sm:$0xff] %vm3683, %v3740
        %3763 = vst.msk [vmem:[#allocation4 + $0x70] sm:$0xff] %vm3683, %v3742
        %3764 = vst.msk [vmem:[#allocation4 + $0x78] sm:$0xff] %vm3683, %v3744
        %3765 = vst.msk [vmem:[#allocation4 + $0x80] sm:$0xff] %vm3683, %v3746
        %v3766 = vld [vmem:[#allocation4] sm:$0xff]
        %v3767 = vld [vmem:[#allocation4 + $0x8] sm:$0xff]
        %v3768 = vld [vmem:[#allocation4 + $0x10] sm:$0xff]
        %v3769 = vld [vmem:[#allocation4 + $0x18] sm:$0xff]
        %v3770 = vld [vmem:[#allocation4 + $0x20] sm:$0xff]
        %v3771 = vld [vmem:[#allocation4 + $0x28] sm:$0xff]
        %v3772 = vld [vmem:[#allocation4 + $0x30] sm:$0xff]
        %v3773 = vld [vmem:[#allocation4 + $0x38] sm:$0xff]
        %v3774 = vld [vmem:[#allocation4 + $0x40] sm:$0xff]
        %v3775 = vld [vmem:[#allocation4 + $0x48] sm:$0xff]
        %v3776 = vld [vmem:[#allocation4 + $0x50] sm:$0xff]
        %v3777 = vld [vmem:[#allocation4 + $0x58] sm:$0xff]
        %v3778 = vld [vmem:[#allocation4 + $0x60] sm:$0xff]
        %v3779 = vld [vmem:[#allocation4 + $0x68] sm:$0xff]
        %v3780 = vld [vmem:[#allocation4 + $0x70] sm:$0xff]
        %v3781 = vld [vmem:[#allocation4 + $0x78] sm:$0xff]
        %v3782 = vld [vmem:[#allocation4 + $0x80] sm:$0xff]
        %v3783 = vld [vmem:[%s8] sm:$0xf]
        %v3784 = vld [vmem:[%s8 + $0x4] sm:$0xf]
        %v3785 = vld [vmem:[%s8 + $0x8] sm:$0xf]
        %v3786 = vld [vmem:[%s8 + $0xc] sm:$0xf]
        %v3787 = vld [vmem:[%s8 + $0x10] sm:$0xf]
        %v3788 = vld [vmem:[%s8 + $0x14] sm:$0xf]
        %v3789 = vld [vmem:[%s8 + $0x18] sm:$0xf]
        %v3790 = vld [vmem:[%s8 + $0x1c] sm:$0xf]
        %v3799 = vunpack.c.l.b16 %v3783
        %v3800 = vunpack.c.l.b16 %v3784
        %v3801 = vunpack.c.l.b16 %v3785
        %v3802 = vunpack.c.l.b16 %v3786
        %v3803 = vunpack.c.l.b16 %v3787
        %v3804 = vunpack.c.l.b16 %v3788
        %v3805 = vunpack.c.l.b16 %v3789
        %v3806 = vunpack.c.l.b16 %v3790
        %v3807 = vpack.c.b16 %v3800, %v3799
        %v3808 = vpack.c.b16 %v3802, %v3801
        %v3809 = vpack.c.b16 %v3804, %v3803
        %v3810 = vpack.c.b16 %v3806, %v3805
        %v3816 = vsel %vm1803, %v3766, 0
        %v3819 = vsel %vm1803, %v3767, 0
        %v3822 = vsel %vm1803, %v3768, 0
        %v3825 = vsel %vm1803, %v3769, 0
        %v3828 = vsel %vm1803, %v3770, 0
        %v3831 = vsel %vm1803, %v3771, 0
        %v3834 = vsel %vm1803, %v3772, 0
        %v3837 = vsel %vm1803, %v3773, 0
        %v3840 = vsel %vm1803, %v3774, 0
        %v3843 = vsel %vm1803, %v3775, 0
        %v3846 = vsel %vm1803, %v3776, 0
        %v3849 = vsel %vm1803, %v3777, 0
        %v3852 = vsel %vm1803, %v3778, 0
        %v3855 = vsel %vm1803, %v3779, 0
        %v3858 = vsel %vm1803, %v3780, 0
        %v3861 = vsel %vm1803, %v3781, 0
        %v3864 = vsel %vm1803, %v3782, 0
        %3866 = vmatprep.subr.bf16.mxu0 0
        %3867 = vmatpush1.bf16.msra.mxu0 %v3807
        %3868 = vmatprep.subr.bf16.mxu0 0
        %3869 = vmatpush1.bf16.msra.mxu0 %v3808
        %3870 = vmatprep.subr.bf16.mxu0 0
        %3871 = vmatpush1.bf16.msra.mxu0 %v3809
        %3872 = vmatprep.subr.bf16.mxu0 0
        %3873 = vmatpush1.bf16.msra.mxu0 %v3810
        %3874 = vmatprep.subr.bf16.mxu0 0
        %3875 = vmatpush1.bf16.msra.mxu0 0
        %3876 = vmatprep.subr.bf16.mxu0 0
        %3877 = vmatpush1.bf16.msra.mxu0 0
        %3878 = vmatprep.subr.bf16.mxu0 0
        %3879 = vmatpush1.bf16.msra.mxu0 0
        %3880 = vmatprep.subr.bf16.mxu0 0
        %3881 = vmatpush1.bf16.msra.mxu0 0
        %3882 = vmatprep.subr.bf16.mxu0 0
        %3883 = vmatpush1.bf16.msra.mxu0 0
        %3884 = vmatprep.subr.bf16.mxu0 0
        %3885 = vmatpush1.bf16.msra.mxu0 0
        %3886 = vmatprep.subr.bf16.mxu0 0
        %3887 = vmatpush1.bf16.msra.mxu0 0
        %3888 = vmatprep.subr.bf16.mxu0 0
        %3889 = vmatpush1.bf16.msra.mxu0 0
        %3890 = vmatprep.subr.bf16.mxu0 0
        %3891 = vmatpush1.bf16.msra.mxu0 0
        %3892 = vmatprep.subr.bf16.mxu0 0
        %3893 = vmatpush1.bf16.msra.mxu0 0
        %3894 = vmatprep.subr.bf16.mxu0 0
        %3895 = vmatpush1.bf16.msra.mxu0 0
        %3896 = vmatprep.subr.bf16.mxu0 0
        %3897 = vmatpush1.bf16.msra.mxu0 0
        %3898 = vmatprep.mubr.bf16.mxu0 0
        %3899 = vmatmul.mubr.bf16.gmra.mrb[0].mxu0 %v3816
        %v3900 = vpop.f32.mrb[0].mxu0
        %v3901 = vadd.f32 0.0, %v3900
        %v3902 = vpop.f32.mrb[0].mxu0
        %v3903 = vpop.f32.mrb[0].mxu0
        %v3904 = vadd.f32 0.0, %v3903
        %v3905 = vpop.f32.mrb[0].mxu0
        %3906 = vmatprep.mubr.bf16.mxu0 0
        %3907 = vmatmul.mubr.bf16.gmra.mrb[0].mxu0 %v3819
        %v3908 = vpop.f32.mrb[0].mxu0
        %v3909 = vadd.f32 0.0, %v3908
        %v3910 = vpop.f32.mrb[0].mxu0
        %v3911 = vpop.f32.mrb[0].mxu0
        %v3912 = vadd.f32 0.0, %v3911
        %v3913 = vpop.f32.mrb[0].mxu0
        %3914 = vmatprep.mubr.bf16.mxu0 0
        %3915 = vmatmul.mubr.bf16.gmra.mrb[0].mxu0 %v3822
        %v3916 = vpop.f32.mrb[0].mxu0
        %v3917 = vadd.f32 0.0, %v3916
        %v3918 = vpop.f32.mrb[0].mxu0
        %v3919 = vpop.f32.mrb[0].mxu0
        %v3920 = vadd.f32 0.0, %v3919
        %v3921 = vpop.f32.mrb[0].mxu0
        %3922 = vmatprep.mubr.bf16.mxu0 0
        %3923 = vmatmul.mubr.bf16.gmra.mrb[0].mxu0 %v3825
        %v3924 = vpop.f32.mrb[0].mxu0
        %v3925 = vadd.f32 0.0, %v3924
        %v3926 = vpop.f32.mrb[0].mxu0
        %v3927 = vpop.f32.mrb[0].mxu0
        %v3928 = vadd.f32 0.0, %v3927
        %v3929 = vpop.f32.mrb[0].mxu0
        %3930 = vmatprep.mubr.bf16.mxu0 0
        %3931 = vmatmul.mubr.bf16.gmra.mrb[0].mxu0 %v3828
        %v3932 = vpop.f32.mrb[0].mxu0
        %v3933 = vadd.f32 0.0, %v3932
        %v3934 = vpop.f32.mrb[0].mxu0
        %v3935 = vpop.f32.mrb[0].mxu0
        %v3936 = vadd.f32 0.0, %v3935
        %v3937 = vpop.f32.mrb[0].mxu0
        %3938 = vmatprep.mubr.bf16.mxu0 0
        %3939 = vmatmul.mubr.bf16.gmra.mrb[0].mxu0 %v3831
        %v3940 = vpop.f32.mrb[0].mxu0
        %v3941 = vadd.f32 0.0, %v3940
        %v3942 = vpop.f32.mrb[0].mxu0
        %v3943 = vpop.f32.mrb[0].mxu0
        %v3944 = vadd.f32 0.0, %v3943
        %v3945 = vpop.f32.mrb[0].mxu0
        %3946 = vmatprep.mubr.bf16.mxu0 0
        %3947 = vmatmul.mubr.bf16.gmra.mrb[0].mxu0 %v3834
        %v3948 = vpop.f32.mrb[0].mxu0
        %v3949 = vadd.f32 0.0, %v3948
        %v3950 = vpop.f32.mrb[0].mxu0
        %v3951 = vpop.f32.mrb[0].mxu0
        %v3952 = vadd.f32 0.0, %v3951
        %v3953 = vpop.f32.mrb[0].mxu0
        %3954 = vmatprep.mubr.bf16.mxu0 0
        %3955 = vmatmul.mubr.bf16.gmra.mrb[0].mxu0 %v3837
        %v3956 = vpop.f32.mrb[0].mxu0
        %v3957 = vadd.f32 0.0, %v3956
        %v3958 = vpop.f32.mrb[0].mxu0
        %v3959 = vpop.f32.mrb[0].mxu0
        %v3960 = vadd.f32 0.0, %v3959
        %v3961 = vpop.f32.mrb[0].mxu0
        %3962 = vmatprep.mubr.bf16.mxu0 0
        %3963 = vmatmul.mubr.bf16.gmra.mrb[0].mxu0 %v3840
        %v3964 = vpop.f32.mrb[0].mxu0
        %v3965 = vadd.f32 0.0, %v3964
        %v3966 = vpop.f32.mrb[0].mxu0
        %v3967 = vpop.f32.mrb[0].mxu0
        %v3968 = vadd.f32 0.0, %v3967
        %v3969 = vpop.f32.mrb[0].mxu0
        %3970 = vmatprep.mubr.bf16.mxu0 0
        %3971 = vmatmul.mubr.bf16.gmra.mrb[0].mxu0 %v3843
        %v3972 = vpop.f32.mrb[0].mxu0
        %v3973 = vadd.f32 0.0, %v3972
        %v3974 = vpop.f32.mrb[0].mxu0
        %v3975 = vpop.f32.mrb[0].mxu0
        %v3976 = vadd.f32 0.0, %v3975
        %v3977 = vpop.f32.mrb[0].mxu0
        %3978 = vmatprep.mubr.bf16.mxu0 0
        %3979 = vmatmul.mubr.bf16.gmra.mrb[0].mxu0 %v3846
        %v3980 = vpop.f32.mrb[0].mxu0
        %v3981 = vadd.f32 0.0, %v3980
        %v3982 = vpop.f32.mrb[0].mxu0
        %v3983 = vpop.f32.mrb[0].mxu0
        %v3984 = vadd.f32 0.0, %v3983
        %v3985 = vpop.f32.mrb[0].mxu0
        %3986 = vmatprep.mubr.bf16.mxu0 0
        %3987 = vmatmul.mubr.bf16.gmra.mrb[0].mxu0 %v3849
        %v3988 = vpop.f32.mrb[0].mxu0
        %v3989 = vadd.f32 0.0, %v3988
        %v3990 = vpop.f32.mrb[0].mxu0
        %v3991 = vpop.f32.mrb[0].mxu0
        %v3992 = vadd.f32 0.0, %v3991
        %v3993 = vpop.f32.mrb[0].mxu0
        %3994 = vmatprep.mubr.bf16.mxu0 0
        %3995 = vmatmul.mubr.bf16.gmra.mrb[0].mxu0 %v3852
        %v3996 = vpop.f32.mrb[0].mxu0
        %v3997 = vadd.f32 0.0, %v3996
        %v3998 = vpop.f32.mrb[0].mxu0
        %v3999 = vpop.f32.mrb[0].mxu0
        %v4000 = vadd.f32 0.0, %v3999
        %v4001 = vpop.f32.mrb[0].mxu0
        %4002 = vmatprep.mubr.bf16.mxu0 0
        %4003 = vmatmul.mubr.bf16.gmra.mrb[0].mxu0 %v3855
        %v4004 = vpop.f32.mrb[0].mxu0
        %v4005 = vadd.f32 0.0, %v4004
        %v4006 = vpop.f32.mrb[0].mxu0
        %v4007 = vpop.f32.mrb[0].mxu0
        %v4008 = vadd.f32 0.0, %v4007
        %v4009 = vpop.f32.mrb[0].mxu0
        %4010 = vmatprep.mubr.bf16.mxu0 0
        %4011 = vmatmul.mubr.bf16.gmra.mrb[0].mxu0 %v3858
        %v4012 = vpop.f32.mrb[0].mxu0
        %v4013 = vadd.f32 0.0, %v4012
        %v4014 = vpop.f32.mrb[0].mxu0
        %v4015 = vpop.f32.mrb[0].mxu0
        %v4016 = vadd.f32 0.0, %v4015
        %v4017 = vpop.f32.mrb[0].mxu0
        %4018 = vmatprep.mubr.bf16.mxu0 0
        %4019 = vmatmul.mubr.bf16.gmra.mrb[0].mxu0 %v3861
        %v4020 = vpop.f32.mrb[0].mxu0
        %v4021 = vadd.f32 0.0, %v4020
        %v4022 = vpop.f32.mrb[0].mxu0
        %v4023 = vpop.f32.mrb[0].mxu0
        %v4024 = vadd.f32 0.0, %v4023
        %v4025 = vpop.f32.mrb[0].mxu0
        %4026 = vmatprep.mubr.bf16.mxu0 0
        %4027 = vmatmul.mubr.bf16.gmra.mrb[0].mxu0 %v3864
        %v4028 = vpop.f32.mrb[0].mxu0
        %v4029 = vadd.f32 0.0, %v4028
        %v4030 = vpop.f32.mrb[0].mxu0
        %v4031 = vpop.f32.mrb[0].mxu0
        %v4032 = vadd.f32 0.0, %v4031
        %v4033 = vpop.f32.mrb[0].mxu0
        %4034 = vdwg.mxu0
        %4069 = vrot.lane.b32.xlu0 %v3901, 96
        %v4070 = vpop.permute.xlu0 %4069
        %4071 = vrot.lane.b32.xlu0 %v3904, 96
        %v4072 = vpop.permute.xlu0 %4071
        %4073 = vrot.lane.b32.xlu0 %v3909, 96
        %v4074 = vpop.permute.xlu0 %4073
        %4075 = vrot.lane.b32.xlu0 %v3912, 96
        %v4076 = vpop.permute.xlu0 %4075
        %4077 = vrot.lane.b32.xlu0 %v3917, 96
        %v4078 = vpop.permute.xlu0 %4077
        %4079 = vrot.lane.b32.xlu0 %v3920, 96
        %v4080 = vpop.permute.xlu0 %4079
        %4081 = vrot.lane.b32.xlu0 %v3925, 96
        %v4082 = vpop.permute.xlu0 %4081
        %4083 = vrot.lane.b32.xlu0 %v3928, 96
        %v4084 = vpop.permute.xlu0 %4083
        %4085 = vrot.lane.b32.xlu0 %v3933, 96
        %v4086 = vpop.permute.xlu0 %4085
        %4087 = vrot.lane.b32.xlu0 %v3936, 96
        %v4088 = vpop.permute.xlu0 %4087
        %4089 = vrot.lane.b32.xlu0 %v3941, 96
        %v4090 = vpop.permute.xlu0 %4089
        %4091 = vrot.lane.b32.xlu0 %v3944, 96
        %v4092 = vpop.permute.xlu0 %4091
        %4093 = vrot.lane.b32.xlu0 %v3949, 96
        %v4094 = vpop.permute.xlu0 %4093
        %4095 = vrot.lane.b32.xlu0 %v3952, 96
        %v4096 = vpop.permute.xlu0 %4095
        %4097 = vrot.lane.b32.xlu0 %v3957, 96
        %v4098 = vpop.permute.xlu0 %4097
        %4099 = vrot.lane.b32.xlu0 %v3960, 96
        %v4100 = vpop.permute.xlu0 %4099
        %4101 = vrot.lane.b32.xlu0 %v3965, 96
        %v4102 = vpop.permute.xlu0 %4101
        %4103 = vrot.lane.b32.xlu0 %v3968, 96
        %v4104 = vpop.permute.xlu0 %4103
        %4105 = vrot.lane.b32.xlu0 %v3973, 96
        %v4106 = vpop.permute.xlu0 %4105
        %4107 = vrot.lane.b32.xlu0 %v3976, 96
        %v4108 = vpop.permute.xlu0 %4107
        %4109 = vrot.lane.b32.xlu0 %v3981, 96
        %v4110 = vpop.permute.xlu0 %4109
        %4111 = vrot.lane.b32.xlu0 %v3984, 96
        %v4112 = vpop.permute.xlu0 %4111
        %4113 = vrot.lane.b32.xlu0 %v3989, 96
        %v4114 = vpop.permute.xlu0 %4113
        %4115 = vrot.lane.b32.xlu0 %v3992, 96
        %v4116 = vpop.permute.xlu0 %4115
        %4117 = vrot.lane.b32.xlu0 %v3997, 96
        %v4118 = vpop.permute.xlu0 %4117
        %4119 = vrot.lane.b32.xlu0 %v4000, 96
        %v4120 = vpop.permute.xlu0 %4119
        %4121 = vrot.lane.b32.xlu0 %v4005, 96
        %v4122 = vpop.permute.xlu0 %4121
        %4123 = vrot.lane.b32.xlu0 %v4008, 96
        %v4124 = vpop.permute.xlu0 %4123
        %4125 = vrot.lane.b32.xlu0 %v4013, 96
        %v4126 = vpop.permute.xlu0 %4125
        %4127 = vrot.lane.b32.xlu0 %v4016, 96
        %v4128 = vpop.permute.xlu0 %4127
        %4129 = vrot.lane.b32.xlu0 %v4021, 96
        %v4130 = vpop.permute.xlu0 %4129
        %4131 = vrot.lane.b32.xlu0 %v4024, 96
        %v4132 = vpop.permute.xlu0 %4131
        %4133 = vrot.lane.b32.xlu0 %v4029, 96
        %v4134 = vpop.permute.xlu0 %4133
        %4135 = vrot.lane.b32.xlu0 %v4032, 96
        %v4136 = vpop.permute.xlu0 %4135
        %v4171 = vsel %vm1214, %v4070, 0.0
        %v4172 = vsel %vm1214, %v4072, 0.0
        %v4173 = vsel %vm1214, %v4074, 0.0
        %v4174 = vsel %vm1214, %v4076, 0.0
        %v4175 = vsel %vm1214, %v4078, 0.0
        %v4176 = vsel %vm1214, %v4080, 0.0
        %v4177 = vsel %vm1214, %v4082, 0.0
        %v4178 = vsel %vm1214, %v4084, 0.0
        %v4179 = vsel %vm1214, %v4086, 0.0
        %v4180 = vsel %vm1214, %v4088, 0.0
        %v4181 = vsel %vm1214, %v4090, 0.0
        %v4182 = vsel %vm1214, %v4092, 0.0
        %v4183 = vsel %vm1214, %v4094, 0.0
        %v4184 = vsel %vm1214, %v4096, 0.0
        %v4185 = vsel %vm1214, %v4098, 0.0
        %v4186 = vsel %vm1214, %v4100, 0.0
        %v4187 = vsel %vm1214, %v4102, 0.0
        %v4188 = vsel %vm1214, %v4104, 0.0
        %v4189 = vsel %vm1214, %v4106, 0.0
        %v4190 = vsel %vm1214, %v4108, 0.0
        %v4191 = vsel %vm1214, %v4110, 0.0
        %v4192 = vsel %vm1214, %v4112, 0.0
        %v4193 = vsel %vm1214, %v4114, 0.0
        %v4194 = vsel %vm1214, %v4116, 0.0
        %v4195 = vsel %vm1214, %v4118, 0.0
        %v4196 = vsel %vm1214, %v4120, 0.0
        %v4197 = vsel %vm1214, %v4122, 0.0
        %v4198 = vsel %vm1214, %v4124, 0.0
        %v4199 = vsel %vm1214, %v4126, 0.0
        %v4200 = vsel %vm1214, %v4128, 0.0
        %v4201 = vsel %vm1214, %v4130, 0.0
        %v4202 = vsel %vm1214, %v4132, 0.0
        %v4203 = vsel %vm1214, %v4134, 0.0
        %v4204 = vsel %vm1214, %v4136, 0.0
        %v4205 = vmul.f32 %v3901, %v3901
        %v4206 = vmul.f32 %v3904, %v3904
        %v4207 = vmul.f32 %v3909, %v3909
        %v4208 = vmul.f32 %v3912, %v3912
        %v4209 = vmul.f32 %v3917, %v3917
        %v4210 = vmul.f32 %v3920, %v3920
        %v4211 = vmul.f32 %v3925, %v3925
        %v4212 = vmul.f32 %v3928, %v3928
        %v4213 = vmul.f32 %v3933, %v3933
        %v4214 = vmul.f32 %v3936, %v3936
        %v4215 = vmul.f32 %v3941, %v3941
        %v4216 = vmul.f32 %v3944, %v3944
        %v4217 = vmul.f32 %v3949, %v3949
        %v4218 = vmul.f32 %v3952, %v3952
        %v4219 = vmul.f32 %v3957, %v3957
        %v4220 = vmul.f32 %v3960, %v3960
        %v4221 = vmul.f32 %v3965, %v3965
        %v4222 = vmul.f32 %v3968, %v3968
        %v4223 = vmul.f32 %v3973, %v3973
        %v4224 = vmul.f32 %v3976, %v3976
        %v4225 = vmul.f32 %v3981, %v3981
        %v4226 = vmul.f32 %v3984, %v3984
        %v4227 = vmul.f32 %v3989, %v3989
        %v4228 = vmul.f32 %v3992, %v3992
        %v4229 = vmul.f32 %v3997, %v3997
        %v4230 = vmul.f32 %v4000, %v4000
        %v4231 = vmul.f32 %v4005, %v4005
        %v4232 = vmul.f32 %v4008, %v4008
        %v4233 = vmul.f32 %v4013, %v4013
        %v4234 = vmul.f32 %v4016, %v4016
        %v4235 = vmul.f32 %v4021, %v4021
        %v4236 = vmul.f32 %v4024, %v4024
        %v4237 = vmul.f32 %v4029, %v4029
        %v4238 = vmul.f32 %v4032, %v4032
        %v4239 = vmul.f32 %v4171, %v4171
        %v4240 = vmul.f32 %v4172, %v4172
        %v4241 = vmul.f32 %v4173, %v4173
        %v4242 = vmul.f32 %v4174, %v4174
        %v4243 = vmul.f32 %v4175, %v4175
        %v4244 = vmul.f32 %v4176, %v4176
        %v4245 = vmul.f32 %v4177, %v4177
        %v4246 = vmul.f32 %v4178, %v4178
        %v4247 = vmul.f32 %v4179, %v4179
        %v4248 = vmul.f32 %v4180, %v4180
        %v4249 = vmul.f32 %v4181, %v4181
        %v4250 = vmul.f32 %v4182, %v4182
        %v4251 = vmul.f32 %v4183, %v4183
        %v4252 = vmul.f32 %v4184, %v4184
        %v4253 = vmul.f32 %v4185, %v4185
        %v4254 = vmul.f32 %v4186, %v4186
        %v4255 = vmul.f32 %v4187, %v4187
        %v4256 = vmul.f32 %v4188, %v4188
        %v4257 = vmul.f32 %v4189, %v4189
        %v4258 = vmul.f32 %v4190, %v4190
        %v4259 = vmul.f32 %v4191, %v4191
        %v4260 = vmul.f32 %v4192, %v4192
        %v4261 = vmul.f32 %v4193, %v4193
        %v4262 = vmul.f32 %v4194, %v4194
        %v4263 = vmul.f32 %v4195, %v4195
        %v4264 = vmul.f32 %v4196, %v4196
        %v4265 = vmul.f32 %v4197, %v4197
        %v4266 = vmul.f32 %v4198, %v4198
        %v4267 = vmul.f32 %v4199, %v4199
        %v4268 = vmul.f32 %v4200, %v4200
        %v4269 = vmul.f32 %v4201, %v4201
        %v4270 = vmul.f32 %v4202, %v4202
        %v4271 = vmul.f32 %v4203, %v4203
        %v4272 = vmul.f32 %v4204, %v4204
        %v4273 = vadd.f32 %v4205, %v4239
        %v4274 = vadd.f32 %v4206, %v4240
        %v4275 = vadd.f32 %v4207, %v4241
        %v4276 = vadd.f32 %v4208, %v4242
        %v4277 = vadd.f32 %v4209, %v4243
        %v4278 = vadd.f32 %v4210, %v4244
        %v4279 = vadd.f32 %v4211, %v4245
        %v4280 = vadd.f32 %v4212, %v4246
        %v4281 = vadd.f32 %v4213, %v4247
        %v4282 = vadd.f32 %v4214, %v4248
        %v4283 = vadd.f32 %v4215, %v4249
        %v4284 = vadd.f32 %v4216, %v4250
        %v4285 = vadd.f32 %v4217, %v4251
        %v4286 = vadd.f32 %v4218, %v4252
        %v4287 = vadd.f32 %v4219, %v4253
        %v4288 = vadd.f32 %v4220, %v4254
        %v4289 = vadd.f32 %v4221, %v4255
        %v4290 = vadd.f32 %v4222, %v4256
        %v4291 = vadd.f32 %v4223, %v4257
        %v4292 = vadd.f32 %v4224, %v4258
        %v4293 = vadd.f32 %v4225, %v4259
        %v4294 = vadd.f32 %v4226, %v4260
        %v4295 = vadd.f32 %v4227, %v4261
        %v4296 = vadd.f32 %v4228, %v4262
        %v4297 = vadd.f32 %v4229, %v4263
        %v4298 = vadd.f32 %v4230, %v4264
        %v4299 = vadd.f32 %v4231, %v4265
        %v4300 = vadd.f32 %v4232, %v4266
        %v4301 = vadd.f32 %v4233, %v4267
        %v4302 = vadd.f32 %v4234, %v4268
        %v4303 = vadd.f32 %v4235, %v4269
        %v4304 = vadd.f32 %v4236, %v4270
        %v4305 = vadd.f32 %v4237, %v4271
        %v4306 = vadd.f32 %v4238, %v4272
        %v4307 = vmax.f32 %v4273, 1e-07
        %v4308 = vmax.f32 %v4274, 1e-07
        %v4309 = vmax.f32 %v4275, 1e-07
        %v4310 = vmax.f32 %v4276, 1e-07
        %v4311 = vmax.f32 %v4277, 1e-07
        %v4312 = vmax.f32 %v4278, 1e-07
        %v4313 = vmax.f32 %v4279, 1e-07
        %v4314 = vmax.f32 %v4280, 1e-07
        %v4315 = vmax.f32 %v4281, 1e-07
        %v4316 = vmax.f32 %v4282, 1e-07
        %v4317 = vmax.f32 %v4283, 1e-07
        %v4318 = vmax.f32 %v4284, 1e-07
        %v4319 = vmax.f32 %v4285, 1e-07
        %v4320 = vmax.f32 %v4286, 1e-07
        %v4321 = vmax.f32 %v4287, 1e-07
        %v4322 = vmax.f32 %v4288, 1e-07
        %v4323 = vmax.f32 %v4289, 1e-07
        %v4324 = vmax.f32 %v4290, 1e-07
        %v4325 = vmax.f32 %v4291, 1e-07
        %v4326 = vmax.f32 %v4292, 1e-07
        %v4327 = vmax.f32 %v4293, 1e-07
        %v4328 = vmax.f32 %v4294, 1e-07
        %v4329 = vmax.f32 %v4295, 1e-07
        %v4330 = vmax.f32 %v4296, 1e-07
        %v4331 = vmax.f32 %v4297, 1e-07
        %v4332 = vmax.f32 %v4298, 1e-07
        %v4333 = vmax.f32 %v4299, 1e-07
        %v4334 = vmax.f32 %v4300, 1e-07
        %v4335 = vmax.f32 %v4301, 1e-07
        %v4336 = vmax.f32 %v4302, 1e-07
        %v4337 = vmax.f32 %v4303, 1e-07
        %v4338 = vmax.f32 %v4304, 1e-07
        %v4339 = vmax.f32 %v4305, 1e-07
        %v4340 = vmax.f32 %v4306, 1e-07
        %v4341 = vrsqrt.pop %v4307
        %v4342 = vmul.f32 %v4307, %v4341
        %vm4343 = vcmp.eq.f32.partialorder %v4307, inf
        %v4344 = vsel %vm4343, %v4307, %v4342
        %vm4345 = vcmp.eq.f32.partialorder %v4307, 0.0
        %v4346 = vand.u32 %v4307, 2147483648
        %v4347 = vsel %vm4345, %v4346, %v4344
        %v4348 = vrsqrt.pop %v4308
        %v4349 = vmul.f32 %v4308, %v4348
        %vm4350 = vcmp.eq.f32.partialorder %v4308, inf
        %v4351 = vsel %vm4350, %v4308, %v4349
        %vm4352 = vcmp.eq.f32.partialorder %v4308, 0.0
        %v4353 = vand.u32 %v4308, 2147483648
        %v4354 = vsel %vm4352, %v4353, %v4351
        %v4355 = vrsqrt.pop %v4309
        %v4356 = vmul.f32 %v4309, %v4355
        %vm4357 = vcmp.eq.f32.partialorder %v4309, inf
        %v4358 = vsel %vm4357, %v4309, %v4356
        %vm4359 = vcmp.eq.f32.partialorder %v4309, 0.0
        %v4360 = vand.u32 %v4309, 2147483648
        %v4361 = vsel %vm4359, %v4360, %v4358
        %v4362 = vrsqrt.pop %v4310
        %v4363 = vmul.f32 %v4310, %v4362
        %vm4364 = vcmp.eq.f32.partialorder %v4310, inf
        %v4365 = vsel %vm4364, %v4310, %v4363
        %vm4366 = vcmp.eq.f32.partialorder %v4310, 0.0
        %v4367 = vand.u32 %v4310, 2147483648
        %v4368 = vsel %vm4366, %v4367, %v4365
        %v4369 = vrsqrt.pop %v4311
        %v4370 = vmul.f32 %v4311, %v4369
        %vm4371 = vcmp.eq.f32.partialorder %v4311, inf
        %v4372 = vsel %vm4371, %v4311, %v4370
        %vm4373 = vcmp.eq.f32.partialorder %v4311, 0.0
        %v4374 = vand.u32 %v4311, 2147483648
        %v4375 = vsel %vm4373, %v4374, %v4372
        %v4376 = vrsqrt.pop %v4312
        %v4377 = vmul.f32 %v4312, %v4376
        %vm4378 = vcmp.eq.f32.partialorder %v4312, inf
        %v4379 = vsel %vm4378, %v4312, %v4377
        %vm4380 = vcmp.eq.f32.partialorder %v4312, 0.0
        %v4381 = vand.u32 %v4312, 2147483648
        %v4382 = vsel %vm4380, %v4381, %v4379
        %v4383 = vrsqrt.pop %v4313
        %v4384 = vmul.f32 %v4313, %v4383
        %vm4385 = vcmp.eq.f32.partialorder %v4313, inf
        %v4386 = vsel %vm4385, %v4313, %v4384
        %vm4387 = vcmp.eq.f32.partialorder %v4313, 0.0
        %v4388 = vand.u32 %v4313, 2147483648
        %v4389 = vsel %vm4387, %v4388, %v4386
        %v4390 = vrsqrt.pop %v4314
        %v4391 = vmul.f32 %v4314, %v4390
        %vm4392 = vcmp.eq.f32.partialorder %v4314, inf
        %v4393 = vsel %vm4392, %v4314, %v4391
        %vm4394 = vcmp.eq.f32.partialorder %v4314, 0.0
        %v4395 = vand.u32 %v4314, 2147483648
        %v4396 = vsel %vm4394, %v4395, %v4393
        %v4397 = vrsqrt.pop %v4315
        %v4398 = vmul.f32 %v4315, %v4397
        %vm4399 = vcmp.eq.f32.partialorder %v4315, inf
        %v4400 = vsel %vm4399, %v4315, %v4398
        %vm4401 = vcmp.eq.f32.partialorder %v4315, 0.0
        %v4402 = vand.u32 %v4315, 2147483648
        %v4403 = vsel %vm4401, %v4402, %v4400
        %v4404 = vrsqrt.pop %v4316
        %v4405 = vmul.f32 %v4316, %v4404
        %vm4406 = vcmp.eq.f32.partialorder %v4316, inf
        %v4407 = vsel %vm4406, %v4316, %v4405
        %vm4408 = vcmp.eq.f32.partialorder %v4316, 0.0
        %v4409 = vand.u32 %v4316, 2147483648
        %v4410 = vsel %vm4408, %v4409, %v4407
        %v4411 = vrsqrt.pop %v4317
        %v4412 = vmul.f32 %v4317, %v4411
        %vm4413 = vcmp.eq.f32.partialorder %v4317, inf
        %v4414 = vsel %vm4413, %v4317, %v4412
        %vm4415 = vcmp.eq.f32.partialorder %v4317, 0.0
        %v4416 = vand.u32 %v4317, 2147483648
        %v4417 = vsel %vm4415, %v4416, %v4414
        %v4418 = vrsqrt.pop %v4318
        %v4419 = vmul.f32 %v4318, %v4418
        %vm4420 = vcmp.eq.f32.partialorder %v4318, inf
        %v4421 = vsel %vm4420, %v4318, %v4419
        %vm4422 = vcmp.eq.f32.partialorder %v4318, 0.0
        %v4423 = vand.u32 %v4318, 2147483648
        %v4424 = vsel %vm4422, %v4423, %v4421
        %v4425 = vrsqrt.pop %v4319
        %v4426 = vmul.f32 %v4319, %v4425
        %vm4427 = vcmp.eq.f32.partialorder %v4319, inf
        %v4428 = vsel %vm4427, %v4319, %v4426
        %vm4429 = vcmp.eq.f32.partialorder %v4319, 0.0
        %v4430 = vand.u32 %v4319, 2147483648
        %v4431 = vsel %vm4429, %v4430, %v4428
        %v4432 = vrsqrt.pop %v4320
        %v4433 = vmul.f32 %v4320, %v4432
        %vm4434 = vcmp.eq.f32.partialorder %v4320, inf
        %v4435 = vsel %vm4434, %v4320, %v4433
        %vm4436 = vcmp.eq.f32.partialorder %v4320, 0.0
        %v4437 = vand.u32 %v4320, 2147483648
        %v4438 = vsel %vm4436, %v4437, %v4435
        %v4439 = vrsqrt.pop %v4321
        %v4440 = vmul.f32 %v4321, %v4439
        %vm4441 = vcmp.eq.f32.partialorder %v4321, inf
        %v4442 = vsel %vm4441, %v4321, %v4440
        %vm4443 = vcmp.eq.f32.partialorder %v4321, 0.0
        %v4444 = vand.u32 %v4321, 2147483648
        %v4445 = vsel %vm4443, %v4444, %v4442
        %v4446 = vrsqrt.pop %v4322
        %v4447 = vmul.f32 %v4322, %v4446
        %vm4448 = vcmp.eq.f32.partialorder %v4322, inf
        %v4449 = vsel %vm4448, %v4322, %v4447
        %vm4450 = vcmp.eq.f32.partialorder %v4322, 0.0
        %v4451 = vand.u32 %v4322, 2147483648
        %v4452 = vsel %vm4450, %v4451, %v4449
        %v4453 = vrsqrt.pop %v4323
        %v4454 = vmul.f32 %v4323, %v4453
        %vm4455 = vcmp.eq.f32.partialorder %v4323, inf
        %v4456 = vsel %vm4455, %v4323, %v4454
        %vm4457 = vcmp.eq.f32.partialorder %v4323, 0.0
        %v4458 = vand.u32 %v4323, 2147483648
        %v4459 = vsel %vm4457, %v4458, %v4456
        %v4460 = vrsqrt.pop %v4324
        %v4461 = vmul.f32 %v4324, %v4460
        %vm4462 = vcmp.eq.f32.partialorder %v4324, inf
        %v4463 = vsel %vm4462, %v4324, %v4461
        %vm4464 = vcmp.eq.f32.partialorder %v4324, 0.0
        %v4465 = vand.u32 %v4324, 2147483648
        %v4466 = vsel %vm4464, %v4465, %v4463
        %v4467 = vrsqrt.pop %v4325
        %v4468 = vmul.f32 %v4325, %v4467
        %vm4469 = vcmp.eq.f32.partialorder %v4325, inf
        %v4470 = vsel %vm4469, %v4325, %v4468
        %vm4471 = vcmp.eq.f32.partialorder %v4325, 0.0
        %v4472 = vand.u32 %v4325, 2147483648
        %v4473 = vsel %vm4471, %v4472, %v4470
        %v4474 = vrsqrt.pop %v4326
        %v4475 = vmul.f32 %v4326, %v4474
        %vm4476 = vcmp.eq.f32.partialorder %v4326, inf
        %v4477 = vsel %vm4476, %v4326, %v4475
        %vm4478 = vcmp.eq.f32.partialorder %v4326, 0.0
        %v4479 = vand.u32 %v4326, 2147483648
        %v4480 = vsel %vm4478, %v4479, %v4477
        %v4481 = vrsqrt.pop %v4327
        %v4482 = vmul.f32 %v4327, %v4481
        %vm4483 = vcmp.eq.f32.partialorder %v4327, inf
        %v4484 = vsel %vm4483, %v4327, %v4482
        %vm4485 = vcmp.eq.f32.partialorder %v4327, 0.0
        %v4486 = vand.u32 %v4327, 2147483648
        %v4487 = vsel %vm4485, %v4486, %v4484
        %v4488 = vrsqrt.pop %v4328
        %v4489 = vmul.f32 %v4328, %v4488
        %vm4490 = vcmp.eq.f32.partialorder %v4328, inf
        %v4491 = vsel %vm4490, %v4328, %v4489
        %vm4492 = vcmp.eq.f32.partialorder %v4328, 0.0
        %v4493 = vand.u32 %v4328, 2147483648
        %v4494 = vsel %vm4492, %v4493, %v4491
        %v4495 = vrsqrt.pop %v4329
        %v4496 = vmul.f32 %v4329, %v4495
        %vm4497 = vcmp.eq.f32.partialorder %v4329, inf
        %v4498 = vsel %vm4497, %v4329, %v4496
        %vm4499 = vcmp.eq.f32.partialorder %v4329, 0.0
        %v4500 = vand.u32 %v4329, 2147483648
        %v4501 = vsel %vm4499, %v4500, %v4498
        %v4502 = vrsqrt.pop %v4330
        %v4503 = vmul.f32 %v4330, %v4502
        %vm4504 = vcmp.eq.f32.partialorder %v4330, inf
        %v4505 = vsel %vm4504, %v4330, %v4503
        %vm4506 = vcmp.eq.f32.partialorder %v4330, 0.0
        %v4507 = vand.u32 %v4330, 2147483648
        %v4508 = vsel %vm4506, %v4507, %v4505
        %v4509 = vrsqrt.pop %v4331
        %v4510 = vmul.f32 %v4331, %v4509
        %vm4511 = vcmp.eq.f32.partialorder %v4331, inf
        %v4512 = vsel %vm4511, %v4331, %v4510
        %vm4513 = vcmp.eq.f32.partialorder %v4331, 0.0
        %v4514 = vand.u32 %v4331, 2147483648
        %v4515 = vsel %vm4513, %v4514, %v4512
        %v4516 = vrsqrt.pop %v4332
        %v4517 = vmul.f32 %v4332, %v4516
        %vm4518 = vcmp.eq.f32.partialorder %v4332, inf
        %v4519 = vsel %vm4518, %v4332, %v4517
        %vm4520 = vcmp.eq.f32.partialorder %v4332, 0.0
        %v4521 = vand.u32 %v4332, 2147483648
        %v4522 = vsel %vm4520, %v4521, %v4519
        %v4523 = vrsqrt.pop %v4333
        %v4524 = vmul.f32 %v4333, %v4523
        %vm4525 = vcmp.eq.f32.partialorder %v4333, inf
        %v4526 = vsel %vm4525, %v4333, %v4524
        %vm4527 = vcmp.eq.f32.partialorder %v4333, 0.0
        %v4528 = vand.u32 %v4333, 2147483648
        %v4529 = vsel %vm4527, %v4528, %v4526
        %v4530 = vrsqrt.pop %v4334
        %v4531 = vmul.f32 %v4334, %v4530
        %vm4532 = vcmp.eq.f32.partialorder %v4334, inf
        %v4533 = vsel %vm4532, %v4334, %v4531
        %vm4534 = vcmp.eq.f32.partialorder %v4334, 0.0
        %v4535 = vand.u32 %v4334, 2147483648
        %v4536 = vsel %vm4534, %v4535, %v4533
        %v4537 = vrsqrt.pop %v4335
        %v4538 = vmul.f32 %v4335, %v4537
        %vm4539 = vcmp.eq.f32.partialorder %v4335, inf
        %v4540 = vsel %vm4539, %v4335, %v4538
        %vm4541 = vcmp.eq.f32.partialorder %v4335, 0.0
        %v4542 = vand.u32 %v4335, 2147483648
        %v4543 = vsel %vm4541, %v4542, %v4540
        %v4544 = vrsqrt.pop %v4336
        %v4545 = vmul.f32 %v4336, %v4544
        %vm4546 = vcmp.eq.f32.partialorder %v4336, inf
        %v4547 = vsel %vm4546, %v4336, %v4545
        %vm4548 = vcmp.eq.f32.partialorder %v4336, 0.0
        %v4549 = vand.u32 %v4336, 2147483648
        %v4550 = vsel %vm4548, %v4549, %v4547
        %v4551 = vrsqrt.pop %v4337
        %v4552 = vmul.f32 %v4337, %v4551
        %vm4553 = vcmp.eq.f32.partialorder %v4337, inf
        %v4554 = vsel %vm4553, %v4337, %v4552
        %vm4555 = vcmp.eq.f32.partialorder %v4337, 0.0
        %v4556 = vand.u32 %v4337, 2147483648
        %v4557 = vsel %vm4555, %v4556, %v4554
        %v4558 = vrsqrt.pop %v4338
        %v4559 = vmul.f32 %v4338, %v4558
        %vm4560 = vcmp.eq.f32.partialorder %v4338, inf
        %v4561 = vsel %vm4560, %v4338, %v4559
        %vm4562 = vcmp.eq.f32.partialorder %v4338, 0.0
        %v4563 = vand.u32 %v4338, 2147483648
        %v4564 = vsel %vm4562, %v4563, %v4561
        %v4565 = vrsqrt.pop %v4339
        %v4566 = vmul.f32 %v4339, %v4565
        %vm4567 = vcmp.eq.f32.partialorder %v4339, inf
        %v4568 = vsel %vm4567, %v4339, %v4566
        %vm4569 = vcmp.eq.f32.partialorder %v4339, 0.0
        %v4570 = vand.u32 %v4339, 2147483648
        %v4571 = vsel %vm4569, %v4570, %v4568
        %v4572 = vrsqrt.pop %v4340
        %v4573 = vmul.f32 %v4340, %v4572
        %vm4574 = vcmp.eq.f32.partialorder %v4340, inf
        %v4575 = vsel %vm4574, %v4340, %v4573
        %vm4576 = vcmp.eq.f32.partialorder %v4340, 0.0
        %v4577 = vand.u32 %v4340, 2147483648
        %v4578 = vsel %vm4576, %v4577, %v4575
        %v4579 = vlog2.pop %v4347
        %v4580 = vmul.f32 %v4579, 0.6931472
        %v4581 = vlog2.pop %v4354
        %v4582 = vmul.f32 %v4581, 0.6931472
        %v4583 = vlog2.pop %v4361
        %v4584 = vmul.f32 %v4583, 0.6931472
        %v4585 = vlog2.pop %v4368
        %v4586 = vmul.f32 %v4585, 0.6931472
        %v4587 = vlog2.pop %v4375
        %v4588 = vmul.f32 %v4587, 0.6931472
        %v4589 = vlog2.pop %v4382
        %v4590 = vmul.f32 %v4589, 0.6931472
        %v4591 = vlog2.pop %v4389
        %v4592 = vmul.f32 %v4591, 0.6931472
        %v4593 = vlog2.pop %v4396
        %v4594 = vmul.f32 %v4593, 0.6931472
        %v4595 = vlog2.pop %v4403
        %v4596 = vmul.f32 %v4595, 0.6931472
        %v4597 = vlog2.pop %v4410
        %v4598 = vmul.f32 %v4597, 0.6931472
        %v4599 = vlog2.pop %v4417
        %v4600 = vmul.f32 %v4599, 0.6931472
        %v4601 = vlog2.pop %v4424
        %v4602 = vmul.f32 %v4601, 0.6931472
        %v4603 = vlog2.pop %v4431
        %v4604 = vmul.f32 %v4603, 0.6931472
        %v4605 = vlog2.pop %v4438
        %v4606 = vmul.f32 %v4605, 0.6931472
        %v4607 = vlog2.pop %v4445
        %v4608 = vmul.f32 %v4607, 0.6931472
        %v4609 = vlog2.pop %v4452
        %v4610 = vmul.f32 %v4609, 0.6931472
        %v4611 = vlog2.pop %v4459
        %v4612 = vmul.f32 %v4611, 0.6931472
        %v4613 = vlog2.pop %v4466
        %v4614 = vmul.f32 %v4613, 0.6931472
        %v4615 = vlog2.pop %v4473
        %v4616 = vmul.f32 %v4615, 0.6931472
        %v4617 = vlog2.pop %v4480
        %v4618 = vmul.f32 %v4617, 0.6931472
        %v4619 = vlog2.pop %v4487
        %v4620 = vmul.f32 %v4619, 0.6931472
        %v4621 = vlog2.pop %v4494
        %v4622 = vmul.f32 %v4621, 0.6931472
        %v4623 = vlog2.pop %v4501
        %v4624 = vmul.f32 %v4623, 0.6931472
        %v4625 = vlog2.pop %v4508
        %v4626 = vmul.f32 %v4625, 0.6931472
        %v4627 = vlog2.pop %v4515
        %v4628 = vmul.f32 %v4627, 0.6931472
        %v4629 = vlog2.pop %v4522
        %v4630 = vmul.f32 %v4629, 0.6931472
        %v4631 = vlog2.pop %v4529
        %v4632 = vmul.f32 %v4631, 0.6931472
        %v4633 = vlog2.pop %v4536
        %v4634 = vmul.f32 %v4633, 0.6931472
        %v4635 = vlog2.pop %v4543
        %v4636 = vmul.f32 %v4635, 0.6931472
        %v4637 = vlog2.pop %v4550
        %v4638 = vmul.f32 %v4637, 0.6931472
        %v4639 = vlog2.pop %v4557
        %v4640 = vmul.f32 %v4639, 0.6931472
        %v4641 = vlog2.pop %v4564
        %v4642 = vmul.f32 %v4641, 0.6931472
        %v4643 = vlog2.pop %v4571
        %v4644 = vmul.f32 %v4643, 0.6931472
        %v4645 = vlog2.pop %v4578
        %v4646 = vmul.f32 %v4645, 0.6931472
        %v4647 = vmax.f32 %v4205, 1e-07
        %v4648 = vmax.f32 %v4206, 1e-07
        %v4649 = vmax.f32 %v4207, 1e-07
        %v4650 = vmax.f32 %v4208, 1e-07
        %v4651 = vmax.f32 %v4209, 1e-07
        %v4652 = vmax.f32 %v4210, 1e-07
        %v4653 = vmax.f32 %v4211, 1e-07
        %v4654 = vmax.f32 %v4212, 1e-07
        %v4655 = vmax.f32 %v4213, 1e-07
        %v4656 = vmax.f32 %v4214, 1e-07
        %v4657 = vmax.f32 %v4215, 1e-07
        %v4658 = vmax.f32 %v4216, 1e-07
        %v4659 = vmax.f32 %v4217, 1e-07
        %v4660 = vmax.f32 %v4218, 1e-07
        %v4661 = vmax.f32 %v4219, 1e-07
        %v4662 = vmax.f32 %v4220, 1e-07
        %v4663 = vmax.f32 %v4221, 1e-07
        %v4664 = vmax.f32 %v4222, 1e-07
        %v4665 = vmax.f32 %v4223, 1e-07
        %v4666 = vmax.f32 %v4224, 1e-07
        %v4667 = vmax.f32 %v4225, 1e-07
        %v4668 = vmax.f32 %v4226, 1e-07
        %v4669 = vmax.f32 %v4227, 1e-07
        %v4670 = vmax.f32 %v4228, 1e-07
        %v4671 = vmax.f32 %v4229, 1e-07
        %v4672 = vmax.f32 %v4230, 1e-07
        %v4673 = vmax.f32 %v4231, 1e-07
        %v4674 = vmax.f32 %v4232, 1e-07
        %v4675 = vmax.f32 %v4233, 1e-07
        %v4676 = vmax.f32 %v4234, 1e-07
        %v4677 = vmax.f32 %v4235, 1e-07
        %v4678 = vmax.f32 %v4236, 1e-07
        %v4679 = vmax.f32 %v4237, 1e-07
        %v4680 = vmax.f32 %v4238, 1e-07
        %v4681 = vrsqrt.pop %v4647
        %v4682 = vmul.f32 %v4647, %v4681
        %vm4683 = vcmp.eq.f32.partialorder %v4647, inf
        %v4684 = vsel %vm4683, %v4647, %v4682
        %vm4685 = vcmp.eq.f32.partialorder %v4647, 0.0
        %v4686 = vand.u32 %v4647, 2147483648
        %v4687 = vsel %vm4685, %v4686, %v4684
        %v4688 = vrsqrt.pop %v4648
        %v4689 = vmul.f32 %v4648, %v4688
        %vm4690 = vcmp.eq.f32.partialorder %v4648, inf
        %v4691 = vsel %vm4690, %v4648, %v4689
        %vm4692 = vcmp.eq.f32.partialorder %v4648, 0.0
        %v4693 = vand.u32 %v4648, 2147483648
        %v4694 = vsel %vm4692, %v4693, %v4691
        %v4695 = vrsqrt.pop %v4649
        %v4696 = vmul.f32 %v4649, %v4695
        %vm4697 = vcmp.eq.f32.partialorder %v4649, inf
        %v4698 = vsel %vm4697, %v4649, %v4696
        %vm4699 = vcmp.eq.f32.partialorder %v4649, 0.0
        %v4700 = vand.u32 %v4649, 2147483648
        %v4701 = vsel %vm4699, %v4700, %v4698
        %v4702 = vrsqrt.pop %v4650
        %v4703 = vmul.f32 %v4650, %v4702
        %vm4704 = vcmp.eq.f32.partialorder %v4650, inf
        %v4705 = vsel %vm4704, %v4650, %v4703
        %vm4706 = vcmp.eq.f32.partialorder %v4650, 0.0
        %v4707 = vand.u32 %v4650, 2147483648
        %v4708 = vsel %vm4706, %v4707, %v4705
        %v4709 = vrsqrt.pop %v4651
        %v4710 = vmul.f32 %v4651, %v4709
        %vm4711 = vcmp.eq.f32.partialorder %v4651, inf
        %v4712 = vsel %vm4711, %v4651, %v4710
        %vm4713 = vcmp.eq.f32.partialorder %v4651, 0.0
        %v4714 = vand.u32 %v4651, 2147483648
        %v4715 = vsel %vm4713, %v4714, %v4712
        %v4716 = vrsqrt.pop %v4652
        %v4717 = vmul.f32 %v4652, %v4716
        %vm4718 = vcmp.eq.f32.partialorder %v4652, inf
        %v4719 = vsel %vm4718, %v4652, %v4717
        %vm4720 = vcmp.eq.f32.partialorder %v4652, 0.0
        %v4721 = vand.u32 %v4652, 2147483648
        %v4722 = vsel %vm4720, %v4721, %v4719
        %v4723 = vrsqrt.pop %v4653
        %v4724 = vmul.f32 %v4653, %v4723
        %vm4725 = vcmp.eq.f32.partialorder %v4653, inf
        %v4726 = vsel %vm4725, %v4653, %v4724
        %vm4727 = vcmp.eq.f32.partialorder %v4653, 0.0
        %v4728 = vand.u32 %v4653, 2147483648
        %v4729 = vsel %vm4727, %v4728, %v4726
        %v4730 = vrsqrt.pop %v4654
        %v4731 = vmul.f32 %v4654, %v4730
        %vm4732 = vcmp.eq.f32.partialorder %v4654, inf
        %v4733 = vsel %vm4732, %v4654, %v4731
        %vm4734 = vcmp.eq.f32.partialorder %v4654, 0.0
        %v4735 = vand.u32 %v4654, 2147483648
        %v4736 = vsel %vm4734, %v4735, %v4733
        %v4737 = vrsqrt.pop %v4655
        %v4738 = vmul.f32 %v4655, %v4737
        %vm4739 = vcmp.eq.f32.partialorder %v4655, inf
        %v4740 = vsel %vm4739, %v4655, %v4738
        %vm4741 = vcmp.eq.f32.partialorder %v4655, 0.0
        %v4742 = vand.u32 %v4655, 2147483648
        %v4743 = vsel %vm4741, %v4742, %v4740
        %v4744 = vrsqrt.pop %v4656
        %v4745 = vmul.f32 %v4656, %v4744
        %vm4746 = vcmp.eq.f32.partialorder %v4656, inf
        %v4747 = vsel %vm4746, %v4656, %v4745
        %vm4748 = vcmp.eq.f32.partialorder %v4656, 0.0
        %v4749 = vand.u32 %v4656, 2147483648
        %v4750 = vsel %vm4748, %v4749, %v4747
        %v4751 = vrsqrt.pop %v4657
        %v4752 = vmul.f32 %v4657, %v4751
        %vm4753 = vcmp.eq.f32.partialorder %v4657, inf
        %v4754 = vsel %vm4753, %v4657, %v4752
        %vm4755 = vcmp.eq.f32.partialorder %v4657, 0.0
        %v4756 = vand.u32 %v4657, 2147483648
        %v4757 = vsel %vm4755, %v4756, %v4754
        %v4758 = vrsqrt.pop %v4658
        %v4759 = vmul.f32 %v4658, %v4758
        %vm4760 = vcmp.eq.f32.partialorder %v4658, inf
        %v4761 = vsel %vm4760, %v4658, %v4759
        %vm4762 = vcmp.eq.f32.partialorder %v4658, 0.0
        %v4763 = vand.u32 %v4658, 2147483648
        %v4764 = vsel %vm4762, %v4763, %v4761
        %v4765 = vrsqrt.pop %v4659
        %v4766 = vmul.f32 %v4659, %v4765
        %vm4767 = vcmp.eq.f32.partialorder %v4659, inf
        %v4768 = vsel %vm4767, %v4659, %v4766
        %vm4769 = vcmp.eq.f32.partialorder %v4659, 0.0
        %v4770 = vand.u32 %v4659, 2147483648
        %v4771 = vsel %vm4769, %v4770, %v4768
        %v4772 = vrsqrt.pop %v4660
        %v4773 = vmul.f32 %v4660, %v4772
        %vm4774 = vcmp.eq.f32.partialorder %v4660, inf
        %v4775 = vsel %vm4774, %v4660, %v4773
        %vm4776 = vcmp.eq.f32.partialorder %v4660, 0.0
        %v4777 = vand.u32 %v4660, 2147483648
        %v4778 = vsel %vm4776, %v4777, %v4775
        %v4779 = vrsqrt.pop %v4661
        %v4780 = vmul.f32 %v4661, %v4779
        %vm4781 = vcmp.eq.f32.partialorder %v4661, inf
        %v4782 = vsel %vm4781, %v4661, %v4780
        %vm4783 = vcmp.eq.f32.partialorder %v4661, 0.0
        %v4784 = vand.u32 %v4661, 2147483648
        %v4785 = vsel %vm4783, %v4784, %v4782
        %v4786 = vrsqrt.pop %v4662
        %v4787 = vmul.f32 %v4662, %v4786
        %vm4788 = vcmp.eq.f32.partialorder %v4662, inf
        %v4789 = vsel %vm4788, %v4662, %v4787
        %vm4790 = vcmp.eq.f32.partialorder %v4662, 0.0
        %v4791 = vand.u32 %v4662, 2147483648
        %v4792 = vsel %vm4790, %v4791, %v4789
        %v4793 = vrsqrt.pop %v4663
        %v4794 = vmul.f32 %v4663, %v4793
        %vm4795 = vcmp.eq.f32.partialorder %v4663, inf
        %v4796 = vsel %vm4795, %v4663, %v4794
        %vm4797 = vcmp.eq.f32.partialorder %v4663, 0.0
        %v4798 = vand.u32 %v4663, 2147483648
        %v4799 = vsel %vm4797, %v4798, %v4796
        %v4800 = vrsqrt.pop %v4664
        %v4801 = vmul.f32 %v4664, %v4800
        %vm4802 = vcmp.eq.f32.partialorder %v4664, inf
        %v4803 = vsel %vm4802, %v4664, %v4801
        %vm4804 = vcmp.eq.f32.partialorder %v4664, 0.0
        %v4805 = vand.u32 %v4664, 2147483648
        %v4806 = vsel %vm4804, %v4805, %v4803
        %v4807 = vrsqrt.pop %v4665
        %v4808 = vmul.f32 %v4665, %v4807
        %vm4809 = vcmp.eq.f32.partialorder %v4665, inf
        %v4810 = vsel %vm4809, %v4665, %v4808
        %vm4811 = vcmp.eq.f32.partialorder %v4665, 0.0
        %v4812 = vand.u32 %v4665, 2147483648
        %v4813 = vsel %vm4811, %v4812, %v4810
        %v4814 = vrsqrt.pop %v4666
        %v4815 = vmul.f32 %v4666, %v4814
        %vm4816 = vcmp.eq.f32.partialorder %v4666, inf
        %v4817 = vsel %vm4816, %v4666, %v4815
        %vm4818 = vcmp.eq.f32.partialorder %v4666, 0.0
        %v4819 = vand.u32 %v4666, 2147483648
        %v4820 = vsel %vm4818, %v4819, %v4817
        %v4821 = vrsqrt.pop %v4667
        %v4822 = vmul.f32 %v4667, %v4821
        %vm4823 = vcmp.eq.f32.partialorder %v4667, inf
        %v4824 = vsel %vm4823, %v4667, %v4822
        %vm4825 = vcmp.eq.f32.partialorder %v4667, 0.0
        %v4826 = vand.u32 %v4667, 2147483648
        %v4827 = vsel %vm4825, %v4826, %v4824
        %v4828 = vrsqrt.pop %v4668
        %v4829 = vmul.f32 %v4668, %v4828
        %vm4830 = vcmp.eq.f32.partialorder %v4668, inf
        %v4831 = vsel %vm4830, %v4668, %v4829
        %vm4832 = vcmp.eq.f32.partialorder %v4668, 0.0
        %v4833 = vand.u32 %v4668, 2147483648
        %v4834 = vsel %vm4832, %v4833, %v4831
        %v4835 = vrsqrt.pop %v4669
        %v4836 = vmul.f32 %v4669, %v4835
        %vm4837 = vcmp.eq.f32.partialorder %v4669, inf
        %v4838 = vsel %vm4837, %v4669, %v4836
        %vm4839 = vcmp.eq.f32.partialorder %v4669, 0.0
        %v4840 = vand.u32 %v4669, 2147483648
        %v4841 = vsel %vm4839, %v4840, %v4838
        %v4842 = vrsqrt.pop %v4670
        %v4843 = vmul.f32 %v4670, %v4842
        %vm4844 = vcmp.eq.f32.partialorder %v4670, inf
        %v4845 = vsel %vm4844, %v4670, %v4843
        %vm4846 = vcmp.eq.f32.partialorder %v4670, 0.0
        %v4847 = vand.u32 %v4670, 2147483648
        %v4848 = vsel %vm4846, %v4847, %v4845
        %v4849 = vrsqrt.pop %v4671
        %v4850 = vmul.f32 %v4671, %v4849
        %vm4851 = vcmp.eq.f32.partialorder %v4671, inf
        %v4852 = vsel %vm4851, %v4671, %v4850
        %vm4853 = vcmp.eq.f32.partialorder %v4671, 0.0
        %v4854 = vand.u32 %v4671, 2147483648
        %v4855 = vsel %vm4853, %v4854, %v4852
        %v4856 = vrsqrt.pop %v4672
        %v4857 = vmul.f32 %v4672, %v4856
        %vm4858 = vcmp.eq.f32.partialorder %v4672, inf
        %v4859 = vsel %vm4858, %v4672, %v4857
        %vm4860 = vcmp.eq.f32.partialorder %v4672, 0.0
        %v4861 = vand.u32 %v4672, 2147483648
        %v4862 = vsel %vm4860, %v4861, %v4859
        %v4863 = vrsqrt.pop %v4673
        %v4864 = vmul.f32 %v4673, %v4863
        %vm4865 = vcmp.eq.f32.partialorder %v4673, inf
        %v4866 = vsel %vm4865, %v4673, %v4864
        %vm4867 = vcmp.eq.f32.partialorder %v4673, 0.0
        %v4868 = vand.u32 %v4673, 2147483648
        %v4869 = vsel %vm4867, %v4868, %v4866
        %v4870 = vrsqrt.pop %v4674
        %v4871 = vmul.f32 %v4674, %v4870
        %vm4872 = vcmp.eq.f32.partialorder %v4674, inf
        %v4873 = vsel %vm4872, %v4674, %v4871
        %vm4874 = vcmp.eq.f32.partialorder %v4674, 0.0
        %v4875 = vand.u32 %v4674, 2147483648
        %v4876 = vsel %vm4874, %v4875, %v4873
        %v4877 = vrsqrt.pop %v4675
        %v4878 = vmul.f32 %v4675, %v4877
        %vm4879 = vcmp.eq.f32.partialorder %v4675, inf
        %v4880 = vsel %vm4879, %v4675, %v4878
        %vm4881 = vcmp.eq.f32.partialorder %v4675, 0.0
        %v4882 = vand.u32 %v4675, 2147483648
        %v4883 = vsel %vm4881, %v4882, %v4880
        %v4884 = vrsqrt.pop %v4676
        %v4885 = vmul.f32 %v4676, %v4884
        %vm4886 = vcmp.eq.f32.partialorder %v4676, inf
        %v4887 = vsel %vm4886, %v4676, %v4885
        %vm4888 = vcmp.eq.f32.partialorder %v4676, 0.0
        %v4889 = vand.u32 %v4676, 2147483648
        %v4890 = vsel %vm4888, %v4889, %v4887
        %v4891 = vrsqrt.pop %v4677
        %v4892 = vmul.f32 %v4677, %v4891
        %vm4893 = vcmp.eq.f32.partialorder %v4677, inf
        %v4894 = vsel %vm4893, %v4677, %v4892
        %vm4895 = vcmp.eq.f32.partialorder %v4677, 0.0
        %v4896 = vand.u32 %v4677, 2147483648
        %v4897 = vsel %vm4895, %v4896, %v4894
        %v4898 = vrsqrt.pop %v4678
        %v4899 = vmul.f32 %v4678, %v4898
        %vm4900 = vcmp.eq.f32.partialorder %v4678, inf
        %v4901 = vsel %vm4900, %v4678, %v4899
        %vm4902 = vcmp.eq.f32.partialorder %v4678, 0.0
        %v4903 = vand.u32 %v4678, 2147483648
        %v4904 = vsel %vm4902, %v4903, %v4901
        %v4905 = vrsqrt.pop %v4679
        %v4906 = vmul.f32 %v4679, %v4905
        %vm4907 = vcmp.eq.f32.partialorder %v4679, inf
        %v4908 = vsel %vm4907, %v4679, %v4906
        %vm4909 = vcmp.eq.f32.partialorder %v4679, 0.0
        %v4910 = vand.u32 %v4679, 2147483648
        %v4911 = vsel %vm4909, %v4910, %v4908
        %v4912 = vrsqrt.pop %v4680
        %v4913 = vmul.f32 %v4680, %v4912
        %vm4914 = vcmp.eq.f32.partialorder %v4680, inf
        %v4915 = vsel %vm4914, %v4680, %v4913
        %vm4916 = vcmp.eq.f32.partialorder %v4680, 0.0
        %v4917 = vand.u32 %v4680, 2147483648
        %v4918 = vsel %vm4916, %v4917, %v4915
        %v4919 = vlog2.pop %v4687
        %v4920 = vmul.f32 %v4919, 0.6931472
        %v4921 = vlog2.pop %v4694
        %v4922 = vmul.f32 %v4921, 0.6931472
        %v4923 = vlog2.pop %v4701
        %v4924 = vmul.f32 %v4923, 0.6931472
        %v4925 = vlog2.pop %v4708
        %v4926 = vmul.f32 %v4925, 0.6931472
        %v4927 = vlog2.pop %v4715
        %v4928 = vmul.f32 %v4927, 0.6931472
        %v4929 = vlog2.pop %v4722
        %v4930 = vmul.f32 %v4929, 0.6931472
        %v4931 = vlog2.pop %v4729
        %v4932 = vmul.f32 %v4931, 0.6931472
        %v4933 = vlog2.pop %v4736
        %v4934 = vmul.f32 %v4933, 0.6931472
        %v4935 = vlog2.pop %v4743
        %v4936 = vmul.f32 %v4935, 0.6931472
        %v4937 = vlog2.pop %v4750
        %v4938 = vmul.f32 %v4937, 0.6931472
        %v4939 = vlog2.pop %v4757
        %v4940 = vmul.f32 %v4939, 0.6931472
        %v4941 = vlog2.pop %v4764
        %v4942 = vmul.f32 %v4941, 0.6931472
        %v4943 = vlog2.pop %v4771
        %v4944 = vmul.f32 %v4943, 0.6931472
        %v4945 = vlog2.pop %v4778
        %v4946 = vmul.f32 %v4945, 0.6931472
        %v4947 = vlog2.pop %v4785
        %v4948 = vmul.f32 %v4947, 0.6931472
        %v4949 = vlog2.pop %v4792
        %v4950 = vmul.f32 %v4949, 0.6931472
        %v4951 = vlog2.pop %v4799
        %v4952 = vmul.f32 %v4951, 0.6931472
        %v4953 = vlog2.pop %v4806
        %v4954 = vmul.f32 %v4953, 0.6931472
        %v4955 = vlog2.pop %v4813
        %v4956 = vmul.f32 %v4955, 0.6931472
        %v4957 = vlog2.pop %v4820
        %v4958 = vmul.f32 %v4957, 0.6931472
        %v4959 = vlog2.pop %v4827
        %v4960 = vmul.f32 %v4959, 0.6931472
        %v4961 = vlog2.pop %v4834
        %v4962 = vmul.f32 %v4961, 0.6931472
        %v4963 = vlog2.pop %v4841
        %v4964 = vmul.f32 %v4963, 0.6931472
        %v4965 = vlog2.pop %v4848
        %v4966 = vmul.f32 %v4965, 0.6931472
        %v4967 = vlog2.pop %v4855
        %v4968 = vmul.f32 %v4967, 0.6931472
        %v4969 = vlog2.pop %v4862
        %v4970 = vmul.f32 %v4969, 0.6931472
        %v4971 = vlog2.pop %v4869
        %v4972 = vmul.f32 %v4971, 0.6931472
        %v4973 = vlog2.pop %v4876
        %v4974 = vmul.f32 %v4973, 0.6931472
        %v4975 = vlog2.pop %v4883
        %v4976 = vmul.f32 %v4975, 0.6931472
        %v4977 = vlog2.pop %v4890
        %v4978 = vmul.f32 %v4977, 0.6931472
        %v4979 = vlog2.pop %v4897
        %v4980 = vmul.f32 %v4979, 0.6931472
        %v4981 = vlog2.pop %v4904
        %v4982 = vmul.f32 %v4981, 0.6931472
        %v4983 = vlog2.pop %v4911
        %v4984 = vmul.f32 %v4983, 0.6931472
        %v4985 = vlog2.pop %v4918
        %v4986 = vmul.f32 %v4985, 0.6931472
        %v4987 = vadd.s32 %v1720, 72
        %v4988 = vadd.s32 %v1720, 80
        %v4989 = vadd.s32 %v1720, 88
        %v4990 = vadd.s32 %v1720, 96
        %v4991 = vadd.s32 %v1720, 104
        %v4992 = vadd.s32 %v1720, 112
        %v4993 = vadd.s32 %v1720, 120
        %v4994 = vadd.s32 %v1720, 128
        %v4995 = vstv %s3104
        %v4996 = vadd.s32 %v1720, %v4995
        %v4997 = vadd.s32 %v1721, %v4995
        %v4998 = vadd.s32 %v1722, %v4995
        %v4999 = vadd.s32 %v1723, %v4995
        %v5000 = vadd.s32 %v1724, %v4995
        %v5001 = vadd.s32 %v1725, %v4995
        %v5002 = vadd.s32 %v1726, %v4995
        %v5003 = vadd.s32 %v1727, %v4995
        %v5004 = vadd.s32 %v1728, %v4995
        %v5005 = vadd.s32 %v4987, %v4995
        %v5006 = vadd.s32 %v4988, %v4995
        %v5007 = vadd.s32 %v4989, %v4995
        %v5008 = vadd.s32 %v4990, %v4995
        %v5009 = vadd.s32 %v4991, %v4995
        %v5010 = vadd.s32 %v4992, %v4995
        %v5011 = vadd.s32 %v4993, %v4995
        %v5012 = vadd.s32 %v4994, %v4995
        %vm5013 = vcmp.lt.s32.totalorder %v4996, 129
        %vm5014 = vcmp.lt.s32.totalorder %v4997, 129
        %vm5015 = vcmp.lt.s32.totalorder %v4998, 129
        %vm5016 = vcmp.lt.s32.totalorder %v4999, 129
        %vm5017 = vcmp.lt.s32.totalorder %v5000, 129
        %vm5018 = vcmp.lt.s32.totalorder %v5001, 129
        %vm5019 = vcmp.lt.s32.totalorder %v5002, 129
        %vm5020 = vcmp.lt.s32.totalorder %v5003, 129
        %vm5021 = vcmp.lt.s32.totalorder %v5004, 129
        %vm5022 = vcmp.lt.s32.totalorder %v5005, 129
        %vm5023 = vcmp.lt.s32.totalorder %v5006, 129
        %vm5024 = vcmp.lt.s32.totalorder %v5007, 129
        %vm5025 = vcmp.lt.s32.totalorder %v5008, 129
        %vm5026 = vcmp.lt.s32.totalorder %v5009, 129
        %vm5027 = vcmp.lt.s32.totalorder %v5010, 129
        %vm5028 = vcmp.lt.s32.totalorder %v5011, 129
        %vm5029 = vcmp.lt.s32.totalorder %v5012, 129
        %v5030 = vsel %vm5013, 1.0, 0.0
        %v5031 = vsel %vm5014, 1.0, 0.0
        %v5032 = vsel %vm5015, 1.0, 0.0
        %v5033 = vsel %vm5016, 1.0, 0.0
        %v5034 = vsel %vm5017, 1.0, 0.0
        %v5035 = vsel %vm5018, 1.0, 0.0
        %v5036 = vsel %vm5019, 1.0, 0.0
        %v5037 = vsel %vm5020, 1.0, 0.0
        %v5038 = vsel %vm5021, 1.0, 0.0
        %v5039 = vsel %vm5022, 1.0, 0.0
        %v5040 = vsel %vm5023, 1.0, 0.0
        %v5041 = vsel %vm5024, 1.0, 0.0
        %v5042 = vsel %vm5025, 1.0, 0.0
        %v5043 = vsel %vm5026, 1.0, 0.0
        %v5044 = vsel %vm5027, 1.0, 0.0
        %v5045 = vsel %vm5028, 1.0, 0.0
        %v5046 = vsel %vm5029, 1.0, 0.0
        %v5047 = vsub.f32 %v4466, %v4347
        %v5048 = vsub.f32 %v4473, %v4354
        %v5049 = vsub.f32 %v4480, %v4361
        %v5050 = vsub.f32 %v4487, %v4368
        %v5051 = vsub.f32 %v4494, %v4375
        %v5052 = vsub.f32 %v4501, %v4382
        %v5053 = vsub.f32 %v4508, %v4389
        %v5054 = vsub.f32 %v4515, %v4396
        %v5055 = vsub.f32 %v4522, %v4403
        %v5056 = vsub.f32 %v4529, %v4410
        %v5057 = vsub.f32 %v4536, %v4417
        %v5058 = vsub.f32 %v4543, %v4424
        %v5059 = vsub.f32 %v4550, %v4431
        %v5060 = vsub.f32 %v4557, %v4438
        %v5061 = vsub.f32 %v4564, %v4445
        %v5062 = vsub.f32 %v4571, %v4452
        %v5063 = vsub.f32 %v4578, %v4459
        %v5064 = vmul.f32 %v5047, %v5030
        %v5065 = vmul.f32 %v5048, %v5031
        %v5066 = vmul.f32 %v5049, %v5032
        %v5067 = vmul.f32 %v5050, %v5033
        %v5068 = vmul.f32 %v5051, %v5034
        %v5069 = vmul.f32 %v5052, %v5035
        %v5070 = vmul.f32 %v5053, %v5036
        %v5071 = vmul.f32 %v5054, %v5037
        %v5072 = vmul.f32 %v5055, %v5038
        %v5073 = vmul.f32 %v5056, %v5039
        %v5074 = vmul.f32 %v5057, %v5040
        %v5075 = vmul.f32 %v5058, %v5041
        %v5076 = vmul.f32 %v5059, %v5042
        %v5077 = vmul.f32 %v5060, %v5043
        %v5078 = vmul.f32 %v5061, %v5044
        %v5079 = vmul.f32 %v5062, %v5045
        %v5080 = vmul.f32 %v5063, %v5046
        %v5081 = vsub.f32 %v4806, %v4687
        %v5082 = vsub.f32 %v4813, %v4694
        %v5083 = vsub.f32 %v4820, %v4701
        %v5084 = vsub.f32 %v4827, %v4708
        %v5085 = vsub.f32 %v4834, %v4715
        %v5086 = vsub.f32 %v4841, %v4722
        %v5087 = vsub.f32 %v4848, %v4729
        %v5088 = vsub.f32 %v4855, %v4736
        %v5089 = vsub.f32 %v4862, %v4743
        %v5090 = vsub.f32 %v4869, %v4750
        %v5091 = vsub.f32 %v4876, %v4757
        %v5092 = vsub.f32 %v4883, %v4764
        %v5093 = vsub.f32 %v4890, %v4771
        %v5094 = vsub.f32 %v4897, %v4778
        %v5095 = vsub.f32 %v4904, %v4785
        %v5096 = vsub.f32 %v4911, %v4792
        %v5097 = vsub.f32 %v4918, %v4799
        %v5098 = vmul.f32 %v5081, %v5030
        %v5099 = vmul.f32 %v5082, %v5031
        %v5100 = vmul.f32 %v5083, %v5032
        %v5101 = vmul.f32 %v5084, %v5033
        %v5102 = vmul.f32 %v5085, %v5034
        %v5103 = vmul.f32 %v5086, %v5035
        %v5104 = vmul.f32 %v5087, %v5036
        %v5105 = vmul.f32 %v5088, %v5037
        %v5106 = vmul.f32 %v5089, %v5038
        %v5107 = vmul.f32 %v5090, %v5039
        %v5108 = vmul.f32 %v5091, %v5040
        %v5109 = vmul.f32 %v5092, %v5041
        %v5110 = vmul.f32 %v5093, %v5042
        %v5111 = vmul.f32 %v5094, %v5043
        %v5112 = vmul.f32 %v5095, %v5044
        %v5113 = vmul.f32 %v5096, %v5045
        %v5114 = vmul.f32 %v5097, %v5046
        %s5115 = sld [smem:[#allocation5 + $0x6]]
        %v5116 = vmul.f32 %v5064, %v5064
        %v5117 = vmul.f32 %v5065, %v5065
        %v5118 = vmul.f32 %v5066, %v5066
        %v5119 = vmul.f32 %v5067, %v5067
        %v5120 = vmul.f32 %v5068, %v5068
        %v5121 = vmul.f32 %v5069, %v5069
        %v5122 = vmul.f32 %v5070, %v5070
        %v5123 = vmul.f32 %v5071, %v5071
        %v5124 = vmul.f32 %v5072, %v5072
        %v5125 = vmul.f32 %v5073, %v5073
        %v5126 = vmul.f32 %v5074, %v5074
        %v5127 = vmul.f32 %v5075, %v5075
        %v5128 = vmul.f32 %v5076, %v5076
        %v5129 = vmul.f32 %v5077, %v5077
        %v5130 = vmul.f32 %v5078, %v5078
        %v5131 = vmul.f32 %v5079, %v5079
        %v5132 = vmul.f32 %v5080, %v5080
        %v5133 = vsel %vm707, %v5116, 0.0
        %v5134 = vsel %vm707, %v5117, 0.0
        %v5135 = vadd.f32 %v5133, %v5134
        %v5136 = vsel %vm707, %v5118, 0.0
        %v5137 = vadd.f32 %v5135, %v5136
        %v5138 = vsel %vm707, %v5119, 0.0
        %v5139 = vadd.f32 %v5137, %v5138
        %v5140 = vsel %vm707, %v5120, 0.0
        %v5141 = vadd.f32 %v5139, %v5140
        %v5142 = vsel %vm707, %v5121, 0.0
        %v5143 = vadd.f32 %v5141, %v5142
        %v5144 = vsel %vm707, %v5122, 0.0
        %v5145 = vadd.f32 %v5143, %v5144
        %v5146 = vsel %vm707, %v5123, 0.0
        %v5147 = vadd.f32 %v5145, %v5146
        %v5148 = vsel %vm707, %v5124, 0.0
        %v5149 = vadd.f32 %v5147, %v5148
        %v5150 = vsel %vm707, %v5125, 0.0
        %v5151 = vadd.f32 %v5149, %v5150
        %v5152 = vsel %vm707, %v5126, 0.0
        %v5153 = vadd.f32 %v5151, %v5152
        %v5154 = vsel %vm707, %v5127, 0.0
        %v5155 = vadd.f32 %v5153, %v5154
        %v5156 = vsel %vm707, %v5128, 0.0
        %v5157 = vadd.f32 %v5155, %v5156
        %v5158 = vsel %vm707, %v5129, 0.0
        %v5159 = vadd.f32 %v5157, %v5158
        %v5160 = vsel %vm707, %v5130, 0.0
        %v5161 = vadd.f32 %v5159, %v5160
        %v5162 = vsel %vm707, %v5131, 0.0
        %v5163 = vadd.f32 %v5161, %v5162
        %v5164 = vsel %vm707, %v5132, 0.0
        %v5165 = vadd.f32 %v5163, %v5164
        %5166 = vadd.xlane.f32.xlu0 %v5165
        %v5167 = vpop.xlane.xlu0 %5166
        %v5168 = vrot.slane %v5167, 4
        %v5169 = vadd.f32 %v5167, %v5168
        %v5170 = vrot.slane %v5169, 2
        %v5171 = vadd.f32 %v5169, %v5170
        %v5172 = vrot.slane %v5171, 1
        %v5173 = vadd.f32 %v5171, %v5172
        %s5174 = vtos %v5173
        %v5175 = vmul.f32 %v5098, %v5098
        %v5176 = vmul.f32 %v5099, %v5099
        %v5177 = vmul.f32 %v5100, %v5100
        %v5178 = vmul.f32 %v5101, %v5101
        %v5179 = vmul.f32 %v5102, %v5102
        %v5180 = vmul.f32 %v5103, %v5103
        %v5181 = vmul.f32 %v5104, %v5104
        %v5182 = vmul.f32 %v5105, %v5105
        %v5183 = vmul.f32 %v5106, %v5106
        %v5184 = vmul.f32 %v5107, %v5107
        %v5185 = vmul.f32 %v5108, %v5108
        %v5186 = vmul.f32 %v5109, %v5109
        %v5187 = vmul.f32 %v5110, %v5110
        %v5188 = vmul.f32 %v5111, %v5111
        %v5189 = vmul.f32 %v5112, %v5112
        %v5190 = vmul.f32 %v5113, %v5113
        %v5191 = vmul.f32 %v5114, %v5114
        %5209 = vrot.lane.b32.xlu0 %v5175, 96
        %v5210 = vpop.permute.xlu0 %5209
        %5211 = vrot.lane.b32.xlu0 %v5176, 96
        %v5212 = vpop.permute.xlu0 %5211
        %5213 = vrot.lane.b32.xlu0 %v5177, 96
        %v5214 = vpop.permute.xlu0 %5213
        %5215 = vrot.lane.b32.xlu0 %v5178, 96
        %v5216 = vpop.permute.xlu0 %5215
        %5217 = vrot.lane.b32.xlu0 %v5179, 96
        %v5218 = vpop.permute.xlu0 %5217
        %5219 = vrot.lane.b32.xlu0 %v5180, 96
        %v5220 = vpop.permute.xlu0 %5219
        %5221 = vrot.lane.b32.xlu0 %v5181, 96
        %v5222 = vpop.permute.xlu0 %5221
        %5223 = vrot.lane.b32.xlu0 %v5182, 96
        %v5224 = vpop.permute.xlu0 %5223
        %5225 = vrot.lane.b32.xlu0 %v5183, 96
        %v5226 = vpop.permute.xlu0 %5225
        %5227 = vrot.lane.b32.xlu0 %v5184, 96
        %v5228 = vpop.permute.xlu0 %5227
        %5229 = vrot.lane.b32.xlu0 %v5185, 96
        %v5230 = vpop.permute.xlu0 %5229
        %5231 = vrot.lane.b32.xlu0 %v5186, 96
        %v5232 = vpop.permute.xlu0 %5231
        %5233 = vrot.lane.b32.xlu0 %v5187, 96
        %v5234 = vpop.permute.xlu0 %5233
        %5235 = vrot.lane.b32.xlu0 %v5188, 96
        %v5236 = vpop.permute.xlu0 %5235
        %5237 = vrot.lane.b32.xlu0 %v5189, 96
        %v5238 = vpop.permute.xlu0 %5237
        %5239 = vrot.lane.b32.xlu0 %v5190, 96
        %v5240 = vpop.permute.xlu0 %5239
        %5241 = vrot.lane.b32.xlu0 %v5191, 96
        %v5242 = vpop.permute.xlu0 %5241
        %v5260 = vsel %vm1875, %v5210, 0.0
        %v5261 = vsel %vm1875, %v5212, 0.0
        %v5262 = vadd.f32 %v5260, %v5261
        %v5263 = vsel %vm1875, %v5214, 0.0
        %v5264 = vadd.f32 %v5262, %v5263
        %v5265 = vsel %vm1875, %v5216, 0.0
        %v5266 = vadd.f32 %v5264, %v5265
        %v5267 = vsel %vm1875, %v5218, 0.0
        %v5268 = vadd.f32 %v5266, %v5267
        %v5269 = vsel %vm1875, %v5220, 0.0
        %v5270 = vadd.f32 %v5268, %v5269
        %v5271 = vsel %vm1875, %v5222, 0.0
        %v5272 = vadd.f32 %v5270, %v5271
        %v5273 = vsel %vm1875, %v5224, 0.0
        %v5274 = vadd.f32 %v5272, %v5273
        %v5275 = vsel %vm1875, %v5226, 0.0
        %v5276 = vadd.f32 %v5274, %v5275
        %v5277 = vsel %vm1875, %v5228, 0.0
        %v5278 = vadd.f32 %v5276, %v5277
        %v5279 = vsel %vm1875, %v5230, 0.0
        %v5280 = vadd.f32 %v5278, %v5279
        %v5281 = vsel %vm1875, %v5232, 0.0
        %v5282 = vadd.f32 %v5280, %v5281
        %v5283 = vsel %vm1875, %v5234, 0.0
        %v5284 = vadd.f32 %v5282, %v5283
        %v5285 = vsel %vm1875, %v5236, 0.0
        %v5286 = vadd.f32 %v5284, %v5285
        %v5287 = vsel %vm1875, %v5238, 0.0
        %v5288 = vadd.f32 %v5286, %v5287
        %v5289 = vsel %vm1875, %v5240, 0.0
        %v5290 = vadd.f32 %v5288, %v5289
        %v5291 = vsel %vm1875, %v5242, 0.0
        %v5292 = vadd.f32 %v5290, %v5291
        %5293 = vadd.xlane.f32.xlu0 %v5292
        %v5294 = vpop.xlane.xlu0 %5293
        %v5295 = vrot.slane %v5294, 4
        %v5296 = vadd.f32 %v5294, %v5295
        %v5297 = vrot.slane %v5296, 2
        %v5298 = vadd.f32 %v5296, %v5297
        %v5299 = vrot.slane %v5298, 1
        %v5300 = vadd.f32 %v5298, %v5299
        %s5301 = vtos %v5300
        %s5302 = sadd.f32 %s5174, %s5301
        %s5303 = sadd.f32 %s5115, %s5302
        %s5304 = scalar_lea.smem [#allocation5], 6
        %5305 = sst [smem:[%s5304]] %s5303
        %s5306 = sld [smem:[#allocation5 + $0x7]]
        %v5307 = vmul.f32 %v4324, %v5030
        %v5308 = vmul.f32 %v4325, %v5031
        %v5309 = vmul.f32 %v4326, %v5032
        %v5310 = vmul.f32 %v4327, %v5033
        %v5311 = vmul.f32 %v4328, %v5034
        %v5312 = vmul.f32 %v4329, %v5035
        %v5313 = vmul.f32 %v4330, %v5036
        %v5314 = vmul.f32 %v4331, %v5037
        %v5315 = vmul.f32 %v4332, %v5038
        %v5316 = vmul.f32 %v4333, %v5039
        %v5317 = vmul.f32 %v4334, %v5040
        %v5318 = vmul.f32 %v4335, %v5041
        %v5319 = vmul.f32 %v4336, %v5042
        %v5320 = vmul.f32 %v4337, %v5043
        %v5321 = vmul.f32 %v4338, %v5044
        %v5322 = vmul.f32 %v4339, %v5045
        %v5323 = vmul.f32 %v4340, %v5046
        %v5324 = vsel %vm707, %v5307, 0.0
        %v5325 = vsel %vm707, %v5308, 0.0
        %v5326 = vadd.f32 %v5324, %v5325
        %v5327 = vsel %vm707, %v5309, 0.0
        %v5328 = vadd.f32 %v5326, %v5327
        %v5329 = vsel %vm707, %v5310, 0.0
        %v5330 = vadd.f32 %v5328, %v5329
        %v5331 = vsel %vm707, %v5311, 0.0
        %v5332 = vadd.f32 %v5330, %v5331
        %v5333 = vsel %vm707, %v5312, 0.0
        %v5334 = vadd.f32 %v5332, %v5333
        %v5335 = vsel %vm707, %v5313, 0.0
        %v5336 = vadd.f32 %v5334, %v5335
        %v5337 = vsel %vm707, %v5314, 0.0
        %v5338 = vadd.f32 %v5336, %v5337
        %v5339 = vsel %vm707, %v5315, 0.0
        %v5340 = vadd.f32 %v5338, %v5339
        %v5341 = vsel %vm707, %v5316, 0.0
        %v5342 = vadd.f32 %v5340, %v5341
        %v5343 = vsel %vm707, %v5317, 0.0
        %v5344 = vadd.f32 %v5342, %v5343
        %v5345 = vsel %vm707, %v5318, 0.0
        %v5346 = vadd.f32 %v5344, %v5345
        %v5347 = vsel %vm707, %v5319, 0.0
        %v5348 = vadd.f32 %v5346, %v5347
        %v5349 = vsel %vm707, %v5320, 0.0
        %v5350 = vadd.f32 %v5348, %v5349
        %v5351 = vsel %vm707, %v5321, 0.0
        %v5352 = vadd.f32 %v5350, %v5351
        %v5353 = vsel %vm707, %v5322, 0.0
        %v5354 = vadd.f32 %v5352, %v5353
        %v5355 = vsel %vm707, %v5323, 0.0
        %v5356 = vadd.f32 %v5354, %v5355
        %5357 = vadd.xlane.f32.xlu0 %v5356
        %v5358 = vpop.xlane.xlu0 %5357
        %v5359 = vrot.slane %v5358, 4
        %v5360 = vadd.f32 %v5358, %v5359
        %v5361 = vrot.slane %v5360, 2
        %v5362 = vadd.f32 %v5360, %v5361
        %v5363 = vrot.slane %v5362, 1
        %v5364 = vadd.f32 %v5362, %v5363
        %s5365 = vtos %v5364
        %v5366 = vmul.f32 %v4664, %v5030
        %v5367 = vmul.f32 %v4665, %v5031
        %v5368 = vmul.f32 %v4666, %v5032
        %v5369 = vmul.f32 %v4667, %v5033
        %v5370 = vmul.f32 %v4668, %v5034
        %v5371 = vmul.f32 %v4669, %v5035
        %v5372 = vmul.f32 %v4670, %v5036
        %v5373 = vmul.f32 %v4671, %v5037
        %v5374 = vmul.f32 %v4672, %v5038
        %v5375 = vmul.f32 %v4673, %v5039
        %v5376 = vmul.f32 %v4674, %v5040
        %v5377 = vmul.f32 %v4675, %v5041
        %v5378 = vmul.f32 %v4676, %v5042
        %v5379 = vmul.f32 %v4677, %v5043
        %v5380 = vmul.f32 %v4678, %v5044
        %v5381 = vmul.f32 %v4679, %v5045
        %v5382 = vmul.f32 %v4680, %v5046
        %5400 = vrot.lane.b32.xlu0 %v5366, 96
        %v5401 = vpop.permute.xlu0 %5400
        %5402 = vrot.lane.b32.xlu0 %v5367, 96
        %v5403 = vpop.permute.xlu0 %5402
        %5404 = vrot.lane.b32.xlu0 %v5368, 96
        %v5405 = vpop.permute.xlu0 %5404
        %5406 = vrot.lane.b32.xlu0 %v5369, 96
        %v5407 = vpop.permute.xlu0 %5406
        %5408 = vrot.lane.b32.xlu0 %v5370, 96
        %v5409 = vpop.permute.xlu0 %5408
        %5410 = vrot.lane.b32.xlu0 %v5371, 96
        %v5411 = vpop.permute.xlu0 %5410
        %5412 = vrot.lane.b32.xlu0 %v5372, 96
        %v5413 = vpop.permute.xlu0 %5412
        %5414 = vrot.lane.b32.xlu0 %v5373, 96
        %v5415 = vpop.permute.xlu0 %5414
        %5416 = vrot.lane.b32.xlu0 %v5374, 96
        %v5417 = vpop.permute.xlu0 %5416
        %5418 = vrot.lane.b32.xlu0 %v5375, 96
        %v5419 = vpop.permute.xlu0 %5418
        %5420 = vrot.lane.b32.xlu0 %v5376, 96
        %v5421 = vpop.permute.xlu0 %5420
        %5422 = vrot.lane.b32.xlu0 %v5377, 96
        %v5423 = vpop.permute.xlu0 %5422
        %5424 = vrot.lane.b32.xlu0 %v5378, 96
        %v5425 = vpop.permute.xlu0 %5424
        %5426 = vrot.lane.b32.xlu0 %v5379, 96
        %v5427 = vpop.permute.xlu0 %5426
        %5428 = vrot.lane.b32.xlu0 %v5380, 96
        %v5429 = vpop.permute.xlu0 %5428
        %5430 = vrot.lane.b32.xlu0 %v5381, 96
        %v5431 = vpop.permute.xlu0 %5430
        %5432 = vrot.lane.b32.xlu0 %v5382, 96
        %v5433 = vpop.permute.xlu0 %5432
        %v5451 = vsel %vm1875, %v5401, 0.0
        %v5452 = vsel %vm1875, %v5403, 0.0
        %v5453 = vadd.f32 %v5451, %v5452
        %v5454 = vsel %vm1875, %v5405, 0.0
        %v5455 = vadd.f32 %v5453, %v5454
        %v5456 = vsel %vm1875, %v5407, 0.0
        %v5457 = vadd.f32 %v5455, %v5456
        %v5458 = vsel %vm1875, %v5409, 0.0
        %v5459 = vadd.f32 %v5457, %v5458
        %v5460 = vsel %vm1875, %v5411, 0.0
        %v5461 = vadd.f32 %v5459, %v5460
        %v5462 = vsel %vm1875, %v5413, 0.0
        %v5463 = vadd.f32 %v5461, %v5462
        %v5464 = vsel %vm1875, %v5415, 0.0
        %v5465 = vadd.f32 %v5463, %v5464
        %v5466 = vsel %vm1875, %v5417, 0.0
        %v5467 = vadd.f32 %v5465, %v5466
        %v5468 = vsel %vm1875, %v5419, 0.0
        %v5469 = vadd.f32 %v5467, %v5468
        %v5470 = vsel %vm1875, %v5421, 0.0
        %v5471 = vadd.f32 %v5469, %v5470
        %v5472 = vsel %vm1875, %v5423, 0.0
        %v5473 = vadd.f32 %v5471, %v5472
        %v5474 = vsel %vm1875, %v5425, 0.0
        %v5475 = vadd.f32 %v5473, %v5474
        %v5476 = vsel %vm1875, %v5427, 0.0
        %v5477 = vadd.f32 %v5475, %v5476
        %v5478 = vsel %vm1875, %v5429, 0.0
        %v5479 = vadd.f32 %v5477, %v5478
        %v5480 = vsel %vm1875, %v5431, 0.0
        %v5481 = vadd.f32 %v5479, %v5480
        %v5482 = vsel %vm1875, %v5433, 0.0
        %v5483 = vadd.f32 %v5481, %v5482
        %5484 = vadd.xlane.f32.xlu0 %v5483
        %v5485 = vpop.xlane.xlu0 %5484
        %v5486 = vrot.slane %v5485, 4
        %v5487 = vadd.f32 %v5485, %v5486
        %v5488 = vrot.slane %v5487, 2
        %v5489 = vadd.f32 %v5487, %v5488
        %v5490 = vrot.slane %v5489, 1
        %v5491 = vadd.f32 %v5489, %v5490
        %s5492 = vtos %v5491
        %s5493 = sadd.f32 %s5365, %s5492
        %s5494 = sadd.f32 %s5306, %s5493
        %s5495 = scalar_lea.smem [#allocation5], 7
        %5496 = sst [smem:[%s5495]] %s5494
        %s5497 = sld [smem:[#allocation5 + $0x8]]
        %v5498 = vsub.f32 %v4614, %v4580
        %v5499 = vsub.f32 %v4616, %v4582
        %v5500 = vsub.f32 %v4618, %v4584
        %v5501 = vsub.f32 %v4620, %v4586
        %v5502 = vsub.f32 %v4622, %v4588
        %v5503 = vsub.f32 %v4624, %v4590
        %v5504 = vsub.f32 %v4626, %v4592
        %v5505 = vsub.f32 %v4628, %v4594
        %v5506 = vsub.f32 %v4630, %v4596
        %v5507 = vsub.f32 %v4632, %v4598
        %v5508 = vsub.f32 %v4634, %v4600
        %v5509 = vsub.f32 %v4636, %v4602
        %v5510 = vsub.f32 %v4638, %v4604
        %v5511 = vsub.f32 %v4640, %v4606
        %v5512 = vsub.f32 %v4642, %v4608
        %v5513 = vsub.f32 %v4644, %v4610
        %v5514 = vsub.f32 %v4646, %v4612
        %v5515 = vand.u32 2147483647, %v5498
        %v5516 = vand.u32 2147483647, %v5499
        %v5517 = vand.u32 2147483647, %v5500
        %v5518 = vand.u32 2147483647, %v5501
        %v5519 = vand.u32 2147483647, %v5502
        %v5520 = vand.u32 2147483647, %v5503
        %v5521 = vand.u32 2147483647, %v5504
        %v5522 = vand.u32 2147483647, %v5505
        %v5523 = vand.u32 2147483647, %v5506
        %v5524 = vand.u32 2147483647, %v5507
        %v5525 = vand.u32 2147483647, %v5508
        %v5526 = vand.u32 2147483647, %v5509
        %v5527 = vand.u32 2147483647, %v5510
        %v5528 = vand.u32 2147483647, %v5511
        %v5529 = vand.u32 2147483647, %v5512
        %v5530 = vand.u32 2147483647, %v5513
        %v5531 = vand.u32 2147483647, %v5514
        %v5532 = vmul.f32 %v5515, %v5030
        %v5533 = vmul.f32 %v5516, %v5031
        %v5534 = vmul.f32 %v5517, %v5032
        %v5535 = vmul.f32 %v5518, %v5033
        %v5536 = vmul.f32 %v5519, %v5034
        %v5537 = vmul.f32 %v5520, %v5035
        %v5538 = vmul.f32 %v5521, %v5036
        %v5539 = vmul.f32 %v5522, %v5037
        %v5540 = vmul.f32 %v5523, %v5038
        %v5541 = vmul.f32 %v5524, %v5039
        %v5542 = vmul.f32 %v5525, %v5040
        %v5543 = vmul.f32 %v5526, %v5041
        %v5544 = vmul.f32 %v5527, %v5042
        %v5545 = vmul.f32 %v5528, %v5043
        %v5546 = vmul.f32 %v5529, %v5044
        %v5547 = vmul.f32 %v5530, %v5045
        %v5548 = vmul.f32 %v5531, %v5046
        %v5549 = vsel %vm707, %v5532, 0.0
        %v5550 = vsel %vm707, %v5533, 0.0
        %v5551 = vadd.f32 %v5549, %v5550
        %v5552 = vsel %vm707, %v5534, 0.0
        %v5553 = vadd.f32 %v5551, %v5552
        %v5554 = vsel %vm707, %v5535, 0.0
        %v5555 = vadd.f32 %v5553, %v5554
        %v5556 = vsel %vm707, %v5536, 0.0
        %v5557 = vadd.f32 %v5555, %v5556
        %v5558 = vsel %vm707, %v5537, 0.0
        %v5559 = vadd.f32 %v5557, %v5558
        %v5560 = vsel %vm707, %v5538, 0.0
        %v5561 = vadd.f32 %v5559, %v5560
        %v5562 = vsel %vm707, %v5539, 0.0
        %v5563 = vadd.f32 %v5561, %v5562
        %v5564 = vsel %vm707, %v5540, 0.0
        %v5565 = vadd.f32 %v5563, %v5564
        %v5566 = vsel %vm707, %v5541, 0.0
        %v5567 = vadd.f32 %v5565, %v5566
        %v5568 = vsel %vm707, %v5542, 0.0
        %v5569 = vadd.f32 %v5567, %v5568
        %v5570 = vsel %vm707, %v5543, 0.0
        %v5571 = vadd.f32 %v5569, %v5570
        %v5572 = vsel %vm707, %v5544, 0.0
        %v5573 = vadd.f32 %v5571, %v5572
        %v5574 = vsel %vm707, %v5545, 0.0
        %v5575 = vadd.f32 %v5573, %v5574
        %v5576 = vsel %vm707, %v5546, 0.0
        %v5577 = vadd.f32 %v5575, %v5576
        %v5578 = vsel %vm707, %v5547, 0.0
        %v5579 = vadd.f32 %v5577, %v5578
        %v5580 = vsel %vm707, %v5548, 0.0
        %v5581 = vadd.f32 %v5579, %v5580
        %5582 = vadd.xlane.f32.xlu0 %v5581
        %v5583 = vpop.xlane.xlu0 %5582
        %v5584 = vrot.slane %v5583, 4
        %v5585 = vadd.f32 %v5583, %v5584
        %v5586 = vrot.slane %v5585, 2
        %v5587 = vadd.f32 %v5585, %v5586
        %v5588 = vrot.slane %v5587, 1
        %v5589 = vadd.f32 %v5587, %v5588
        %s5590 = vtos %v5589
        %v5591 = vsub.f32 %v4954, %v4920
        %v5592 = vsub.f32 %v4956, %v4922
        %v5593 = vsub.f32 %v4958, %v4924
        %v5594 = vsub.f32 %v4960, %v4926
        %v5595 = vsub.f32 %v4962, %v4928
        %v5596 = vsub.f32 %v4964, %v4930
        %v5597 = vsub.f32 %v4966, %v4932
        %v5598 = vsub.f32 %v4968, %v4934
        %v5599 = vsub.f32 %v4970, %v4936
        %v5600 = vsub.f32 %v4972, %v4938
        %v5601 = vsub.f32 %v4974, %v4940
        %v5602 = vsub.f32 %v4976, %v4942
        %v5603 = vsub.f32 %v4978, %v4944
        %v5604 = vsub.f32 %v4980, %v4946
        %v5605 = vsub.f32 %v4982, %v4948
        %v5606 = vsub.f32 %v4984, %v4950
        %v5607 = vsub.f32 %v4986, %v4952
        %v5608 = vand.u32 2147483647, %v5591
        %v5609 = vand.u32 2147483647, %v5592
        %v5610 = vand.u32 2147483647, %v5593
        %v5611 = vand.u32 2147483647, %v5594
        %v5612 = vand.u32 2147483647, %v5595
        %v5613 = vand.u32 2147483647, %v5596
        %v5614 = vand.u32 2147483647, %v5597
        %v5615 = vand.u32 2147483647, %v5598
        %v5616 = vand.u32 2147483647, %v5599
        %v5617 = vand.u32 2147483647, %v5600
        %v5618 = vand.u32 2147483647, %v5601
        %v5619 = vand.u32 2147483647, %v5602
        %v5620 = vand.u32 2147483647, %v5603
        %v5621 = vand.u32 2147483647, %v5604
        %v5622 = vand.u32 2147483647, %v5605
        %v5623 = vand.u32 2147483647, %v5606
        %v5624 = vand.u32 2147483647, %v5607
        %v5625 = vmul.f32 %v5608, %v5030
        %v5626 = vmul.f32 %v5609, %v5031
        %v5627 = vmul.f32 %v5610, %v5032
        %v5628 = vmul.f32 %v5611, %v5033
        %v5629 = vmul.f32 %v5612, %v5034
        %v5630 = vmul.f32 %v5613, %v5035
        %v5631 = vmul.f32 %v5614, %v5036
        %v5632 = vmul.f32 %v5615, %v5037
        %v5633 = vmul.f32 %v5616, %v5038
        %v5634 = vmul.f32 %v5617, %v5039
        %v5635 = vmul.f32 %v5618, %v5040
        %v5636 = vmul.f32 %v5619, %v5041
        %v5637 = vmul.f32 %v5620, %v5042
        %v5638 = vmul.f32 %v5621, %v5043
        %v5639 = vmul.f32 %v5622, %v5044
        %v5640 = vmul.f32 %v5623, %v5045
        %v5641 = vmul.f32 %v5624, %v5046
        %5659 = vrot.lane.b32.xlu0 %v5625, 96
        %v5660 = vpop.permute.xlu0 %5659
        %5661 = vrot.lane.b32.xlu0 %v5626, 96
        %v5662 = vpop.permute.xlu0 %5661
        %5663 = vrot.lane.b32.xlu0 %v5627, 96
        %v5664 = vpop.permute.xlu0 %5663
        %5665 = vrot.lane.b32.xlu0 %v5628, 96
        %v5666 = vpop.permute.xlu0 %5665
        %5667 = vrot.lane.b32.xlu0 %v5629, 96
        %v5668 = vpop.permute.xlu0 %5667
        %5669 = vrot.lane.b32.xlu0 %v5630, 96
        %v5670 = vpop.permute.xlu0 %5669
        %5671 = vrot.lane.b32.xlu0 %v5631, 96
        %v5672 = vpop.permute.xlu0 %5671
        %5673 = vrot.lane.b32.xlu0 %v5632, 96
        %v5674 = vpop.permute.xlu0 %5673
        %5675 = vrot.lane.b32.xlu0 %v5633, 96
        %v5676 = vpop.permute.xlu0 %5675
        %5677 = vrot.lane.b32.xlu0 %v5634, 96
        %v5678 = vpop.permute.xlu0 %5677
        %5679 = vrot.lane.b32.xlu0 %v5635, 96
        %v5680 = vpop.permute.xlu0 %5679
        %5681 = vrot.lane.b32.xlu0 %v5636, 96
        %v5682 = vpop.permute.xlu0 %5681
        %5683 = vrot.lane.b32.xlu0 %v5637, 96
        %v5684 = vpop.permute.xlu0 %5683
        %5685 = vrot.lane.b32.xlu0 %v5638, 96
        %v5686 = vpop.permute.xlu0 %5685
        %5687 = vrot.lane.b32.xlu0 %v5639, 96
        %v5688 = vpop.permute.xlu0 %5687
        %5689 = vrot.lane.b32.xlu0 %v5640, 96
        %v5690 = vpop.permute.xlu0 %5689
        %5691 = vrot.lane.b32.xlu0 %v5641, 96
        %v5692 = vpop.permute.xlu0 %5691
        %v5710 = vsel %vm1875, %v5660, 0.0
        %v5711 = vsel %vm1875, %v5662, 0.0
        %v5712 = vadd.f32 %v5710, %v5711
        %v5713 = vsel %vm1875, %v5664, 0.0
        %v5714 = vadd.f32 %v5712, %v5713
        %v5715 = vsel %vm1875, %v5666, 0.0
        %v5716 = vadd.f32 %v5714, %v5715
        %v5717 = vsel %vm1875, %v5668, 0.0
        %v5718 = vadd.f32 %v5716, %v5717
        %v5719 = vsel %vm1875, %v5670, 0.0
        %v5720 = vadd.f32 %v5718, %v5719
        %v5721 = vsel %vm1875, %v5672, 0.0
        %v5722 = vadd.f32 %v5720, %v5721
        %v5723 = vsel %vm1875, %v5674, 0.0
        %v5724 = vadd.f32 %v5722, %v5723
        %v5725 = vsel %vm1875, %v5676, 0.0
        %v5726 = vadd.f32 %v5724, %v5725
        %v5727 = vsel %vm1875, %v5678, 0.0
        %v5728 = vadd.f32 %v5726, %v5727
        %v5729 = vsel %vm1875, %v5680, 0.0
        %v5730 = vadd.f32 %v5728, %v5729
        %v5731 = vsel %vm1875, %v5682, 0.0
        %v5732 = vadd.f32 %v5730, %v5731
        %v5733 = vsel %vm1875, %v5684, 0.0
        %v5734 = vadd.f32 %v5732, %v5733
        %v5735 = vsel %vm1875, %v5686, 0.0
        %v5736 = vadd.f32 %v5734, %v5735
        %v5737 = vsel %vm1875, %v5688, 0.0
        %v5738 = vadd.f32 %v5736, %v5737
        %v5739 = vsel %vm1875, %v5690, 0.0
        %v5740 = vadd.f32 %v5738, %v5739
        %v5741 = vsel %vm1875, %v5692, 0.0
        %v5742 = vadd.f32 %v5740, %v5741
        %5743 = vadd.xlane.f32.xlu0 %v5742
        %v5744 = vpop.xlane.xlu0 %5743
        %v5745 = vrot.slane %v5744, 4
        %v5746 = vadd.f32 %v5744, %v5745
        %v5747 = vrot.slane %v5746, 2
        %v5748 = vadd.f32 %v5746, %v5747
        %v5749 = vrot.slane %v5748, 1
        %v5750 = vadd.f32 %v5748, %v5749
        %s5751 = vtos %v5750
        %s5752 = sadd.f32 %s5590, %s5751
        %s5753 = sadd.f32 %s5497, %s5752
        %s5754 = scalar_lea.smem [#allocation5], 8
        %5755 = sst [smem:[%s5754]] %s5753
        // Predicated region
        $region77: #{se_loss_forward.1} parent=71 // pred_check
          %p5756 = pneg %p621
        $region78: #{se_loss_forward.1} parent=71 // pred_check_branch
          %5758 = sbr.rel (%p5756) target = $region80
        $region79: #{se_loss_forward.1} parent=71 // pred_region
          %v5759 = vld [vmem:[%s603] sm:$0xff]
          %v5760 = vld [vmem:[%s603 + $0x8] sm:$0xff]
          %v5761 = vld [vmem:[%s608] sm:$0xff]
          %v5762 = vld [vmem:[%s608 + $0x8] sm:$0xff]
          %v5763 = vld [vmem:[%s613] sm:$0xff]
          %v5764 = vld [vmem:[%s613 + $0x8] sm:$0xff]
          %v5765 = vld [vmem:[%s618] sm:$0xf]
          %v5766 = vld [vmem:[%s618 + $0x4] sm:$0xf]
          %v5767 = vunpack.c.l.bf16 %v5765
          %v5768 = vunpack.c.l.bf16 %v5766
          %vm5769 = vcmp.gt.f32.partialorder %v5767, 1.5
          %vm5770 = vcmp.gt.f32.partialorder %v5768, 1.5
          %v5771 = vsel %vm5769, 1.0, 0.0
          %v5772 = vsel %vm5770, 1.0, 0.0
          %v5773 = vsub.f32 %v5767, 1.0
          %v5774 = vsub.f32 %v5768, 1.0
          %v5775 = vand.u32 2147483647, %v5773
          %v5776 = vand.u32 2147483647, %v5774
          %vm5777 = vcmp.lt.f32.partialorder %v5775, 0.25
          %vm5778 = vcmp.lt.f32.partialorder %v5776, 0.25
          %v5779 = vsel %vm5777, 1.0, 0.0
          %v5780 = vsel %vm5778, 1.0, 0.0
          %s5781 = sld [smem:[#allocation5 + $0x9]]
          %v5782 = vadd.f32 %v5759, %v5761
          %v5783 = vadd.f32 %v5760, %v5762
          %v5784 = vsub.f32 %v5782, %v5763
          %v5785 = vsub.f32 %v5783, %v5764
          %v5786 = vand.u32 2147483647, %v5784
          %v5787 = vand.u32 2147483647, %v5785
          %v5788 = vadd.f32 %v5786, %v5787
          %5789 = vadd.xlane.f32.xlu0 %v5788
          %v5790 = vpop.xlane.xlu0 %5789
          %v5791 = vrot.slane %v5790, 4
          %v5792 = vadd.f32 %v5790, %v5791
          %v5793 = vrot.slane %v5792, 2
          %v5794 = vadd.f32 %v5792, %v5793
          %v5795 = vrot.slane %v5794, 1
          %v5796 = vadd.f32 %v5794, %v5795
          %s5797 = vtos %v5796
          %s5798 = sadd.f32 %s5781, %s5797
          %s5799 = scalar_lea.smem [#allocation5], 9
          %5800 = sst [smem:[%s5799]] %s5798
          %v5801 = vsub.f32 %v5761, %v5763
          %v5802 = vsub.f32 %v5762, %v5764
          %v5803 = vmul.f32 %v5801, %v5779
          %v5804 = vmul.f32 %v5802, %v5780
          %s5805 = sld [smem:[#allocation5 + $0xa]]
          %v5806 = vmul.f32 %v5803, %v5803
          %v5807 = vmul.f32 %v5804, %v5804
          %v5808 = vadd.f32 %v5806, %v5807
          %5809 = vadd.xlane.f32.xlu0 %v5808
          %v5810 = vpop.xlane.xlu0 %5809
          %v5811 = vrot.slane %v5810, 4
          %v5812 = vadd.f32 %v5810, %v5811
          %v5813 = vrot.slane %v5812, 2
          %v5814 = vadd.f32 %v5812, %v5813
          %v5815 = vrot.slane %v5814, 1
          %v5816 = vadd.f32 %v5814, %v5815
          %s5817 = vtos %v5816
          %s5818 = sadd.f32 %s5805, %s5817
          %s5819 = scalar_lea.smem [#allocation5], 10
          %5820 = sst [smem:[%s5819]] %s5818
          %s5821 = sld [smem:[#allocation5 + $0xb]]
          %v5822 = vadd.f32 %v5779, %v5780
          %5823 = vadd.xlane.f32.xlu0 %v5822
          %v5824 = vpop.xlane.xlu0 %5823
          %v5825 = vrot.slane %v5824, 4
          %v5826 = vadd.f32 %v5824, %v5825
          %v5827 = vrot.slane %v5826, 2
          %v5828 = vadd.f32 %v5826, %v5827
          %v5829 = vrot.slane %v5828, 1
          %v5830 = vadd.f32 %v5828, %v5829
          %s5831 = vtos %v5830
          %s5832 = sadd.f32 %s5821, %s5831
          %s5833 = scalar_lea.smem [#allocation5], 11
          %5834 = sst [smem:[%s5833]] %s5832
          %s5835 = sld [smem:[#allocation5 + $0xc]]
          %v5836 = vand.u32 2147483647, %v5759
          %v5837 = vand.u32 2147483647, %v5760
          %v5838 = vadd.f32 %v5836, 1.0
          %v5839 = vlog2.pop %v5838
          %v5840 = vmul.f32 %v5839, 0.6931472
          %v5841 = vmul.f32 -0.5, %v5836
          %v5842 = vadd.f32 %v5841, 1.0
          %v5843 = vmul.f32 %v5842, %v5836
          %v5844 = vand.u32 2147483647, %v5836
          %vm5845 = vcmp.lt.f32.partialorder %v5844, 0.0004427343
          %v5846 = vsel %vm5845, %v5843, %v5840
          %v5847 = vadd.f32 %v5837, 1.0
          %v5848 = vlog2.pop %v5847
          %v5849 = vmul.f32 %v5848, 0.6931472
          %v5850 = vmul.f32 -0.5, %v5837
          %v5851 = vadd.f32 %v5850, 1.0
          %v5852 = vmul.f32 %v5851, %v5837
          %v5853 = vand.u32 2147483647, %v5837
          %vm5854 = vcmp.lt.f32.partialorder %v5853, 0.0004427343
          %v5855 = vsel %vm5854, %v5852, %v5849
          %v5856 = vmul.f32 %v5846, %v5771
          %v5857 = vmul.f32 %v5855, %v5772
          %v5858 = vadd.f32 %v5856, %v5857
          %5859 = vadd.xlane.f32.xlu0 %v5858
          %v5860 = vpop.xlane.xlu0 %5859
          %v5861 = vrot.slane %v5860, 4
          %v5862 = vadd.f32 %v5860, %v5861
          %v5863 = vrot.slane %v5862, 2
          %v5864 = vadd.f32 %v5862, %v5863
          %v5865 = vrot.slane %v5864, 1
          %v5866 = vadd.f32 %v5864, %v5865
          %s5867 = vtos %v5866
          %s5868 = sadd.f32 %s5835, %s5867
          %s5869 = scalar_lea.smem [#allocation5], 12
          %5870 = sst [smem:[%s5869]] %s5868
        $region80: #{se_loss_forward.1} parent=71 // pred_fallthru
          _
        // Predicated region
        $region81: #{se_loss_forward.1} parent=71 // pred_check
          %p5871 = pneg %p373
        $region82: #{se_loss_forward.1} parent=71 // pred_check_branch
          %5873 = sbr.rel (%p5871) target = $region84
        $region83: #{se_loss_forward.1} parent=71 // pred_region
          %s5875 = ssub.s32 16, 16
          %5876 = vsyncadd [#allocation6], %s5875
          %s5878 = sshll.u32 %s13, 4
          %s5879 = int_to_ptr.vmem [resolvable:$true] %s5878
          %5881 = dma.smem_to_vmem [#allocation5], 16, %s5879, [#allocation6]
        $region84: #{se_loss_forward.1} parent=71 // pred_fallthru
          _
        // Predicated region
        $region85: #{se_loss_forward.1} parent=71 // pred_check
          %p5882 = pneg %p373
        $region86: #{se_loss_forward.1} parent=71 // pred_check_branch
          %5884 = sbr.rel (%p5882) target = $region88
        $region87: #{se_loss_forward.1} parent=71 // pred_region
          %5885 = dma.done [#allocation6], 16
        $region88: #{se_loss_forward.1} parent=71 // pred_fallthru
          _
        %5886 = sfence
      $region72: #{se_loss_forward.1} parent=5 // pred_fallthru
        _
      %p5887 = scmp.le.s32.totalorder 2, %s20
      // Predicated region
      $region89: #{se_loss_forward.1} parent=5 // pred_check
        %p5888 = pneg %p5887
      $region90: #{se_loss_forward.1} parent=5 // pred_check_branch
        %5890 = sbr.rel (%p5888) target = $region92
      $region91: #{se_loss_forward.1} parent=5 // pred_region
        %s5891 = ssub.s32 %s20, 2
      $region92: #{se_loss_forward.1} parent=5 // pred_fallthru
        _
    $region6: #{se_loss_forward.1} parent=1 // loop_footer
      %s24 = sadd.s32 1, %s20
    $region7: #{se_loss_forward.1} parent=1 // loop_footer_branch
      %19 = sbr.rel target = $region3
    $region8: #{se_loss_forward.1} parent=1 // loop_exit
      _
    %5892 = vsyncpa [#allocation6], 1
    %s5893 = scalar_lea.sflag [#allocation6], 1
    %5894 = vsyncpa %s5893, 1

</llo_original>
